<compile_context>
chip_gen: v7x
topology: tpu7x:2x2x1
jax: 0.10.0
libtpu: 0.0.40
codegen_flags: <defaults>
</compile_context>

<pallas_src>
import jax
import jax.numpy as jnp
from jax.experimental import pallas as pl
from jax.experimental.pallas import tpu as pltpu

EPS = 1e-5


# -----------------------------------------------------------------------------
# Fused kernel: contrast branches + channel gate + spatial gate, one batch item
# per grid step.
# -----------------------------------------------------------------------------
def make_fused_kernel(H, W, Cin, Cout, Cr, d1, d2, pad):
    C = 2 * Cout
    HW = H * W

    def kernel(xp_ref, wcat_ref, sc_ref, sh_ref, w1_ref, w2_ref, b2_ref,
               b1_ref, w7_ref, sbn_ref, o_ref):
        # ---- contrast branches: 9 fused MXU matmuls, K = 3*Cin, f32 acc ----
        # weight layout per tap k: rows [0:Cin]      = [Wl1 | Wl2]
        #                          rows [Cin:2Cin]   = [-Wc1 | 0  ]
        #                          rows [2Cin:3Cin]  = [ 0   | -Wc2]
        acc = jnp.zeros((HW, C), jnp.float32)
        for k in range(9):
            kh, kw = divmod(k, 3)
            ohl, owl = pad + (kh - 1), pad + (kw - 1)                 # dil 1
            oh1, ow1 = pad + (kh - 1) * d1, pad + (kw - 1) * d1       # dil d1
            oh2, ow2 = pad + (kh - 1) * d2, pad + (kw - 1) * d2       # dil d2
            xl = xp_ref[ohl:ohl + H, owl:owl + W, :].reshape(HW, Cin)
            x1 = xp_ref[oh1:oh1 + H, ow1:ow1 + W, :].reshape(HW, Cin)
            x2 = xp_ref[oh2:oh2 + H, ow2:ow2 + W, :].reshape(HW, Cin)
            xcat = jnp.concatenate([xl, x1, x2], axis=-1)             # (HW,3Cin)
            acc = acc + jnp.dot(xcat, wcat_ref[k],
                                preferred_element_type=jnp.float32)
        # fused eval-mode BN (scale/shift also absorb the conv biases) + ReLU
        y = jnp.maximum(sc_ref[...] * acc + sh_ref[...], 0.0)         # (HW, C)

        # ---- CBAM channel gate: avg pool -> tiny MLP on VPU -> sigmoid -----
        avg = jnp.sum(y, axis=0, keepdims=True) * (1.0 / HW)          # (1, C)
        att = b2_ref[...]                                             # (1, C)
        for j in range(Cr):                                           # Cr small
            hj = jnp.maximum(
                jnp.sum(avg * w1_ref[j:j + 1, :], axis=1, keepdims=True)
                + b1_ref[j], 0.0)                                     # (1, 1)
            att = att + hj * w2_ref[j:j + 1, :]
        cgate = 1.0 / (1.0 + jnp.exp(-att))                           # (1, C)
        y3 = (y * cgate).reshape(H, W, C)                             # NHWC

        # ---- CBAM spatial gate: 7x7 conv on channel mean, BN + sigmoid -----
        # Fully 2-D: (H, W) / (H+6, W+6), padded map built in registers.
        m = jnp.mean(y3, axis=2)                                      # (H, W)
        zc = jnp.zeros((H, 3), jnp.float32)
        zr = jnp.zeros((3, W + 6), jnp.float32)
        mp = jnp.concatenate(
            [zr, jnp.concatenate([zc, m, zc], axis=1), zr], axis=0)   # (H+6,W+6)
        acc7 = jnp.zeros((H, W), jnp.float32)
        for k in range(49):
            kh, kw = divmod(k, 7)
            acc7 = acc7 + mp[kh:kh + H, kw:kw + W] * w7_ref[k]
        z = sbn_ref[0] * acc7 + sbn_ref[1]
        sgate = 1.0 / (1.0 + jnp.exp(-z))                             # (H, W)

        # ---- apply gates, emit lane-dense NCHW block (C, H*W) --------------
        out = (y3 * sgate[:, :, None]).reshape(HW, C)
        o_ref[...] = out.T                                            # (C, HW)

    return kernel


# -----------------------------------------------------------------------------
# Full module forward (NCHW in / NCHW out, like the PyTorch module)
# -----------------------------------------------------------------------------
def contrast_block_deep_forward(x_nchw, P_, d1, d2):
    x = jnp.transpose(x_nchw, (0, 2, 3, 1)).astype(jnp.float32)  # NCHW -> NHWC
    N, H, W, Cin = x.shape
    Cout = P_["Wl1"].shape[0]
    C = 2 * Cout
    Cr = P_["mW1"].shape[0]
    HW = H * W
    pad = max(1, d1, d2)
    Hp, Wp = H + 2 * pad, W + 2 * pad

    # single padded copy of x shared by local and both dilated-context convs
    xp = jnp.pad(x, ((0, 0), (pad, pad), (pad, pad), (0, 0)))

    def prep(Wc):  # (Cout, Cin, 3, 3) -> (9, Cin, Cout)
        return jnp.transpose(Wc, (2, 3, 1, 0)).reshape(9, Cin, -1)

    wl = jnp.concatenate([prep(P_["Wl1"]), prep(P_["Wl2"])], axis=-1)  # (9,Cin,C)
    wc1 = prep(P_["Wc1"])                                              # (9,Cin,Cout)
    wc2 = prep(P_["Wc2"])
    zpad = jnp.zeros((9, Cin, Cout), jnp.float32)
    # combined branch weight: local minus both contexts, K = 3*Cin
    wcat = jnp.concatenate([
        wl,
        jnp.concatenate([-wc1, zpad], axis=-1),
        jnp.concatenate([zpad, -wc2], axis=-1),
    ], axis=1)                                                         # (9,3Cin,C)

    # fold conv biases + eval-mode BN into per-channel scale/shift
    s1 = P_["g1"] / jnp.sqrt(P_["v1"] + EPS)
    s2 = P_["g2"] / jnp.sqrt(P_["v2"] + EPS)
    scale = jnp.concatenate([s1, s2]).reshape(1, C)
    shift = jnp.concatenate([
        s1 * (P_["bl1"] - P_["bc1"]) + P_["be1"] - s1 * P_["m1"],
        s2 * (P_["bl2"] - P_["bc2"]) + P_["be2"] - s2 * P_["m2"],
    ]).reshape(1, C)

    w1 = P_["mW1"].astype(jnp.float32)            # (Cr, C)
    b1 = P_["mb1"].astype(jnp.float32)            # (Cr,)  -> SMEM
    w2 = P_["mW2"].T.astype(jnp.float32)          # (Cr, C)
    b2 = P_["mb2"].reshape(1, C).astype(jnp.float32)

    w49 = P_["W7"].reshape(49).astype(jnp.float32)
    s7 = P_["sg"] / jnp.sqrt(P_["sv"] + EPS)
    sbn = jnp.concatenate([s7, P_["sb"] - s7 * P_["sm"]]).astype(jnp.float32)

    kernel = make_fused_kernel(H, W, Cin, Cout, Cr, d1, d2, pad)

    grid_spec = pltpu.PrefetchScalarGridSpec(
        num_scalar_prefetch=0,
        grid=(N,),
        in_specs=[
            pl.BlockSpec((None, Hp, Wp, Cin), lambda n: (n, 0, 0, 0)),  # xp
            pl.BlockSpec((9, 3 * Cin, C), lambda n: (0, 0, 0)),         # wcat
            pl.BlockSpec((1, C), lambda n: (0, 0)),                     # scale
            pl.BlockSpec((1, C), lambda n: (0, 0)),                     # shift
            pl.BlockSpec((Cr, C), lambda n: (0, 0)),                    # mlp W1
            pl.BlockSpec((Cr, C), lambda n: (0, 0)),                    # mlp W2^T
            pl.BlockSpec((1, C), lambda n: (0, 0)),                     # mlp b2
            pl.BlockSpec(memory_space=pltpu.MemorySpace.SMEM),          # mlp b1
            pl.BlockSpec(memory_space=pltpu.MemorySpace.SMEM),          # 7x7 taps
            pl.BlockSpec(memory_space=pltpu.MemorySpace.SMEM),          # spatial BN
        ],
        out_specs=pl.BlockSpec((None, C, HW), lambda n: (n, 0, 0)),     # NCHW
    )

    out = pl.pallas_call(
        kernel,
        out_shape=jax.ShapeDtypeStruct((N, C, HW), jnp.float32),
        grid_spec=grid_spec,
        compiler_params=pltpu.CompilerParams(
            dimension_semantics=("parallel",),
            # per-step footprint is well under 1 MiB; keep the limit modest so
            # it is safe on v7x (64 MiB physical VMEM) as well as v5e/v6e.
            vmem_limit_bytes=16 * 1024 * 1024),
    )(xp, wcat, scale, shift, w1, w2, b2, b1, w49, sbn)

    return out.reshape(N, C, H, W)  # free reshape, already NCHW


# -----------------------------------------------------------------------------
# Pure-JAX reference (same eval-mode BN semantics) for self-verification.
# -----------------------------------------------------------------------------
def _conv_ref(x, Wt, b, d):
    rhs = jnp.transpose(Wt, (2, 3, 1, 0))  # HWIO
    out = jax.lax.conv_general_dilated(
        x, rhs, window_strides=(1, 1), padding=((d, d), (d, d)),
        rhs_dilation=(d, d), dimension_numbers=("NHWC", "HWIO", "NHWC"),
        precision=jax.lax.Precision.HIGHEST)
    return out + b.reshape(1, 1, 1, -1)


def _bn_ref(x, g, b, m, v):
    return g.reshape(1, 1, 1, -1) * (x - m.reshape(1, 1, 1, -1)) / \
        jnp.sqrt(v.reshape(1, 1, 1, -1) + EPS) + b.reshape(1, 1, 1, -1)


def reference_forward(x_nchw, P_, d1, d2):
    x = jnp.transpose(x_nchw, (0, 2, 3, 1))
    c1 = jnp.maximum(_bn_ref(_conv_ref(x, P_["Wl1"], P_["bl1"], 1) -
                             _conv_ref(x, P_["Wc1"], P_["bc1"], d1),
                             P_["g1"], P_["be1"], P_["m1"], P_["v1"]), 0.0)
    c2 = jnp.maximum(_bn_ref(_conv_ref(x, P_["Wl2"], P_["bl2"], 1) -
                             _conv_ref(x, P_["Wc2"], P_["bc2"], d2),
                             P_["g2"], P_["be2"], P_["m2"], P_["v2"]), 0.0)
    y = jnp.concatenate([c1, c2], axis=-1)
    avg = jnp.mean(y, axis=(1, 2))
    h = jnp.maximum(avg @ P_["mW1"].T + P_["mb1"], 0.0)
    att = h @ P_["mW2"].T + P_["mb2"]
    gate = jax.nn.sigmoid(att)
    y2 = y * gate[:, None, None, :]
    m = jnp.mean(y2, axis=-1, keepdims=True)
    rhs = jnp.transpose(P_["W7"], (2, 3, 1, 0))
    z = jax.lax.conv_general_dilated(
        m, rhs, window_strides=(1, 1), padding=((3, 3), (3, 3)),
        dimension_numbers=("NHWC", "HWIO", "NHWC"),
        precision=jax.lax.Precision.HIGHEST)
    s = P_["sg"] / jnp.sqrt(P_["sv"] + EPS)
    z = s.reshape(1, 1, 1, 1) * z + (P_["sb"] - s * P_["sm"]).reshape(1, 1, 1, 1)
    out = y2 * jax.nn.sigmoid(z)
    return jnp.transpose(out, (0, 3, 1, 2))


# -----------------------------------------------------------------------------
# Deterministic parameter construction
# -----------------------------------------------------------------------------
def make_params(key, planes):
    inpl = planes
    outpl = planes // 2
    Cr = inpl // 16
    ks = jax.random.split(key, 32)
    n = lambda i, shape, s=0.1: s * jax.random.normal(ks[i], shape, jnp.float32)
    return dict(
        Wl1=n(0, (outpl, inpl, 3, 3)), bl1=n(1, (outpl,)),
        Wc1=n(2, (outpl, inpl, 3, 3)), bc1=n(3, (outpl,)),
        Wl2=n(4, (outpl, inpl, 3, 3)), bl2=n(5, (outpl,)),
        Wc2=n(6, (outpl, inpl, 3, 3)), bc2=n(7, (outpl,)),
        g1=1.0 + n(8, (outpl,)), be1=n(9, (outpl,)),
        m1=n(10, (outpl,)), v1=1.0 + jnp.abs(n(11, (outpl,))),
        g2=1.0 + n(12, (outpl,)), be2=n(13, (outpl,)),
        m2=n(14, (outpl,)), v2=1.0 + jnp.abs(n(15, (outpl,))),
        mW1=n(16, (Cr, inpl), 0.2), mb1=n(17, (Cr,)),
        mW2=n(18, (inpl, Cr), 0.2), mb2=n(19, (inpl,)),
        W7=n(20, (1, 1, 7, 7), 0.2),
        sg=1.0 + n(21, (1,)), sb=n(22, (1,)),
        sm=n(23, (1,)), sv=1.0 + jnp.abs(n(24, (1,))),
    )


if __name__ == "__main__":
    planes, d1, d2 = 32, 2, 4
    N, H, W = 2, 16, 16

    key = jax.random.PRNGKey(0)
    kx, kp = jax.random.split(key)
    x = jax.random.normal(kx, (N, planes, H, W), jnp.float32)   # NCHW input
    P = make_params(kp, planes)

    out = jax.block_until_ready(contrast_block_deep_forward(x, P, d1, d2))
    ref = jax.block_until_ready(reference_forward(x, P, d1, d2))

    assert out.shape == (N, planes, H, W)
    max_err = float(jnp.max(jnp.abs(out - ref)))
    assert max_err < 2e-3, f"mismatch vs reference: {max_err}"

    print("KERNEL_OK")
</pallas_src>

<mosaic_0001>
module attributes {stable_mosaic.version = 11 : i64} {
  func.func @kernel(%arg0: i32, %arg1: memref<1x24x24x32xf32, #tpu.memory_space<vmem>>, %arg2: memref<9x96x32xf32, #tpu.memory_space<vmem>>, %arg3: memref<1x32xf32, #tpu.memory_space<vmem>>, %arg4: memref<1x32xf32, #tpu.memory_space<vmem>>, %arg5: memref<2x32xf32, #tpu.memory_space<vmem>>, %arg6: memref<2x32xf32, #tpu.memory_space<vmem>>, %arg7: memref<1x32xf32, #tpu.memory_space<vmem>>, %arg8: memref<2xf32, #tpu.memory_space<smem>>, %arg9: memref<49xf32, #tpu.memory_space<smem>>, %arg10: memref<2xf32, #tpu.memory_space<smem>>, %arg11: memref<1x32x256xf32, #tpu.memory_space<vmem>>) attributes {dimension_semantics = [#tpu.dimension_semantics<parallel>], iteration_bounds = array<i64: 2>, scalar_prefetch = 0 : i64, scratch_operands = 0 : i64, tpu.core_type = #tpu.core_type<tc>, window_params = [{transform_indices = @transform_0, window_bounds = array<i64: 1, 24, 24, 32>}, {pipeline_mode = #tpu.pipeline_mode<synchronous>, transform_indices = @transform_1, window_bounds = array<i64: 9, 96, 32>}, {pipeline_mode = #tpu.pipeline_mode<synchronous>, transform_indices = @transform_2, window_bounds = array<i64: 1, 32>}, {pipeline_mode = #tpu.pipeline_mode<synchronous>, transform_indices = @transform_3, window_bounds = array<i64: 1, 32>}, {pipeline_mode = #tpu.pipeline_mode<synchronous>, transform_indices = @transform_4, window_bounds = array<i64: 2, 32>}, {pipeline_mode = #tpu.pipeline_mode<synchronous>, transform_indices = @transform_5, window_bounds = array<i64: 2, 32>}, {pipeline_mode = #tpu.pipeline_mode<synchronous>, transform_indices = @transform_6, window_bounds = array<i64: 1, 32>}, {transform_indices = @transform_7, window_bounds = array<i64: 2>}, {transform_indices = @transform_8, window_bounds = array<i64: 49>}, {transform_indices = @transform_9, window_bounds = array<i64: 2>}, {transform_indices = @transform_10, window_bounds = array<i64: 1, 32, 256>}]} {
    %cst = arith.constant 0.000000e+00 : f32
    %0 = vector.broadcast %cst : f32 to vector<256x32xf32>
    %c0 = arith.constant 0 : index
    %c3 = arith.constant 3 : index
    %c3_0 = arith.constant 3 : index
    %c0_1 = arith.constant 0 : index
    %1 = vector.load %arg1[%c0, %c3, %c3_0, %c0_1] : memref<1x24x24x32xf32, #tpu.memory_space<vmem>>, vector<1x16x16x32xf32>
    %2 = vector.shape_cast %1 : vector<1x16x16x32xf32> to vector<16x16x32xf32>
    %3 = vector.shape_cast %2 : vector<16x16x32xf32> to vector<256x32xf32>
    %c0_2 = arith.constant 0 : index
    %c2 = arith.constant 2 : index
    %c2_3 = arith.constant 2 : index
    %c0_4 = arith.constant 0 : index
    %4 = vector.load %arg1[%c0_2, %c2, %c2_3, %c0_4] : memref<1x24x24x32xf32, #tpu.memory_space<vmem>>, vector<1x16x16x32xf32>
    %5 = vector.shape_cast %4 : vector<1x16x16x32xf32> to vector<16x16x32xf32>
    %6 = vector.shape_cast %5 : vector<16x16x32xf32> to vector<256x32xf32>
    %c0_5 = arith.constant 0 : index
    %c0_6 = arith.constant 0 : index
    %c0_7 = arith.constant 0 : index
    %c0_8 = arith.constant 0 : index
    %7 = vector.load %arg1[%c0_5, %c0_6, %c0_7, %c0_8] : memref<1x24x24x32xf32, #tpu.memory_space<vmem>>, vector<1x16x16x32xf32>
    %8 = vector.shape_cast %7 : vector<1x16x16x32xf32> to vector<16x16x32xf32>
    %9 = vector.shape_cast %8 : vector<16x16x32xf32> to vector<256x32xf32>
    %10 = tpu.concatenate %3, %6, %9 in 1 : vector<256x32xf32>, vector<256x32xf32>, vector<256x32xf32> -> vector<256x96xf32>
    %c0_9 = arith.constant 0 : index
    %c0_10 = arith.constant 0 : index
    %c0_11 = arith.constant 0 : index
    %11 = vector.load %arg2[%c0_9, %c0_10, %c0_11] : memref<9x96x32xf32, #tpu.memory_space<vmem>>, vector<1x96x32xf32>
    %12 = vector.shape_cast %11 : vector<1x96x32xf32> to vector<96x32xf32>
    %cst_12 = arith.constant dense<0.000000e+00> : vector<256x32xf32>
    %13 = tpu.matmul %10, %12, %cst_12 {dimension_numbers = #tpu.dot_dimension_numbers<[1], [0], [0], [1], [0, 0, 1, 1], [], []>} : vector<256x96xf32>, vector<96x32xf32>, vector<256x32xf32> -> vector<256x32xf32>
    %14 = arith.addf %0, %13 : vector<256x32xf32>
    %c0_13 = arith.constant 0 : index
    %c3_14 = arith.constant 3 : index
    %c4 = arith.constant 4 : index
    %c0_15 = arith.constant 0 : index
    %15 = vector.load %arg1[%c0_13, %c3_14, %c4, %c0_15] : memref<1x24x24x32xf32, #tpu.memory_space<vmem>>, vector<1x16x16x32xf32>
    %16 = vector.shape_cast %15 : vector<1x16x16x32xf32> to vector<16x16x32xf32>
    %17 = vector.shape_cast %16 : vector<16x16x32xf32> to vector<256x32xf32>
    %c0_16 = arith.constant 0 : index
    %c2_17 = arith.constant 2 : index
    %c4_18 = arith.constant 4 : index
    %c0_19 = arith.constant 0 : index
    %18 = vector.load %arg1[%c0_16, %c2_17, %c4_18, %c0_19] : memref<1x24x24x32xf32, #tpu.memory_space<vmem>>, vector<1x16x16x32xf32>
    %19 = vector.shape_cast %18 : vector<1x16x16x32xf32> to vector<16x16x32xf32>
    %20 = vector.shape_cast %19 : vector<16x16x32xf32> to vector<256x32xf32>
    %c0_20 = arith.constant 0 : index
    %c0_21 = arith.constant 0 : index
    %c4_22 = arith.constant 4 : index
    %c0_23 = arith.constant 0 : index
    %21 = vector.load %arg1[%c0_20, %c0_21, %c4_22, %c0_23] : memref<1x24x24x32xf32, #tpu.memory_space<vmem>>, vector<1x16x16x32xf32>
    %22 = vector.shape_cast %21 : vector<1x16x16x32xf32> to vector<16x16x32xf32>
    %23 = vector.shape_cast %22 : vector<16x16x32xf32> to vector<256x32xf32>
    %24 = tpu.concatenate %17, %20, %23 in 1 : vector<256x32xf32>, vector<256x32xf32>, vector<256x32xf32> -> vector<256x96xf32>
    %c1 = arith.constant 1 : index
    %c0_24 = arith.constant 0 : index
    %c0_25 = arith.constant 0 : index
    %25 = vector.load %arg2[%c1, %c0_24, %c0_25] : memref<9x96x32xf32, #tpu.memory_space<vmem>>, vector<1x96x32xf32>
    %26 = vector.shape_cast %25 : vector<1x96x32xf32> to vector<96x32xf32>
    %cst_26 = arith.constant dense<0.000000e+00> : vector<256x32xf32>
    %27 = tpu.matmul %24, %26, %cst_26 {dimension_numbers = #tpu.dot_dimension_numbers<[1], [0], [0], [1], [0, 0, 1, 1], [], []>} : vector<256x96xf32>, vector<96x32xf32>, vector<256x32xf32> -> vector<256x32xf32>
    %28 = arith.addf %14, %27 : vector<256x32xf32>
    %c0_27 = arith.constant 0 : index
    %c3_28 = arith.constant 3 : index
    %c5 = arith.constant 5 : index
    %c0_29 = arith.constant 0 : index
    %29 = vector.load %arg1[%c0_27, %c3_28, %c5, %c0_29] : memref<1x24x24x32xf32, #tpu.memory_space<vmem>>, vector<1x16x16x32xf32>
    %30 = vector.shape_cast %29 : vector<1x16x16x32xf32> to vector<16x16x32xf32>
    %31 = vector.shape_cast %30 : vector<16x16x32xf32> to vector<256x32xf32>
    %c0_30 = arith.constant 0 : index
    %c2_31 = arith.constant 2 : index
    %c6 = arith.constant 6 : index
    %c0_32 = arith.constant 0 : index
    %32 = vector.load %arg1[%c0_30, %c2_31, %c6, %c0_32] : memref<1x24x24x32xf32, #tpu.memory_space<vmem>>, vector<1x16x16x32xf32>
    %33 = vector.shape_cast %32 : vector<1x16x16x32xf32> to vector<16x16x32xf32>
    %34 = vector.shape_cast %33 : vector<16x16x32xf32> to vector<256x32xf32>
    %c0_33 = arith.constant 0 : index
    %c0_34 = arith.constant 0 : index
    %c8 = arith.constant 8 : index
    %c0_35 = arith.constant 0 : index
    %35 = vector.load %arg1[%c0_33, %c0_34, %c8, %c0_35] : memref<1x24x24x32xf32, #tpu.memory_space<vmem>>, vector<1x16x16x32xf32>
    %36 = vector.shape_cast %35 : vector<1x16x16x32xf32> to vector<16x16x32xf32>
    %37 = vector.shape_cast %36 : vector<16x16x32xf32> to vector<256x32xf32>
    %38 = tpu.concatenate %31, %34, %37 in 1 : vector<256x32xf32>, vector<256x32xf32>, vector<256x32xf32> -> vector<256x96xf32>
    %c2_36 = arith.constant 2 : index
    %c0_37 = arith.constant 0 : index
    %c0_38 = arith.constant 0 : index
    %39 = vector.load %arg2[%c2_36, %c0_37, %c0_38] : memref<9x96x32xf32, #tpu.memory_space<vmem>>, vector<1x96x32xf32>
    %40 = vector.shape_cast %39 : vector<1x96x32xf32> to vector<96x32xf32>
    %cst_39 = arith.constant dense<0.000000e+00> : vector<256x32xf32>
    %41 = tpu.matmul %38, %40, %cst_39 {dimension_numbers = #tpu.dot_dimension_numbers<[1], [0], [0], [1], [0, 0, 1, 1], [], []>} : vector<256x96xf32>, vector<96x32xf32>, vector<256x32xf32> -> vector<256x32xf32>
    %42 = arith.addf %28, %41 : vector<256x32xf32>
    %c0_40 = arith.constant 0 : index
    %c4_41 = arith.constant 4 : index
    %c3_42 = arith.constant 3 : index
    %c0_43 = arith.constant 0 : index
    %43 = vector.load %arg1[%c0_40, %c4_41, %c3_42, %c0_43] : memref<1x24x24x32xf32, #tpu.memory_space<vmem>>, vector<1x16x16x32xf32>
    %44 = vector.shape_cast %43 : vector<1x16x16x32xf32> to vector<16x16x32xf32>
    %45 = vector.shape_cast %44 : vector<16x16x32xf32> to vector<256x32xf32>
    %c0_44 = arith.constant 0 : index
    %c4_45 = arith.constant 4 : index
    %c2_46 = arith.constant 2 : index
    %c0_47 = arith.constant 0 : index
    %46 = vector.load %arg1[%c0_44, %c4_45, %c2_46, %c0_47] : memref<1x24x24x32xf32, #tpu.memory_space<vmem>>, vector<1x16x16x32xf32>
    %47 = vector.shape_cast %46 : vector<1x16x16x32xf32> to vector<16x16x32xf32>
    %48 = vector.shape_cast %47 : vector<16x16x32xf32> to vector<256x32xf32>
    %c0_48 = arith.constant 0 : index
    %c4_49 = arith.constant 4 : index
    %c0_50 = arith.constant 0 : index
    %c0_51 = arith.constant 0 : index
    %49 = vector.load %arg1[%c0_48, %c4_49, %c0_50, %c0_51] : memref<1x24x24x32xf32, #tpu.memory_space<vmem>>, vector<1x16x16x32xf32>
    %50 = vector.shape_cast %49 : vector<1x16x16x32xf32> to vector<16x16x32xf32>
    %51 = vector.shape_cast %50 : vector<16x16x32xf32> to vector<256x32xf32>
    %52 = tpu.concatenate %45, %48, %51 in 1 : vector<256x32xf32>, vector<256x32xf32>, vector<256x32xf32> -> vector<256x96xf32>
    %c3_52 = arith.constant 3 : index
    %c0_53 = arith.constant 0 : index
    %c0_54 = arith.constant 0 : index
    %53 = vector.load %arg2[%c3_52, %c0_53, %c0_54] : memref<9x96x32xf32, #tpu.memory_space<vmem>>, vector<1x96x32xf32>
    %54 = vector.shape_cast %53 : vector<1x96x32xf32> to vector<96x32xf32>
    %cst_55 = arith.constant dense<0.000000e+00> : vector<256x32xf32>
    %55 = tpu.matmul %52, %54, %cst_55 {dimension_numbers = #tpu.dot_dimension_numbers<[1], [0], [0], [1], [0, 0, 1, 1], [], []>} : vector<256x96xf32>, vector<96x32xf32>, vector<256x32xf32> -> vector<256x32xf32>
    %56 = arith.addf %42, %55 : vector<256x32xf32>
    %c0_56 = arith.constant 0 : index
    %c4_57 = arith.constant 4 : index
    %c4_58 = arith.constant 4 : index
    %c0_59 = arith.constant 0 : index
    %57 = vector.load %arg1[%c0_56, %c4_57, %c4_58, %c0_59] : memref<1x24x24x32xf32, #tpu.memory_space<vmem>>, vector<1x16x16x32xf32>
    %58 = vector.shape_cast %57 : vector<1x16x16x32xf32> to vector<16x16x32xf32>
    %59 = vector.shape_cast %58 : vector<16x16x32xf32> to vector<256x32xf32>
    %c0_60 = arith.constant 0 : index
    %c4_61 = arith.constant 4 : index
    %c4_62 = arith.constant 4 : index
    %c0_63 = arith.constant 0 : index
    %60 = vector.load %arg1[%c0_60, %c4_61, %c4_62, %c0_63] : memref<1x24x24x32xf32, #tpu.memory_space<vmem>>, vector<1x16x16x32xf32>
    %61 = vector.shape_cast %60 : vector<1x16x16x32xf32> to vector<16x16x32xf32>
    %62 = vector.shape_cast %61 : vector<16x16x32xf32> to vector<256x32xf32>
    %c0_64 = arith.constant 0 : index
    %c4_65 = arith.constant 4 : index
    %c4_66 = arith.constant 4 : index
    %c0_67 = arith.constant 0 : index
    %63 = vector.load %arg1[%c0_64, %c4_65, %c4_66, %c0_67] : memref<1x24x24x32xf32, #tpu.memory_space<vmem>>, vector<1x16x16x32xf32>
    %64 = vector.shape_cast %63 : vector<1x16x16x32xf32> to vector<16x16x32xf32>
    %65 = vector.shape_cast %64 : vector<16x16x32xf32> to vector<256x32xf32>
    %66 = tpu.concatenate %59, %62, %65 in 1 : vector<256x32xf32>, vector<256x32xf32>, vector<256x32xf32> -> vector<256x96xf32>
    %c4_68 = arith.constant 4 : index
    %c0_69 = arith.constant 0 : index
    %c0_70 = arith.constant 0 : index
    %67 = vector.load %arg2[%c4_68, %c0_69, %c0_70] : memref<9x96x32xf32, #tpu.memory_space<vmem>>, vector<1x96x32xf32>
    %68 = vector.shape_cast %67 : vector<1x96x32xf32> to vector<96x32xf32>
    %cst_71 = arith.constant dense<0.000000e+00> : vector<256x32xf32>
    %69 = tpu.matmul %66, %68, %cst_71 {dimension_numbers = #tpu.dot_dimension_numbers<[1], [0], [0], [1], [0, 0, 1, 1], [], []>} : vector<256x96xf32>, vector<96x32xf32>, vector<256x32xf32> -> vector<256x32xf32>
    %70 = arith.addf %56, %69 : vector<256x32xf32>
    %c0_72 = arith.constant 0 : index
    %c4_73 = arith.constant 4 : index
    %c5_74 = arith.constant 5 : index
    %c0_75 = arith.constant 0 : index
    %71 = vector.load %arg1[%c0_72, %c4_73, %c5_74, %c0_75] : memref<1x24x24x32xf32, #tpu.memory_space<vmem>>, vector<1x16x16x32xf32>
    %72 = vector.shape_cast %71 : vector<1x16x16x32xf32> to vector<16x16x32xf32>
    %73 = vector.shape_cast %72 : vector<16x16x32xf32> to vector<256x32xf32>
    %c0_76 = arith.constant 0 : index
    %c4_77 = arith.constant 4 : index
    %c6_78 = arith.constant 6 : index
    %c0_79 = arith.constant 0 : index
    %74 = vector.load %arg1[%c0_76, %c4_77, %c6_78, %c0_79] : memref<1x24x24x32xf32, #tpu.memory_space<vmem>>, vector<1x16x16x32xf32>
    %75 = vector.shape_cast %74 : vector<1x16x16x32xf32> to vector<16x16x32xf32>
    %76 = vector.shape_cast %75 : vector<16x16x32xf32> to vector<256x32xf32>
    %c0_80 = arith.constant 0 : index
    %c4_81 = arith.constant 4 : index
    %c8_82 = arith.constant 8 : index
    %c0_83 = arith.constant 0 : index
    %77 = vector.load %arg1[%c0_80, %c4_81, %c8_82, %c0_83] : memref<1x24x24x32xf32, #tpu.memory_space<vmem>>, vector<1x16x16x32xf32>
    %78 = vector.shape_cast %77 : vector<1x16x16x32xf32> to vector<16x16x32xf32>
    %79 = vector.shape_cast %78 : vector<16x16x32xf32> to vector<256x32xf32>
    %80 = tpu.concatenate %73, %76, %79 in 1 : vector<256x32xf32>, vector<256x32xf32>, vector<256x32xf32> -> vector<256x96xf32>
    %c5_84 = arith.constant 5 : index
    %c0_85 = arith.constant 0 : index
    %c0_86 = arith.constant 0 : index
    %81 = vector.load %arg2[%c5_84, %c0_85, %c0_86] : memref<9x96x32xf32, #tpu.memory_space<vmem>>, vector<1x96x32xf32>
    %82 = vector.shape_cast %81 : vector<1x96x32xf32> to vector<96x32xf32>
    %cst_87 = arith.constant dense<0.000000e+00> : vector<256x32xf32>
    %83 = tpu.matmul %80, %82, %cst_87 {dimension_numbers = #tpu.dot_dimension_numbers<[1], [0], [0], [1], [0, 0, 1, 1], [], []>} : vector<256x96xf32>, vector<96x32xf32>, vector<256x32xf32> -> vector<256x32xf32>
    %84 = arith.addf %70, %83 : vector<256x32xf32>
    %c0_88 = arith.constant 0 : index
    %c5_89 = arith.constant 5 : index
    %c3_90 = arith.constant 3 : index
    %c0_91 = arith.constant 0 : index
    %85 = vector.load %arg1[%c0_88, %c5_89, %c3_90, %c0_91] : memref<1x24x24x32xf32, #tpu.memory_space<vmem>>, vector<1x16x16x32xf32>
    %86 = vector.shape_cast %85 : vector<1x16x16x32xf32> to vector<16x16x32xf32>
    %87 = vector.shape_cast %86 : vector<16x16x32xf32> to vector<256x32xf32>
    %c0_92 = arith.constant 0 : index
    %c6_93 = arith.constant 6 : index
    %c2_94 = arith.constant 2 : index
    %c0_95 = arith.constant 0 : index
    %88 = vector.load %arg1[%c0_92, %c6_93, %c2_94, %c0_95] : memref<1x24x24x32xf32, #tpu.memory_space<vmem>>, vector<1x16x16x32xf32>
    %89 = vector.shape_cast %88 : vector<1x16x16x32xf32> to vector<16x16x32xf32>
    %90 = vector.shape_cast %89 : vector<16x16x32xf32> to vector<256x32xf32>
    %c0_96 = arith.constant 0 : index
    %c8_97 = arith.constant 8 : index
    %c0_98 = arith.constant 0 : index
    %c0_99 = arith.constant 0 : index
    %91 = vector.load %arg1[%c0_96, %c8_97, %c0_98, %c0_99] : memref<1x24x24x32xf32, #tpu.memory_space<vmem>>, vector<1x16x16x32xf32>
    %92 = vector.shape_cast %91 : vector<1x16x16x32xf32> to vector<16x16x32xf32>
    %93 = vector.shape_cast %92 : vector<16x16x32xf32> to vector<256x32xf32>
    %94 = tpu.concatenate %87, %90, %93 in 1 : vector<256x32xf32>, vector<256x32xf32>, vector<256x32xf32> -> vector<256x96xf32>
    %c6_100 = arith.constant 6 : index
    %c0_101 = arith.constant 0 : index
    %c0_102 = arith.constant 0 : index
    %95 = vector.load %arg2[%c6_100, %c0_101, %c0_102] : memref<9x96x32xf32, #tpu.memory_space<vmem>>, vector<1x96x32xf32>
    %96 = vector.shape_cast %95 : vector<1x96x32xf32> to vector<96x32xf32>
    %cst_103 = arith.constant dense<0.000000e+00> : vector<256x32xf32>
    %97 = tpu.matmul %94, %96, %cst_103 {dimension_numbers = #tpu.dot_dimension_numbers<[1], [0], [0], [1], [0, 0, 1, 1], [], []>} : vector<256x96xf32>, vector<96x32xf32>, vector<256x32xf32> -> vector<256x32xf32>
    %98 = arith.addf %84, %97 : vector<256x32xf32>
    %c0_104 = arith.constant 0 : index
    %c5_105 = arith.constant 5 : index
    %c4_106 = arith.constant 4 : index
    %c0_107 = arith.constant 0 : index
    %99 = vector.load %arg1[%c0_104, %c5_105, %c4_106, %c0_107] : memref<1x24x24x32xf32, #tpu.memory_space<vmem>>, vector<1x16x16x32xf32>
    %100 = vector.shape_cast %99 : vector<1x16x16x32xf32> to vector<16x16x32xf32>
    %101 = vector.shape_cast %100 : vector<16x16x32xf32> to vector<256x32xf32>
    %c0_108 = arith.constant 0 : index
    %c6_109 = arith.constant 6 : index
    %c4_110 = arith.constant 4 : index
    %c0_111 = arith.constant 0 : index
    %102 = vector.load %arg1[%c0_108, %c6_109, %c4_110, %c0_111] : memref<1x24x24x32xf32, #tpu.memory_space<vmem>>, vector<1x16x16x32xf32>
    %103 = vector.shape_cast %102 : vector<1x16x16x32xf32> to vector<16x16x32xf32>
    %104 = vector.shape_cast %103 : vector<16x16x32xf32> to vector<256x32xf32>
    %c0_112 = arith.constant 0 : index
    %c8_113 = arith.constant 8 : index
    %c4_114 = arith.constant 4 : index
    %c0_115 = arith.constant 0 : index
    %105 = vector.load %arg1[%c0_112, %c8_113, %c4_114, %c0_115] : memref<1x24x24x32xf32, #tpu.memory_space<vmem>>, vector<1x16x16x32xf32>
    %106 = vector.shape_cast %105 : vector<1x16x16x32xf32> to vector<16x16x32xf32>
    %107 = vector.shape_cast %106 : vector<16x16x32xf32> to vector<256x32xf32>
    %108 = tpu.concatenate %101, %104, %107 in 1 : vector<256x32xf32>, vector<256x32xf32>, vector<256x32xf32> -> vector<256x96xf32>
    %c7 = arith.constant 7 : index
    %c0_116 = arith.constant 0 : index
    %c0_117 = arith.constant 0 : index
    %109 = vector.load %arg2[%c7, %c0_116, %c0_117] : memref<9x96x32xf32, #tpu.memory_space<vmem>>, vector<1x96x32xf32>
    %110 = vector.shape_cast %109 : vector<1x96x32xf32> to vector<96x32xf32>
    %cst_118 = arith.constant dense<0.000000e+00> : vector<256x32xf32>
    %111 = tpu.matmul %108, %110, %cst_118 {dimension_numbers = #tpu.dot_dimension_numbers<[1], [0], [0], [1], [0, 0, 1, 1], [], []>} : vector<256x96xf32>, vector<96x32xf32>, vector<256x32xf32> -> vector<256x32xf32>
    %112 = arith.addf %98, %111 : vector<256x32xf32>
    %c0_119 = arith.constant 0 : index
    %c5_120 = arith.constant 5 : index
    %c5_121 = arith.constant 5 : index
    %c0_122 = arith.constant 0 : index
    %113 = vector.load %arg1[%c0_119, %c5_120, %c5_121, %c0_122] : memref<1x24x24x32xf32, #tpu.memory_space<vmem>>, vector<1x16x16x32xf32>
    %114 = vector.shape_cast %113 : vector<1x16x16x32xf32> to vector<16x16x32xf32>
    %115 = vector.shape_cast %114 : vector<16x16x32xf32> to vector<256x32xf32>
    %c0_123 = arith.constant 0 : index
    %c6_124 = arith.constant 6 : index
    %c6_125 = arith.constant 6 : index
    %c0_126 = arith.constant 0 : index
    %116 = vector.load %arg1[%c0_123, %c6_124, %c6_125, %c0_126] : memref<1x24x24x32xf32, #tpu.memory_space<vmem>>, vector<1x16x16x32xf32>
    %117 = vector.shape_cast %116 : vector<1x16x16x32xf32> to vector<16x16x32xf32>
    %118 = vector.shape_cast %117 : vector<16x16x32xf32> to vector<256x32xf32>
    %c0_127 = arith.constant 0 : index
    %c8_128 = arith.constant 8 : index
    %c8_129 = arith.constant 8 : index
    %c0_130 = arith.constant 0 : index
    %119 = vector.load %arg1[%c0_127, %c8_128, %c8_129, %c0_130] : memref<1x24x24x32xf32, #tpu.memory_space<vmem>>, vector<1x16x16x32xf32>
    %120 = vector.shape_cast %119 : vector<1x16x16x32xf32> to vector<16x16x32xf32>
    %121 = vector.shape_cast %120 : vector<16x16x32xf32> to vector<256x32xf32>
    %122 = tpu.concatenate %115, %118, %121 in 1 : vector<256x32xf32>, vector<256x32xf32>, vector<256x32xf32> -> vector<256x96xf32>
    %c8_131 = arith.constant 8 : index
    %c0_132 = arith.constant 0 : index
    %c0_133 = arith.constant 0 : index
    %123 = vector.load %arg2[%c8_131, %c0_132, %c0_133] : memref<9x96x32xf32, #tpu.memory_space<vmem>>, vector<1x96x32xf32>
    %124 = vector.shape_cast %123 : vector<1x96x32xf32> to vector<96x32xf32>
    %cst_134 = arith.constant dense<0.000000e+00> : vector<256x32xf32>
    %125 = tpu.matmul %122, %124, %cst_134 {dimension_numbers = #tpu.dot_dimension_numbers<[1], [0], [0], [1], [0, 0, 1, 1], [], []>} : vector<256x96xf32>, vector<96x32xf32>, vector<256x32xf32> -> vector<256x32xf32>
    %126 = arith.addf %112, %125 : vector<256x32xf32>
    %c0_135 = arith.constant 0 : index
    %c0_136 = arith.constant 0 : index
    %127 = vector.load %arg3[%c0_135, %c0_136] : memref<1x32xf32, #tpu.memory_space<vmem>>, vector<1x32xf32>
    %128 = vector.broadcast %127 : vector<1x32xf32> to vector<256x32xf32>
    %129 = arith.mulf %128, %126 : vector<256x32xf32>
    %c0_137 = arith.constant 0 : index
    %c0_138 = arith.constant 0 : index
    %130 = vector.load %arg4[%c0_137, %c0_138] : memref<1x32xf32, #tpu.memory_space<vmem>>, vector<1x32xf32>
    %131 = vector.broadcast %130 : vector<1x32xf32> to vector<256x32xf32>
    %132 = arith.addf %129, %131 : vector<256x32xf32>
    %cst_139 = arith.constant 0.000000e+00 : f32
    %133 = vector.broadcast %cst_139 : f32 to vector<256x32xf32>
    %134 = arith.maximumf %132, %133 : vector<256x32xf32>
    %cst_140 = arith.constant dense<0.000000e+00> : vector<32xf32>
    %135 = vector.multi_reduction <add>, %134, %cst_140 [0] : vector<256x32xf32> to vector<32xf32>
    %136 = vector.shape_cast %135 : vector<32xf32> to vector<1x32xf32>
    %cst_141 = arith.constant 3.906250e-03 : f32
    %137 = vector.broadcast %cst_141 : f32 to vector<1x32xf32>
    %138 = arith.mulf %136, %137 : vector<1x32xf32>
    %c0_142 = arith.constant 0 : index
    %c0_143 = arith.constant 0 : index
    %139 = vector.load %arg7[%c0_142, %c0_143] : memref<1x32xf32, #tpu.memory_space<vmem>>, vector<1x32xf32>
    %c0_144 = arith.constant 0 : index
    %c0_145 = arith.constant 0 : index
    %140 = vector.load %arg5[%c0_144, %c0_145] : memref<2x32xf32, #tpu.memory_space<vmem>>, vector<1x32xf32>
    %141 = arith.mulf %138, %140 : vector<1x32xf32>
    %cst_146 = arith.constant dense<0.000000e+00> : vector<1xf32>
    %142 = vector.multi_reduction <add>, %141, %cst_146 [1] : vector<1x32xf32> to vector<1xf32>
    %143 = vector.shape_cast %142 : vector<1xf32> to vector<1x1xf32>
    %c0_147 = arith.constant 0 : index
    %144 = memref.load %arg8[%c0_147] : memref<2xf32, #tpu.memory_space<smem>>
    %145 = vector.broadcast %144 : f32 to vector<1x1xf32>
    %146 = arith.addf %143, %145 : vector<1x1xf32>
    %cst_148 = arith.constant 0.000000e+00 : f32
    %147 = vector.broadcast %cst_148 : f32 to vector<1x1xf32>
    %148 = arith.maximumf %146, %147 : vector<1x1xf32>
    %c0_149 = arith.constant 0 : index
    %c0_150 = arith.constant 0 : index
    %149 = vector.load %arg6[%c0_149, %c0_150] : memref<2x32xf32, #tpu.memory_space<vmem>>, vector<1x32xf32>
    %150 = vector.broadcast %148 : vector<1x1xf32> to vector<1x32xf32>
    %151 = arith.mulf %150, %149 : vector<1x32xf32>
    %152 = arith.addf %139, %151 : vector<1x32xf32>
    %c1_151 = arith.constant 1 : index
    %c0_152 = arith.constant 0 : index
    %153 = vector.load %arg5[%c1_151, %c0_152] : memref<2x32xf32, #tpu.memory_space<vmem>>, vector<1x32xf32>
    %154 = arith.mulf %138, %153 : vector<1x32xf32>
    %cst_153 = arith.constant dense<0.000000e+00> : vector<1xf32>
    %155 = vector.multi_reduction <add>, %154, %cst_153 [1] : vector<1x32xf32> to vector<1xf32>
    %156 = vector.shape_cast %155 : vector<1xf32> to vector<1x1xf32>
    %c1_154 = arith.constant 1 : index
    %157 = memref.load %arg8[%c1_154] : memref<2xf32, #tpu.memory_space<smem>>
    %158 = vector.broadcast %157 : f32 to vector<1x1xf32>
    %159 = arith.addf %156, %158 : vector<1x1xf32>
    %cst_155 = arith.constant 0.000000e+00 : f32
    %160 = vector.broadcast %cst_155 : f32 to vector<1x1xf32>
    %161 = arith.maximumf %159, %160 : vector<1x1xf32>
    %c1_156 = arith.constant 1 : index
    %c0_157 = arith.constant 0 : index
    %162 = vector.load %arg6[%c1_156, %c0_157] : memref<2x32xf32, #tpu.memory_space<vmem>>, vector<1x32xf32>
    %163 = vector.broadcast %161 : vector<1x1xf32> to vector<1x32xf32>
    %164 = arith.mulf %163, %162 : vector<1x32xf32>
    %165 = arith.addf %152, %164 : vector<1x32xf32>
    %cst_158 = arith.constant 0.000000e+00 : f32
    %166 = vector.broadcast %cst_158 : f32 to vector<1x32xf32>
    %167 = arith.subf %166, %165 : vector<1x32xf32>
    %168 = math.exp %167 : vector<1x32xf32>
    %cst_159 = arith.constant 1.000000e+00 : f32
    %169 = vector.broadcast %cst_159 : f32 to vector<1x32xf32>
    %170 = arith.addf %169, %168 : vector<1x32xf32>
    %cst_160 = arith.constant 1.000000e+00 : f32
    %171 = vector.broadcast %cst_160 : f32 to vector<1x32xf32>
    %172 = arith.divf %171, %170 : vector<1x32xf32>
    %173 = vector.broadcast %172 : vector<1x32xf32> to vector<256x32xf32>
    %174 = arith.mulf %134, %173 : vector<256x32xf32>
    %175 = vector.shape_cast %174 : vector<256x32xf32> to vector<16x16x32xf32>
    %cst_161 = arith.constant dense<0.000000e+00> : vector<16x16xf32>
    %176 = vector.multi_reduction <add>, %175, %cst_161 [2] : vector<16x16x32xf32> to vector<16x16xf32>
    %cst_162 = arith.constant 3.200000e+01 : f32
    %177 = vector.broadcast %cst_162 : f32 to vector<16x16xf32>
    %178 = arith.divf %176, %177 : vector<16x16xf32>
    %cst_163 = arith.constant 0.000000e+00 : f32
    %179 = vector.broadcast %cst_163 : f32 to vector<16x3xf32>
    %cst_164 = arith.constant 0.000000e+00 : f32
    %180 = vector.broadcast %cst_164 : f32 to vector<3x22xf32>
    %181 = tpu.concatenate %179, %178, %179 in 1 : vector<16x3xf32>, vector<16x16xf32>, vector<16x3xf32> -> vector<16x22xf32>
    %182 = tpu.concatenate %180, %181, %180 in 0 : vector<3x22xf32>, vector<16x22xf32>, vector<3x22xf32> -> vector<22x22xf32>
    %cst_165 = arith.constant 0.000000e+00 : f32
    %183 = vector.broadcast %cst_165 : f32 to vector<16x16xf32>
    %184 = vector.extract_strided_slice %182 {offsets = [0, 0], sizes = [16, 16], strides = [1, 1]} : vector<22x22xf32> to vector<16x16xf32>
    %c0_166 = arith.constant 0 : index
    %185 = memref.load %arg9[%c0_166] : memref<49xf32, #tpu.memory_space<smem>>
    %186 = vector.broadcast %185 : f32 to vector<16x16xf32>
    %187 = arith.mulf %184, %186 : vector<16x16xf32>
    %188 = arith.addf %183, %187 : vector<16x16xf32>
    %189 = vector.extract_strided_slice %182 {offsets = [0, 1], sizes = [16, 16], strides = [1, 1]} : vector<22x22xf32> to vector<16x16xf32>
    %c1_167 = arith.constant 1 : index
    %190 = memref.load %arg9[%c1_167] : memref<49xf32, #tpu.memory_space<smem>>
    %191 = vector.broadcast %190 : f32 to vector<16x16xf32>
    %192 = arith.mulf %189, %191 : vector<16x16xf32>
    %193 = arith.addf %188, %192 : vector<16x16xf32>
    %194 = vector.extract_strided_slice %182 {offsets = [0, 2], sizes = [16, 16], strides = [1, 1]} : vector<22x22xf32> to vector<16x16xf32>
    %c2_168 = arith.constant 2 : index
    %195 = memref.load %arg9[%c2_168] : memref<49xf32, #tpu.memory_space<smem>>
    %196 = vector.broadcast %195 : f32 to vector<16x16xf32>
    %197 = arith.mulf %194, %196 : vector<16x16xf32>
    %198 = arith.addf %193, %197 : vector<16x16xf32>
    %199 = vector.extract_strided_slice %182 {offsets = [0, 3], sizes = [16, 16], strides = [1, 1]} : vector<22x22xf32> to vector<16x16xf32>
    %c3_169 = arith.constant 3 : index
    %200 = memref.load %arg9[%c3_169] : memref<49xf32, #tpu.memory_space<smem>>
    %201 = vector.broadcast %200 : f32 to vector<16x16xf32>
    %202 = arith.mulf %199, %201 : vector<16x16xf32>
    %203 = arith.addf %198, %202 : vector<16x16xf32>
    %204 = vector.extract_strided_slice %182 {offsets = [0, 4], sizes = [16, 16], strides = [1, 1]} : vector<22x22xf32> to vector<16x16xf32>
    %c4_170 = arith.constant 4 : index
    %205 = memref.load %arg9[%c4_170] : memref<49xf32, #tpu.memory_space<smem>>
    %206 = vector.broadcast %205 : f32 to vector<16x16xf32>
    %207 = arith.mulf %204, %206 : vector<16x16xf32>
    %208 = arith.addf %203, %207 : vector<16x16xf32>
    %209 = vector.extract_strided_slice %182 {offsets = [0, 5], sizes = [16, 16], strides = [1, 1]} : vector<22x22xf32> to vector<16x16xf32>
    %c5_171 = arith.constant 5 : index
    %210 = memref.load %arg9[%c5_171] : memref<49xf32, #tpu.memory_space<smem>>
    %211 = vector.broadcast %210 : f32 to vector<16x16xf32>
    %212 = arith.mulf %209, %211 : vector<16x16xf32>
    %213 = arith.addf %208, %212 : vector<16x16xf32>
    %214 = vector.extract_strided_slice %182 {offsets = [0, 6], sizes = [16, 16], strides = [1, 1]} : vector<22x22xf32> to vector<16x16xf32>
    %c6_172 = arith.constant 6 : index
    %215 = memref.load %arg9[%c6_172] : memref<49xf32, #tpu.memory_space<smem>>
    %216 = vector.broadcast %215 : f32 to vector<16x16xf32>
    %217 = arith.mulf %214, %216 : vector<16x16xf32>
    %218 = arith.addf %213, %217 : vector<16x16xf32>
    %219 = vector.extract_strided_slice %182 {offsets = [1, 0], sizes = [16, 16], strides = [1, 1]} : vector<22x22xf32> to vector<16x16xf32>
    %c7_173 = arith.constant 7 : index
    %220 = memref.load %arg9[%c7_173] : memref<49xf32, #tpu.memory_space<smem>>
    %221 = vector.broadcast %220 : f32 to vector<16x16xf32>
    %222 = arith.mulf %219, %221 : vector<16x16xf32>
    %223 = arith.addf %218, %222 : vector<16x16xf32>
    %224 = vector.extract_strided_slice %182 {offsets = [1, 1], sizes = [16, 16], strides = [1, 1]} : vector<22x22xf32> to vector<16x16xf32>
    %c8_174 = arith.constant 8 : index
    %225 = memref.load %arg9[%c8_174] : memref<49xf32, #tpu.memory_space<smem>>
    %226 = vector.broadcast %225 : f32 to vector<16x16xf32>
    %227 = arith.mulf %224, %226 : vector<16x16xf32>
    %228 = arith.addf %223, %227 : vector<16x16xf32>
    %229 = vector.extract_strided_slice %182 {offsets = [1, 2], sizes = [16, 16], strides = [1, 1]} : vector<22x22xf32> to vector<16x16xf32>
    %c9 = arith.constant 9 : index
    %230 = memref.load %arg9[%c9] : memref<49xf32, #tpu.memory_space<smem>>
    %231 = vector.broadcast %230 : f32 to vector<16x16xf32>
    %232 = arith.mulf %229, %231 : vector<16x16xf32>
    %233 = arith.addf %228, %232 : vector<16x16xf32>
    %234 = vector.extract_strided_slice %182 {offsets = [1, 3], sizes = [16, 16], strides = [1, 1]} : vector<22x22xf32> to vector<16x16xf32>
    %c10 = arith.constant 10 : index
    %235 = memref.load %arg9[%c10] : memref<49xf32, #tpu.memory_space<smem>>
    %236 = vector.broadcast %235 : f32 to vector<16x16xf32>
    %237 = arith.mulf %234, %236 : vector<16x16xf32>
    %238 = arith.addf %233, %237 : vector<16x16xf32>
    %239 = vector.extract_strided_slice %182 {offsets = [1, 4], sizes = [16, 16], strides = [1, 1]} : vector<22x22xf32> to vector<16x16xf32>
    %c11 = arith.constant 11 : index
    %240 = memref.load %arg9[%c11] : memref<49xf32, #tpu.memory_space<smem>>
    %241 = vector.broadcast %240 : f32 to vector<16x16xf32>
    %242 = arith.mulf %239, %241 : vector<16x16xf32>
    %243 = arith.addf %238, %242 : vector<16x16xf32>
    %244 = vector.extract_strided_slice %182 {offsets = [1, 5], sizes = [16, 16], strides = [1, 1]} : vector<22x22xf32> to vector<16x16xf32>
    %c12 = arith.constant 12 : index
    %245 = memref.load %arg9[%c12] : memref<49xf32, #tpu.memory_space<smem>>
    %246 = vector.broadcast %245 : f32 to vector<16x16xf32>
    %247 = arith.mulf %244, %246 : vector<16x16xf32>
    %248 = arith.addf %243, %247 : vector<16x16xf32>
    %249 = vector.extract_strided_slice %182 {offsets = [1, 6], sizes = [16, 16], strides = [1, 1]} : vector<22x22xf32> to vector<16x16xf32>
    %c13 = arith.constant 13 : index
    %250 = memref.load %arg9[%c13] : memref<49xf32, #tpu.memory_space<smem>>
    %251 = vector.broadcast %250 : f32 to vector<16x16xf32>
    %252 = arith.mulf %249, %251 : vector<16x16xf32>
    %253 = arith.addf %248, %252 : vector<16x16xf32>
    %254 = vector.extract_strided_slice %182 {offsets = [2, 0], sizes = [16, 16], strides = [1, 1]} : vector<22x22xf32> to vector<16x16xf32>
    %c14 = arith.constant 14 : index
    %255 = memref.load %arg9[%c14] : memref<49xf32, #tpu.memory_space<smem>>
    %256 = vector.broadcast %255 : f32 to vector<16x16xf32>
    %257 = arith.mulf %254, %256 : vector<16x16xf32>
    %258 = arith.addf %253, %257 : vector<16x16xf32>
    %259 = vector.extract_strided_slice %182 {offsets = [2, 1], sizes = [16, 16], strides = [1, 1]} : vector<22x22xf32> to vector<16x16xf32>
    %c15 = arith.constant 15 : index
    %260 = memref.load %arg9[%c15] : memref<49xf32, #tpu.memory_space<smem>>
    %261 = vector.broadcast %260 : f32 to vector<16x16xf32>
    %262 = arith.mulf %259, %261 : vector<16x16xf32>
    %263 = arith.addf %258, %262 : vector<16x16xf32>
    %264 = vector.extract_strided_slice %182 {offsets = [2, 2], sizes = [16, 16], strides = [1, 1]} : vector<22x22xf32> to vector<16x16xf32>
    %c16 = arith.constant 16 : index
    %265 = memref.load %arg9[%c16] : memref<49xf32, #tpu.memory_space<smem>>
    %266 = vector.broadcast %265 : f32 to vector<16x16xf32>
    %267 = arith.mulf %264, %266 : vector<16x16xf32>
    %268 = arith.addf %263, %267 : vector<16x16xf32>
    %269 = vector.extract_strided_slice %182 {offsets = [2, 3], sizes = [16, 16], strides = [1, 1]} : vector<22x22xf32> to vector<16x16xf32>
    %c17 = arith.constant 17 : index
    %270 = memref.load %arg9[%c17] : memref<49xf32, #tpu.memory_space<smem>>
    %271 = vector.broadcast %270 : f32 to vector<16x16xf32>
    %272 = arith.mulf %269, %271 : vector<16x16xf32>
    %273 = arith.addf %268, %272 : vector<16x16xf32>
    %274 = vector.extract_strided_slice %182 {offsets = [2, 4], sizes = [16, 16], strides = [1, 1]} : vector<22x22xf32> to vector<16x16xf32>
    %c18 = arith.constant 18 : index
    %275 = memref.load %arg9[%c18] : memref<49xf32, #tpu.memory_space<smem>>
    %276 = vector.broadcast %275 : f32 to vector<16x16xf32>
    %277 = arith.mulf %274, %276 : vector<16x16xf32>
    %278 = arith.addf %273, %277 : vector<16x16xf32>
    %279 = vector.extract_strided_slice %182 {offsets = [2, 5], sizes = [16, 16], strides = [1, 1]} : vector<22x22xf32> to vector<16x16xf32>
    %c19 = arith.constant 19 : index
    %280 = memref.load %arg9[%c19] : memref<49xf32, #tpu.memory_space<smem>>
    %281 = vector.broadcast %280 : f32 to vector<16x16xf32>
    %282 = arith.mulf %279, %281 : vector<16x16xf32>
    %283 = arith.addf %278, %282 : vector<16x16xf32>
    %284 = vector.extract_strided_slice %182 {offsets = [2, 6], sizes = [16, 16], strides = [1, 1]} : vector<22x22xf32> to vector<16x16xf32>
    %c20 = arith.constant 20 : index
    %285 = memref.load %arg9[%c20] : memref<49xf32, #tpu.memory_space<smem>>
    %286 = vector.broadcast %285 : f32 to vector<16x16xf32>
    %287 = arith.mulf %284, %286 : vector<16x16xf32>
    %288 = arith.addf %283, %287 : vector<16x16xf32>
    %289 = vector.extract_strided_slice %182 {offsets = [3, 0], sizes = [16, 16], strides = [1, 1]} : vector<22x22xf32> to vector<16x16xf32>
    %c21 = arith.constant 21 : index
    %290 = memref.load %arg9[%c21] : memref<49xf32, #tpu.memory_space<smem>>
    %291 = vector.broadcast %290 : f32 to vector<16x16xf32>
    %292 = arith.mulf %289, %291 : vector<16x16xf32>
    %293 = arith.addf %288, %292 : vector<16x16xf32>
    %294 = vector.extract_strided_slice %182 {offsets = [3, 1], sizes = [16, 16], strides = [1, 1]} : vector<22x22xf32> to vector<16x16xf32>
    %c22 = arith.constant 22 : index
    %295 = memref.load %arg9[%c22] : memref<49xf32, #tpu.memory_space<smem>>
    %296 = vector.broadcast %295 : f32 to vector<16x16xf32>
    %297 = arith.mulf %294, %296 : vector<16x16xf32>
    %298 = arith.addf %293, %297 : vector<16x16xf32>
    %299 = vector.extract_strided_slice %182 {offsets = [3, 2], sizes = [16, 16], strides = [1, 1]} : vector<22x22xf32> to vector<16x16xf32>
    %c23 = arith.constant 23 : index
    %300 = memref.load %arg9[%c23] : memref<49xf32, #tpu.memory_space<smem>>
    %301 = vector.broadcast %300 : f32 to vector<16x16xf32>
    %302 = arith.mulf %299, %301 : vector<16x16xf32>
    %303 = arith.addf %298, %302 : vector<16x16xf32>
    %304 = vector.extract_strided_slice %182 {offsets = [3, 3], sizes = [16, 16], strides = [1, 1]} : vector<22x22xf32> to vector<16x16xf32>
    %c24 = arith.constant 24 : index
    %305 = memref.load %arg9[%c24] : memref<49xf32, #tpu.memory_space<smem>>
    %306 = vector.broadcast %305 : f32 to vector<16x16xf32>
    %307 = arith.mulf %304, %306 : vector<16x16xf32>
    %308 = arith.addf %303, %307 : vector<16x16xf32>
    %309 = vector.extract_strided_slice %182 {offsets = [3, 4], sizes = [16, 16], strides = [1, 1]} : vector<22x22xf32> to vector<16x16xf32>
    %c25 = arith.constant 25 : index
    %310 = memref.load %arg9[%c25] : memref<49xf32, #tpu.memory_space<smem>>
    %311 = vector.broadcast %310 : f32 to vector<16x16xf32>
    %312 = arith.mulf %309, %311 : vector<16x16xf32>
    %313 = arith.addf %308, %312 : vector<16x16xf32>
    %314 = vector.extract_strided_slice %182 {offsets = [3, 5], sizes = [16, 16], strides = [1, 1]} : vector<22x22xf32> to vector<16x16xf32>
    %c26 = arith.constant 26 : index
    %315 = memref.load %arg9[%c26] : memref<49xf32, #tpu.memory_space<smem>>
    %316 = vector.broadcast %315 : f32 to vector<16x16xf32>
    %317 = arith.mulf %314, %316 : vector<16x16xf32>
    %318 = arith.addf %313, %317 : vector<16x16xf32>
    %319 = vector.extract_strided_slice %182 {offsets = [3, 6], sizes = [16, 16], strides = [1, 1]} : vector<22x22xf32> to vector<16x16xf32>
    %c27 = arith.constant 27 : index
    %320 = memref.load %arg9[%c27] : memref<49xf32, #tpu.memory_space<smem>>
    %321 = vector.broadcast %320 : f32 to vector<16x16xf32>
    %322 = arith.mulf %319, %321 : vector<16x16xf32>
    %323 = arith.addf %318, %322 : vector<16x16xf32>
    %324 = vector.extract_strided_slice %182 {offsets = [4, 0], sizes = [16, 16], strides = [1, 1]} : vector<22x22xf32> to vector<16x16xf32>
    %c28 = arith.constant 28 : index
    %325 = memref.load %arg9[%c28] : memref<49xf32, #tpu.memory_space<smem>>
    %326 = vector.broadcast %325 : f32 to vector<16x16xf32>
    %327 = arith.mulf %324, %326 : vector<16x16xf32>
    %328 = arith.addf %323, %327 : vector<16x16xf32>
    %329 = vector.extract_strided_slice %182 {offsets = [4, 1], sizes = [16, 16], strides = [1, 1]} : vector<22x22xf32> to vector<16x16xf32>
    %c29 = arith.constant 29 : index
    %330 = memref.load %arg9[%c29] : memref<49xf32, #tpu.memory_space<smem>>
    %331 = vector.broadcast %330 : f32 to vector<16x16xf32>
    %332 = arith.mulf %329, %331 : vector<16x16xf32>
    %333 = arith.addf %328, %332 : vector<16x16xf32>
    %334 = vector.extract_strided_slice %182 {offsets = [4, 2], sizes = [16, 16], strides = [1, 1]} : vector<22x22xf32> to vector<16x16xf32>
    %c30 = arith.constant 30 : index
    %335 = memref.load %arg9[%c30] : memref<49xf32, #tpu.memory_space<smem>>
    %336 = vector.broadcast %335 : f32 to vector<16x16xf32>
    %337 = arith.mulf %334, %336 : vector<16x16xf32>
    %338 = arith.addf %333, %337 : vector<16x16xf32>
    %339 = vector.extract_strided_slice %182 {offsets = [4, 3], sizes = [16, 16], strides = [1, 1]} : vector<22x22xf32> to vector<16x16xf32>
    %c31 = arith.constant 31 : index
    %340 = memref.load %arg9[%c31] : memref<49xf32, #tpu.memory_space<smem>>
    %341 = vector.broadcast %340 : f32 to vector<16x16xf32>
    %342 = arith.mulf %339, %341 : vector<16x16xf32>
    %343 = arith.addf %338, %342 : vector<16x16xf32>
    %344 = vector.extract_strided_slice %182 {offsets = [4, 4], sizes = [16, 16], strides = [1, 1]} : vector<22x22xf32> to vector<16x16xf32>
    %c32 = arith.constant 32 : index
    %345 = memref.load %arg9[%c32] : memref<49xf32, #tpu.memory_space<smem>>
    %346 = vector.broadcast %345 : f32 to vector<16x16xf32>
    %347 = arith.mulf %344, %346 : vector<16x16xf32>
    %348 = arith.addf %343, %347 : vector<16x16xf32>
    %349 = vector.extract_strided_slice %182 {offsets = [4, 5], sizes = [16, 16], strides = [1, 1]} : vector<22x22xf32> to vector<16x16xf32>
    %c33 = arith.constant 33 : index
    %350 = memref.load %arg9[%c33] : memref<49xf32, #tpu.memory_space<smem>>
    %351 = vector.broadcast %350 : f32 to vector<16x16xf32>
    %352 = arith.mulf %349, %351 : vector<16x16xf32>
    %353 = arith.addf %348, %352 : vector<16x16xf32>
    %354 = vector.extract_strided_slice %182 {offsets = [4, 6], sizes = [16, 16], strides = [1, 1]} : vector<22x22xf32> to vector<16x16xf32>
    %c34 = arith.constant 34 : index
    %355 = memref.load %arg9[%c34] : memref<49xf32, #tpu.memory_space<smem>>
    %356 = vector.broadcast %355 : f32 to vector<16x16xf32>
    %357 = arith.mulf %354, %356 : vector<16x16xf32>
    %358 = arith.addf %353, %357 : vector<16x16xf32>
    %359 = vector.extract_strided_slice %182 {offsets = [5, 0], sizes = [16, 16], strides = [1, 1]} : vector<22x22xf32> to vector<16x16xf32>
    %c35 = arith.constant 35 : index
    %360 = memref.load %arg9[%c35] : memref<49xf32, #tpu.memory_space<smem>>
    %361 = vector.broadcast %360 : f32 to vector<16x16xf32>
    %362 = arith.mulf %359, %361 : vector<16x16xf32>
    %363 = arith.addf %358, %362 : vector<16x16xf32>
    %364 = vector.extract_strided_slice %182 {offsets = [5, 1], sizes = [16, 16], strides = [1, 1]} : vector<22x22xf32> to vector<16x16xf32>
    %c36 = arith.constant 36 : index
    %365 = memref.load %arg9[%c36] : memref<49xf32, #tpu.memory_space<smem>>
    %366 = vector.broadcast %365 : f32 to vector<16x16xf32>
    %367 = arith.mulf %364, %366 : vector<16x16xf32>
    %368 = arith.addf %363, %367 : vector<16x16xf32>
    %369 = vector.extract_strided_slice %182 {offsets = [5, 2], sizes = [16, 16], strides = [1, 1]} : vector<22x22xf32> to vector<16x16xf32>
    %c37 = arith.constant 37 : index
    %370 = memref.load %arg9[%c37] : memref<49xf32, #tpu.memory_space<smem>>
    %371 = vector.broadcast %370 : f32 to vector<16x16xf32>
    %372 = arith.mulf %369, %371 : vector<16x16xf32>
    %373 = arith.addf %368, %372 : vector<16x16xf32>
    %374 = vector.extract_strided_slice %182 {offsets = [5, 3], sizes = [16, 16], strides = [1, 1]} : vector<22x22xf32> to vector<16x16xf32>
    %c38 = arith.constant 38 : index
    %375 = memref.load %arg9[%c38] : memref<49xf32, #tpu.memory_space<smem>>
    %376 = vector.broadcast %375 : f32 to vector<16x16xf32>
    %377 = arith.mulf %374, %376 : vector<16x16xf32>
    %378 = arith.addf %373, %377 : vector<16x16xf32>
    %379 = vector.extract_strided_slice %182 {offsets = [5, 4], sizes = [16, 16], strides = [1, 1]} : vector<22x22xf32> to vector<16x16xf32>
    %c39 = arith.constant 39 : index
    %380 = memref.load %arg9[%c39] : memref<49xf32, #tpu.memory_space<smem>>
    %381 = vector.broadcast %380 : f32 to vector<16x16xf32>
    %382 = arith.mulf %379, %381 : vector<16x16xf32>
    %383 = arith.addf %378, %382 : vector<16x16xf32>
    %384 = vector.extract_strided_slice %182 {offsets = [5, 5], sizes = [16, 16], strides = [1, 1]} : vector<22x22xf32> to vector<16x16xf32>
    %c40 = arith.constant 40 : index
    %385 = memref.load %arg9[%c40] : memref<49xf32, #tpu.memory_space<smem>>
    %386 = vector.broadcast %385 : f32 to vector<16x16xf32>
    %387 = arith.mulf %384, %386 : vector<16x16xf32>
    %388 = arith.addf %383, %387 : vector<16x16xf32>
    %389 = vector.extract_strided_slice %182 {offsets = [5, 6], sizes = [16, 16], strides = [1, 1]} : vector<22x22xf32> to vector<16x16xf32>
    %c41 = arith.constant 41 : index
    %390 = memref.load %arg9[%c41] : memref<49xf32, #tpu.memory_space<smem>>
    %391 = vector.broadcast %390 : f32 to vector<16x16xf32>
    %392 = arith.mulf %389, %391 : vector<16x16xf32>
    %393 = arith.addf %388, %392 : vector<16x16xf32>
    %394 = vector.extract_strided_slice %182 {offsets = [6, 0], sizes = [16, 16], strides = [1, 1]} : vector<22x22xf32> to vector<16x16xf32>
    %c42 = arith.constant 42 : index
    %395 = memref.load %arg9[%c42] : memref<49xf32, #tpu.memory_space<smem>>
    %396 = vector.broadcast %395 : f32 to vector<16x16xf32>
    %397 = arith.mulf %394, %396 : vector<16x16xf32>
    %398 = arith.addf %393, %397 : vector<16x16xf32>
    %399 = vector.extract_strided_slice %182 {offsets = [6, 1], sizes = [16, 16], strides = [1, 1]} : vector<22x22xf32> to vector<16x16xf32>
    %c43 = arith.constant 43 : index
    %400 = memref.load %arg9[%c43] : memref<49xf32, #tpu.memory_space<smem>>
    %401 = vector.broadcast %400 : f32 to vector<16x16xf32>
    %402 = arith.mulf %399, %401 : vector<16x16xf32>
    %403 = arith.addf %398, %402 : vector<16x16xf32>
    %404 = vector.extract_strided_slice %182 {offsets = [6, 2], sizes = [16, 16], strides = [1, 1]} : vector<22x22xf32> to vector<16x16xf32>
    %c44 = arith.constant 44 : index
    %405 = memref.load %arg9[%c44] : memref<49xf32, #tpu.memory_space<smem>>
    %406 = vector.broadcast %405 : f32 to vector<16x16xf32>
    %407 = arith.mulf %404, %406 : vector<16x16xf32>
    %408 = arith.addf %403, %407 : vector<16x16xf32>
    %409 = vector.extract_strided_slice %182 {offsets = [6, 3], sizes = [16, 16], strides = [1, 1]} : vector<22x22xf32> to vector<16x16xf32>
    %c45 = arith.constant 45 : index
    %410 = memref.load %arg9[%c45] : memref<49xf32, #tpu.memory_space<smem>>
    %411 = vector.broadcast %410 : f32 to vector<16x16xf32>
    %412 = arith.mulf %409, %411 : vector<16x16xf32>
    %413 = arith.addf %408, %412 : vector<16x16xf32>
    %414 = vector.extract_strided_slice %182 {offsets = [6, 4], sizes = [16, 16], strides = [1, 1]} : vector<22x22xf32> to vector<16x16xf32>
    %c46 = arith.constant 46 : index
    %415 = memref.load %arg9[%c46] : memref<49xf32, #tpu.memory_space<smem>>
    %416 = vector.broadcast %415 : f32 to vector<16x16xf32>
    %417 = arith.mulf %414, %416 : vector<16x16xf32>
    %418 = arith.addf %413, %417 : vector<16x16xf32>
    %419 = vector.extract_strided_slice %182 {offsets = [6, 5], sizes = [16, 16], strides = [1, 1]} : vector<22x22xf32> to vector<16x16xf32>
    %c47 = arith.constant 47 : index
    %420 = memref.load %arg9[%c47] : memref<49xf32, #tpu.memory_space<smem>>
    %421 = vector.broadcast %420 : f32 to vector<16x16xf32>
    %422 = arith.mulf %419, %421 : vector<16x16xf32>
    %423 = arith.addf %418, %422 : vector<16x16xf32>
    %424 = vector.extract_strided_slice %182 {offsets = [6, 6], sizes = [16, 16], strides = [1, 1]} : vector<22x22xf32> to vector<16x16xf32>
    %c48 = arith.constant 48 : index
    %425 = memref.load %arg9[%c48] : memref<49xf32, #tpu.memory_space<smem>>
    %426 = vector.broadcast %425 : f32 to vector<16x16xf32>
    %427 = arith.mulf %424, %426 : vector<16x16xf32>
    %428 = arith.addf %423, %427 : vector<16x16xf32>
    %c0_175 = arith.constant 0 : index
    %429 = memref.load %arg10[%c0_175] : memref<2xf32, #tpu.memory_space<smem>>
    %430 = vector.broadcast %429 : f32 to vector<16x16xf32>
    %431 = arith.mulf %430, %428 : vector<16x16xf32>
    %c1_176 = arith.constant 1 : index
    %432 = memref.load %arg10[%c1_176] : memref<2xf32, #tpu.memory_space<smem>>
    %433 = vector.broadcast %432 : f32 to vector<16x16xf32>
    %434 = arith.addf %431, %433 : vector<16x16xf32>
    %cst_177 = arith.constant 0.000000e+00 : f32
    %435 = vector.broadcast %cst_177 : f32 to vector<16x16xf32>
    %436 = arith.subf %435, %434 : vector<16x16xf32>
    %437 = math.exp %436 : vector<16x16xf32>
    %cst_178 = arith.constant 1.000000e+00 : f32
    %438 = vector.broadcast %cst_178 : f32 to vector<16x16xf32>
    %439 = arith.addf %438, %437 : vector<16x16xf32>
    %cst_179 = arith.constant 1.000000e+00 : f32
    %440 = vector.broadcast %cst_179 : f32 to vector<16x16xf32>
    %441 = arith.divf %440, %439 : vector<16x16xf32>
    %442 = vector.shape_cast %441 : vector<16x16xf32> to vector<16x16x1xf32>
    %443 = vector.broadcast %442 : vector<16x16x1xf32> to vector<16x16x32xf32>
    %444 = arith.mulf %175, %443 : vector<16x16x32xf32>
    %445 = vector.shape_cast %444 : vector<16x16x32xf32> to vector<256x32xf32>
    %446 = tpu.transpose %445, [1, 0] : vector<256x32xf32> -> vector<32x256xf32>
    %c0_180 = arith.constant 0 : index
    %c0_181 = arith.constant 0 : index
    %c0_182 = arith.constant 0 : index
    %447 = vector.load %arg11[%c0_180, %c0_181, %c0_182] : memref<1x32x256xf32, #tpu.memory_space<vmem>>, vector<1x32x256xf32>
    %448 = vector.shape_cast %447 : vector<1x32x256xf32> to vector<32x256xf32>
    %449 = vector.shape_cast %446 : vector<32x256xf32> to vector<1x32x256xf32>
    tpu.vector_store %arg11[%c0_180, %c0_181, %c0_182], %449 {strides = array<i32>} : memref<1x32x256xf32, #tpu.memory_space<vmem>>, vector<1x32x256xf32>,
    return
  }
  func.func @transform_0(%arg0: i32) -> (i32, i32, i32, i32) {
    %c0_i32 = arith.constant 0 : i32
    %c0_i32_0 = arith.constant 0 : i32
    %c0_i32_1 = arith.constant 0 : i32
    %c0_i32_2 = arith.constant 0 : i32
    return %arg0, %c0_i32, %c0_i32_0, %c0_i32_1 : i32, i32, i32, i32
  }
  func.func @transform_1(%arg0: i32) -> (i32, i32, i32) {
    %c0_i32 = arith.constant 0 : i32
    %c0_i32_0 = arith.constant 0 : i32
    %c0_i32_1 = arith.constant 0 : i32
    %c0_i32_2 = arith.constant 0 : i32
    return %c0_i32, %c0_i32_0, %c0_i32_1 : i32, i32, i32
  }
  func.func @transform_2(%arg0: i32) -> (i32, i32) {
    %c0_i32 = arith.constant 0 : i32
    %c0_i32_0 = arith.constant 0 : i32
    %c0_i32_1 = arith.constant 0 : i32
    return %c0_i32, %c0_i32_0 : i32, i32
  }
  func.func @transform_3(%arg0: i32) -> (i32, i32) {
    %c0_i32 = arith.constant 0 : i32
    %c0_i32_0 = arith.constant 0 : i32
    %c0_i32_1 = arith.constant 0 : i32
    return %c0_i32, %c0_i32_0 : i32, i32
  }
  func.func @transform_4(%arg0: i32) -> (i32, i32) {
    %c0_i32 = arith.constant 0 : i32
    %c0_i32_0 = arith.constant 0 : i32
    %c0_i32_1 = arith.constant 0 : i32
    return %c0_i32, %c0_i32_0 : i32, i32
  }
  func.func @transform_5(%arg0: i32) -> (i32, i32) {
    %c0_i32 = arith.constant 0 : i32
    %c0_i32_0 = arith.constant 0 : i32
    %c0_i32_1 = arith.constant 0 : i32
    return %c0_i32, %c0_i32_0 : i32, i32
  }
  func.func @transform_6(%arg0: i32) -> (i32, i32) {
    %c0_i32 = arith.constant 0 : i32
    %c0_i32_0 = arith.constant 0 : i32
    %c0_i32_1 = arith.constant 0 : i32
    return %c0_i32, %c0_i32_0 : i32, i32
  }
  func.func @transform_7(%arg0: i32) -> i32 {
    %c0_i32 = arith.constant 0 : i32
    %c0_i32_0 = arith.constant 0 : i32
    return %c0_i32 : i32
  }
  func.func @transform_8(%arg0: i32) -> i32 {
    %c0_i32 = arith.constant 0 : i32
    %c0_i32_0 = arith.constant 0 : i32
    return %c0_i32 : i32
  }
  func.func @transform_9(%arg0: i32) -> i32 {
    %c0_i32 = arith.constant 0 : i32
    %c0_i32_0 = arith.constant 0 : i32
    return %c0_i32 : i32
  }
  func.func @transform_10(%arg0: i32) -> (i32, i32, i32) {
    %c0_i32 = arith.constant 0 : i32
    %c0_i32_0 = arith.constant 0 : i32
    %c0_i32_1 = arith.constant 0 : i32
    return %arg0, %c0_i32, %c0_i32_0 : i32, i32, i32
  }
}

</mosaic_0001>

<llo_original>
// kernel: tpu_custom_call.1
$region0: #{tpu_custom_call.1}
  #allocation0 [shape = 'u32[]', space=smem, size = 0x4, offset = 0x4, fixed_abs, tag = 'smem constant byte address 0x4 - core index']
  #allocation1 [shape = 'u32[144,128]{1,0:T(1,128)}', space=vmem, size = 0x12000, scoped, tag = 'internal scratch']
  %s0 = inlined_call_operand.vmem [shape: f32[2,24,24,32], index: 0, kind: input, shape index: {}]
  %s1 = inlined_call_operand.vmem [shape: f32[9,96,32], index: 1, kind: input, shape index: {}]
  %s2 = inlined_call_operand.hbm [shape: f32[1,32], index: 2, kind: input, shape index: {}]
  %s3 = inlined_call_operand.hbm [shape: f32[1,32], index: 3, kind: input, shape index: {}]
  %s4 = inlined_call_operand.vmem [shape: f32[2,32], index: 4, kind: input, shape index: {}]
  %s5 = inlined_call_operand.vmem [shape: f32[2,32], index: 5, kind: input, shape index: {}]
  %s6 = inlined_call_operand.vmem [shape: f32[1,32], index: 6, kind: input, shape index: {}]
  %s7 = inlined_call_operand.vmem [shape: f32[2], index: 7, kind: input, shape index: {}]
  %s8 = inlined_call_operand.vmem [shape: f32[49], index: 8, kind: input, shape index: {}]
  %s9 = inlined_call_operand.vmem [shape: f32[2], index: 9, kind: input, shape index: {}]
  %s10 = inlined_call_operand.hbm [shape: f32[2,32,256], index: 10, kind: output, shape index: {}]
  %s11 = sld [smem:[#allocation0]]
  $region93: #{tpu_custom_call.1} parent=0
    _
  %s13 = ssub.s32 1, %s11
  %s14 = scalar_select 0, %s13, %s11
  $region1: #{tpu_custom_call.1} parent=0
    #allocation2 [shape = 'u8[512]{0}', space=vmem, size = 0x400, scoped, tag = 'input window, operand 2, single buffered']
    #allocation3 [shape = 's32[2]{0}', space=sflag, size = 0x8, scoped, tag = 'scoped memory for tpu_custom_call.1']
    #allocation4 [shape = 's32[2]{0}', space=sflag, size = 0x8, scoped, tag = 'scoped memory for tpu_custom_call.1']
    #allocation5 [shape = 's32[2]{0}', space=sflag, size = 0x8, scoped, tag = 'scoped memory for tpu_custom_call.1']
    #allocation6 [shape = 'u8[512]{0}', space=vmem, size = 0x400, scoped, tag = 'input window, operand 3, single buffered']
    #allocation7 [shape = 's32[1]{0}', space=sflag, size = 0x4, scoped, tag = 'scoped memory for tpu_custom_call.1']
    #allocation8 [shape = 'u8[512]{0}', space=smem, size = 0x200, scoped, tag = 'input window, operand 7, single buffered']
    #allocation9 [shape = 'u8[512]{0}', space=smem, size = 0x200, scoped, tag = 'input window, operand 8, single buffered']
    #allocation10 [shape = 's32[1]{0}', space=sflag, size = 0x4, scoped, tag = 'scoped memory for tpu_custom_call.1']
    #allocation11 [shape = 'u8[512]{0}', space=smem, size = 0x200, scoped, tag = 'input window, operand 9, single buffered']
    #allocation12 [shape = 'u8[65536]{0}', space=vmem, size = 0x10000, scoped, tag = 'output window, operand 0']
    %15 = vsyncpa [#allocation3], 0
    %16 = vsyncpa [#allocation7], 0
    %17 = vsyncpa [#allocation5], 0
    %18 = vsyncpa [#allocation10], 0
    %19 = vsyncpa [#allocation4], 0
    %s20 = scalar_lea.sflag [#allocation4], 1
    %21 = vsyncpa %s20, 0
    loop: start=0, step=1, limit=4
    $region2: #{tpu_custom_call.1} parent=1 // loop_pre_header
      _
    $region3: #{tpu_custom_call.1} parent=1 // loop_header
      %s23 = sphi 0, %s27
      %p24 = scmp.ge.s32.totalorder %s23, 4
      %s33 = sphi 0, %s35
      %s36 = sphi 0, %s33
      %s37 = sphi 0, %s36
      %s53 = sphi 0, %s37
      %s57 = sphi 0, %s57
      %s59 = sphi 0, %s57
      %s60 = sphi 0, %s59
      %s74 = sphi 0, %s60
      %s78 = sphi 0, %s78
      %s80 = sphi 0, %s78
      %s81 = sphi 0, %s80
      %s95 = sphi 0, %s81
      %s99 = sphi 0, %s99
      %s101 = sphi 0, %s99
      %s102 = sphi 0, %s101
      %s116 = sphi 0, %s102
      %s120 = sphi 0, %s120
      %s122 = sphi 0, %s120
      %s123 = sphi 0, %s122
      %s137 = sphi 0, %s123
      %s141 = sphi 0, %s141
      %s143 = sphi 0, %s141
      %s144 = sphi 0, %s143
      %s158 = sphi 0, %s144
      %s162 = sphi 0, %s162
      %s164 = sphi 0, %s162
      %s165 = sphi 0, %s164
      %s179 = sphi 0, %s165
      %s183 = sphi 0, %s183
      %s185 = sphi 0, %s183
      %s186 = sphi 0, %s185
      %s200 = sphi 0, %s186
      %s204 = sphi 0, %s204
      %s206 = sphi 0, %s204
      %s207 = sphi 0, %s206
      %s221 = sphi 0, %s207
      %s225 = sphi 0, %s225
      %s227 = sphi 0, %s225
      %s228 = sphi 0, %s227
      %s242 = sphi 0, %s228
      %s248 = sphi 0, %s250
      %s251 = sphi 0, %s248
      %s252 = sphi 0, %s251
      %s268 = sphi 0, %s252
    $region4: #{tpu_custom_call.1} parent=1 // loop_header_branch
      %26 = sbr.rel (%p24) target = $region8
    $region5: #{tpu_custom_call.1} parent=1 // loop_body
      %s28 = ssub.s32 %s23, 1
      %s29 = ssub.s32 %s23, 2
      %s30 = sadd.s32 %s23, 1
      %s31 = ssub.s32 %s23, %s30
      %p32 = scmp.eq.s32.totalorder %s31, 0
      %s34 = sadd.s32 %s33, 1
      %s35 = scalar_select %p32, %s33, %s34
      %p38 = pneg %p32
      %p39 = scmp.eq.s32.totalorder %s23, 1
      %p40 = por %p38, %p39
      %p41 = scmp.ne.s32.totalorder %s33, %s36
      %p42 = scmp.eq.s32.totalorder %s23, 0
      %p43 = por %p41, %p42
      %p44 = scmp.ne.s32.totalorder %s33, %s36
      %p45 = scmp.eq.s32.totalorder %s28, 1
      %p46 = por %p44, %p45
      %p47 = scmp.ne.s32.totalorder %s36, %s37
      %p48 = scmp.eq.s32.totalorder %s28, 0
      %p49 = por %p47, %p48
      %p50 = scmp.ne.s32.totalorder %s36, %s37
      %p51 = scmp.eq.s32.totalorder %s29, 1
      %p52 = por %p50, %p51
      %p54 = scmp.ne.s32.totalorder %s37, %s53
      %p55 = scmp.eq.s32.totalorder %s29, 0
      %p56 = por %p54, %p55
      %s58 = sadd.s32 %s57, 1
      %p61 = scmp.eq.s32.totalorder %s23, 1
      %p62 = scmp.ne.s32.totalorder %s57, %s59
      %p63 = scmp.eq.s32.totalorder %s23, 0
      %p64 = por %p62, %p63
      %p65 = scmp.ne.s32.totalorder %s57, %s59
      %p66 = scmp.eq.s32.totalorder %s28, 1
      %p67 = por %p65, %p66
      %p68 = scmp.ne.s32.totalorder %s59, %s60
      %p69 = scmp.eq.s32.totalorder %s28, 0
      %p70 = por %p68, %p69
      %p71 = scmp.ne.s32.totalorder %s59, %s60
      %p72 = scmp.eq.s32.totalorder %s29, 1
      %p73 = por %p71, %p72
      %p75 = scmp.ne.s32.totalorder %s60, %s74
      %p76 = scmp.eq.s32.totalorder %s29, 0
      %p77 = por %p75, %p76
      %s79 = sadd.s32 %s78, 1
      %p82 = scmp.eq.s32.totalorder %s23, 1
      %p83 = scmp.ne.s32.totalorder %s78, %s80
      %p84 = scmp.eq.s32.totalorder %s23, 0
      %p85 = por %p83, %p84
      %p86 = scmp.ne.s32.totalorder %s78, %s80
      %p87 = scmp.eq.s32.totalorder %s28, 1
      %p88 = por %p86, %p87
      %p89 = scmp.ne.s32.totalorder %s80, %s81
      %p90 = scmp.eq.s32.totalorder %s28, 0
      %p91 = por %p89, %p90
      %p92 = scmp.ne.s32.totalorder %s80, %s81
      %p93 = scmp.eq.s32.totalorder %s29, 1
      %p94 = por %p92, %p93
      %p96 = scmp.ne.s32.totalorder %s81, %s95
      %p97 = scmp.eq.s32.totalorder %s29, 0
      %p98 = por %p96, %p97
      %s100 = sadd.s32 %s99, 1
      %p103 = scmp.eq.s32.totalorder %s23, 1
      %p104 = scmp.ne.s32.totalorder %s99, %s101
      %p105 = scmp.eq.s32.totalorder %s23, 0
      %p106 = por %p104, %p105
      %p107 = scmp.ne.s32.totalorder %s99, %s101
      %p108 = scmp.eq.s32.totalorder %s28, 1
      %p109 = por %p107, %p108
      %p110 = scmp.ne.s32.totalorder %s101, %s102
      %p111 = scmp.eq.s32.totalorder %s28, 0
      %p112 = por %p110, %p111
      %p113 = scmp.ne.s32.totalorder %s101, %s102
      %p114 = scmp.eq.s32.totalorder %s29, 1
      %p115 = por %p113, %p114
      %p117 = scmp.ne.s32.totalorder %s102, %s116
      %p118 = scmp.eq.s32.totalorder %s29, 0
      %p119 = por %p117, %p118
      %s121 = sadd.s32 %s120, 1
      %p124 = scmp.eq.s32.totalorder %s23, 1
      %p125 = scmp.ne.s32.totalorder %s120, %s122
      %p126 = scmp.eq.s32.totalorder %s23, 0
      %p127 = por %p125, %p126
      %p128 = scmp.ne.s32.totalorder %s120, %s122
      %p129 = scmp.eq.s32.totalorder %s28, 1
      %p130 = por %p128, %p129
      %p131 = scmp.ne.s32.totalorder %s122, %s123
      %p132 = scmp.eq.s32.totalorder %s28, 0
      %p133 = por %p131, %p132
      %p134 = scmp.ne.s32.totalorder %s122, %s123
      %p135 = scmp.eq.s32.totalorder %s29, 1
      %p136 = por %p134, %p135
      %p138 = scmp.ne.s32.totalorder %s123, %s137
      %p139 = scmp.eq.s32.totalorder %s29, 0
      %p140 = por %p138, %p139
      %s142 = sadd.s32 %s141, 1
      %p145 = scmp.eq.s32.totalorder %s23, 1
      %p146 = scmp.ne.s32.totalorder %s141, %s143
      %p147 = scmp.eq.s32.totalorder %s23, 0
      %p148 = por %p146, %p147
      %p149 = scmp.ne.s32.totalorder %s141, %s143
      %p150 = scmp.eq.s32.totalorder %s28, 1
      %p151 = por %p149, %p150
      %p152 = scmp.ne.s32.totalorder %s143, %s144
      %p153 = scmp.eq.s32.totalorder %s28, 0
      %p154 = por %p152, %p153
      %p155 = scmp.ne.s32.totalorder %s143, %s144
      %p156 = scmp.eq.s32.totalorder %s29, 1
      %p157 = por %p155, %p156
      %p159 = scmp.ne.s32.totalorder %s144, %s158
      %p160 = scmp.eq.s32.totalorder %s29, 0
      %p161 = por %p159, %p160
      %s163 = sadd.s32 %s162, 1
      %p166 = scmp.eq.s32.totalorder %s23, 1
      %p167 = scmp.ne.s32.totalorder %s162, %s164
      %p168 = scmp.eq.s32.totalorder %s23, 0
      %p169 = por %p167, %p168
      %p170 = scmp.ne.s32.totalorder %s162, %s164
      %p171 = scmp.eq.s32.totalorder %s28, 1
      %p172 = por %p170, %p171
      %p173 = scmp.ne.s32.totalorder %s164, %s165
      %p174 = scmp.eq.s32.totalorder %s28, 0
      %p175 = por %p173, %p174
      %p176 = scmp.ne.s32.totalorder %s164, %s165
      %p177 = scmp.eq.s32.totalorder %s29, 1
      %p178 = por %p176, %p177
      %p180 = scmp.ne.s32.totalorder %s165, %s179
      %p181 = scmp.eq.s32.totalorder %s29, 0
      %p182 = por %p180, %p181
      %s184 = sadd.s32 %s183, 1
      %p187 = scmp.eq.s32.totalorder %s23, 1
      %p188 = scmp.ne.s32.totalorder %s183, %s185
      %p189 = scmp.eq.s32.totalorder %s23, 0
      %p190 = por %p188, %p189
      %p191 = scmp.ne.s32.totalorder %s183, %s185
      %p192 = scmp.eq.s32.totalorder %s28, 1
      %p193 = por %p191, %p192
      %p194 = scmp.ne.s32.totalorder %s185, %s186
      %p195 = scmp.eq.s32.totalorder %s28, 0
      %p196 = por %p194, %p195
      %p197 = scmp.ne.s32.totalorder %s185, %s186
      %p198 = scmp.eq.s32.totalorder %s29, 1
      %p199 = por %p197, %p198
      %p201 = scmp.ne.s32.totalorder %s186, %s200
      %p202 = scmp.eq.s32.totalorder %s29, 0
      %p203 = por %p201, %p202
      %s205 = sadd.s32 %s204, 1
      %p208 = scmp.eq.s32.totalorder %s23, 1
      %p209 = scmp.ne.s32.totalorder %s204, %s206
      %p210 = scmp.eq.s32.totalorder %s23, 0
      %p211 = por %p209, %p210
      %p212 = scmp.ne.s32.totalorder %s204, %s206
      %p213 = scmp.eq.s32.totalorder %s28, 1
      %p214 = por %p212, %p213
      %p215 = scmp.ne.s32.totalorder %s206, %s207
      %p216 = scmp.eq.s32.totalorder %s28, 0
      %p217 = por %p215, %p216
      %p218 = scmp.ne.s32.totalorder %s206, %s207
      %p219 = scmp.eq.s32.totalorder %s29, 1
      %p220 = por %p218, %p219
      %p222 = scmp.ne.s32.totalorder %s207, %s221
      %p223 = scmp.eq.s32.totalorder %s29, 0
      %p224 = por %p222, %p223
      %s226 = sadd.s32 %s225, 1
      %p229 = scmp.eq.s32.totalorder %s23, 1
      %p230 = scmp.ne.s32.totalorder %s225, %s227
      %p231 = scmp.eq.s32.totalorder %s23, 0
      %p232 = por %p230, %p231
      %p233 = scmp.ne.s32.totalorder %s225, %s227
      %p234 = scmp.eq.s32.totalorder %s28, 1
      %p235 = por %p233, %p234
      %p236 = scmp.ne.s32.totalorder %s227, %s228
      %p237 = scmp.eq.s32.totalorder %s28, 0
      %p238 = por %p236, %p237
      %p239 = scmp.ne.s32.totalorder %s227, %s228
      %p240 = scmp.eq.s32.totalorder %s29, 1
      %p241 = por %p239, %p240
      %p243 = scmp.ne.s32.totalorder %s228, %s242
      %p244 = scmp.eq.s32.totalorder %s29, 0
      %p245 = por %p243, %p244
      %s246 = ssub.s32 %s23, %s30
      %p247 = scmp.eq.s32.totalorder %s246, 0
      %s249 = sadd.s32 %s248, 1
      %s250 = scalar_select %p247, %s248, %s249
      %p253 = pneg %p247
      %p254 = scmp.eq.s32.totalorder %s23, 1
      %p255 = por %p253, %p254
      %p256 = scmp.ne.s32.totalorder %s248, %s251
      %p257 = scmp.eq.s32.totalorder %s23, 0
      %p258 = por %p256, %p257
      %p259 = scmp.ne.s32.totalorder %s248, %s251
      %p260 = scmp.eq.s32.totalorder %s28, 1
      %p261 = por %p259, %p260
      %p262 = scmp.ne.s32.totalorder %s251, %s252
      %p263 = scmp.eq.s32.totalorder %s28, 0
      %p264 = por %p262, %p263
      %p265 = scmp.ne.s32.totalorder %s251, %s252
      %p266 = scmp.eq.s32.totalorder %s29, 1
      %p267 = por %p265, %p266
      %p269 = scmp.ne.s32.totalorder %s252, %s268
      %p270 = scmp.eq.s32.totalorder %s29, 0
      %p271 = por %p269, %p270
      %p272 = scmp.le.s32.totalorder 1, %s23
      %p273 = scmp.lt.s32.totalorder %s23, 3
      %p274 = pnand %p272, %p273
      %p275 = pneg %p274
      // Predicated region
      $region9: #{tpu_custom_call.1} parent=5 // pred_check
        _
      $region10: #{tpu_custom_call.1} parent=5 // pred_check_branch
        %277 = sbr.rel (%p274) target = $region12
      $region11: #{tpu_custom_call.1} parent=5 // pred_region
        %s278 = ssub.s32 %s23, 1
        // Predicated region
        $region13: #{tpu_custom_call.1} parent=11 // pred_check
          %p279 = pneg %p70
        $region14: #{tpu_custom_call.1} parent=11 // pred_check_branch
          %281 = sbr.rel (%p279) target = $region16
        $region15: #{tpu_custom_call.1} parent=11 // pred_region
          _
        $region16: #{tpu_custom_call.1} parent=11 // pred_fallthru
          _
        // Predicated region
        $region17: #{tpu_custom_call.1} parent=11 // pred_check
          %p282 = pneg %p91
        $region18: #{tpu_custom_call.1} parent=11 // pred_check_branch
          %284 = sbr.rel (%p282) target = $region20
        $region19: #{tpu_custom_call.1} parent=11 // pred_region
          %s286 = ssub.s32 16, 16
          %287 = vsyncadd [#allocation3], %s286
          %s289 = sshll.u32 [#allocation2], 4
          %s290 = int_to_ptr.vmem [resolvable:$true] %s289
          %292 = dma.hbm_to_vmem [thread:$0]  %s2, 16, %s290, [#allocation3]
        $region20: #{tpu_custom_call.1} parent=11 // pred_fallthru
          _
        // Predicated region
        $region21: #{tpu_custom_call.1} parent=11 // pred_check
          %p293 = pneg %p112
        $region22: #{tpu_custom_call.1} parent=11 // pred_check_branch
          %295 = sbr.rel (%p293) target = $region24
        $region23: #{tpu_custom_call.1} parent=11 // pred_region
          %s297 = ssub.s32 16, 16
          %298 = vsyncadd [#allocation7], %s297
          %s300 = sshll.u32 [#allocation6], 4
          %s301 = int_to_ptr.vmem [resolvable:$true] %s300
          %303 = dma.hbm_to_vmem [thread:$0]  %s3, 16, %s301, [#allocation7]
        $region24: #{tpu_custom_call.1} parent=11 // pred_fallthru
          _
        // Predicated region
        $region25: #{tpu_custom_call.1} parent=11 // pred_check
          %p304 = pneg %p133
        $region26: #{tpu_custom_call.1} parent=11 // pred_check_branch
          %306 = sbr.rel (%p304) target = $region28
        $region27: #{tpu_custom_call.1} parent=11 // pred_region
          _
        $region28: #{tpu_custom_call.1} parent=11 // pred_fallthru
          _
        // Predicated region
        $region29: #{tpu_custom_call.1} parent=11 // pred_check
          %p307 = pneg %p154
        $region30: #{tpu_custom_call.1} parent=11 // pred_check_branch
          %309 = sbr.rel (%p307) target = $region32
        $region31: #{tpu_custom_call.1} parent=11 // pred_region
          _
        $region32: #{tpu_custom_call.1} parent=11 // pred_fallthru
          _
        // Predicated region
        $region33: #{tpu_custom_call.1} parent=11 // pred_check
          %p310 = pneg %p175
        $region34: #{tpu_custom_call.1} parent=11 // pred_check_branch
          %312 = sbr.rel (%p310) target = $region36
        $region35: #{tpu_custom_call.1} parent=11 // pred_region
          _
        $region36: #{tpu_custom_call.1} parent=11 // pred_fallthru
          _
        // Predicated region
        $region37: #{tpu_custom_call.1} parent=11 // pred_check
          %p313 = pneg %p196
        $region38: #{tpu_custom_call.1} parent=11 // pred_check_branch
          %315 = sbr.rel (%p313) target = $region40
        $region39: #{tpu_custom_call.1} parent=11 // pred_region
          %s317 = ssub.s32 16, 16
          %318 = vsyncadd [#allocation5], %s317
          %s320 = sshll.u32 %s7, 4
          %s321 = int_to_ptr.vmem [resolvable:$true] %s320
          %323 = dma.vmem_to_smem %s321, 16, [#allocation8], [#allocation5]
        $region40: #{tpu_custom_call.1} parent=11 // pred_fallthru
          _
        // Predicated region
        $region41: #{tpu_custom_call.1} parent=11 // pred_check
          %p324 = pneg %p217
        $region42: #{tpu_custom_call.1} parent=11 // pred_check_branch
          %326 = sbr.rel (%p324) target = $region44
        $region43: #{tpu_custom_call.1} parent=11 // pred_region
          %s328 = ssub.s32 16, 16
          %329 = vsyncadd [#allocation10], %s328
          %s331 = sshll.u32 %s8, 4
          %s332 = int_to_ptr.vmem [resolvable:$true] %s331
          %334 = dma.vmem_to_smem %s332, 16, [#allocation9], [#allocation10]
        $region44: #{tpu_custom_call.1} parent=11 // pred_fallthru
          _
        // Predicated region
        $region45: #{tpu_custom_call.1} parent=11 // pred_check
          %p335 = pneg %p238
        $region46: #{tpu_custom_call.1} parent=11 // pred_check_branch
          %337 = sbr.rel (%p335) target = $region48
        $region47: #{tpu_custom_call.1} parent=11 // pred_region
          %s339 = ssub.s32 16, 16
          %340 = vsyncadd [#allocation10], %s339
          %s342 = sshll.u32 %s9, 4
          %s343 = int_to_ptr.vmem [resolvable:$true] %s342
          %345 = dma.vmem_to_smem %s343, 16, [#allocation11], [#allocation10]
        $region48: #{tpu_custom_call.1} parent=11 // pred_fallthru
          _
      $region12: #{tpu_custom_call.1} parent=5 // pred_fallthru
        _
      %p346 = scmp.lt.s32.totalorder %s23, 2
      // Predicated region
      $region49: #{tpu_custom_call.1} parent=5 // pred_check
        %p347 = pneg %p346
      $region50: #{tpu_custom_call.1} parent=5 // pred_check_branch
        %349 = sbr.rel (%p347) target = $region52
      $region51: #{tpu_custom_call.1} parent=5 // pred_region
        // Predicated region
        $region53: #{tpu_custom_call.1} parent=51 // pred_check
          %p350 = pneg %p43
        $region54: #{tpu_custom_call.1} parent=51 // pred_check_branch
          %352 = sbr.rel (%p350) target = $region56
        $region55: #{tpu_custom_call.1} parent=51 // pred_region
          %p353 = scmp.lt.s32.totalorder %s23, 1
          %s354 = scalar_select %p353, %s23, 1
          %s355 = smul.addr %s354, 72
          %s356 = smul.addr %s355, 8
          %s357 = scalar_lea.vmem %s0, %s356
        $region56: #{tpu_custom_call.1} parent=51 // pred_fallthru
          _
      $region52: #{tpu_custom_call.1} parent=5 // pred_fallthru
        _
      %p358 = scmp.le.s32.totalorder 1, %s23
      %p359 = scmp.lt.s32.totalorder %s23, 3
      %p360 = pnand %p358, %p359
      %p361 = pneg %p360
      // Predicated region
      $region57: #{tpu_custom_call.1} parent=5 // pred_check
        _
      $region58: #{tpu_custom_call.1} parent=5 // pred_check_branch
        %363 = sbr.rel (%p360) target = $region60
      $region59: #{tpu_custom_call.1} parent=5 // pred_region
        %s364 = ssub.s32 %s23, 1
        // Predicated region
        $region61: #{tpu_custom_call.1} parent=59 // pred_check
          %p365 = pneg %p91
        $region62: #{tpu_custom_call.1} parent=59 // pred_check_branch
          %367 = sbr.rel (%p365) target = $region64
        $region63: #{tpu_custom_call.1} parent=59 // pred_region
          %368 = dma.done [#allocation3], 16
        $region64: #{tpu_custom_call.1} parent=59 // pred_fallthru
          _
        // Predicated region
        $region65: #{tpu_custom_call.1} parent=59 // pred_check
          %p369 = pneg %p112
        $region66: #{tpu_custom_call.1} parent=59 // pred_check_branch
          %371 = sbr.rel (%p369) target = $region68
        $region67: #{tpu_custom_call.1} parent=59 // pred_region
          %372 = dma.done [#allocation7], 16
        $region68: #{tpu_custom_call.1} parent=59 // pred_fallthru
          _
        // Predicated region
        $region69: #{tpu_custom_call.1} parent=59 // pred_check
          %p373 = pneg %p196
        $region70: #{tpu_custom_call.1} parent=59 // pred_check_branch
          %375 = sbr.rel (%p373) target = $region72
        $region71: #{tpu_custom_call.1} parent=59 // pred_region
          %376 = dma.done [#allocation5], 16
        $region72: #{tpu_custom_call.1} parent=59 // pred_fallthru
          _
        // Predicated region
        $region73: #{tpu_custom_call.1} parent=59 // pred_check
          %p377 = pneg %p217
        $region74: #{tpu_custom_call.1} parent=59 // pred_check_branch
          %379 = sbr.rel (%p377) target = $region76
        $region75: #{tpu_custom_call.1} parent=59 // pred_region
          %380 = dma.done [#allocation10], 16
        $region76: #{tpu_custom_call.1} parent=59 // pred_fallthru
          _
        // Predicated region
        $region77: #{tpu_custom_call.1} parent=59 // pred_check
          %p381 = pneg %p238
        $region78: #{tpu_custom_call.1} parent=59 // pred_check_branch
          %383 = sbr.rel (%p381) target = $region80
        $region79: #{tpu_custom_call.1} parent=59 // pred_region
          %384 = dma.done [#allocation10], 16
        $region80: #{tpu_custom_call.1} parent=59 // pred_fallthru
          _
        %385 = sfence
        %p386 = scmp.lt.s32.totalorder %s28, 1
        %s387 = scalar_select %p386, %s28, 1
        %s388 = smul.addr %s387, 72
        %s389 = smul.addr %s388, 8
        %s390 = scalar_lea.vmem %s0, %s389
        %p391 = pneg %p49
        %p392 = pneg %p46
        %p393 = pneg %p70
        %p394 = pneg %p67
        %p395 = pneg %p91
        %p396 = pneg %p88
        %p397 = pneg %p112
        %p398 = pneg %p109
        %p399 = pneg %p133
        %p400 = pneg %p130
        %p401 = pneg %p154
        %p402 = pneg %p151
        %p403 = pneg %p175
        %p404 = pneg %p172
        %p405 = pneg %p196
        %p406 = pneg %p193
        %p407 = pneg %p217
        %p408 = pneg %p214
        %p409 = pneg %p238
        %p410 = pneg %p235
        %p411 = pneg %p264
        %p412 = pneg %p261
        %s413 = sand.u32 %s251, 1
        %s414 = scalar_lea.sflag [#allocation4], %s413
        %s415 = sand.u32 %s251, 1
        %s416 = smul.addr %s415, 64
        %s417 = scalar_lea.vmem [#allocation12], %s416
        %p418 = scmp.lt.s32.totalorder %s28, 1
        %s419 = scalar_select %p418, %s28, 1
        %s420 = smul.addr %s419, 72
        %s421 = smul.addr %s420, 8
        %s422 = scalar_lea.vmem %s0, %s421
        %s423 = scalar_lea.vmem %s422, 72
        %v424 = vld [vmem:[%s423 + $0x3] sm:$0xff]
        %v425 = vld [vmem:[%s423 + $0xb] sm:$0xff]
        %v426 = vld [vmem:[%s423 + $0x1b] sm:$0xff]
        %v427 = vld [vmem:[%s423 + $0x23] sm:$0xff]
        %v428 = vld [vmem:[%s423 + $0x33] sm:$0xff]
        %v429 = vld [vmem:[%s423 + $0x3b] sm:$0xff]
        %v430 = vld [vmem:[%s423 + $0x4b] sm:$0xff]
        %v431 = vld [vmem:[%s423 + $0x53] sm:$0xff]
        %v432 = vld [vmem:[%s423 + $0x63] sm:$0xff]
        %v433 = vld [vmem:[%s423 + $0x6b] sm:$0xff]
        %v434 = vld [vmem:[%s423 + $0x7b] sm:$0xff]
        %v435 = vld [vmem:[%s423 + $0x83] sm:$0xff]
        %v436 = vld [vmem:[%s423 + $0x93] sm:$0xff]
        %v437 = vld [vmem:[%s423 + $0x9b] sm:$0xff]
        %v438 = vld [vmem:[%s423 + $0xab] sm:$0xff]
        %v439 = vld [vmem:[%s423 + $0xb3] sm:$0xff]
        %v440 = vld [vmem:[%s423 + $0xc3] sm:$0xff]
        %v441 = vld [vmem:[%s423 + $0xcb] sm:$0xff]
        %v442 = vld [vmem:[%s423 + $0xdb] sm:$0xff]
        %v443 = vld [vmem:[%s423 + $0xe3] sm:$0xff]
        %v444 = vld [vmem:[%s423 + $0xf3] sm:$0xff]
        %v445 = vld [vmem:[%s423 + $0xfb] sm:$0xff]
        %v446 = vld [vmem:[%s423 + $0x10b] sm:$0xff]
        %v447 = vld [vmem:[%s423 + $0x113] sm:$0xff]
        %v448 = vld [vmem:[%s423 + $0x123] sm:$0xff]
        %v449 = vld [vmem:[%s423 + $0x12b] sm:$0xff]
        %v450 = vld [vmem:[%s423 + $0x13b] sm:$0xff]
        %v451 = vld [vmem:[%s423 + $0x143] sm:$0xff]
        %v452 = vld [vmem:[%s423 + $0x153] sm:$0xff]
        %v453 = vld [vmem:[%s423 + $0x15b] sm:$0xff]
        %v454 = vld [vmem:[%s423 + $0x16b] sm:$0xff]
        %v455 = vld [vmem:[%s423 + $0x173] sm:$0xff]
        %s456 = scalar_lea.vmem %s422, 48
        %v457 = vld [vmem:[%s456 + $0x2] sm:$0xff]
        %v458 = vld [vmem:[%s456 + $0xa] sm:$0xff]
        %v459 = vld [vmem:[%s456 + $0x1a] sm:$0xff]
        %v460 = vld [vmem:[%s456 + $0x22] sm:$0xff]
        %v461 = vld [vmem:[%s456 + $0x32] sm:$0xff]
        %v462 = vld [vmem:[%s456 + $0x3a] sm:$0xff]
        %v463 = vld [vmem:[%s456 + $0x4a] sm:$0xff]
        %v464 = vld [vmem:[%s456 + $0x52] sm:$0xff]
        %v465 = vld [vmem:[%s456 + $0x62] sm:$0xff]
        %v466 = vld [vmem:[%s456 + $0x6a] sm:$0xff]
        %v467 = vld [vmem:[%s456 + $0x7a] sm:$0xff]
        %v468 = vld [vmem:[%s456 + $0x82] sm:$0xff]
        %v469 = vld [vmem:[%s456 + $0x92] sm:$0xff]
        %v470 = vld [vmem:[%s456 + $0x9a] sm:$0xff]
        %v471 = vld [vmem:[%s456 + $0xaa] sm:$0xff]
        %v472 = vld [vmem:[%s456 + $0xb2] sm:$0xff]
        %v473 = vld [vmem:[%s456 + $0xc2] sm:$0xff]
        %v474 = vld [vmem:[%s456 + $0xca] sm:$0xff]
        %v475 = vld [vmem:[%s456 + $0xda] sm:$0xff]
        %v476 = vld [vmem:[%s456 + $0xe2] sm:$0xff]
        %v477 = vld [vmem:[%s456 + $0xf2] sm:$0xff]
        %v478 = vld [vmem:[%s456 + $0xfa] sm:$0xff]
        %v479 = vld [vmem:[%s456 + $0x10a] sm:$0xff]
        %v480 = vld [vmem:[%s456 + $0x112] sm:$0xff]
        %v481 = vld [vmem:[%s456 + $0x122] sm:$0xff]
        %v482 = vld [vmem:[%s456 + $0x12a] sm:$0xff]
        %v483 = vld [vmem:[%s456 + $0x13a] sm:$0xff]
        %v484 = vld [vmem:[%s456 + $0x142] sm:$0xff]
        %v485 = vld [vmem:[%s456 + $0x152] sm:$0xff]
        %v486 = vld [vmem:[%s456 + $0x15a] sm:$0xff]
        %v487 = vld [vmem:[%s456 + $0x16a] sm:$0xff]
        %v488 = vld [vmem:[%s456 + $0x172] sm:$0xff]
        %v489 = vld [vmem:[%s422] sm:$0xff]
        %v490 = vld [vmem:[%s422 + $0x8] sm:$0xff]
        %v491 = vld [vmem:[%s422 + $0x18] sm:$0xff]
        %v492 = vld [vmem:[%s422 + $0x20] sm:$0xff]
        %v493 = vld [vmem:[%s422 + $0x30] sm:$0xff]
        %v494 = vld [vmem:[%s422 + $0x38] sm:$0xff]
        %v495 = vld [vmem:[%s422 + $0x48] sm:$0xff]
        %v496 = vld [vmem:[%s422 + $0x50] sm:$0xff]
        %v497 = vld [vmem:[%s422 + $0x60] sm:$0xff]
        %v498 = vld [vmem:[%s422 + $0x68] sm:$0xff]
        %v499 = vld [vmem:[%s422 + $0x78] sm:$0xff]
        %v500 = vld [vmem:[%s422 + $0x80] sm:$0xff]
        %v501 = vld [vmem:[%s422 + $0x90] sm:$0xff]
        %v502 = vld [vmem:[%s422 + $0x98] sm:$0xff]
        %v503 = vld [vmem:[%s422 + $0xa8] sm:$0xff]
        %v504 = vld [vmem:[%s422 + $0xb0] sm:$0xff]
        %v505 = vld [vmem:[%s422 + $0xc0] sm:$0xff]
        %v506 = vld [vmem:[%s422 + $0xc8] sm:$0xff]
        %v507 = vld [vmem:[%s422 + $0xd8] sm:$0xff]
        %v508 = vld [vmem:[%s422 + $0xe0] sm:$0xff]
        %v509 = vld [vmem:[%s422 + $0xf0] sm:$0xff]
        %v510 = vld [vmem:[%s422 + $0xf8] sm:$0xff]
        %v511 = vld [vmem:[%s422 + $0x108] sm:$0xff]
        %v512 = vld [vmem:[%s422 + $0x110] sm:$0xff]
        %v513 = vld [vmem:[%s422 + $0x120] sm:$0xff]
        %v514 = vld [vmem:[%s422 + $0x128] sm:$0xff]
        %v515 = vld [vmem:[%s422 + $0x138] sm:$0xff]
        %v516 = vld [vmem:[%s422 + $0x140] sm:$0xff]
        %v517 = vld [vmem:[%s422 + $0x150] sm:$0xff]
        %v518 = vld [vmem:[%s422 + $0x158] sm:$0xff]
        %v519 = vld [vmem:[%s422 + $0x168] sm:$0xff]
        %v520 = vld [vmem:[%s422 + $0x170] sm:$0xff]
        %553 = vrot.lane.b32.xlu0 %v457, 32
        %v554 = vpop.permute.xlu0 %553
        %555 = vrot.lane.b32.xlu0 %v458, 32
        %v556 = vpop.permute.xlu0 %555
        %557 = vrot.lane.b32.xlu0 %v459, 32
        %v558 = vpop.permute.xlu0 %557
        %559 = vrot.lane.b32.xlu0 %v460, 32
        %v560 = vpop.permute.xlu0 %559
        %561 = vrot.lane.b32.xlu0 %v461, 32
        %v562 = vpop.permute.xlu0 %561
        %563 = vrot.lane.b32.xlu0 %v462, 32
        %v564 = vpop.permute.xlu0 %563
        %565 = vrot.lane.b32.xlu0 %v463, 32
        %v566 = vpop.permute.xlu0 %565
        %567 = vrot.lane.b32.xlu0 %v464, 32
        %v568 = vpop.permute.xlu0 %567
        %569 = vrot.lane.b32.xlu0 %v465, 32
        %v570 = vpop.permute.xlu0 %569
        %571 = vrot.lane.b32.xlu0 %v466, 32
        %v572 = vpop.permute.xlu0 %571
        %573 = vrot.lane.b32.xlu0 %v467, 32
        %v574 = vpop.permute.xlu0 %573
        %575 = vrot.lane.b32.xlu0 %v468, 32
        %v576 = vpop.permute.xlu0 %575
        %577 = vrot.lane.b32.xlu0 %v469, 32
        %v578 = vpop.permute.xlu0 %577
        %579 = vrot.lane.b32.xlu0 %v470, 32
        %v580 = vpop.permute.xlu0 %579
        %581 = vrot.lane.b32.xlu0 %v471, 32
        %v582 = vpop.permute.xlu0 %581
        %583 = vrot.lane.b32.xlu0 %v472, 32
        %v584 = vpop.permute.xlu0 %583
        %585 = vrot.lane.b32.xlu0 %v473, 32
        %v586 = vpop.permute.xlu0 %585
        %587 = vrot.lane.b32.xlu0 %v474, 32
        %v588 = vpop.permute.xlu0 %587
        %589 = vrot.lane.b32.xlu0 %v475, 32
        %v590 = vpop.permute.xlu0 %589
        %591 = vrot.lane.b32.xlu0 %v476, 32
        %v592 = vpop.permute.xlu0 %591
        %593 = vrot.lane.b32.xlu0 %v477, 32
        %v594 = vpop.permute.xlu0 %593
        %595 = vrot.lane.b32.xlu0 %v478, 32
        %v596 = vpop.permute.xlu0 %595
        %597 = vrot.lane.b32.xlu0 %v479, 32
        %v598 = vpop.permute.xlu0 %597
        %599 = vrot.lane.b32.xlu0 %v480, 32
        %v600 = vpop.permute.xlu0 %599
        %601 = vrot.lane.b32.xlu0 %v481, 32
        %v602 = vpop.permute.xlu0 %601
        %603 = vrot.lane.b32.xlu0 %v482, 32
        %v604 = vpop.permute.xlu0 %603
        %605 = vrot.lane.b32.xlu0 %v483, 32
        %v606 = vpop.permute.xlu0 %605
        %607 = vrot.lane.b32.xlu0 %v484, 32
        %v608 = vpop.permute.xlu0 %607
        %609 = vrot.lane.b32.xlu0 %v485, 32
        %v610 = vpop.permute.xlu0 %609
        %611 = vrot.lane.b32.xlu0 %v486, 32
        %v612 = vpop.permute.xlu0 %611
        %613 = vrot.lane.b32.xlu0 %v487, 32
        %v614 = vpop.permute.xlu0 %613
        %615 = vrot.lane.b32.xlu0 %v488, 32
        %v616 = vpop.permute.xlu0 %615
        %681 = vrot.lane.b32.xlu0 %v489, 64
        %v682 = vpop.permute.xlu0 %681
        %683 = vrot.lane.b32.xlu0 %v490, 64
        %v684 = vpop.permute.xlu0 %683
        %685 = vrot.lane.b32.xlu0 %v491, 64
        %v686 = vpop.permute.xlu0 %685
        %687 = vrot.lane.b32.xlu0 %v492, 64
        %v688 = vpop.permute.xlu0 %687
        %689 = vrot.lane.b32.xlu0 %v493, 64
        %v690 = vpop.permute.xlu0 %689
        %691 = vrot.lane.b32.xlu0 %v494, 64
        %v692 = vpop.permute.xlu0 %691
        %693 = vrot.lane.b32.xlu0 %v495, 64
        %v694 = vpop.permute.xlu0 %693
        %695 = vrot.lane.b32.xlu0 %v496, 64
        %v696 = vpop.permute.xlu0 %695
        %697 = vrot.lane.b32.xlu0 %v497, 64
        %v698 = vpop.permute.xlu0 %697
        %699 = vrot.lane.b32.xlu0 %v498, 64
        %v700 = vpop.permute.xlu0 %699
        %701 = vrot.lane.b32.xlu0 %v499, 64
        %v702 = vpop.permute.xlu0 %701
        %703 = vrot.lane.b32.xlu0 %v500, 64
        %v704 = vpop.permute.xlu0 %703
        %705 = vrot.lane.b32.xlu0 %v501, 64
        %v706 = vpop.permute.xlu0 %705
        %707 = vrot.lane.b32.xlu0 %v502, 64
        %v708 = vpop.permute.xlu0 %707
        %709 = vrot.lane.b32.xlu0 %v503, 64
        %v710 = vpop.permute.xlu0 %709
        %711 = vrot.lane.b32.xlu0 %v504, 64
        %v712 = vpop.permute.xlu0 %711
        %713 = vrot.lane.b32.xlu0 %v505, 64
        %v714 = vpop.permute.xlu0 %713
        %715 = vrot.lane.b32.xlu0 %v506, 64
        %v716 = vpop.permute.xlu0 %715
        %717 = vrot.lane.b32.xlu0 %v507, 64
        %v718 = vpop.permute.xlu0 %717
        %719 = vrot.lane.b32.xlu0 %v508, 64
        %v720 = vpop.permute.xlu0 %719
        %721 = vrot.lane.b32.xlu0 %v509, 64
        %v722 = vpop.permute.xlu0 %721
        %723 = vrot.lane.b32.xlu0 %v510, 64
        %v724 = vpop.permute.xlu0 %723
        %725 = vrot.lane.b32.xlu0 %v511, 64
        %v726 = vpop.permute.xlu0 %725
        %727 = vrot.lane.b32.xlu0 %v512, 64
        %v728 = vpop.permute.xlu0 %727
        %729 = vrot.lane.b32.xlu0 %v513, 64
        %v730 = vpop.permute.xlu0 %729
        %731 = vrot.lane.b32.xlu0 %v514, 64
        %v732 = vpop.permute.xlu0 %731
        %733 = vrot.lane.b32.xlu0 %v515, 64
        %v734 = vpop.permute.xlu0 %733
        %735 = vrot.lane.b32.xlu0 %v516, 64
        %v736 = vpop.permute.xlu0 %735
        %737 = vrot.lane.b32.xlu0 %v517, 64
        %v738 = vpop.permute.xlu0 %737
        %739 = vrot.lane.b32.xlu0 %v518, 64
        %v740 = vpop.permute.xlu0 %739
        %741 = vrot.lane.b32.xlu0 %v519, 64
        %v742 = vpop.permute.xlu0 %741
        %743 = vrot.lane.b32.xlu0 %v520, 64
        %v744 = vpop.permute.xlu0 %743
        %vm777 = vcmask 261120
        %v778 = vsel %vm777, %v424, %v554
        %v779 = vsel %vm777, %v425, %v556
        %v780 = vsel %vm777, %v426, %v558
        %v781 = vsel %vm777, %v427, %v560
        %v782 = vsel %vm777, %v428, %v562
        %v783 = vsel %vm777, %v429, %v564
        %v784 = vsel %vm777, %v430, %v566
        %v785 = vsel %vm777, %v431, %v568
        %v786 = vsel %vm777, %v432, %v570
        %v787 = vsel %vm777, %v433, %v572
        %v788 = vsel %vm777, %v434, %v574
        %v789 = vsel %vm777, %v435, %v576
        %v790 = vsel %vm777, %v436, %v578
        %v791 = vsel %vm777, %v437, %v580
        %v792 = vsel %vm777, %v438, %v582
        %v793 = vsel %vm777, %v439, %v584
        %v794 = vsel %vm777, %v440, %v586
        %v795 = vsel %vm777, %v441, %v588
        %v796 = vsel %vm777, %v442, %v590
        %v797 = vsel %vm777, %v443, %v592
        %v798 = vsel %vm777, %v444, %v594
        %v799 = vsel %vm777, %v445, %v596
        %v800 = vsel %vm777, %v446, %v598
        %v801 = vsel %vm777, %v447, %v600
        %v802 = vsel %vm777, %v448, %v602
        %v803 = vsel %vm777, %v449, %v604
        %v804 = vsel %vm777, %v450, %v606
        %v805 = vsel %vm777, %v451, %v608
        %v806 = vsel %vm777, %v452, %v610
        %v807 = vsel %vm777, %v453, %v612
        %v808 = vsel %vm777, %v454, %v614
        %v809 = vsel %vm777, %v455, %v616
        %vm810 = vcmask 523264
        %v811 = vsel %vm810, %v778, %v682
        %v812 = vsel %vm810, %v779, %v684
        %v813 = vsel %vm810, %v780, %v686
        %v814 = vsel %vm810, %v781, %v688
        %v815 = vsel %vm810, %v782, %v690
        %v816 = vsel %vm810, %v783, %v692
        %v817 = vsel %vm810, %v784, %v694
        %v818 = vsel %vm810, %v785, %v696
        %v819 = vsel %vm810, %v786, %v698
        %v820 = vsel %vm810, %v787, %v700
        %v821 = vsel %vm810, %v788, %v702
        %v822 = vsel %vm810, %v789, %v704
        %v823 = vsel %vm810, %v790, %v706
        %v824 = vsel %vm810, %v791, %v708
        %v825 = vsel %vm810, %v792, %v710
        %v826 = vsel %vm810, %v793, %v712
        %v827 = vsel %vm810, %v794, %v714
        %v828 = vsel %vm810, %v795, %v716
        %v829 = vsel %vm810, %v796, %v718
        %v830 = vsel %vm810, %v797, %v720
        %v831 = vsel %vm810, %v798, %v722
        %v832 = vsel %vm810, %v799, %v724
        %v833 = vsel %vm810, %v800, %v726
        %v834 = vsel %vm810, %v801, %v728
        %v835 = vsel %vm810, %v802, %v730
        %v836 = vsel %vm810, %v803, %v732
        %v837 = vsel %vm810, %v804, %v734
        %v838 = vsel %vm810, %v805, %v736
        %v839 = vsel %vm810, %v806, %v738
        %v840 = vsel %vm810, %v807, %v740
        %v841 = vsel %vm810, %v808, %v742
        %v842 = vsel %vm810, %v809, %v744
        %v843 = vld [vmem:[%s1] sm:$0xff]
        %v844 = vld [vmem:[%s1 + $0x8] sm:$0xff]
        %v845 = vld [vmem:[%s1 + $0x10] sm:$0xff]
        %v846 = vld [vmem:[%s1 + $0x18] sm:$0xff]
        %v847 = vld [vmem:[%s1 + $0x20] sm:$0xff]
        %v848 = vld [vmem:[%s1 + $0x28] sm:$0xff]
        %v849 = vld [vmem:[%s1 + $0x30] sm:$0xff]
        %v850 = vld [vmem:[%s1 + $0x38] sm:$0xff]
        %v851 = vld [vmem:[%s1 + $0x40] sm:$0xff]
        %v852 = vld [vmem:[%s1 + $0x48] sm:$0xff]
        %v853 = vld [vmem:[%s1 + $0x50] sm:$0xff]
        %v854 = vld [vmem:[%s1 + $0x58] sm:$0xff]
        %v855 = vld [vmem:[%s423 + $0x4] sm:$0xff]
        %v856 = vld [vmem:[%s423 + $0xc] sm:$0xff]
        %v857 = vld [vmem:[%s423 + $0x1c] sm:$0xff]
        %v858 = vld [vmem:[%s423 + $0x24] sm:$0xff]
        %v859 = vld [vmem:[%s423 + $0x34] sm:$0xff]
        %v860 = vld [vmem:[%s423 + $0x3c] sm:$0xff]
        %v861 = vld [vmem:[%s423 + $0x4c] sm:$0xff]
        %v862 = vld [vmem:[%s423 + $0x54] sm:$0xff]
        %v863 = vld [vmem:[%s423 + $0x64] sm:$0xff]
        %v864 = vld [vmem:[%s423 + $0x6c] sm:$0xff]
        %v865 = vld [vmem:[%s423 + $0x7c] sm:$0xff]
        %v866 = vld [vmem:[%s423 + $0x84] sm:$0xff]
        %v867 = vld [vmem:[%s423 + $0x94] sm:$0xff]
        %v868 = vld [vmem:[%s423 + $0x9c] sm:$0xff]
        %v869 = vld [vmem:[%s423 + $0xac] sm:$0xff]
        %v870 = vld [vmem:[%s423 + $0xb4] sm:$0xff]
        %v871 = vld [vmem:[%s423 + $0xc4] sm:$0xff]
        %v872 = vld [vmem:[%s423 + $0xcc] sm:$0xff]
        %v873 = vld [vmem:[%s423 + $0xdc] sm:$0xff]
        %v874 = vld [vmem:[%s423 + $0xe4] sm:$0xff]
        %v875 = vld [vmem:[%s423 + $0xf4] sm:$0xff]
        %v876 = vld [vmem:[%s423 + $0xfc] sm:$0xff]
        %v877 = vld [vmem:[%s423 + $0x10c] sm:$0xff]
        %v878 = vld [vmem:[%s423 + $0x114] sm:$0xff]
        %v879 = vld [vmem:[%s423 + $0x124] sm:$0xff]
        %v880 = vld [vmem:[%s423 + $0x12c] sm:$0xff]
        %v881 = vld [vmem:[%s423 + $0x13c] sm:$0xff]
        %v882 = vld [vmem:[%s423 + $0x144] sm:$0xff]
        %v883 = vld [vmem:[%s423 + $0x154] sm:$0xff]
        %v884 = vld [vmem:[%s423 + $0x15c] sm:$0xff]
        %v885 = vld [vmem:[%s423 + $0x16c] sm:$0xff]
        %v886 = vld [vmem:[%s423 + $0x174] sm:$0xff]
        %v887 = vld [vmem:[%s456 + $0x4] sm:$0xff]
        %v888 = vld [vmem:[%s456 + $0xc] sm:$0xff]
        %v889 = vld [vmem:[%s456 + $0x1c] sm:$0xff]
        %v890 = vld [vmem:[%s456 + $0x24] sm:$0xff]
        %v891 = vld [vmem:[%s456 + $0x34] sm:$0xff]
        %v892 = vld [vmem:[%s456 + $0x3c] sm:$0xff]
        %v893 = vld [vmem:[%s456 + $0x4c] sm:$0xff]
        %v894 = vld [vmem:[%s456 + $0x54] sm:$0xff]
        %v895 = vld [vmem:[%s456 + $0x64] sm:$0xff]
        %v896 = vld [vmem:[%s456 + $0x6c] sm:$0xff]
        %v897 = vld [vmem:[%s456 + $0x7c] sm:$0xff]
        %v898 = vld [vmem:[%s456 + $0x84] sm:$0xff]
        %v899 = vld [vmem:[%s456 + $0x94] sm:$0xff]
        %v900 = vld [vmem:[%s456 + $0x9c] sm:$0xff]
        %v901 = vld [vmem:[%s456 + $0xac] sm:$0xff]
        %v902 = vld [vmem:[%s456 + $0xb4] sm:$0xff]
        %v903 = vld [vmem:[%s456 + $0xc4] sm:$0xff]
        %v904 = vld [vmem:[%s456 + $0xcc] sm:$0xff]
        %v905 = vld [vmem:[%s456 + $0xdc] sm:$0xff]
        %v906 = vld [vmem:[%s456 + $0xe4] sm:$0xff]
        %v907 = vld [vmem:[%s456 + $0xf4] sm:$0xff]
        %v908 = vld [vmem:[%s456 + $0xfc] sm:$0xff]
        %v909 = vld [vmem:[%s456 + $0x10c] sm:$0xff]
        %v910 = vld [vmem:[%s456 + $0x114] sm:$0xff]
        %v911 = vld [vmem:[%s456 + $0x124] sm:$0xff]
        %v912 = vld [vmem:[%s456 + $0x12c] sm:$0xff]
        %v913 = vld [vmem:[%s456 + $0x13c] sm:$0xff]
        %v914 = vld [vmem:[%s456 + $0x144] sm:$0xff]
        %v915 = vld [vmem:[%s456 + $0x154] sm:$0xff]
        %v916 = vld [vmem:[%s456 + $0x15c] sm:$0xff]
        %v917 = vld [vmem:[%s456 + $0x16c] sm:$0xff]
        %v918 = vld [vmem:[%s456 + $0x174] sm:$0xff]
        %v919 = vld [vmem:[%s422 + $0x4] sm:$0xff]
        %v920 = vld [vmem:[%s422 + $0xc] sm:$0xff]
        %v921 = vld [vmem:[%s422 + $0x1c] sm:$0xff]
        %v922 = vld [vmem:[%s422 + $0x24] sm:$0xff]
        %v923 = vld [vmem:[%s422 + $0x34] sm:$0xff]
        %v924 = vld [vmem:[%s422 + $0x3c] sm:$0xff]
        %v925 = vld [vmem:[%s422 + $0x4c] sm:$0xff]
        %v926 = vld [vmem:[%s422 + $0x54] sm:$0xff]
        %v927 = vld [vmem:[%s422 + $0x64] sm:$0xff]
        %v928 = vld [vmem:[%s422 + $0x6c] sm:$0xff]
        %v929 = vld [vmem:[%s422 + $0x7c] sm:$0xff]
        %v930 = vld [vmem:[%s422 + $0x84] sm:$0xff]
        %v931 = vld [vmem:[%s422 + $0x94] sm:$0xff]
        %v932 = vld [vmem:[%s422 + $0x9c] sm:$0xff]
        %v933 = vld [vmem:[%s422 + $0xac] sm:$0xff]
        %v934 = vld [vmem:[%s422 + $0xb4] sm:$0xff]
        %v935 = vld [vmem:[%s422 + $0xc4] sm:$0xff]
        %v936 = vld [vmem:[%s422 + $0xcc] sm:$0xff]
        %v937 = vld [vmem:[%s422 + $0xdc] sm:$0xff]
        %v938 = vld [vmem:[%s422 + $0xe4] sm:$0xff]
        %v939 = vld [vmem:[%s422 + $0xf4] sm:$0xff]
        %v940 = vld [vmem:[%s422 + $0xfc] sm:$0xff]
        %v941 = vld [vmem:[%s422 + $0x10c] sm:$0xff]
        %v942 = vld [vmem:[%s422 + $0x114] sm:$0xff]
        %v943 = vld [vmem:[%s422 + $0x124] sm:$0xff]
        %v944 = vld [vmem:[%s422 + $0x12c] sm:$0xff]
        %v945 = vld [vmem:[%s422 + $0x13c] sm:$0xff]
        %v946 = vld [vmem:[%s422 + $0x144] sm:$0xff]
        %v947 = vld [vmem:[%s422 + $0x154] sm:$0xff]
        %v948 = vld [vmem:[%s422 + $0x15c] sm:$0xff]
        %v949 = vld [vmem:[%s422 + $0x16c] sm:$0xff]
        %v950 = vld [vmem:[%s422 + $0x174] sm:$0xff]
        %983 = vrot.lane.b32.xlu0 %v887, 32
        %v984 = vpop.permute.xlu0 %983
        %985 = vrot.lane.b32.xlu0 %v888, 32
        %v986 = vpop.permute.xlu0 %985
        %987 = vrot.lane.b32.xlu0 %v889, 32
        %v988 = vpop.permute.xlu0 %987
        %989 = vrot.lane.b32.xlu0 %v890, 32
        %v990 = vpop.permute.xlu0 %989
        %991 = vrot.lane.b32.xlu0 %v891, 32
        %v992 = vpop.permute.xlu0 %991
        %993 = vrot.lane.b32.xlu0 %v892, 32
        %v994 = vpop.permute.xlu0 %993
        %995 = vrot.lane.b32.xlu0 %v893, 32
        %v996 = vpop.permute.xlu0 %995
        %997 = vrot.lane.b32.xlu0 %v894, 32
        %v998 = vpop.permute.xlu0 %997
        %999 = vrot.lane.b32.xlu0 %v895, 32
        %v1000 = vpop.permute.xlu0 %999
        %1001 = vrot.lane.b32.xlu0 %v896, 32
        %v1002 = vpop.permute.xlu0 %1001
        %1003 = vrot.lane.b32.xlu0 %v897, 32
        %v1004 = vpop.permute.xlu0 %1003
        %1005 = vrot.lane.b32.xlu0 %v898, 32
        %v1006 = vpop.permute.xlu0 %1005
        %1007 = vrot.lane.b32.xlu0 %v899, 32
        %v1008 = vpop.permute.xlu0 %1007
        %1009 = vrot.lane.b32.xlu0 %v900, 32
        %v1010 = vpop.permute.xlu0 %1009
        %1011 = vrot.lane.b32.xlu0 %v901, 32
        %v1012 = vpop.permute.xlu0 %1011
        %1013 = vrot.lane.b32.xlu0 %v902, 32
        %v1014 = vpop.permute.xlu0 %1013
        %1015 = vrot.lane.b32.xlu0 %v903, 32
        %v1016 = vpop.permute.xlu0 %1015
        %1017 = vrot.lane.b32.xlu0 %v904, 32
        %v1018 = vpop.permute.xlu0 %1017
        %1019 = vrot.lane.b32.xlu0 %v905, 32
        %v1020 = vpop.permute.xlu0 %1019
        %1021 = vrot.lane.b32.xlu0 %v906, 32
        %v1022 = vpop.permute.xlu0 %1021
        %1023 = vrot.lane.b32.xlu0 %v907, 32
        %v1024 = vpop.permute.xlu0 %1023
        %1025 = vrot.lane.b32.xlu0 %v908, 32
        %v1026 = vpop.permute.xlu0 %1025
        %1027 = vrot.lane.b32.xlu0 %v909, 32
        %v1028 = vpop.permute.xlu0 %1027
        %1029 = vrot.lane.b32.xlu0 %v910, 32
        %v1030 = vpop.permute.xlu0 %1029
        %1031 = vrot.lane.b32.xlu0 %v911, 32
        %v1032 = vpop.permute.xlu0 %1031
        %1033 = vrot.lane.b32.xlu0 %v912, 32
        %v1034 = vpop.permute.xlu0 %1033
        %1035 = vrot.lane.b32.xlu0 %v913, 32
        %v1036 = vpop.permute.xlu0 %1035
        %1037 = vrot.lane.b32.xlu0 %v914, 32
        %v1038 = vpop.permute.xlu0 %1037
        %1039 = vrot.lane.b32.xlu0 %v915, 32
        %v1040 = vpop.permute.xlu0 %1039
        %1041 = vrot.lane.b32.xlu0 %v916, 32
        %v1042 = vpop.permute.xlu0 %1041
        %1043 = vrot.lane.b32.xlu0 %v917, 32
        %v1044 = vpop.permute.xlu0 %1043
        %1045 = vrot.lane.b32.xlu0 %v918, 32
        %v1046 = vpop.permute.xlu0 %1045
        %1111 = vrot.lane.b32.xlu0 %v919, 64
        %v1112 = vpop.permute.xlu0 %1111
        %1113 = vrot.lane.b32.xlu0 %v920, 64
        %v1114 = vpop.permute.xlu0 %1113
        %1115 = vrot.lane.b32.xlu0 %v921, 64
        %v1116 = vpop.permute.xlu0 %1115
        %1117 = vrot.lane.b32.xlu0 %v922, 64
        %v1118 = vpop.permute.xlu0 %1117
        %1119 = vrot.lane.b32.xlu0 %v923, 64
        %v1120 = vpop.permute.xlu0 %1119
        %1121 = vrot.lane.b32.xlu0 %v924, 64
        %v1122 = vpop.permute.xlu0 %1121
        %1123 = vrot.lane.b32.xlu0 %v925, 64
        %v1124 = vpop.permute.xlu0 %1123
        %1125 = vrot.lane.b32.xlu0 %v926, 64
        %v1126 = vpop.permute.xlu0 %1125
        %1127 = vrot.lane.b32.xlu0 %v927, 64
        %v1128 = vpop.permute.xlu0 %1127
        %1129 = vrot.lane.b32.xlu0 %v928, 64
        %v1130 = vpop.permute.xlu0 %1129
        %1131 = vrot.lane.b32.xlu0 %v929, 64
        %v1132 = vpop.permute.xlu0 %1131
        %1133 = vrot.lane.b32.xlu0 %v930, 64
        %v1134 = vpop.permute.xlu0 %1133
        %1135 = vrot.lane.b32.xlu0 %v931, 64
        %v1136 = vpop.permute.xlu0 %1135
        %1137 = vrot.lane.b32.xlu0 %v932, 64
        %v1138 = vpop.permute.xlu0 %1137
        %1139 = vrot.lane.b32.xlu0 %v933, 64
        %v1140 = vpop.permute.xlu0 %1139
        %1141 = vrot.lane.b32.xlu0 %v934, 64
        %v1142 = vpop.permute.xlu0 %1141
        %1143 = vrot.lane.b32.xlu0 %v935, 64
        %v1144 = vpop.permute.xlu0 %1143
        %1145 = vrot.lane.b32.xlu0 %v936, 64
        %v1146 = vpop.permute.xlu0 %1145
        %1147 = vrot.lane.b32.xlu0 %v937, 64
        %v1148 = vpop.permute.xlu0 %1147
        %1149 = vrot.lane.b32.xlu0 %v938, 64
        %v1150 = vpop.permute.xlu0 %1149
        %1151 = vrot.lane.b32.xlu0 %v939, 64
        %v1152 = vpop.permute.xlu0 %1151
        %1153 = vrot.lane.b32.xlu0 %v940, 64
        %v1154 = vpop.permute.xlu0 %1153
        %1155 = vrot.lane.b32.xlu0 %v941, 64
        %v1156 = vpop.permute.xlu0 %1155
        %1157 = vrot.lane.b32.xlu0 %v942, 64
        %v1158 = vpop.permute.xlu0 %1157
        %1159 = vrot.lane.b32.xlu0 %v943, 64
        %v1160 = vpop.permute.xlu0 %1159
        %1161 = vrot.lane.b32.xlu0 %v944, 64
        %v1162 = vpop.permute.xlu0 %1161
        %1163 = vrot.lane.b32.xlu0 %v945, 64
        %v1164 = vpop.permute.xlu0 %1163
        %1165 = vrot.lane.b32.xlu0 %v946, 64
        %v1166 = vpop.permute.xlu0 %1165
        %1167 = vrot.lane.b32.xlu0 %v947, 64
        %v1168 = vpop.permute.xlu0 %1167
        %1169 = vrot.lane.b32.xlu0 %v948, 64
        %v1170 = vpop.permute.xlu0 %1169
        %1171 = vrot.lane.b32.xlu0 %v949, 64
        %v1172 = vpop.permute.xlu0 %1171
        %1173 = vrot.lane.b32.xlu0 %v950, 64
        %v1174 = vpop.permute.xlu0 %1173
        %v1207 = vsel %vm777, %v855, %v984
        %v1208 = vsel %vm777, %v856, %v986
        %v1209 = vsel %vm777, %v857, %v988
        %v1210 = vsel %vm777, %v858, %v990
        %v1211 = vsel %vm777, %v859, %v992
        %v1212 = vsel %vm777, %v860, %v994
        %v1213 = vsel %vm777, %v861, %v996
        %v1214 = vsel %vm777, %v862, %v998
        %v1215 = vsel %vm777, %v863, %v1000
        %v1216 = vsel %vm777, %v864, %v1002
        %v1217 = vsel %vm777, %v865, %v1004
        %v1218 = vsel %vm777, %v866, %v1006
        %v1219 = vsel %vm777, %v867, %v1008
        %v1220 = vsel %vm777, %v868, %v1010
        %v1221 = vsel %vm777, %v869, %v1012
        %v1222 = vsel %vm777, %v870, %v1014
        %v1223 = vsel %vm777, %v871, %v1016
        %v1224 = vsel %vm777, %v872, %v1018
        %v1225 = vsel %vm777, %v873, %v1020
        %v1226 = vsel %vm777, %v874, %v1022
        %v1227 = vsel %vm777, %v875, %v1024
        %v1228 = vsel %vm777, %v876, %v1026
        %v1229 = vsel %vm777, %v877, %v1028
        %v1230 = vsel %vm777, %v878, %v1030
        %v1231 = vsel %vm777, %v879, %v1032
        %v1232 = vsel %vm777, %v880, %v1034
        %v1233 = vsel %vm777, %v881, %v1036
        %v1234 = vsel %vm777, %v882, %v1038
        %v1235 = vsel %vm777, %v883, %v1040
        %v1236 = vsel %vm777, %v884, %v1042
        %v1237 = vsel %vm777, %v885, %v1044
        %v1238 = vsel %vm777, %v886, %v1046
        %v1239 = vsel %vm810, %v1207, %v1112
        %v1240 = vsel %vm810, %v1208, %v1114
        %v1241 = vsel %vm810, %v1209, %v1116
        %v1242 = vsel %vm810, %v1210, %v1118
        %v1243 = vsel %vm810, %v1211, %v1120
        %v1244 = vsel %vm810, %v1212, %v1122
        %v1245 = vsel %vm810, %v1213, %v1124
        %v1246 = vsel %vm810, %v1214, %v1126
        %v1247 = vsel %vm810, %v1215, %v1128
        %v1248 = vsel %vm810, %v1216, %v1130
        %v1249 = vsel %vm810, %v1217, %v1132
        %v1250 = vsel %vm810, %v1218, %v1134
        %v1251 = vsel %vm810, %v1219, %v1136
        %v1252 = vsel %vm810, %v1220, %v1138
        %v1253 = vsel %vm810, %v1221, %v1140
        %v1254 = vsel %vm810, %v1222, %v1142
        %v1255 = vsel %vm810, %v1223, %v1144
        %v1256 = vsel %vm810, %v1224, %v1146
        %v1257 = vsel %vm810, %v1225, %v1148
        %v1258 = vsel %vm810, %v1226, %v1150
        %v1259 = vsel %vm810, %v1227, %v1152
        %v1260 = vsel %vm810, %v1228, %v1154
        %v1261 = vsel %vm810, %v1229, %v1156
        %v1262 = vsel %vm810, %v1230, %v1158
        %v1263 = vsel %vm810, %v1231, %v1160
        %v1264 = vsel %vm810, %v1232, %v1162
        %v1265 = vsel %vm810, %v1233, %v1164
        %v1266 = vsel %vm810, %v1234, %v1166
        %v1267 = vsel %vm810, %v1235, %v1168
        %v1268 = vsel %vm810, %v1236, %v1170
        %v1269 = vsel %vm810, %v1237, %v1172
        %v1270 = vsel %vm810, %v1238, %v1174
        %s1271 = scalar_lea.vmem %s1, 96
        %v1272 = vld [vmem:[%s1271] sm:$0xff]
        %v1273 = vld [vmem:[%s1271 + $0x8] sm:$0xff]
        %v1274 = vld [vmem:[%s1271 + $0x10] sm:$0xff]
        %v1275 = vld [vmem:[%s1271 + $0x18] sm:$0xff]
        %v1276 = vld [vmem:[%s1271 + $0x20] sm:$0xff]
        %v1277 = vld [vmem:[%s1271 + $0x28] sm:$0xff]
        %v1278 = vld [vmem:[%s1271 + $0x30] sm:$0xff]
        %v1279 = vld [vmem:[%s1271 + $0x38] sm:$0xff]
        %v1280 = vld [vmem:[%s1271 + $0x40] sm:$0xff]
        %v1281 = vld [vmem:[%s1271 + $0x48] sm:$0xff]
        %v1282 = vld [vmem:[%s1271 + $0x50] sm:$0xff]
        %v1283 = vld [vmem:[%s1271 + $0x58] sm:$0xff]
        %vm1284 = vcmask 785408
        %v1286 = vsel %vm1284, %v1239, 0
        %v1289 = vsel %vm1284, %v1240, 0
        %v1292 = vsel %vm1284, %v1241, 0
        %v1295 = vsel %vm1284, %v1242, 0
        %v1298 = vsel %vm1284, %v1243, 0
        %v1301 = vsel %vm1284, %v1244, 0
        %v1304 = vsel %vm1284, %v1245, 0
        %v1307 = vsel %vm1284, %v1246, 0
        %v1310 = vsel %vm1284, %v1247, 0
        %v1313 = vsel %vm1284, %v1248, 0
        %v1316 = vsel %vm1284, %v1249, 0
        %v1319 = vsel %vm1284, %v1250, 0
        %v1322 = vsel %vm1284, %v1251, 0
        %v1325 = vsel %vm1284, %v1252, 0
        %v1328 = vsel %vm1284, %v1253, 0
        %v1331 = vsel %vm1284, %v1254, 0
        %v1334 = vsel %vm1284, %v1255, 0
        %v1337 = vsel %vm1284, %v1256, 0
        %v1340 = vsel %vm1284, %v1257, 0
        %v1343 = vsel %vm1284, %v1258, 0
        %v1346 = vsel %vm1284, %v1259, 0
        %v1349 = vsel %vm1284, %v1260, 0
        %v1352 = vsel %vm1284, %v1261, 0
        %v1355 = vsel %vm1284, %v1262, 0
        %v1358 = vsel %vm1284, %v1263, 0
        %v1361 = vsel %vm1284, %v1264, 0
        %v1364 = vsel %vm1284, %v1265, 0
        %v1367 = vsel %vm1284, %v1266, 0
        %v1370 = vsel %vm1284, %v1267, 0
        %v1373 = vsel %vm1284, %v1268, 0
        %v1376 = vsel %vm1284, %v1269, 0
        %v1379 = vsel %vm1284, %v1270, 0
        %1381 = vmatprep.subr.mxu0 0.0
        %1382 = vmatpush1.msra.mxu0 %v1272
        %1383 = vmatprep.subr.mxu0 0.0
        %1384 = vmatpush1.msra.mxu0 %v1273
        %1385 = vmatprep.subr.mxu0 0.0
        %1386 = vmatpush1.msra.mxu0 %v1274
        %1387 = vmatprep.subr.mxu0 0.0
        %1388 = vmatpush1.msra.mxu0 %v1275
        %1389 = vmatprep.subr.mxu0 0.0
        %1390 = vmatpush1.msra.mxu0 %v1276
        %1391 = vmatprep.subr.mxu0 0.0
        %1392 = vmatpush1.msra.mxu0 %v1277
        %1393 = vmatprep.subr.mxu0 0.0
        %1394 = vmatpush1.msra.mxu0 %v1278
        %1395 = vmatprep.subr.mxu0 0.0
        %1396 = vmatpush1.msra.mxu0 %v1279
        %1397 = vmatprep.subr.mxu0 0.0
        %1398 = vmatpush1.msra.mxu0 %v1280
        %1399 = vmatprep.subr.mxu0 0.0
        %1400 = vmatpush1.msra.mxu0 %v1281
        %1401 = vmatprep.subr.mxu0 0.0
        %1402 = vmatpush1.msra.mxu0 %v1282
        %1403 = vmatprep.subr.mxu0 0.0
        %1404 = vmatpush1.msra.mxu0 %v1283
        %1405 = vmatprep.subr.mxu0 0.0
        %1406 = vmatpush1.msra.mxu0 0.0
        %1407 = vmatprep.subr.mxu0 0.0
        %1408 = vmatpush1.msra.mxu0 0.0
        %1409 = vmatprep.subr.mxu0 0.0
        %1410 = vmatpush1.msra.mxu0 0.0
        %1411 = vmatprep.subr.mxu0 0.0
        %1412 = vmatpush1.msra.mxu0 0.0
        %1413 = vmatprep.subr.mxu0 0.0
        %1414 = vmatpush1.msra.mxu0 0.0
        %1415 = vmatprep.subr.mxu0 0.0
        %1416 = vmatpush1.msra.mxu0 0.0
        %1417 = vmatprep.subr.mxu0 0.0
        %1418 = vmatpush1.msra.mxu0 0.0
        %1419 = vmatprep.subr.mxu0 0.0
        %1420 = vmatpush1.msra.mxu0 0.0
        %1421 = vmatprep.subr.mxu0 0.0
        %1422 = vmatpush1.msra.mxu0 0.0
        %1423 = vmatprep.subr.mxu0 0.0
        %1424 = vmatpush1.msra.mxu0 0.0
        %1425 = vmatprep.subr.mxu0 0.0
        %1426 = vmatpush1.msra.mxu0 0.0
        %1427 = vmatprep.subr.mxu0 0.0
        %1428 = vmatpush1.msra.mxu0 0.0
        %1429 = vmatprep.subr.mxu0 0.0
        %1430 = vmatpush1.msra.mxu0 0.0
        %1431 = vmatprep.subr.mxu0 0.0
        %1432 = vmatpush1.msra.mxu0 0.0
        %1433 = vmatprep.subr.mxu0 0.0
        %1434 = vmatpush1.msra.mxu0 0.0
        %1435 = vmatprep.subr.mxu0 0.0
        %1436 = vmatpush1.msra.mxu0 0.0
        %1437 = vmatprep.subr.mxu0 0.0
        %1438 = vmatpush1.msra.mxu0 0.0
        %1439 = vmatprep.subr.mxu0 0.0
        %1440 = vmatpush1.msra.mxu0 0.0
        %1441 = vmatprep.subr.mxu0 0.0
        %1442 = vmatpush1.msra.mxu0 0.0
        %1443 = vmatprep.subr.mxu0 0.0
        %1444 = vmatpush1.msra.mxu0 0.0
        %1445 = vmatprep.mubr.f32.mxu0 0.0
        %1446 = vmatmul.mubr.f32.gmra.mrb[0].mxu0 %v1286
        %v1447 = vpop.f32.mrb[0].mxu0
        %v1448 = vadd.f32 0.0, %v1447
        %v1449 = vpop.f32.mrb[0].mxu0
        %1450 = vmatprep.mubr.f32.mxu0 0.0
        %1451 = vmatmul.mubr.f32.gmra.mrb[0].mxu0 %v1289
        %v1452 = vpop.f32.mrb[0].mxu0
        %v1453 = vadd.f32 0.0, %v1452
        %v1454 = vpop.f32.mrb[0].mxu0
        %1455 = vmatprep.mubr.f32.mxu0 0.0
        %1456 = vmatmul.mubr.f32.gmra.mrb[0].mxu0 %v1292
        %v1457 = vpop.f32.mrb[0].mxu0
        %v1458 = vadd.f32 0.0, %v1457
        %v1459 = vpop.f32.mrb[0].mxu0
        %1460 = vmatprep.mubr.f32.mxu0 0.0
        %1461 = vmatmul.mubr.f32.gmra.mrb[0].mxu0 %v1295
        %v1462 = vpop.f32.mrb[0].mxu0
        %v1463 = vadd.f32 0.0, %v1462
        %v1464 = vpop.f32.mrb[0].mxu0
        %1465 = vmatprep.mubr.f32.mxu0 0.0
        %1466 = vmatmul.mubr.f32.gmra.mrb[0].mxu0 %v1298
        %v1467 = vpop.f32.mrb[0].mxu0
        %v1468 = vadd.f32 0.0, %v1467
        %v1469 = vpop.f32.mrb[0].mxu0
        %1470 = vmatprep.mubr.f32.mxu0 0.0
        %1471 = vmatmul.mubr.f32.gmra.mrb[0].mxu0 %v1301
        %v1472 = vpop.f32.mrb[0].mxu0
        %v1473 = vadd.f32 0.0, %v1472
        %v1474 = vpop.f32.mrb[0].mxu0
        %1475 = vmatprep.mubr.f32.mxu0 0.0
        %1476 = vmatmul.mubr.f32.gmra.mrb[0].mxu0 %v1304
        %v1477 = vpop.f32.mrb[0].mxu0
        %v1478 = vadd.f32 0.0, %v1477
        %v1479 = vpop.f32.mrb[0].mxu0
        %1480 = vmatprep.mubr.f32.mxu0 0.0
        %1481 = vmatmul.mubr.f32.gmra.mrb[0].mxu0 %v1307
        %v1482 = vpop.f32.mrb[0].mxu0
        %v1483 = vadd.f32 0.0, %v1482
        %v1484 = vpop.f32.mrb[0].mxu0
        %1485 = vmatprep.mubr.f32.mxu0 0.0
        %1486 = vmatmul.mubr.f32.gmra.mrb[0].mxu0 %v1310
        %v1487 = vpop.f32.mrb[0].mxu0
        %v1488 = vadd.f32 0.0, %v1487
        %v1489 = vpop.f32.mrb[0].mxu0
        %1490 = vmatprep.mubr.f32.mxu0 0.0
        %1491 = vmatmul.mubr.f32.gmra.mrb[0].mxu0 %v1313
        %v1492 = vpop.f32.mrb[0].mxu0
        %v1493 = vadd.f32 0.0, %v1492
        %v1494 = vpop.f32.mrb[0].mxu0
        %1495 = vmatprep.mubr.f32.mxu0 0.0
        %1496 = vmatmul.mubr.f32.gmra.mrb[0].mxu0 %v1316
        %v1497 = vpop.f32.mrb[0].mxu0
        %v1498 = vadd.f32 0.0, %v1497
        %v1499 = vpop.f32.mrb[0].mxu0
        %1500 = vmatprep.mubr.f32.mxu0 0.0
        %1501 = vmatmul.mubr.f32.gmra.mrb[0].mxu0 %v1319
        %v1502 = vpop.f32.mrb[0].mxu0
        %v1503 = vadd.f32 0.0, %v1502
        %v1504 = vpop.f32.mrb[0].mxu0
        %1505 = vmatprep.mubr.f32.mxu0 0.0
        %1506 = vmatmul.mubr.f32.gmra.mrb[0].mxu0 %v1322
        %v1507 = vpop.f32.mrb[0].mxu0
        %v1508 = vadd.f32 0.0, %v1507
        %v1509 = vpop.f32.mrb[0].mxu0
        %1510 = vmatprep.mubr.f32.mxu0 0.0
        %1511 = vmatmul.mubr.f32.gmra.mrb[0].mxu0 %v1325
        %v1512 = vpop.f32.mrb[0].mxu0
        %v1513 = vadd.f32 0.0, %v1512
        %v1514 = vpop.f32.mrb[0].mxu0
        %1515 = vmatprep.mubr.f32.mxu0 0.0
        %1516 = vmatmul.mubr.f32.gmra.mrb[0].mxu0 %v1328
        %v1517 = vpop.f32.mrb[0].mxu0
        %v1518 = vadd.f32 0.0, %v1517
        %v1519 = vpop.f32.mrb[0].mxu0
        %1520 = vmatprep.mubr.f32.mxu0 0.0
        %1521 = vmatmul.mubr.f32.gmra.mrb[0].mxu0 %v1331
        %v1522 = vpop.f32.mrb[0].mxu0
        %v1523 = vadd.f32 0.0, %v1522
        %v1524 = vpop.f32.mrb[0].mxu0
        %1525 = vmatprep.mubr.f32.mxu0 0.0
        %1526 = vmatmul.mubr.f32.gmra.mrb[0].mxu0 %v1334
        %v1527 = vpop.f32.mrb[0].mxu0
        %v1528 = vadd.f32 0.0, %v1527
        %v1529 = vpop.f32.mrb[0].mxu0
        %1530 = vmatprep.mubr.f32.mxu0 0.0
        %1531 = vmatmul.mubr.f32.gmra.mrb[0].mxu0 %v1337
        %v1532 = vpop.f32.mrb[0].mxu0
        %v1533 = vadd.f32 0.0, %v1532
        %v1534 = vpop.f32.mrb[0].mxu0
        %1535 = vmatprep.mubr.f32.mxu0 0.0
        %1536 = vmatmul.mubr.f32.gmra.mrb[0].mxu0 %v1340
        %v1537 = vpop.f32.mrb[0].mxu0
        %v1538 = vadd.f32 0.0, %v1537
        %v1539 = vpop.f32.mrb[0].mxu0
        %1540 = vmatprep.mubr.f32.mxu0 0.0
        %1541 = vmatmul.mubr.f32.gmra.mrb[0].mxu0 %v1343
        %v1542 = vpop.f32.mrb[0].mxu0
        %v1543 = vadd.f32 0.0, %v1542
        %v1544 = vpop.f32.mrb[0].mxu0
        %1545 = vmatprep.mubr.f32.mxu0 0.0
        %1546 = vmatmul.mubr.f32.gmra.mrb[0].mxu0 %v1346
        %v1547 = vpop.f32.mrb[0].mxu0
        %v1548 = vadd.f32 0.0, %v1547
        %v1549 = vpop.f32.mrb[0].mxu0
        %1550 = vmatprep.mubr.f32.mxu0 0.0
        %1551 = vmatmul.mubr.f32.gmra.mrb[0].mxu0 %v1349
        %v1552 = vpop.f32.mrb[0].mxu0
        %v1553 = vadd.f32 0.0, %v1552
        %v1554 = vpop.f32.mrb[0].mxu0
        %1555 = vmatprep.mubr.f32.mxu0 0.0
        %1556 = vmatmul.mubr.f32.gmra.mrb[0].mxu0 %v1352
        %v1557 = vpop.f32.mrb[0].mxu0
        %v1558 = vadd.f32 0.0, %v1557
        %v1559 = vpop.f32.mrb[0].mxu0
        %1560 = vmatprep.mubr.f32.mxu0 0.0
        %1561 = vmatmul.mubr.f32.gmra.mrb[0].mxu0 %v1355
        %v1562 = vpop.f32.mrb[0].mxu0
        %v1563 = vadd.f32 0.0, %v1562
        %v1564 = vpop.f32.mrb[0].mxu0
        %1565 = vmatprep.mubr.f32.mxu0 0.0
        %1566 = vmatmul.mubr.f32.gmra.mrb[0].mxu0 %v1358
        %v1567 = vpop.f32.mrb[0].mxu0
        %v1568 = vadd.f32 0.0, %v1567
        %v1569 = vpop.f32.mrb[0].mxu0
        %1570 = vmatprep.mubr.f32.mxu0 0.0
        %1571 = vmatmul.mubr.f32.gmra.mrb[0].mxu0 %v1361
        %v1572 = vpop.f32.mrb[0].mxu0
        %v1573 = vadd.f32 0.0, %v1572
        %v1574 = vpop.f32.mrb[0].mxu0
        %1575 = vmatprep.mubr.f32.mxu0 0.0
        %1576 = vmatmul.mubr.f32.gmra.mrb[0].mxu0 %v1364
        %v1577 = vpop.f32.mrb[0].mxu0
        %v1578 = vadd.f32 0.0, %v1577
        %v1579 = vpop.f32.mrb[0].mxu0
        %1580 = vmatprep.mubr.f32.mxu0 0.0
        %1581 = vmatmul.mubr.f32.gmra.mrb[0].mxu0 %v1367
        %v1582 = vpop.f32.mrb[0].mxu0
        %v1583 = vadd.f32 0.0, %v1582
        %v1584 = vpop.f32.mrb[0].mxu0
        %1585 = vmatprep.mubr.f32.mxu0 0.0
        %1586 = vmatmul.mubr.f32.gmra.mrb[0].mxu0 %v1370
        %v1587 = vpop.f32.mrb[0].mxu0
        %v1588 = vadd.f32 0.0, %v1587
        %v1589 = vpop.f32.mrb[0].mxu0
        %1590 = vmatprep.mubr.f32.mxu0 0.0
        %1591 = vmatmul.mubr.f32.gmra.mrb[0].mxu0 %v1373
        %v1592 = vpop.f32.mrb[0].mxu0
        %v1593 = vadd.f32 0.0, %v1592
        %v1594 = vpop.f32.mrb[0].mxu0
        %1595 = vmatprep.mubr.f32.mxu0 0.0
        %1596 = vmatmul.mubr.f32.gmra.mrb[0].mxu0 %v1376
        %v1597 = vpop.f32.mrb[0].mxu0
        %v1598 = vadd.f32 0.0, %v1597
        %v1599 = vpop.f32.mrb[0].mxu0
        %1600 = vmatprep.mubr.f32.mxu0 0.0
        %1601 = vmatmul.mubr.f32.gmra.mrb[0].mxu0 %v1379
        %v1602 = vpop.f32.mrb[0].mxu0
        %v1603 = vadd.f32 0.0, %v1602
        %v1604 = vpop.f32.mrb[0].mxu0
        %1605 = vdwg.mxu0
        %v1607 = vsel %vm1284, %v811, 0
        %v1610 = vsel %vm1284, %v812, 0
        %v1613 = vsel %vm1284, %v813, 0
        %v1616 = vsel %vm1284, %v814, 0
        %v1619 = vsel %vm1284, %v815, 0
        %v1622 = vsel %vm1284, %v816, 0
        %v1625 = vsel %vm1284, %v817, 0
        %v1628 = vsel %vm1284, %v818, 0
        %v1631 = vsel %vm1284, %v819, 0
        %v1634 = vsel %vm1284, %v820, 0
        %v1637 = vsel %vm1284, %v821, 0
        %v1640 = vsel %vm1284, %v822, 0
        %v1643 = vsel %vm1284, %v823, 0
        %v1646 = vsel %vm1284, %v824, 0
        %v1649 = vsel %vm1284, %v825, 0
        %v1652 = vsel %vm1284, %v826, 0
        %v1655 = vsel %vm1284, %v827, 0
        %v1658 = vsel %vm1284, %v828, 0
        %v1661 = vsel %vm1284, %v829, 0
        %v1664 = vsel %vm1284, %v830, 0
        %v1667 = vsel %vm1284, %v831, 0
        %v1670 = vsel %vm1284, %v832, 0
        %v1673 = vsel %vm1284, %v833, 0
        %v1676 = vsel %vm1284, %v834, 0
        %v1679 = vsel %vm1284, %v835, 0
        %v1682 = vsel %vm1284, %v836, 0
        %v1685 = vsel %vm1284, %v837, 0
        %v1688 = vsel %vm1284, %v838, 0
        %v1691 = vsel %vm1284, %v839, 0
        %v1694 = vsel %vm1284, %v840, 0
        %v1697 = vsel %vm1284, %v841, 0
        %v1700 = vsel %vm1284, %v842, 0
        %1702 = vmatprep.subr.mxu0 0.0
        %1703 = vmatpush1.msra.mxu0 %v843
        %1704 = vmatprep.subr.mxu0 0.0
        %1705 = vmatpush1.msra.mxu0 %v844
        %1706 = vmatprep.subr.mxu0 0.0
        %1707 = vmatpush1.msra.mxu0 %v845
        %1708 = vmatprep.subr.mxu0 0.0
        %1709 = vmatpush1.msra.mxu0 %v846
        %1710 = vmatprep.subr.mxu0 0.0
        %1711 = vmatpush1.msra.mxu0 %v847
        %1712 = vmatprep.subr.mxu0 0.0
        %1713 = vmatpush1.msra.mxu0 %v848
        %1714 = vmatprep.subr.mxu0 0.0
        %1715 = vmatpush1.msra.mxu0 %v849
        %1716 = vmatprep.subr.mxu0 0.0
        %1717 = vmatpush1.msra.mxu0 %v850
        %1718 = vmatprep.subr.mxu0 0.0
        %1719 = vmatpush1.msra.mxu0 %v851
        %1720 = vmatprep.subr.mxu0 0.0
        %1721 = vmatpush1.msra.mxu0 %v852
        %1722 = vmatprep.subr.mxu0 0.0
        %1723 = vmatpush1.msra.mxu0 %v853
        %1724 = vmatprep.subr.mxu0 0.0
        %1725 = vmatpush1.msra.mxu0 %v854
        %1726 = vmatprep.subr.mxu0 0.0
        %1727 = vmatpush1.msra.mxu0 0.0
        %1728 = vmatprep.subr.mxu0 0.0
        %1729 = vmatpush1.msra.mxu0 0.0
        %1730 = vmatprep.subr.mxu0 0.0
        %1731 = vmatpush1.msra.mxu0 0.0
        %1732 = vmatprep.subr.mxu0 0.0
        %1733 = vmatpush1.msra.mxu0 0.0
        %1734 = vmatprep.subr.mxu0 0.0
        %1735 = vmatpush1.msra.mxu0 0.0
        %1736 = vmatprep.subr.mxu0 0.0
        %1737 = vmatpush1.msra.mxu0 0.0
        %1738 = vmatprep.subr.mxu0 0.0
        %1739 = vmatpush1.msra.mxu0 0.0
        %1740 = vmatprep.subr.mxu0 0.0
        %1741 = vmatpush1.msra.mxu0 0.0
        %1742 = vmatprep.subr.mxu0 0.0
        %1743 = vmatpush1.msra.mxu0 0.0
        %1744 = vmatprep.subr.mxu0 0.0
        %1745 = vmatpush1.msra.mxu0 0.0
        %1746 = vmatprep.subr.mxu0 0.0
        %1747 = vmatpush1.msra.mxu0 0.0
        %1748 = vmatprep.subr.mxu0 0.0
        %1749 = vmatpush1.msra.mxu0 0.0
        %1750 = vmatprep.subr.mxu0 0.0
        %1751 = vmatpush1.msra.mxu0 0.0
        %1752 = vmatprep.subr.mxu0 0.0
        %1753 = vmatpush1.msra.mxu0 0.0
        %1754 = vmatprep.subr.mxu0 0.0
        %1755 = vmatpush1.msra.mxu0 0.0
        %1756 = vmatprep.subr.mxu0 0.0
        %1757 = vmatpush1.msra.mxu0 0.0
        %1758 = vmatprep.subr.mxu0 0.0
        %1759 = vmatpush1.msra.mxu0 0.0
        %1760 = vmatprep.subr.mxu0 0.0
        %1761 = vmatpush1.msra.mxu0 0.0
        %1762 = vmatprep.subr.mxu0 0.0
        %1763 = vmatpush1.msra.mxu0 0.0
        %1764 = vmatprep.subr.mxu0 0.0
        %1765 = vmatpush1.msra.mxu0 0.0
        %1766 = vmatprep.mubr.f32.mxu0 0.0
        %1767 = vmatmul.mubr.f32.gmra.mrb[0].mxu0 %v1607
        %v1768 = vpop.f32.mrb[0].mxu0
        %v1769 = vadd.f32 %v1448, %v1768
        %v1770 = vpop.f32.mrb[0].mxu0
        %1771 = vmatprep.mubr.f32.mxu0 0.0
        %1772 = vmatmul.mubr.f32.gmra.mrb[0].mxu0 %v1610
        %v1773 = vpop.f32.mrb[0].mxu0
        %v1774 = vadd.f32 %v1453, %v1773
        %v1775 = vpop.f32.mrb[0].mxu0
        %1776 = vmatprep.mubr.f32.mxu0 0.0
        %1777 = vmatmul.mubr.f32.gmra.mrb[0].mxu0 %v1613
        %v1778 = vpop.f32.mrb[0].mxu0
        %v1779 = vadd.f32 %v1458, %v1778
        %v1780 = vpop.f32.mrb[0].mxu0
        %1781 = vmatprep.mubr.f32.mxu0 0.0
        %1782 = vmatmul.mubr.f32.gmra.mrb[0].mxu0 %v1616
        %v1783 = vpop.f32.mrb[0].mxu0
        %v1784 = vadd.f32 %v1463, %v1783
        %v1785 = vpop.f32.mrb[0].mxu0
        %1786 = vmatprep.mubr.f32.mxu0 0.0
        %1787 = vmatmul.mubr.f32.gmra.mrb[0].mxu0 %v1619
        %v1788 = vpop.f32.mrb[0].mxu0
        %v1789 = vadd.f32 %v1468, %v1788
        %v1790 = vpop.f32.mrb[0].mxu0
        %1791 = vmatprep.mubr.f32.mxu0 0.0
        %1792 = vmatmul.mubr.f32.gmra.mrb[0].mxu0 %v1622
        %v1793 = vpop.f32.mrb[0].mxu0
        %v1794 = vadd.f32 %v1473, %v1793
        %v1795 = vpop.f32.mrb[0].mxu0
        %1796 = vmatprep.mubr.f32.mxu0 0.0
        %1797 = vmatmul.mubr.f32.gmra.mrb[0].mxu0 %v1625
        %v1798 = vpop.f32.mrb[0].mxu0
        %v1799 = vadd.f32 %v1478, %v1798
        %v1800 = vpop.f32.mrb[0].mxu0
        %1801 = vmatprep.mubr.f32.mxu0 0.0
        %1802 = vmatmul.mubr.f32.gmra.mrb[0].mxu0 %v1628
        %v1803 = vpop.f32.mrb[0].mxu0
        %v1804 = vadd.f32 %v1483, %v1803
        %v1805 = vpop.f32.mrb[0].mxu0
        %1806 = vmatprep.mubr.f32.mxu0 0.0
        %1807 = vmatmul.mubr.f32.gmra.mrb[0].mxu0 %v1631
        %v1808 = vpop.f32.mrb[0].mxu0
        %v1809 = vadd.f32 %v1488, %v1808
        %v1810 = vpop.f32.mrb[0].mxu0
        %1811 = vmatprep.mubr.f32.mxu0 0.0
        %1812 = vmatmul.mubr.f32.gmra.mrb[0].mxu0 %v1634
        %v1813 = vpop.f32.mrb[0].mxu0
        %v1814 = vadd.f32 %v1493, %v1813
        %v1815 = vpop.f32.mrb[0].mxu0
        %1816 = vmatprep.mubr.f32.mxu0 0.0
        %1817 = vmatmul.mubr.f32.gmra.mrb[0].mxu0 %v1637
        %v1818 = vpop.f32.mrb[0].mxu0
        %v1819 = vadd.f32 %v1498, %v1818
        %v1820 = vpop.f32.mrb[0].mxu0
        %1821 = vmatprep.mubr.f32.mxu0 0.0
        %1822 = vmatmul.mubr.f32.gmra.mrb[0].mxu0 %v1640
        %v1823 = vpop.f32.mrb[0].mxu0
        %v1824 = vadd.f32 %v1503, %v1823
        %v1825 = vpop.f32.mrb[0].mxu0
        %1826 = vmatprep.mubr.f32.mxu0 0.0
        %1827 = vmatmul.mubr.f32.gmra.mrb[0].mxu0 %v1643
        %v1828 = vpop.f32.mrb[0].mxu0
        %v1829 = vadd.f32 %v1508, %v1828
        %v1830 = vpop.f32.mrb[0].mxu0
        %1831 = vmatprep.mubr.f32.mxu0 0.0
        %1832 = vmatmul.mubr.f32.gmra.mrb[0].mxu0 %v1646
        %v1833 = vpop.f32.mrb[0].mxu0
        %v1834 = vadd.f32 %v1513, %v1833
        %v1835 = vpop.f32.mrb[0].mxu0
        %1836 = vmatprep.mubr.f32.mxu0 0.0
        %1837 = vmatmul.mubr.f32.gmra.mrb[0].mxu0 %v1649
        %v1838 = vpop.f32.mrb[0].mxu0
        %v1839 = vadd.f32 %v1518, %v1838
        %v1840 = vpop.f32.mrb[0].mxu0
        %1841 = vmatprep.mubr.f32.mxu0 0.0
        %1842 = vmatmul.mubr.f32.gmra.mrb[0].mxu0 %v1652
        %v1843 = vpop.f32.mrb[0].mxu0
        %v1844 = vadd.f32 %v1523, %v1843
        %v1845 = vpop.f32.mrb[0].mxu0
        %1846 = vmatprep.mubr.f32.mxu0 0.0
        %1847 = vmatmul.mubr.f32.gmra.mrb[0].mxu0 %v1655
        %v1848 = vpop.f32.mrb[0].mxu0
        %v1849 = vadd.f32 %v1528, %v1848
        %v1850 = vpop.f32.mrb[0].mxu0
        %1851 = vmatprep.mubr.f32.mxu0 0.0
        %1852 = vmatmul.mubr.f32.gmra.mrb[0].mxu0 %v1658
        %v1853 = vpop.f32.mrb[0].mxu0
        %v1854 = vadd.f32 %v1533, %v1853
        %v1855 = vpop.f32.mrb[0].mxu0
        %1856 = vmatprep.mubr.f32.mxu0 0.0
        %1857 = vmatmul.mubr.f32.gmra.mrb[0].mxu0 %v1661
        %v1858 = vpop.f32.mrb[0].mxu0
        %v1859 = vadd.f32 %v1538, %v1858
        %v1860 = vpop.f32.mrb[0].mxu0
        %1861 = vmatprep.mubr.f32.mxu0 0.0
        %1862 = vmatmul.mubr.f32.gmra.mrb[0].mxu0 %v1664
        %v1863 = vpop.f32.mrb[0].mxu0
        %v1864 = vadd.f32 %v1543, %v1863
        %v1865 = vpop.f32.mrb[0].mxu0
        %1866 = vmatprep.mubr.f32.mxu0 0.0
        %1867 = vmatmul.mubr.f32.gmra.mrb[0].mxu0 %v1667
        %v1868 = vpop.f32.mrb[0].mxu0
        %v1869 = vadd.f32 %v1548, %v1868
        %v1870 = vpop.f32.mrb[0].mxu0
        %1871 = vmatprep.mubr.f32.mxu0 0.0
        %1872 = vmatmul.mubr.f32.gmra.mrb[0].mxu0 %v1670
        %v1873 = vpop.f32.mrb[0].mxu0
        %v1874 = vadd.f32 %v1553, %v1873
        %v1875 = vpop.f32.mrb[0].mxu0
        %1876 = vmatprep.mubr.f32.mxu0 0.0
        %1877 = vmatmul.mubr.f32.gmra.mrb[0].mxu0 %v1673
        %v1878 = vpop.f32.mrb[0].mxu0
        %v1879 = vadd.f32 %v1558, %v1878
        %v1880 = vpop.f32.mrb[0].mxu0
        %1881 = vmatprep.mubr.f32.mxu0 0.0
        %1882 = vmatmul.mubr.f32.gmra.mrb[0].mxu0 %v1676
        %v1883 = vpop.f32.mrb[0].mxu0
        %v1884 = vadd.f32 %v1563, %v1883
        %v1885 = vpop.f32.mrb[0].mxu0
        %1886 = vmatprep.mubr.f32.mxu0 0.0
        %1887 = vmatmul.mubr.f32.gmra.mrb[0].mxu0 %v1679
        %v1888 = vpop.f32.mrb[0].mxu0
        %v1889 = vadd.f32 %v1568, %v1888
        %v1890 = vpop.f32.mrb[0].mxu0
        %1891 = vmatprep.mubr.f32.mxu0 0.0
        %1892 = vmatmul.mubr.f32.gmra.mrb[0].mxu0 %v1682
        %v1893 = vpop.f32.mrb[0].mxu0
        %v1894 = vadd.f32 %v1573, %v1893
        %v1895 = vpop.f32.mrb[0].mxu0
        %1896 = vmatprep.mubr.f32.mxu0 0.0
        %1897 = vmatmul.mubr.f32.gmra.mrb[0].mxu0 %v1685
        %v1898 = vpop.f32.mrb[0].mxu0
        %v1899 = vadd.f32 %v1578, %v1898
        %v1900 = vpop.f32.mrb[0].mxu0
        %1901 = vmatprep.mubr.f32.mxu0 0.0
        %1902 = vmatmul.mubr.f32.gmra.mrb[0].mxu0 %v1688
        %v1903 = vpop.f32.mrb[0].mxu0
        %v1904 = vadd.f32 %v1583, %v1903
        %v1905 = vpop.f32.mrb[0].mxu0
        %1906 = vmatprep.mubr.f32.mxu0 0.0
        %1907 = vmatmul.mubr.f32.gmra.mrb[0].mxu0 %v1691
        %v1908 = vpop.f32.mrb[0].mxu0
        %v1909 = vadd.f32 %v1588, %v1908
        %v1910 = vpop.f32.mrb[0].mxu0
        %1911 = vmatprep.mubr.f32.mxu0 0.0
        %1912 = vmatmul.mubr.f32.gmra.mrb[0].mxu0 %v1694
        %v1913 = vpop.f32.mrb[0].mxu0
        %v1914 = vadd.f32 %v1593, %v1913
        %v1915 = vpop.f32.mrb[0].mxu0
        %1916 = vmatprep.mubr.f32.mxu0 0.0
        %1917 = vmatmul.mubr.f32.gmra.mrb[0].mxu0 %v1697
        %v1918 = vpop.f32.mrb[0].mxu0
        %v1919 = vadd.f32 %v1598, %v1918
        %v1920 = vpop.f32.mrb[0].mxu0
        %1921 = vmatprep.mubr.f32.mxu0 0.0
        %1922 = vmatmul.mubr.f32.gmra.mrb[0].mxu0 %v1700
        %v1923 = vpop.f32.mrb[0].mxu0
        %v1924 = vadd.f32 %v1603, %v1923
        %v1925 = vpop.f32.mrb[0].mxu0
        %1926 = vdwg.mxu0
        %v1927 = vld [vmem:[%s423 + $0x5] sm:$0xff]
        %v1928 = vld [vmem:[%s423 + $0xd] sm:$0xff]
        %v1929 = vld [vmem:[%s423 + $0x1d] sm:$0xff]
        %v1930 = vld [vmem:[%s423 + $0x25] sm:$0xff]
        %v1931 = vld [vmem:[%s423 + $0x35] sm:$0xff]
        %v1932 = vld [vmem:[%s423 + $0x3d] sm:$0xff]
        %v1933 = vld [vmem:[%s423 + $0x4d] sm:$0xff]
        %v1934 = vld [vmem:[%s423 + $0x55] sm:$0xff]
        %v1935 = vld [vmem:[%s423 + $0x65] sm:$0xff]
        %v1936 = vld [vmem:[%s423 + $0x6d] sm:$0xff]
        %v1937 = vld [vmem:[%s423 + $0x7d] sm:$0xff]
        %v1938 = vld [vmem:[%s423 + $0x85] sm:$0xff]
        %v1939 = vld [vmem:[%s423 + $0x95] sm:$0xff]
        %v1940 = vld [vmem:[%s423 + $0x9d] sm:$0xff]
        %v1941 = vld [vmem:[%s423 + $0xad] sm:$0xff]
        %v1942 = vld [vmem:[%s423 + $0xb5] sm:$0xff]
        %v1943 = vld [vmem:[%s423 + $0xc5] sm:$0xff]
        %v1944 = vld [vmem:[%s423 + $0xcd] sm:$0xff]
        %v1945 = vld [vmem:[%s423 + $0xdd] sm:$0xff]
        %v1946 = vld [vmem:[%s423 + $0xe5] sm:$0xff]
        %v1947 = vld [vmem:[%s423 + $0xf5] sm:$0xff]
        %v1948 = vld [vmem:[%s423 + $0xfd] sm:$0xff]
        %v1949 = vld [vmem:[%s423 + $0x10d] sm:$0xff]
        %v1950 = vld [vmem:[%s423 + $0x115] sm:$0xff]
        %v1951 = vld [vmem:[%s423 + $0x125] sm:$0xff]
        %v1952 = vld [vmem:[%s423 + $0x12d] sm:$0xff]
        %v1953 = vld [vmem:[%s423 + $0x13d] sm:$0xff]
        %v1954 = vld [vmem:[%s423 + $0x145] sm:$0xff]
        %v1955 = vld [vmem:[%s423 + $0x155] sm:$0xff]
        %v1956 = vld [vmem:[%s423 + $0x15d] sm:$0xff]
        %v1957 = vld [vmem:[%s423 + $0x16d] sm:$0xff]
        %v1958 = vld [vmem:[%s423 + $0x175] sm:$0xff]
        %v1959 = vld [vmem:[%s456 + $0x6] sm:$0xff]
        %v1960 = vld [vmem:[%s456 + $0xe] sm:$0xff]
        %v1961 = vld [vmem:[%s456 + $0x1e] sm:$0xff]
        %v1962 = vld [vmem:[%s456 + $0x26] sm:$0xff]
        %v1963 = vld [vmem:[%s456 + $0x36] sm:$0xff]
        %v1964 = vld [vmem:[%s456 + $0x3e] sm:$0xff]
        %v1965 = vld [vmem:[%s456 + $0x4e] sm:$0xff]
        %v1966 = vld [vmem:[%s456 + $0x56] sm:$0xff]
        %v1967 = vld [vmem:[%s456 + $0x66] sm:$0xff]
        %v1968 = vld [vmem:[%s456 + $0x6e] sm:$0xff]
        %v1969 = vld [vmem:[%s456 + $0x7e] sm:$0xff]
        %v1970 = vld [vmem:[%s456 + $0x86] sm:$0xff]
        %v1971 = vld [vmem:[%s456 + $0x96] sm:$0xff]
        %v1972 = vld [vmem:[%s456 + $0x9e] sm:$0xff]
        %v1973 = vld [vmem:[%s456 + $0xae] sm:$0xff]
        %v1974 = vld [vmem:[%s456 + $0xb6] sm:$0xff]
        %v1975 = vld [vmem:[%s456 + $0xc6] sm:$0xff]
        %v1976 = vld [vmem:[%s456 + $0xce] sm:$0xff]
        %v1977 = vld [vmem:[%s456 + $0xde] sm:$0xff]
        %v1978 = vld [vmem:[%s456 + $0xe6] sm:$0xff]
        %v1979 = vld [vmem:[%s456 + $0xf6] sm:$0xff]
        %v1980 = vld [vmem:[%s456 + $0xfe] sm:$0xff]
        %v1981 = vld [vmem:[%s456 + $0x10e] sm:$0xff]
        %v1982 = vld [vmem:[%s456 + $0x116] sm:$0xff]
        %v1983 = vld [vmem:[%s456 + $0x126] sm:$0xff]
        %v1984 = vld [vmem:[%s456 + $0x12e] sm:$0xff]
        %v1985 = vld [vmem:[%s456 + $0x13e] sm:$0xff]
        %v1986 = vld [vmem:[%s456 + $0x146] sm:$0xff]
        %v1987 = vld [vmem:[%s456 + $0x156] sm:$0xff]
        %v1988 = vld [vmem:[%s456 + $0x15e] sm:$0xff]
        %v1989 = vld [vmem:[%s456 + $0x16e] sm:$0xff]
        %v1990 = vld [vmem:[%s456 + $0x176] sm:$0xff]
        %v1991 = vld [vmem:[%s422 + $0x8] sm:$0xff]
        %v1992 = vld [vmem:[%s422 + $0x10] sm:$0xff]
        %v1993 = vld [vmem:[%s422 + $0x20] sm:$0xff]
        %v1994 = vld [vmem:[%s422 + $0x28] sm:$0xff]
        %v1995 = vld [vmem:[%s422 + $0x38] sm:$0xff]
        %v1996 = vld [vmem:[%s422 + $0x40] sm:$0xff]
        %v1997 = vld [vmem:[%s422 + $0x50] sm:$0xff]
        %v1998 = vld [vmem:[%s422 + $0x58] sm:$0xff]
        %v1999 = vld [vmem:[%s422 + $0x68] sm:$0xff]
        %v2000 = vld [vmem:[%s422 + $0x70] sm:$0xff]
        %v2001 = vld [vmem:[%s422 + $0x80] sm:$0xff]
        %v2002 = vld [vmem:[%s422 + $0x88] sm:$0xff]
        %v2003 = vld [vmem:[%s422 + $0x98] sm:$0xff]
        %v2004 = vld [vmem:[%s422 + $0xa0] sm:$0xff]
        %v2005 = vld [vmem:[%s422 + $0xb0] sm:$0xff]
        %v2006 = vld [vmem:[%s422 + $0xb8] sm:$0xff]
        %v2007 = vld [vmem:[%s422 + $0xc8] sm:$0xff]
        %v2008 = vld [vmem:[%s422 + $0xd0] sm:$0xff]
        %v2009 = vld [vmem:[%s422 + $0xe0] sm:$0xff]
        %v2010 = vld [vmem:[%s422 + $0xe8] sm:$0xff]
        %v2011 = vld [vmem:[%s422 + $0xf8] sm:$0xff]
        %v2012 = vld [vmem:[%s422 + $0x100] sm:$0xff]
        %v2013 = vld [vmem:[%s422 + $0x110] sm:$0xff]
        %v2014 = vld [vmem:[%s422 + $0x118] sm:$0xff]
        %v2015 = vld [vmem:[%s422 + $0x128] sm:$0xff]
        %v2016 = vld [vmem:[%s422 + $0x130] sm:$0xff]
        %v2017 = vld [vmem:[%s422 + $0x140] sm:$0xff]
        %v2018 = vld [vmem:[%s422 + $0x148] sm:$0xff]
        %v2019 = vld [vmem:[%s422 + $0x158] sm:$0xff]
        %v2020 = vld [vmem:[%s422 + $0x160] sm:$0xff]
        %v2021 = vld [vmem:[%s422 + $0x170] sm:$0xff]
        %v2022 = vld [vmem:[%s422 + $0x178] sm:$0xff]
        %2055 = vrot.lane.b32.xlu0 %v1959, 32
        %v2056 = vpop.permute.xlu0 %2055
        %2057 = vrot.lane.b32.xlu0 %v1960, 32
        %v2058 = vpop.permute.xlu0 %2057
        %2059 = vrot.lane.b32.xlu0 %v1961, 32
        %v2060 = vpop.permute.xlu0 %2059
        %2061 = vrot.lane.b32.xlu0 %v1962, 32
        %v2062 = vpop.permute.xlu0 %2061
        %2063 = vrot.lane.b32.xlu0 %v1963, 32
        %v2064 = vpop.permute.xlu0 %2063
        %2065 = vrot.lane.b32.xlu0 %v1964, 32
        %v2066 = vpop.permute.xlu0 %2065
        %2067 = vrot.lane.b32.xlu0 %v1965, 32
        %v2068 = vpop.permute.xlu0 %2067
        %2069 = vrot.lane.b32.xlu0 %v1966, 32
        %v2070 = vpop.permute.xlu0 %2069
        %2071 = vrot.lane.b32.xlu0 %v1967, 32
        %v2072 = vpop.permute.xlu0 %2071
        %2073 = vrot.lane.b32.xlu0 %v1968, 32
        %v2074 = vpop.permute.xlu0 %2073
        %2075 = vrot.lane.b32.xlu0 %v1969, 32
        %v2076 = vpop.permute.xlu0 %2075
        %2077 = vrot.lane.b32.xlu0 %v1970, 32
        %v2078 = vpop.permute.xlu0 %2077
        %2079 = vrot.lane.b32.xlu0 %v1971, 32
        %v2080 = vpop.permute.xlu0 %2079
        %2081 = vrot.lane.b32.xlu0 %v1972, 32
        %v2082 = vpop.permute.xlu0 %2081
        %2083 = vrot.lane.b32.xlu0 %v1973, 32
        %v2084 = vpop.permute.xlu0 %2083
        %2085 = vrot.lane.b32.xlu0 %v1974, 32
        %v2086 = vpop.permute.xlu0 %2085
        %2087 = vrot.lane.b32.xlu0 %v1975, 32
        %v2088 = vpop.permute.xlu0 %2087
        %2089 = vrot.lane.b32.xlu0 %v1976, 32
        %v2090 = vpop.permute.xlu0 %2089
        %2091 = vrot.lane.b32.xlu0 %v1977, 32
        %v2092 = vpop.permute.xlu0 %2091
        %2093 = vrot.lane.b32.xlu0 %v1978, 32
        %v2094 = vpop.permute.xlu0 %2093
        %2095 = vrot.lane.b32.xlu0 %v1979, 32
        %v2096 = vpop.permute.xlu0 %2095
        %2097 = vrot.lane.b32.xlu0 %v1980, 32
        %v2098 = vpop.permute.xlu0 %2097
        %2099 = vrot.lane.b32.xlu0 %v1981, 32
        %v2100 = vpop.permute.xlu0 %2099
        %2101 = vrot.lane.b32.xlu0 %v1982, 32
        %v2102 = vpop.permute.xlu0 %2101
        %2103 = vrot.lane.b32.xlu0 %v1983, 32
        %v2104 = vpop.permute.xlu0 %2103
        %2105 = vrot.lane.b32.xlu0 %v1984, 32
        %v2106 = vpop.permute.xlu0 %2105
        %2107 = vrot.lane.b32.xlu0 %v1985, 32
        %v2108 = vpop.permute.xlu0 %2107
        %2109 = vrot.lane.b32.xlu0 %v1986, 32
        %v2110 = vpop.permute.xlu0 %2109
        %2111 = vrot.lane.b32.xlu0 %v1987, 32
        %v2112 = vpop.permute.xlu0 %2111
        %2113 = vrot.lane.b32.xlu0 %v1988, 32
        %v2114 = vpop.permute.xlu0 %2113
        %2115 = vrot.lane.b32.xlu0 %v1989, 32
        %v2116 = vpop.permute.xlu0 %2115
        %2117 = vrot.lane.b32.xlu0 %v1990, 32
        %v2118 = vpop.permute.xlu0 %2117
        %2183 = vrot.lane.b32.xlu0 %v1991, 64
        %v2184 = vpop.permute.xlu0 %2183
        %2185 = vrot.lane.b32.xlu0 %v1992, 64
        %v2186 = vpop.permute.xlu0 %2185
        %2187 = vrot.lane.b32.xlu0 %v1993, 64
        %v2188 = vpop.permute.xlu0 %2187
        %2189 = vrot.lane.b32.xlu0 %v1994, 64
        %v2190 = vpop.permute.xlu0 %2189
        %2191 = vrot.lane.b32.xlu0 %v1995, 64
        %v2192 = vpop.permute.xlu0 %2191
        %2193 = vrot.lane.b32.xlu0 %v1996, 64
        %v2194 = vpop.permute.xlu0 %2193
        %2195 = vrot.lane.b32.xlu0 %v1997, 64
        %v2196 = vpop.permute.xlu0 %2195
        %2197 = vrot.lane.b32.xlu0 %v1998, 64
        %v2198 = vpop.permute.xlu0 %2197
        %2199 = vrot.lane.b32.xlu0 %v1999, 64
        %v2200 = vpop.permute.xlu0 %2199
        %2201 = vrot.lane.b32.xlu0 %v2000, 64
        %v2202 = vpop.permute.xlu0 %2201
        %2203 = vrot.lane.b32.xlu0 %v2001, 64
        %v2204 = vpop.permute.xlu0 %2203
        %2205 = vrot.lane.b32.xlu0 %v2002, 64
        %v2206 = vpop.permute.xlu0 %2205
        %2207 = vrot.lane.b32.xlu0 %v2003, 64
        %v2208 = vpop.permute.xlu0 %2207
        %2209 = vrot.lane.b32.xlu0 %v2004, 64
        %v2210 = vpop.permute.xlu0 %2209
        %2211 = vrot.lane.b32.xlu0 %v2005, 64
        %v2212 = vpop.permute.xlu0 %2211
        %2213 = vrot.lane.b32.xlu0 %v2006, 64
        %v2214 = vpop.permute.xlu0 %2213
        %2215 = vrot.lane.b32.xlu0 %v2007, 64
        %v2216 = vpop.permute.xlu0 %2215
        %2217 = vrot.lane.b32.xlu0 %v2008, 64
        %v2218 = vpop.permute.xlu0 %2217
        %2219 = vrot.lane.b32.xlu0 %v2009, 64
        %v2220 = vpop.permute.xlu0 %2219
        %2221 = vrot.lane.b32.xlu0 %v2010, 64
        %v2222 = vpop.permute.xlu0 %2221
        %2223 = vrot.lane.b32.xlu0 %v2011, 64
        %v2224 = vpop.permute.xlu0 %2223
        %2225 = vrot.lane.b32.xlu0 %v2012, 64
        %v2226 = vpop.permute.xlu0 %2225
        %2227 = vrot.lane.b32.xlu0 %v2013, 64
        %v2228 = vpop.permute.xlu0 %2227
        %2229 = vrot.lane.b32.xlu0 %v2014, 64
        %v2230 = vpop.permute.xlu0 %2229
        %2231 = vrot.lane.b32.xlu0 %v2015, 64
        %v2232 = vpop.permute.xlu0 %2231
        %2233 = vrot.lane.b32.xlu0 %v2016, 64
        %v2234 = vpop.permute.xlu0 %2233
        %2235 = vrot.lane.b32.xlu0 %v2017, 64
        %v2236 = vpop.permute.xlu0 %2235
        %2237 = vrot.lane.b32.xlu0 %v2018, 64
        %v2238 = vpop.permute.xlu0 %2237
        %2239 = vrot.lane.b32.xlu0 %v2019, 64
        %v2240 = vpop.permute.xlu0 %2239
        %2241 = vrot.lane.b32.xlu0 %v2020, 64
        %v2242 = vpop.permute.xlu0 %2241
        %2243 = vrot.lane.b32.xlu0 %v2021, 64
        %v2244 = vpop.permute.xlu0 %2243
        %2245 = vrot.lane.b32.xlu0 %v2022, 64
        %v2246 = vpop.permute.xlu0 %2245
        %v2279 = vsel %vm777, %v1927, %v2056
        %v2280 = vsel %vm777, %v1928, %v2058
        %v2281 = vsel %vm777, %v1929, %v2060
        %v2282 = vsel %vm777, %v1930, %v2062
        %v2283 = vsel %vm777, %v1931, %v2064
        %v2284 = vsel %vm777, %v1932, %v2066
        %v2285 = vsel %vm777, %v1933, %v2068
        %v2286 = vsel %vm777, %v1934, %v2070
        %v2287 = vsel %vm777, %v1935, %v2072
        %v2288 = vsel %vm777, %v1936, %v2074
        %v2289 = vsel %vm777, %v1937, %v2076
        %v2290 = vsel %vm777, %v1938, %v2078
        %v2291 = vsel %vm777, %v1939, %v2080
        %v2292 = vsel %vm777, %v1940, %v2082
        %v2293 = vsel %vm777, %v1941, %v2084
        %v2294 = vsel %vm777, %v1942, %v2086
        %v2295 = vsel %vm777, %v1943, %v2088
        %v2296 = vsel %vm777, %v1944, %v2090
        %v2297 = vsel %vm777, %v1945, %v2092
        %v2298 = vsel %vm777, %v1946, %v2094
        %v2299 = vsel %vm777, %v1947, %v2096
        %v2300 = vsel %vm777, %v1948, %v2098
        %v2301 = vsel %vm777, %v1949, %v2100
        %v2302 = vsel %vm777, %v1950, %v2102
        %v2303 = vsel %vm777, %v1951, %v2104
        %v2304 = vsel %vm777, %v1952, %v2106
        %v2305 = vsel %vm777, %v1953, %v2108
        %v2306 = vsel %vm777, %v1954, %v2110
        %v2307 = vsel %vm777, %v1955, %v2112
        %v2308 = vsel %vm777, %v1956, %v2114
        %v2309 = vsel %vm777, %v1957, %v2116
        %v2310 = vsel %vm777, %v1958, %v2118
        %v2311 = vsel %vm810, %v2279, %v2184
        %v2312 = vsel %vm810, %v2280, %v2186
        %v2313 = vsel %vm810, %v2281, %v2188
        %v2314 = vsel %vm810, %v2282, %v2190
        %v2315 = vsel %vm810, %v2283, %v2192
        %v2316 = vsel %vm810, %v2284, %v2194
        %v2317 = vsel %vm810, %v2285, %v2196
        %v2318 = vsel %vm810, %v2286, %v2198
        %v2319 = vsel %vm810, %v2287, %v2200
        %v2320 = vsel %vm810, %v2288, %v2202
        %v2321 = vsel %vm810, %v2289, %v2204
        %v2322 = vsel %vm810, %v2290, %v2206
        %v2323 = vsel %vm810, %v2291, %v2208
        %v2324 = vsel %vm810, %v2292, %v2210
        %v2325 = vsel %vm810, %v2293, %v2212
        %v2326 = vsel %vm810, %v2294, %v2214
        %v2327 = vsel %vm810, %v2295, %v2216
        %v2328 = vsel %vm810, %v2296, %v2218
        %v2329 = vsel %vm810, %v2297, %v2220
        %v2330 = vsel %vm810, %v2298, %v2222
        %v2331 = vsel %vm810, %v2299, %v2224
        %v2332 = vsel %vm810, %v2300, %v2226
        %v2333 = vsel %vm810, %v2301, %v2228
        %v2334 = vsel %vm810, %v2302, %v2230
        %v2335 = vsel %vm810, %v2303, %v2232
        %v2336 = vsel %vm810, %v2304, %v2234
        %v2337 = vsel %vm810, %v2305, %v2236
        %v2338 = vsel %vm810, %v2306, %v2238
        %v2339 = vsel %vm810, %v2307, %v2240
        %v2340 = vsel %vm810, %v2308, %v2242
        %v2341 = vsel %vm810, %v2309, %v2244
        %v2342 = vsel %vm810, %v2310, %v2246
        %s2343 = scalar_lea.vmem %s1, 192
        %v2344 = vld [vmem:[%s2343] sm:$0xff]
        %v2345 = vld [vmem:[%s2343 + $0x8] sm:$0xff]
        %v2346 = vld [vmem:[%s2343 + $0x10] sm:$0xff]
        %v2347 = vld [vmem:[%s2343 + $0x18] sm:$0xff]
        %v2348 = vld [vmem:[%s2343 + $0x20] sm:$0xff]
        %v2349 = vld [vmem:[%s2343 + $0x28] sm:$0xff]
        %v2350 = vld [vmem:[%s2343 + $0x30] sm:$0xff]
        %v2351 = vld [vmem:[%s2343 + $0x38] sm:$0xff]
        %v2352 = vld [vmem:[%s2343 + $0x40] sm:$0xff]
        %v2353 = vld [vmem:[%s2343 + $0x48] sm:$0xff]
        %v2354 = vld [vmem:[%s2343 + $0x50] sm:$0xff]
        %v2355 = vld [vmem:[%s2343 + $0x58] sm:$0xff]
        %v2357 = vsel %vm1284, %v2311, 0
        %v2360 = vsel %vm1284, %v2312, 0
        %v2363 = vsel %vm1284, %v2313, 0
        %v2366 = vsel %vm1284, %v2314, 0
        %v2369 = vsel %vm1284, %v2315, 0
        %v2372 = vsel %vm1284, %v2316, 0
        %v2375 = vsel %vm1284, %v2317, 0
        %v2378 = vsel %vm1284, %v2318, 0
        %v2381 = vsel %vm1284, %v2319, 0
        %v2384 = vsel %vm1284, %v2320, 0
        %v2387 = vsel %vm1284, %v2321, 0
        %v2390 = vsel %vm1284, %v2322, 0
        %v2393 = vsel %vm1284, %v2323, 0
        %v2396 = vsel %vm1284, %v2324, 0
        %v2399 = vsel %vm1284, %v2325, 0
        %v2402 = vsel %vm1284, %v2326, 0
        %v2405 = vsel %vm1284, %v2327, 0
        %v2408 = vsel %vm1284, %v2328, 0
        %v2411 = vsel %vm1284, %v2329, 0
        %v2414 = vsel %vm1284, %v2330, 0
        %v2417 = vsel %vm1284, %v2331, 0
        %v2420 = vsel %vm1284, %v2332, 0
        %v2423 = vsel %vm1284, %v2333, 0
        %v2426 = vsel %vm1284, %v2334, 0
        %v2429 = vsel %vm1284, %v2335, 0
        %v2432 = vsel %vm1284, %v2336, 0
        %v2435 = vsel %vm1284, %v2337, 0
        %v2438 = vsel %vm1284, %v2338, 0
        %v2441 = vsel %vm1284, %v2339, 0
        %v2444 = vsel %vm1284, %v2340, 0
        %v2447 = vsel %vm1284, %v2341, 0
        %v2450 = vsel %vm1284, %v2342, 0
        %2452 = vmatprep.subr.mxu0 0.0
        %2453 = vmatpush1.msra.mxu0 %v2344
        %2454 = vmatprep.subr.mxu0 0.0
        %2455 = vmatpush1.msra.mxu0 %v2345
        %2456 = vmatprep.subr.mxu0 0.0
        %2457 = vmatpush1.msra.mxu0 %v2346
        %2458 = vmatprep.subr.mxu0 0.0
        %2459 = vmatpush1.msra.mxu0 %v2347
        %2460 = vmatprep.subr.mxu0 0.0
        %2461 = vmatpush1.msra.mxu0 %v2348
        %2462 = vmatprep.subr.mxu0 0.0
        %2463 = vmatpush1.msra.mxu0 %v2349
        %2464 = vmatprep.subr.mxu0 0.0
        %2465 = vmatpush1.msra.mxu0 %v2350
        %2466 = vmatprep.subr.mxu0 0.0
        %2467 = vmatpush1.msra.mxu0 %v2351
        %2468 = vmatprep.subr.mxu0 0.0
        %2469 = vmatpush1.msra.mxu0 %v2352
        %2470 = vmatprep.subr.mxu0 0.0
        %2471 = vmatpush1.msra.mxu0 %v2353
        %2472 = vmatprep.subr.mxu0 0.0
        %2473 = vmatpush1.msra.mxu0 %v2354
        %2474 = vmatprep.subr.mxu0 0.0
        %2475 = vmatpush1.msra.mxu0 %v2355
        %2476 = vmatprep.subr.mxu0 0.0
        %2477 = vmatpush1.msra.mxu0 0.0
        %2478 = vmatprep.subr.mxu0 0.0
        %2479 = vmatpush1.msra.mxu0 0.0
        %2480 = vmatprep.subr.mxu0 0.0
        %2481 = vmatpush1.msra.mxu0 0.0
        %2482 = vmatprep.subr.mxu0 0.0
        %2483 = vmatpush1.msra.mxu0 0.0
        %2484 = vmatprep.subr.mxu0 0.0
        %2485 = vmatpush1.msra.mxu0 0.0
        %2486 = vmatprep.subr.mxu0 0.0
        %2487 = vmatpush1.msra.mxu0 0.0
        %2488 = vmatprep.subr.mxu0 0.0
        %2489 = vmatpush1.msra.mxu0 0.0
        %2490 = vmatprep.subr.mxu0 0.0
        %2491 = vmatpush1.msra.mxu0 0.0
        %2492 = vmatprep.subr.mxu0 0.0
        %2493 = vmatpush1.msra.mxu0 0.0
        %2494 = vmatprep.subr.mxu0 0.0
        %2495 = vmatpush1.msra.mxu0 0.0
        %2496 = vmatprep.subr.mxu0 0.0
        %2497 = vmatpush1.msra.mxu0 0.0
        %2498 = vmatprep.subr.mxu0 0.0
        %2499 = vmatpush1.msra.mxu0 0.0
        %2500 = vmatprep.subr.mxu0 0.0
        %2501 = vmatpush1.msra.mxu0 0.0
        %2502 = vmatprep.subr.mxu0 0.0
        %2503 = vmatpush1.msra.mxu0 0.0
        %2504 = vmatprep.subr.mxu0 0.0
        %2505 = vmatpush1.msra.mxu0 0.0
        %2506 = vmatprep.subr.mxu0 0.0
        %2507 = vmatpush1.msra.mxu0 0.0
        %2508 = vmatprep.subr.mxu0 0.0
        %2509 = vmatpush1.msra.mxu0 0.0
        %2510 = vmatprep.subr.mxu0 0.0
        %2511 = vmatpush1.msra.mxu0 0.0
        %2512 = vmatprep.subr.mxu0 0.0
        %2513 = vmatpush1.msra.mxu0 0.0
        %2514 = vmatprep.subr.mxu0 0.0
        %2515 = vmatpush1.msra.mxu0 0.0
        %2516 = vmatprep.mubr.f32.mxu0 0.0
        %2517 = vmatmul.mubr.f32.gmra.mrb[0].mxu0 %v2357
        %v2518 = vpop.f32.mrb[0].mxu0
        %v2519 = vadd.f32 0.0, %v2518
        %v2520 = vpop.f32.mrb[0].mxu0
        %2521 = vmatprep.mubr.f32.mxu0 0.0
        %2522 = vmatmul.mubr.f32.gmra.mrb[0].mxu0 %v2360
        %v2523 = vpop.f32.mrb[0].mxu0
        %v2524 = vadd.f32 0.0, %v2523
        %v2525 = vpop.f32.mrb[0].mxu0
        %2526 = vmatprep.mubr.f32.mxu0 0.0
        %2527 = vmatmul.mubr.f32.gmra.mrb[0].mxu0 %v2363
        %v2528 = vpop.f32.mrb[0].mxu0
        %v2529 = vadd.f32 0.0, %v2528
        %v2530 = vpop.f32.mrb[0].mxu0
        %2531 = vmatprep.mubr.f32.mxu0 0.0
        %2532 = vmatmul.mubr.f32.gmra.mrb[0].mxu0 %v2366
        %v2533 = vpop.f32.mrb[0].mxu0
        %v2534 = vadd.f32 0.0, %v2533
        %v2535 = vpop.f32.mrb[0].mxu0
        %2536 = vmatprep.mubr.f32.mxu0 0.0
        %2537 = vmatmul.mubr.f32.gmra.mrb[0].mxu0 %v2369
        %v2538 = vpop.f32.mrb[0].mxu0
        %v2539 = vadd.f32 0.0, %v2538
        %v2540 = vpop.f32.mrb[0].mxu0
        %2541 = vmatprep.mubr.f32.mxu0 0.0
        %2542 = vmatmul.mubr.f32.gmra.mrb[0].mxu0 %v2372
        %v2543 = vpop.f32.mrb[0].mxu0
        %v2544 = vadd.f32 0.0, %v2543
        %v2545 = vpop.f32.mrb[0].mxu0
        %2546 = vmatprep.mubr.f32.mxu0 0.0
        %2547 = vmatmul.mubr.f32.gmra.mrb[0].mxu0 %v2375
        %v2548 = vpop.f32.mrb[0].mxu0
        %v2549 = vadd.f32 0.0, %v2548
        %v2550 = vpop.f32.mrb[0].mxu0
        %2551 = vmatprep.mubr.f32.mxu0 0.0
        %2552 = vmatmul.mubr.f32.gmra.mrb[0].mxu0 %v2378
        %v2553 = vpop.f32.mrb[0].mxu0
        %v2554 = vadd.f32 0.0, %v2553
        %v2555 = vpop.f32.mrb[0].mxu0
        %2556 = vmatprep.mubr.f32.mxu0 0.0
        %2557 = vmatmul.mubr.f32.gmra.mrb[0].mxu0 %v2381
        %v2558 = vpop.f32.mrb[0].mxu0
        %v2559 = vadd.f32 0.0, %v2558
        %v2560 = vpop.f32.mrb[0].mxu0
        %2561 = vmatprep.mubr.f32.mxu0 0.0
        %2562 = vmatmul.mubr.f32.gmra.mrb[0].mxu0 %v2384
        %v2563 = vpop.f32.mrb[0].mxu0
        %v2564 = vadd.f32 0.0, %v2563
        %v2565 = vpop.f32.mrb[0].mxu0
        %2566 = vmatprep.mubr.f32.mxu0 0.0
        %2567 = vmatmul.mubr.f32.gmra.mrb[0].mxu0 %v2387
        %v2568 = vpop.f32.mrb[0].mxu0
        %v2569 = vadd.f32 0.0, %v2568
        %v2570 = vpop.f32.mrb[0].mxu0
        %2571 = vmatprep.mubr.f32.mxu0 0.0
        %2572 = vmatmul.mubr.f32.gmra.mrb[0].mxu0 %v2390
        %v2573 = vpop.f32.mrb[0].mxu0
        %v2574 = vadd.f32 0.0, %v2573
        %v2575 = vpop.f32.mrb[0].mxu0
        %2576 = vmatprep.mubr.f32.mxu0 0.0
        %2577 = vmatmul.mubr.f32.gmra.mrb[0].mxu0 %v2393
        %v2578 = vpop.f32.mrb[0].mxu0
        %v2579 = vadd.f32 0.0, %v2578
        %v2580 = vpop.f32.mrb[0].mxu0
        %2581 = vmatprep.mubr.f32.mxu0 0.0
        %2582 = vmatmul.mubr.f32.gmra.mrb[0].mxu0 %v2396
        %v2583 = vpop.f32.mrb[0].mxu0
        %v2584 = vadd.f32 0.0, %v2583
        %v2585 = vpop.f32.mrb[0].mxu0
        %2586 = vmatprep.mubr.f32.mxu0 0.0
        %2587 = vmatmul.mubr.f32.gmra.mrb[0].mxu0 %v2399
        %v2588 = vpop.f32.mrb[0].mxu0
        %v2589 = vadd.f32 0.0, %v2588
        %v2590 = vpop.f32.mrb[0].mxu0
        %2591 = vmatprep.mubr.f32.mxu0 0.0
        %2592 = vmatmul.mubr.f32.gmra.mrb[0].mxu0 %v2402
        %v2593 = vpop.f32.mrb[0].mxu0
        %v2594 = vadd.f32 0.0, %v2593
        %v2595 = vpop.f32.mrb[0].mxu0
        %2596 = vmatprep.mubr.f32.mxu0 0.0
        %2597 = vmatmul.mubr.f32.gmra.mrb[0].mxu0 %v2405
        %v2598 = vpop.f32.mrb[0].mxu0
        %v2599 = vadd.f32 0.0, %v2598
        %v2600 = vpop.f32.mrb[0].mxu0
        %2601 = vmatprep.mubr.f32.mxu0 0.0
        %2602 = vmatmul.mubr.f32.gmra.mrb[0].mxu0 %v2408
        %v2603 = vpop.f32.mrb[0].mxu0
        %v2604 = vadd.f32 0.0, %v2603
        %v2605 = vpop.f32.mrb[0].mxu0
        %2606 = vmatprep.mubr.f32.mxu0 0.0
        %2607 = vmatmul.mubr.f32.gmra.mrb[0].mxu0 %v2411
        %v2608 = vpop.f32.mrb[0].mxu0
        %v2609 = vadd.f32 0.0, %v2608
        %v2610 = vpop.f32.mrb[0].mxu0
        %2611 = vmatprep.mubr.f32.mxu0 0.0
        %2612 = vmatmul.mubr.f32.gmra.mrb[0].mxu0 %v2414
        %v2613 = vpop.f32.mrb[0].mxu0
        %v2614 = vadd.f32 0.0, %v2613
        %v2615 = vpop.f32.mrb[0].mxu0
        %2616 = vmatprep.mubr.f32.mxu0 0.0
        %2617 = vmatmul.mubr.f32.gmra.mrb[0].mxu0 %v2417
        %v2618 = vpop.f32.mrb[0].mxu0
        %v2619 = vadd.f32 0.0, %v2618
        %v2620 = vpop.f32.mrb[0].mxu0
        %2621 = vmatprep.mubr.f32.mxu0 0.0
        %2622 = vmatmul.mubr.f32.gmra.mrb[0].mxu0 %v2420
        %v2623 = vpop.f32.mrb[0].mxu0
        %v2624 = vadd.f32 0.0, %v2623
        %v2625 = vpop.f32.mrb[0].mxu0
        %2626 = vmatprep.mubr.f32.mxu0 0.0
        %2627 = vmatmul.mubr.f32.gmra.mrb[0].mxu0 %v2423
        %v2628 = vpop.f32.mrb[0].mxu0
        %v2629 = vadd.f32 0.0, %v2628
        %v2630 = vpop.f32.mrb[0].mxu0
        %2631 = vmatprep.mubr.f32.mxu0 0.0
        %2632 = vmatmul.mubr.f32.gmra.mrb[0].mxu0 %v2426
        %v2633 = vpop.f32.mrb[0].mxu0
        %v2634 = vadd.f32 0.0, %v2633
        %v2635 = vpop.f32.mrb[0].mxu0
        %2636 = vmatprep.mubr.f32.mxu0 0.0
        %2637 = vmatmul.mubr.f32.gmra.mrb[0].mxu0 %v2429
        %v2638 = vpop.f32.mrb[0].mxu0
        %v2639 = vadd.f32 0.0, %v2638
        %v2640 = vpop.f32.mrb[0].mxu0
        %2641 = vmatprep.mubr.f32.mxu0 0.0
        %2642 = vmatmul.mubr.f32.gmra.mrb[0].mxu0 %v2432
        %v2643 = vpop.f32.mrb[0].mxu0
        %v2644 = vadd.f32 0.0, %v2643
        %v2645 = vpop.f32.mrb[0].mxu0
        %2646 = vmatprep.mubr.f32.mxu0 0.0
        %2647 = vmatmul.mubr.f32.gmra.mrb[0].mxu0 %v2435
        %v2648 = vpop.f32.mrb[0].mxu0
        %v2649 = vadd.f32 0.0, %v2648
        %v2650 = vpop.f32.mrb[0].mxu0
        %2651 = vmatprep.mubr.f32.mxu0 0.0
        %2652 = vmatmul.mubr.f32.gmra.mrb[0].mxu0 %v2438
        %v2653 = vpop.f32.mrb[0].mxu0
        %v2654 = vadd.f32 0.0, %v2653
        %v2655 = vpop.f32.mrb[0].mxu0
        %2656 = vmatprep.mubr.f32.mxu0 0.0
        %2657 = vmatmul.mubr.f32.gmra.mrb[0].mxu0 %v2441
        %v2658 = vpop.f32.mrb[0].mxu0
        %v2659 = vadd.f32 0.0, %v2658
        %v2660 = vpop.f32.mrb[0].mxu0
        %2661 = vmatprep.mubr.f32.mxu0 0.0
        %2662 = vmatmul.mubr.f32.gmra.mrb[0].mxu0 %v2444
        %v2663 = vpop.f32.mrb[0].mxu0
        %v2664 = vadd.f32 0.0, %v2663
        %v2665 = vpop.f32.mrb[0].mxu0
        %2666 = vmatprep.mubr.f32.mxu0 0.0
        %2667 = vmatmul.mubr.f32.gmra.mrb[0].mxu0 %v2447
        %v2668 = vpop.f32.mrb[0].mxu0
        %v2669 = vadd.f32 0.0, %v2668
        %v2670 = vpop.f32.mrb[0].mxu0
        %2671 = vmatprep.mubr.f32.mxu0 0.0
        %2672 = vmatmul.mubr.f32.gmra.mrb[0].mxu0 %v2450
        %v2673 = vpop.f32.mrb[0].mxu0
        %v2674 = vadd.f32 0.0, %v2673
        %v2675 = vpop.f32.mrb[0].mxu0
        %2676 = vdwg.mxu0
        %v2677 = vadd.f32 %v1769, %v2519
        %v2678 = vadd.f32 %v1774, %v2524
        %v2679 = vadd.f32 %v1779, %v2529
        %v2680 = vadd.f32 %v1784, %v2534
        %v2681 = vadd.f32 %v1789, %v2539
        %v2682 = vadd.f32 %v1794, %v2544
        %v2683 = vadd.f32 %v1799, %v2549
        %v2684 = vadd.f32 %v1804, %v2554
        %v2685 = vadd.f32 %v1809, %v2559
        %v2686 = vadd.f32 %v1814, %v2564
        %v2687 = vadd.f32 %v1819, %v2569
        %v2688 = vadd.f32 %v1824, %v2574
        %v2689 = vadd.f32 %v1829, %v2579
        %v2690 = vadd.f32 %v1834, %v2584
        %v2691 = vadd.f32 %v1839, %v2589
        %v2692 = vadd.f32 %v1844, %v2594
        %v2693 = vadd.f32 %v1849, %v2599
        %v2694 = vadd.f32 %v1854, %v2604
        %v2695 = vadd.f32 %v1859, %v2609
        %v2696 = vadd.f32 %v1864, %v2614
        %v2697 = vadd.f32 %v1869, %v2619
        %v2698 = vadd.f32 %v1874, %v2624
        %v2699 = vadd.f32 %v1879, %v2629
        %v2700 = vadd.f32 %v1884, %v2634
        %v2701 = vadd.f32 %v1889, %v2639
        %v2702 = vadd.f32 %v1894, %v2644
        %v2703 = vadd.f32 %v1899, %v2649
        %v2704 = vadd.f32 %v1904, %v2654
        %v2705 = vadd.f32 %v1909, %v2659
        %v2706 = vadd.f32 %v1914, %v2664
        %v2707 = vadd.f32 %v1919, %v2669
        %v2708 = vadd.f32 %v1924, %v2674
        %s2709 = scalar_lea.vmem %s422, 96
        %v2710 = vld [vmem:[%s2709 + $0x3] sm:$0xff]
        %v2711 = vld [vmem:[%s2709 + $0xb] sm:$0xff]
        %v2712 = vld [vmem:[%s2709 + $0x1b] sm:$0xff]
        %v2713 = vld [vmem:[%s2709 + $0x23] sm:$0xff]
        %v2714 = vld [vmem:[%s2709 + $0x33] sm:$0xff]
        %v2715 = vld [vmem:[%s2709 + $0x3b] sm:$0xff]
        %v2716 = vld [vmem:[%s2709 + $0x4b] sm:$0xff]
        %v2717 = vld [vmem:[%s2709 + $0x53] sm:$0xff]
        %v2718 = vld [vmem:[%s2709 + $0x63] sm:$0xff]
        %v2719 = vld [vmem:[%s2709 + $0x6b] sm:$0xff]
        %v2720 = vld [vmem:[%s2709 + $0x7b] sm:$0xff]
        %v2721 = vld [vmem:[%s2709 + $0x83] sm:$0xff]
        %v2722 = vld [vmem:[%s2709 + $0x93] sm:$0xff]
        %v2723 = vld [vmem:[%s2709 + $0x9b] sm:$0xff]
        %v2724 = vld [vmem:[%s2709 + $0xab] sm:$0xff]
        %v2725 = vld [vmem:[%s2709 + $0xb3] sm:$0xff]
        %v2726 = vld [vmem:[%s2709 + $0xc3] sm:$0xff]
        %v2727 = vld [vmem:[%s2709 + $0xcb] sm:$0xff]
        %v2728 = vld [vmem:[%s2709 + $0xdb] sm:$0xff]
        %v2729 = vld [vmem:[%s2709 + $0xe3] sm:$0xff]
        %v2730 = vld [vmem:[%s2709 + $0xf3] sm:$0xff]
        %v2731 = vld [vmem:[%s2709 + $0xfb] sm:$0xff]
        %v2732 = vld [vmem:[%s2709 + $0x10b] sm:$0xff]
        %v2733 = vld [vmem:[%s2709 + $0x113] sm:$0xff]
        %v2734 = vld [vmem:[%s2709 + $0x123] sm:$0xff]
        %v2735 = vld [vmem:[%s2709 + $0x12b] sm:$0xff]
        %v2736 = vld [vmem:[%s2709 + $0x13b] sm:$0xff]
        %v2737 = vld [vmem:[%s2709 + $0x143] sm:$0xff]
        %v2738 = vld [vmem:[%s2709 + $0x153] sm:$0xff]
        %v2739 = vld [vmem:[%s2709 + $0x15b] sm:$0xff]
        %v2740 = vld [vmem:[%s2709 + $0x16b] sm:$0xff]
        %v2741 = vld [vmem:[%s2709 + $0x173] sm:$0xff]
        %v2742 = vld [vmem:[%s2709 + $0x2] sm:$0xff]
        %v2743 = vld [vmem:[%s2709 + $0xa] sm:$0xff]
        %v2744 = vld [vmem:[%s2709 + $0x1a] sm:$0xff]
        %v2745 = vld [vmem:[%s2709 + $0x22] sm:$0xff]
        %v2746 = vld [vmem:[%s2709 + $0x32] sm:$0xff]
        %v2747 = vld [vmem:[%s2709 + $0x3a] sm:$0xff]
        %v2748 = vld [vmem:[%s2709 + $0x4a] sm:$0xff]
        %v2749 = vld [vmem:[%s2709 + $0x52] sm:$0xff]
        %v2750 = vld [vmem:[%s2709 + $0x62] sm:$0xff]
        %v2751 = vld [vmem:[%s2709 + $0x6a] sm:$0xff]
        %v2752 = vld [vmem:[%s2709 + $0x7a] sm:$0xff]
        %v2753 = vld [vmem:[%s2709 + $0x82] sm:$0xff]
        %v2754 = vld [vmem:[%s2709 + $0x92] sm:$0xff]
        %v2755 = vld [vmem:[%s2709 + $0x9a] sm:$0xff]
        %v2756 = vld [vmem:[%s2709 + $0xaa] sm:$0xff]
        %v2757 = vld [vmem:[%s2709 + $0xb2] sm:$0xff]
        %v2758 = vld [vmem:[%s2709 + $0xc2] sm:$0xff]
        %v2759 = vld [vmem:[%s2709 + $0xca] sm:$0xff]
        %v2760 = vld [vmem:[%s2709 + $0xda] sm:$0xff]
        %v2761 = vld [vmem:[%s2709 + $0xe2] sm:$0xff]
        %v2762 = vld [vmem:[%s2709 + $0xf2] sm:$0xff]
        %v2763 = vld [vmem:[%s2709 + $0xfa] sm:$0xff]
        %v2764 = vld [vmem:[%s2709 + $0x10a] sm:$0xff]
        %v2765 = vld [vmem:[%s2709 + $0x112] sm:$0xff]
        %v2766 = vld [vmem:[%s2709 + $0x122] sm:$0xff]
        %v2767 = vld [vmem:[%s2709 + $0x12a] sm:$0xff]
        %v2768 = vld [vmem:[%s2709 + $0x13a] sm:$0xff]
        %v2769 = vld [vmem:[%s2709 + $0x142] sm:$0xff]
        %v2770 = vld [vmem:[%s2709 + $0x152] sm:$0xff]
        %v2771 = vld [vmem:[%s2709 + $0x15a] sm:$0xff]
        %v2772 = vld [vmem:[%s2709 + $0x16a] sm:$0xff]
        %v2773 = vld [vmem:[%s2709 + $0x172] sm:$0xff]
        %v2774 = vld [vmem:[%s2709] sm:$0xff]
        %v2775 = vld [vmem:[%s2709 + $0x8] sm:$0xff]
        %v2776 = vld [vmem:[%s2709 + $0x18] sm:$0xff]
        %v2777 = vld [vmem:[%s2709 + $0x20] sm:$0xff]
        %v2778 = vld [vmem:[%s2709 + $0x30] sm:$0xff]
        %v2779 = vld [vmem:[%s2709 + $0x38] sm:$0xff]
        %v2780 = vld [vmem:[%s2709 + $0x48] sm:$0xff]
        %v2781 = vld [vmem:[%s2709 + $0x50] sm:$0xff]
        %v2782 = vld [vmem:[%s2709 + $0x60] sm:$0xff]
        %v2783 = vld [vmem:[%s2709 + $0x68] sm:$0xff]
        %v2784 = vld [vmem:[%s2709 + $0x78] sm:$0xff]
        %v2785 = vld [vmem:[%s2709 + $0x80] sm:$0xff]
        %v2786 = vld [vmem:[%s2709 + $0x90] sm:$0xff]
        %v2787 = vld [vmem:[%s2709 + $0x98] sm:$0xff]
        %v2788 = vld [vmem:[%s2709 + $0xa8] sm:$0xff]
        %v2789 = vld [vmem:[%s2709 + $0xb0] sm:$0xff]
        %v2790 = vld [vmem:[%s2709 + $0xc0] sm:$0xff]
        %v2791 = vld [vmem:[%s2709 + $0xc8] sm:$0xff]
        %v2792 = vld [vmem:[%s2709 + $0xd8] sm:$0xff]
        %v2793 = vld [vmem:[%s2709 + $0xe0] sm:$0xff]
        %v2794 = vld [vmem:[%s2709 + $0xf0] sm:$0xff]
        %v2795 = vld [vmem:[%s2709 + $0xf8] sm:$0xff]
        %v2796 = vld [vmem:[%s2709 + $0x108] sm:$0xff]
        %v2797 = vld [vmem:[%s2709 + $0x110] sm:$0xff]
        %v2798 = vld [vmem:[%s2709 + $0x120] sm:$0xff]
        %v2799 = vld [vmem:[%s2709 + $0x128] sm:$0xff]
        %v2800 = vld [vmem:[%s2709 + $0x138] sm:$0xff]
        %v2801 = vld [vmem:[%s2709 + $0x140] sm:$0xff]
        %v2802 = vld [vmem:[%s2709 + $0x150] sm:$0xff]
        %v2803 = vld [vmem:[%s2709 + $0x158] sm:$0xff]
        %v2804 = vld [vmem:[%s2709 + $0x168] sm:$0xff]
        %v2805 = vld [vmem:[%s2709 + $0x170] sm:$0xff]
        %2838 = vrot.lane.b32.xlu0 %v2742, 32
        %v2839 = vpop.permute.xlu0 %2838
        %2840 = vrot.lane.b32.xlu0 %v2743, 32
        %v2841 = vpop.permute.xlu0 %2840
        %2842 = vrot.lane.b32.xlu0 %v2744, 32
        %v2843 = vpop.permute.xlu0 %2842
        %2844 = vrot.lane.b32.xlu0 %v2745, 32
        %v2845 = vpop.permute.xlu0 %2844
        %2846 = vrot.lane.b32.xlu0 %v2746, 32
        %v2847 = vpop.permute.xlu0 %2846
        %2848 = vrot.lane.b32.xlu0 %v2747, 32
        %v2849 = vpop.permute.xlu0 %2848
        %2850 = vrot.lane.b32.xlu0 %v2748, 32
        %v2851 = vpop.permute.xlu0 %2850
        %2852 = vrot.lane.b32.xlu0 %v2749, 32
        %v2853 = vpop.permute.xlu0 %2852
        %2854 = vrot.lane.b32.xlu0 %v2750, 32
        %v2855 = vpop.permute.xlu0 %2854
        %2856 = vrot.lane.b32.xlu0 %v2751, 32
        %v2857 = vpop.permute.xlu0 %2856
        %2858 = vrot.lane.b32.xlu0 %v2752, 32
        %v2859 = vpop.permute.xlu0 %2858
        %2860 = vrot.lane.b32.xlu0 %v2753, 32
        %v2861 = vpop.permute.xlu0 %2860
        %2862 = vrot.lane.b32.xlu0 %v2754, 32
        %v2863 = vpop.permute.xlu0 %2862
        %2864 = vrot.lane.b32.xlu0 %v2755, 32
        %v2865 = vpop.permute.xlu0 %2864
        %2866 = vrot.lane.b32.xlu0 %v2756, 32
        %v2867 = vpop.permute.xlu0 %2866
        %2868 = vrot.lane.b32.xlu0 %v2757, 32
        %v2869 = vpop.permute.xlu0 %2868
        %2870 = vrot.lane.b32.xlu0 %v2758, 32
        %v2871 = vpop.permute.xlu0 %2870
        %2872 = vrot.lane.b32.xlu0 %v2759, 32
        %v2873 = vpop.permute.xlu0 %2872
        %2874 = vrot.lane.b32.xlu0 %v2760, 32
        %v2875 = vpop.permute.xlu0 %2874
        %2876 = vrot.lane.b32.xlu0 %v2761, 32
        %v2877 = vpop.permute.xlu0 %2876
        %2878 = vrot.lane.b32.xlu0 %v2762, 32
        %v2879 = vpop.permute.xlu0 %2878
        %2880 = vrot.lane.b32.xlu0 %v2763, 32
        %v2881 = vpop.permute.xlu0 %2880
        %2882 = vrot.lane.b32.xlu0 %v2764, 32
        %v2883 = vpop.permute.xlu0 %2882
        %2884 = vrot.lane.b32.xlu0 %v2765, 32
        %v2885 = vpop.permute.xlu0 %2884
        %2886 = vrot.lane.b32.xlu0 %v2766, 32
        %v2887 = vpop.permute.xlu0 %2886
        %2888 = vrot.lane.b32.xlu0 %v2767, 32
        %v2889 = vpop.permute.xlu0 %2888
        %2890 = vrot.lane.b32.xlu0 %v2768, 32
        %v2891 = vpop.permute.xlu0 %2890
        %2892 = vrot.lane.b32.xlu0 %v2769, 32
        %v2893 = vpop.permute.xlu0 %2892
        %2894 = vrot.lane.b32.xlu0 %v2770, 32
        %v2895 = vpop.permute.xlu0 %2894
        %2896 = vrot.lane.b32.xlu0 %v2771, 32
        %v2897 = vpop.permute.xlu0 %2896
        %2898 = vrot.lane.b32.xlu0 %v2772, 32
        %v2899 = vpop.permute.xlu0 %2898
        %2900 = vrot.lane.b32.xlu0 %v2773, 32
        %v2901 = vpop.permute.xlu0 %2900
        %2966 = vrot.lane.b32.xlu0 %v2774, 64
        %v2967 = vpop.permute.xlu0 %2966
        %2968 = vrot.lane.b32.xlu0 %v2775, 64
        %v2969 = vpop.permute.xlu0 %2968
        %2970 = vrot.lane.b32.xlu0 %v2776, 64
        %v2971 = vpop.permute.xlu0 %2970
        %2972 = vrot.lane.b32.xlu0 %v2777, 64
        %v2973 = vpop.permute.xlu0 %2972
        %2974 = vrot.lane.b32.xlu0 %v2778, 64
        %v2975 = vpop.permute.xlu0 %2974
        %2976 = vrot.lane.b32.xlu0 %v2779, 64
        %v2977 = vpop.permute.xlu0 %2976
        %2978 = vrot.lane.b32.xlu0 %v2780, 64
        %v2979 = vpop.permute.xlu0 %2978
        %2980 = vrot.lane.b32.xlu0 %v2781, 64
        %v2981 = vpop.permute.xlu0 %2980
        %2982 = vrot.lane.b32.xlu0 %v2782, 64
        %v2983 = vpop.permute.xlu0 %2982
        %2984 = vrot.lane.b32.xlu0 %v2783, 64
        %v2985 = vpop.permute.xlu0 %2984
        %2986 = vrot.lane.b32.xlu0 %v2784, 64
        %v2987 = vpop.permute.xlu0 %2986
        %2988 = vrot.lane.b32.xlu0 %v2785, 64
        %v2989 = vpop.permute.xlu0 %2988
        %2990 = vrot.lane.b32.xlu0 %v2786, 64
        %v2991 = vpop.permute.xlu0 %2990
        %2992 = vrot.lane.b32.xlu0 %v2787, 64
        %v2993 = vpop.permute.xlu0 %2992
        %2994 = vrot.lane.b32.xlu0 %v2788, 64
        %v2995 = vpop.permute.xlu0 %2994
        %2996 = vrot.lane.b32.xlu0 %v2789, 64
        %v2997 = vpop.permute.xlu0 %2996
        %2998 = vrot.lane.b32.xlu0 %v2790, 64
        %v2999 = vpop.permute.xlu0 %2998
        %3000 = vrot.lane.b32.xlu0 %v2791, 64
        %v3001 = vpop.permute.xlu0 %3000
        %3002 = vrot.lane.b32.xlu0 %v2792, 64
        %v3003 = vpop.permute.xlu0 %3002
        %3004 = vrot.lane.b32.xlu0 %v2793, 64
        %v3005 = vpop.permute.xlu0 %3004
        %3006 = vrot.lane.b32.xlu0 %v2794, 64
        %v3007 = vpop.permute.xlu0 %3006
        %3008 = vrot.lane.b32.xlu0 %v2795, 64
        %v3009 = vpop.permute.xlu0 %3008
        %3010 = vrot.lane.b32.xlu0 %v2796, 64
        %v3011 = vpop.permute.xlu0 %3010
        %3012 = vrot.lane.b32.xlu0 %v2797, 64
        %v3013 = vpop.permute.xlu0 %3012
        %3014 = vrot.lane.b32.xlu0 %v2798, 64
        %v3015 = vpop.permute.xlu0 %3014
        %3016 = vrot.lane.b32.xlu0 %v2799, 64
        %v3017 = vpop.permute.xlu0 %3016
        %3018 = vrot.lane.b32.xlu0 %v2800, 64
        %v3019 = vpop.permute.xlu0 %3018
        %3020 = vrot.lane.b32.xlu0 %v2801, 64
        %v3021 = vpop.permute.xlu0 %3020
        %3022 = vrot.lane.b32.xlu0 %v2802, 64
        %v3023 = vpop.permute.xlu0 %3022
        %3024 = vrot.lane.b32.xlu0 %v2803, 64
        %v3025 = vpop.permute.xlu0 %3024
        %3026 = vrot.lane.b32.xlu0 %v2804, 64
        %v3027 = vpop.permute.xlu0 %3026
        %3028 = vrot.lane.b32.xlu0 %v2805, 64
        %v3029 = vpop.permute.xlu0 %3028
        %v3062 = vsel %vm777, %v2710, %v2839
        %v3063 = vsel %vm777, %v2711, %v2841
        %v3064 = vsel %vm777, %v2712, %v2843
        %v3065 = vsel %vm777, %v2713, %v2845
        %v3066 = vsel %vm777, %v2714, %v2847
        %v3067 = vsel %vm777, %v2715, %v2849
        %v3068 = vsel %vm777, %v2716, %v2851
        %v3069 = vsel %vm777, %v2717, %v2853
        %v3070 = vsel %vm777, %v2718, %v2855
        %v3071 = vsel %vm777, %v2719, %v2857
        %v3072 = vsel %vm777, %v2720, %v2859
        %v3073 = vsel %vm777, %v2721, %v2861
        %v3074 = vsel %vm777, %v2722, %v2863
        %v3075 = vsel %vm777, %v2723, %v2865
        %v3076 = vsel %vm777, %v2724, %v2867
        %v3077 = vsel %vm777, %v2725, %v2869
        %v3078 = vsel %vm777, %v2726, %v2871
        %v3079 = vsel %vm777, %v2727, %v2873
        %v3080 = vsel %vm777, %v2728, %v2875
        %v3081 = vsel %vm777, %v2729, %v2877
        %v3082 = vsel %vm777, %v2730, %v2879
        %v3083 = vsel %vm777, %v2731, %v2881
        %v3084 = vsel %vm777, %v2732, %v2883
        %v3085 = vsel %vm777, %v2733, %v2885
        %v3086 = vsel %vm777, %v2734, %v2887
        %v3087 = vsel %vm777, %v2735, %v2889
        %v3088 = vsel %vm777, %v2736, %v2891
        %v3089 = vsel %vm777, %v2737, %v2893
        %v3090 = vsel %vm777, %v2738, %v2895
        %v3091 = vsel %vm777, %v2739, %v2897
        %v3092 = vsel %vm777, %v2740, %v2899
        %v3093 = vsel %vm777, %v2741, %v2901
        %v3094 = vsel %vm810, %v3062, %v2967
        %v3095 = vsel %vm810, %v3063, %v2969
        %v3096 = vsel %vm810, %v3064, %v2971
        %v3097 = vsel %vm810, %v3065, %v2973
        %v3098 = vsel %vm810, %v3066, %v2975
        %v3099 = vsel %vm810, %v3067, %v2977
        %v3100 = vsel %vm810, %v3068, %v2979
        %v3101 = vsel %vm810, %v3069, %v2981
        %v3102 = vsel %vm810, %v3070, %v2983
        %v3103 = vsel %vm810, %v3071, %v2985
        %v3104 = vsel %vm810, %v3072, %v2987
        %v3105 = vsel %vm810, %v3073, %v2989
        %v3106 = vsel %vm810, %v3074, %v2991
        %v3107 = vsel %vm810, %v3075, %v2993
        %v3108 = vsel %vm810, %v3076, %v2995
        %v3109 = vsel %vm810, %v3077, %v2997
        %v3110 = vsel %vm810, %v3078, %v2999
        %v3111 = vsel %vm810, %v3079, %v3001
        %v3112 = vsel %vm810, %v3080, %v3003
        %v3113 = vsel %vm810, %v3081, %v3005
        %v3114 = vsel %vm810, %v3082, %v3007
        %v3115 = vsel %vm810, %v3083, %v3009
        %v3116 = vsel %vm810, %v3084, %v3011
        %v3117 = vsel %vm810, %v3085, %v3013
        %v3118 = vsel %vm810, %v3086, %v3015
        %v3119 = vsel %vm810, %v3087, %v3017
        %v3120 = vsel %vm810, %v3088, %v3019
        %v3121 = vsel %vm810, %v3089, %v3021
        %v3122 = vsel %vm810, %v3090, %v3023
        %v3123 = vsel %vm810, %v3091, %v3025
        %v3124 = vsel %vm810, %v3092, %v3027
        %v3125 = vsel %vm810, %v3093, %v3029
        %s3126 = scalar_lea.vmem %s1, 288
        %v3127 = vld [vmem:[%s3126] sm:$0xff]
        %v3128 = vld [vmem:[%s3126 + $0x8] sm:$0xff]
        %v3129 = vld [vmem:[%s3126 + $0x10] sm:$0xff]
        %v3130 = vld [vmem:[%s3126 + $0x18] sm:$0xff]
        %v3131 = vld [vmem:[%s3126 + $0x20] sm:$0xff]
        %v3132 = vld [vmem:[%s3126 + $0x28] sm:$0xff]
        %v3133 = vld [vmem:[%s3126 + $0x30] sm:$0xff]
        %v3134 = vld [vmem:[%s3126 + $0x38] sm:$0xff]
        %v3135 = vld [vmem:[%s3126 + $0x40] sm:$0xff]
        %v3136 = vld [vmem:[%s3126 + $0x48] sm:$0xff]
        %v3137 = vld [vmem:[%s3126 + $0x50] sm:$0xff]
        %v3138 = vld [vmem:[%s3126 + $0x58] sm:$0xff]
        %v3140 = vsel %vm1284, %v3094, 0
        %v3143 = vsel %vm1284, %v3095, 0
        %v3146 = vsel %vm1284, %v3096, 0
        %v3149 = vsel %vm1284, %v3097, 0
        %v3152 = vsel %vm1284, %v3098, 0
        %v3155 = vsel %vm1284, %v3099, 0
        %v3158 = vsel %vm1284, %v3100, 0
        %v3161 = vsel %vm1284, %v3101, 0
        %v3164 = vsel %vm1284, %v3102, 0
        %v3167 = vsel %vm1284, %v3103, 0
        %v3170 = vsel %vm1284, %v3104, 0
        %v3173 = vsel %vm1284, %v3105, 0
        %v3176 = vsel %vm1284, %v3106, 0
        %v3179 = vsel %vm1284, %v3107, 0
        %v3182 = vsel %vm1284, %v3108, 0
        %v3185 = vsel %vm1284, %v3109, 0
        %v3188 = vsel %vm1284, %v3110, 0
        %v3191 = vsel %vm1284, %v3111, 0
        %v3194 = vsel %vm1284, %v3112, 0
        %v3197 = vsel %vm1284, %v3113, 0
        %v3200 = vsel %vm1284, %v3114, 0
        %v3203 = vsel %vm1284, %v3115, 0
        %v3206 = vsel %vm1284, %v3116, 0
        %v3209 = vsel %vm1284, %v3117, 0
        %v3212 = vsel %vm1284, %v3118, 0
        %v3215 = vsel %vm1284, %v3119, 0
        %v3218 = vsel %vm1284, %v3120, 0
        %v3221 = vsel %vm1284, %v3121, 0
        %v3224 = vsel %vm1284, %v3122, 0
        %v3227 = vsel %vm1284, %v3123, 0
        %v3230 = vsel %vm1284, %v3124, 0
        %v3233 = vsel %vm1284, %v3125, 0
        %3235 = vmatprep.subr.mxu0 0.0
        %3236 = vmatpush1.msra.mxu0 %v3127
        %3237 = vmatprep.subr.mxu0 0.0
        %3238 = vmatpush1.msra.mxu0 %v3128
        %3239 = vmatprep.subr.mxu0 0.0
        %3240 = vmatpush1.msra.mxu0 %v3129
        %3241 = vmatprep.subr.mxu0 0.0
        %3242 = vmatpush1.msra.mxu0 %v3130
        %3243 = vmatprep.subr.mxu0 0.0
        %3244 = vmatpush1.msra.mxu0 %v3131
        %3245 = vmatprep.subr.mxu0 0.0
        %3246 = vmatpush1.msra.mxu0 %v3132
        %3247 = vmatprep.subr.mxu0 0.0
        %3248 = vmatpush1.msra.mxu0 %v3133
        %3249 = vmatprep.subr.mxu0 0.0
        %3250 = vmatpush1.msra.mxu0 %v3134
        %3251 = vmatprep.subr.mxu0 0.0
        %3252 = vmatpush1.msra.mxu0 %v3135
        %3253 = vmatprep.subr.mxu0 0.0
        %3254 = vmatpush1.msra.mxu0 %v3136
        %3255 = vmatprep.subr.mxu0 0.0
        %3256 = vmatpush1.msra.mxu0 %v3137
        %3257 = vmatprep.subr.mxu0 0.0
        %3258 = vmatpush1.msra.mxu0 %v3138
        %3259 = vmatprep.subr.mxu0 0.0
        %3260 = vmatpush1.msra.mxu0 0.0
        %3261 = vmatprep.subr.mxu0 0.0
        %3262 = vmatpush1.msra.mxu0 0.0
        %3263 = vmatprep.subr.mxu0 0.0
        %3264 = vmatpush1.msra.mxu0 0.0
        %3265 = vmatprep.subr.mxu0 0.0
        %3266 = vmatpush1.msra.mxu0 0.0
        %3267 = vmatprep.subr.mxu0 0.0
        %3268 = vmatpush1.msra.mxu0 0.0
        %3269 = vmatprep.subr.mxu0 0.0
        %3270 = vmatpush1.msra.mxu0 0.0
        %3271 = vmatprep.subr.mxu0 0.0
        %3272 = vmatpush1.msra.mxu0 0.0
        %3273 = vmatprep.subr.mxu0 0.0
        %3274 = vmatpush1.msra.mxu0 0.0
        %3275 = vmatprep.subr.mxu0 0.0
        %3276 = vmatpush1.msra.mxu0 0.0
        %3277 = vmatprep.subr.mxu0 0.0
        %3278 = vmatpush1.msra.mxu0 0.0
        %3279 = vmatprep.subr.mxu0 0.0
        %3280 = vmatpush1.msra.mxu0 0.0
        %3281 = vmatprep.subr.mxu0 0.0
        %3282 = vmatpush1.msra.mxu0 0.0
        %3283 = vmatprep.subr.mxu0 0.0
        %3284 = vmatpush1.msra.mxu0 0.0
        %3285 = vmatprep.subr.mxu0 0.0
        %3286 = vmatpush1.msra.mxu0 0.0
        %3287 = vmatprep.subr.mxu0 0.0
        %3288 = vmatpush1.msra.mxu0 0.0
        %3289 = vmatprep.subr.mxu0 0.0
        %3290 = vmatpush1.msra.mxu0 0.0
        %3291 = vmatprep.subr.mxu0 0.0
        %3292 = vmatpush1.msra.mxu0 0.0
        %3293 = vmatprep.subr.mxu0 0.0
        %3294 = vmatpush1.msra.mxu0 0.0
        %3295 = vmatprep.subr.mxu0 0.0
        %3296 = vmatpush1.msra.mxu0 0.0
        %3297 = vmatprep.subr.mxu0 0.0
        %3298 = vmatpush1.msra.mxu0 0.0
        %3299 = vmatprep.mubr.f32.mxu0 0.0
        %3300 = vmatmul.mubr.f32.gmra.mrb[0].mxu0 %v3140
        %v3301 = vpop.f32.mrb[0].mxu0
        %v3302 = vadd.f32 0.0, %v3301
        %v3303 = vpop.f32.mrb[0].mxu0
        %3304 = vmatprep.mubr.f32.mxu0 0.0
        %3305 = vmatmul.mubr.f32.gmra.mrb[0].mxu0 %v3143
        %v3306 = vpop.f32.mrb[0].mxu0
        %v3307 = vadd.f32 0.0, %v3306
        %v3308 = vpop.f32.mrb[0].mxu0
        %3309 = vmatprep.mubr.f32.mxu0 0.0
        %3310 = vmatmul.mubr.f32.gmra.mrb[0].mxu0 %v3146
        %v3311 = vpop.f32.mrb[0].mxu0
        %v3312 = vadd.f32 0.0, %v3311
        %v3313 = vpop.f32.mrb[0].mxu0
        %3314 = vmatprep.mubr.f32.mxu0 0.0
        %3315 = vmatmul.mubr.f32.gmra.mrb[0].mxu0 %v3149
        %v3316 = vpop.f32.mrb[0].mxu0
        %v3317 = vadd.f32 0.0, %v3316
        %v3318 = vpop.f32.mrb[0].mxu0
        %3319 = vmatprep.mubr.f32.mxu0 0.0
        %3320 = vmatmul.mubr.f32.gmra.mrb[0].mxu0 %v3152
        %v3321 = vpop.f32.mrb[0].mxu0
        %v3322 = vadd.f32 0.0, %v3321
        %v3323 = vpop.f32.mrb[0].mxu0
        %3324 = vmatprep.mubr.f32.mxu0 0.0
        %3325 = vmatmul.mubr.f32.gmra.mrb[0].mxu0 %v3155
        %v3326 = vpop.f32.mrb[0].mxu0
        %v3327 = vadd.f32 0.0, %v3326
        %v3328 = vpop.f32.mrb[0].mxu0
        %3329 = vmatprep.mubr.f32.mxu0 0.0
        %3330 = vmatmul.mubr.f32.gmra.mrb[0].mxu0 %v3158
        %v3331 = vpop.f32.mrb[0].mxu0
        %v3332 = vadd.f32 0.0, %v3331
        %v3333 = vpop.f32.mrb[0].mxu0
        %3334 = vmatprep.mubr.f32.mxu0 0.0
        %3335 = vmatmul.mubr.f32.gmra.mrb[0].mxu0 %v3161
        %v3336 = vpop.f32.mrb[0].mxu0
        %v3337 = vadd.f32 0.0, %v3336
        %v3338 = vpop.f32.mrb[0].mxu0
        %3339 = vmatprep.mubr.f32.mxu0 0.0
        %3340 = vmatmul.mubr.f32.gmra.mrb[0].mxu0 %v3164
        %v3341 = vpop.f32.mrb[0].mxu0
        %v3342 = vadd.f32 0.0, %v3341
        %v3343 = vpop.f32.mrb[0].mxu0
        %3344 = vmatprep.mubr.f32.mxu0 0.0
        %3345 = vmatmul.mubr.f32.gmra.mrb[0].mxu0 %v3167
        %v3346 = vpop.f32.mrb[0].mxu0
        %v3347 = vadd.f32 0.0, %v3346
        %v3348 = vpop.f32.mrb[0].mxu0
        %3349 = vmatprep.mubr.f32.mxu0 0.0
        %3350 = vmatmul.mubr.f32.gmra.mrb[0].mxu0 %v3170
        %v3351 = vpop.f32.mrb[0].mxu0
        %v3352 = vadd.f32 0.0, %v3351
        %v3353 = vpop.f32.mrb[0].mxu0
        %3354 = vmatprep.mubr.f32.mxu0 0.0
        %3355 = vmatmul.mubr.f32.gmra.mrb[0].mxu0 %v3173
        %v3356 = vpop.f32.mrb[0].mxu0
        %v3357 = vadd.f32 0.0, %v3356
        %v3358 = vpop.f32.mrb[0].mxu0
        %3359 = vmatprep.mubr.f32.mxu0 0.0
        %3360 = vmatmul.mubr.f32.gmra.mrb[0].mxu0 %v3176
        %v3361 = vpop.f32.mrb[0].mxu0
        %v3362 = vadd.f32 0.0, %v3361
        %v3363 = vpop.f32.mrb[0].mxu0
        %3364 = vmatprep.mubr.f32.mxu0 0.0
        %3365 = vmatmul.mubr.f32.gmra.mrb[0].mxu0 %v3179
        %v3366 = vpop.f32.mrb[0].mxu0
        %v3367 = vadd.f32 0.0, %v3366
        %v3368 = vpop.f32.mrb[0].mxu0
        %3369 = vmatprep.mubr.f32.mxu0 0.0
        %3370 = vmatmul.mubr.f32.gmra.mrb[0].mxu0 %v3182
        %v3371 = vpop.f32.mrb[0].mxu0
        %v3372 = vadd.f32 0.0, %v3371
        %v3373 = vpop.f32.mrb[0].mxu0
        %3374 = vmatprep.mubr.f32.mxu0 0.0
        %3375 = vmatmul.mubr.f32.gmra.mrb[0].mxu0 %v3185
        %v3376 = vpop.f32.mrb[0].mxu0
        %v3377 = vadd.f32 0.0, %v3376
        %v3378 = vpop.f32.mrb[0].mxu0
        %3379 = vmatprep.mubr.f32.mxu0 0.0
        %3380 = vmatmul.mubr.f32.gmra.mrb[0].mxu0 %v3188
        %v3381 = vpop.f32.mrb[0].mxu0
        %v3382 = vadd.f32 0.0, %v3381
        %v3383 = vpop.f32.mrb[0].mxu0
        %3384 = vmatprep.mubr.f32.mxu0 0.0
        %3385 = vmatmul.mubr.f32.gmra.mrb[0].mxu0 %v3191
        %v3386 = vpop.f32.mrb[0].mxu0
        %v3387 = vadd.f32 0.0, %v3386
        %v3388 = vpop.f32.mrb[0].mxu0
        %3389 = vmatprep.mubr.f32.mxu0 0.0
        %3390 = vmatmul.mubr.f32.gmra.mrb[0].mxu0 %v3194
        %v3391 = vpop.f32.mrb[0].mxu0
        %v3392 = vadd.f32 0.0, %v3391
        %v3393 = vpop.f32.mrb[0].mxu0
        %3394 = vmatprep.mubr.f32.mxu0 0.0
        %3395 = vmatmul.mubr.f32.gmra.mrb[0].mxu0 %v3197
        %v3396 = vpop.f32.mrb[0].mxu0
        %v3397 = vadd.f32 0.0, %v3396
        %v3398 = vpop.f32.mrb[0].mxu0
        %3399 = vmatprep.mubr.f32.mxu0 0.0
        %3400 = vmatmul.mubr.f32.gmra.mrb[0].mxu0 %v3200
        %v3401 = vpop.f32.mrb[0].mxu0
        %v3402 = vadd.f32 0.0, %v3401
        %v3403 = vpop.f32.mrb[0].mxu0
        %3404 = vmatprep.mubr.f32.mxu0 0.0
        %3405 = vmatmul.mubr.f32.gmra.mrb[0].mxu0 %v3203
        %v3406 = vpop.f32.mrb[0].mxu0
        %v3407 = vadd.f32 0.0, %v3406
        %v3408 = vpop.f32.mrb[0].mxu0
        %3409 = vmatprep.mubr.f32.mxu0 0.0
        %3410 = vmatmul.mubr.f32.gmra.mrb[0].mxu0 %v3206
        %v3411 = vpop.f32.mrb[0].mxu0
        %v3412 = vadd.f32 0.0, %v3411
        %v3413 = vpop.f32.mrb[0].mxu0
        %3414 = vmatprep.mubr.f32.mxu0 0.0
        %3415 = vmatmul.mubr.f32.gmra.mrb[0].mxu0 %v3209
        %v3416 = vpop.f32.mrb[0].mxu0
        %v3417 = vadd.f32 0.0, %v3416
        %v3418 = vpop.f32.mrb[0].mxu0
        %3419 = vmatprep.mubr.f32.mxu0 0.0
        %3420 = vmatmul.mubr.f32.gmra.mrb[0].mxu0 %v3212
        %v3421 = vpop.f32.mrb[0].mxu0
        %v3422 = vadd.f32 0.0, %v3421
        %v3423 = vpop.f32.mrb[0].mxu0
        %3424 = vmatprep.mubr.f32.mxu0 0.0
        %3425 = vmatmul.mubr.f32.gmra.mrb[0].mxu0 %v3215
        %v3426 = vpop.f32.mrb[0].mxu0
        %v3427 = vadd.f32 0.0, %v3426
        %v3428 = vpop.f32.mrb[0].mxu0
        %3429 = vmatprep.mubr.f32.mxu0 0.0
        %3430 = vmatmul.mubr.f32.gmra.mrb[0].mxu0 %v3218
        %v3431 = vpop.f32.mrb[0].mxu0
        %v3432 = vadd.f32 0.0, %v3431
        %v3433 = vpop.f32.mrb[0].mxu0
        %3434 = vmatprep.mubr.f32.mxu0 0.0
        %3435 = vmatmul.mubr.f32.gmra.mrb[0].mxu0 %v3221
        %v3436 = vpop.f32.mrb[0].mxu0
        %v3437 = vadd.f32 0.0, %v3436
        %v3438 = vpop.f32.mrb[0].mxu0
        %3439 = vmatprep.mubr.f32.mxu0 0.0
        %3440 = vmatmul.mubr.f32.gmra.mrb[0].mxu0 %v3224
        %v3441 = vpop.f32.mrb[0].mxu0
        %v3442 = vadd.f32 0.0, %v3441
        %v3443 = vpop.f32.mrb[0].mxu0
        %3444 = vmatprep.mubr.f32.mxu0 0.0
        %3445 = vmatmul.mubr.f32.gmra.mrb[0].mxu0 %v3227
        %v3446 = vpop.f32.mrb[0].mxu0
        %v3447 = vadd.f32 0.0, %v3446
        %v3448 = vpop.f32.mrb[0].mxu0
        %3449 = vmatprep.mubr.f32.mxu0 0.0
        %3450 = vmatmul.mubr.f32.gmra.mrb[0].mxu0 %v3230
        %v3451 = vpop.f32.mrb[0].mxu0
        %v3452 = vadd.f32 0.0, %v3451
        %v3453 = vpop.f32.mrb[0].mxu0
        %3454 = vmatprep.mubr.f32.mxu0 0.0
        %3455 = vmatmul.mubr.f32.gmra.mrb[0].mxu0 %v3233
        %v3456 = vpop.f32.mrb[0].mxu0
        %v3457 = vadd.f32 0.0, %v3456
        %v3458 = vpop.f32.mrb[0].mxu0
        %3459 = vdwg.mxu0
        %v3460 = vadd.f32 %v2677, %v3302
        %v3461 = vadd.f32 %v2678, %v3307
        %v3462 = vadd.f32 %v2679, %v3312
        %v3463 = vadd.f32 %v2680, %v3317
        %v3464 = vadd.f32 %v2681, %v3322
        %v3465 = vadd.f32 %v2682, %v3327
        %v3466 = vadd.f32 %v2683, %v3332
        %v3467 = vadd.f32 %v2684, %v3337
        %v3468 = vadd.f32 %v2685, %v3342
        %v3469 = vadd.f32 %v2686, %v3347
        %v3470 = vadd.f32 %v2687, %v3352
        %v3471 = vadd.f32 %v2688, %v3357
        %v3472 = vadd.f32 %v2689, %v3362
        %v3473 = vadd.f32 %v2690, %v3367
        %v3474 = vadd.f32 %v2691, %v3372
        %v3475 = vadd.f32 %v2692, %v3377
        %v3476 = vadd.f32 %v2693, %v3382
        %v3477 = vadd.f32 %v2694, %v3387
        %v3478 = vadd.f32 %v2695, %v3392
        %v3479 = vadd.f32 %v2696, %v3397
        %v3480 = vadd.f32 %v2697, %v3402
        %v3481 = vadd.f32 %v2698, %v3407
        %v3482 = vadd.f32 %v2699, %v3412
        %v3483 = vadd.f32 %v2700, %v3417
        %v3484 = vadd.f32 %v2701, %v3422
        %v3485 = vadd.f32 %v2702, %v3427
        %v3486 = vadd.f32 %v2703, %v3432
        %v3487 = vadd.f32 %v2704, %v3437
        %v3488 = vadd.f32 %v2705, %v3442
        %v3489 = vadd.f32 %v2706, %v3447
        %v3490 = vadd.f32 %v2707, %v3452
        %v3491 = vadd.f32 %v2708, %v3457
        %v3492 = vld [vmem:[%s2709 + $0x4] sm:$0xff]
        %v3493 = vld [vmem:[%s2709 + $0xc] sm:$0xff]
        %v3494 = vld [vmem:[%s2709 + $0x1c] sm:$0xff]
        %v3495 = vld [vmem:[%s2709 + $0x24] sm:$0xff]
        %v3496 = vld [vmem:[%s2709 + $0x34] sm:$0xff]
        %v3497 = vld [vmem:[%s2709 + $0x3c] sm:$0xff]
        %v3498 = vld [vmem:[%s2709 + $0x4c] sm:$0xff]
        %v3499 = vld [vmem:[%s2709 + $0x54] sm:$0xff]
        %v3500 = vld [vmem:[%s2709 + $0x64] sm:$0xff]
        %v3501 = vld [vmem:[%s2709 + $0x6c] sm:$0xff]
        %v3502 = vld [vmem:[%s2709 + $0x7c] sm:$0xff]
        %v3503 = vld [vmem:[%s2709 + $0x84] sm:$0xff]
        %v3504 = vld [vmem:[%s2709 + $0x94] sm:$0xff]
        %v3505 = vld [vmem:[%s2709 + $0x9c] sm:$0xff]
        %v3506 = vld [vmem:[%s2709 + $0xac] sm:$0xff]
        %v3507 = vld [vmem:[%s2709 + $0xb4] sm:$0xff]
        %v3508 = vld [vmem:[%s2709 + $0xc4] sm:$0xff]
        %v3509 = vld [vmem:[%s2709 + $0xcc] sm:$0xff]
        %v3510 = vld [vmem:[%s2709 + $0xdc] sm:$0xff]
        %v3511 = vld [vmem:[%s2709 + $0xe4] sm:$0xff]
        %v3512 = vld [vmem:[%s2709 + $0xf4] sm:$0xff]
        %v3513 = vld [vmem:[%s2709 + $0xfc] sm:$0xff]
        %v3514 = vld [vmem:[%s2709 + $0x10c] sm:$0xff]
        %v3515 = vld [vmem:[%s2709 + $0x114] sm:$0xff]
        %v3516 = vld [vmem:[%s2709 + $0x124] sm:$0xff]
        %v3517 = vld [vmem:[%s2709 + $0x12c] sm:$0xff]
        %v3518 = vld [vmem:[%s2709 + $0x13c] sm:$0xff]
        %v3519 = vld [vmem:[%s2709 + $0x144] sm:$0xff]
        %v3520 = vld [vmem:[%s2709 + $0x154] sm:$0xff]
        %v3521 = vld [vmem:[%s2709 + $0x15c] sm:$0xff]
        %v3522 = vld [vmem:[%s2709 + $0x16c] sm:$0xff]
        %v3523 = vld [vmem:[%s2709 + $0x174] sm:$0xff]
        %3556 = vrot.lane.b32.xlu0 %v3492, 32
        %v3557 = vpop.permute.xlu0 %3556
        %3558 = vrot.lane.b32.xlu0 %v3493, 32
        %v3559 = vpop.permute.xlu0 %3558
        %3560 = vrot.lane.b32.xlu0 %v3494, 32
        %v3561 = vpop.permute.xlu0 %3560
        %3562 = vrot.lane.b32.xlu0 %v3495, 32
        %v3563 = vpop.permute.xlu0 %3562
        %3564 = vrot.lane.b32.xlu0 %v3496, 32
        %v3565 = vpop.permute.xlu0 %3564
        %3566 = vrot.lane.b32.xlu0 %v3497, 32
        %v3567 = vpop.permute.xlu0 %3566
        %3568 = vrot.lane.b32.xlu0 %v3498, 32
        %v3569 = vpop.permute.xlu0 %3568
        %3570 = vrot.lane.b32.xlu0 %v3499, 32
        %v3571 = vpop.permute.xlu0 %3570
        %3572 = vrot.lane.b32.xlu0 %v3500, 32
        %v3573 = vpop.permute.xlu0 %3572
        %3574 = vrot.lane.b32.xlu0 %v3501, 32
        %v3575 = vpop.permute.xlu0 %3574
        %3576 = vrot.lane.b32.xlu0 %v3502, 32
        %v3577 = vpop.permute.xlu0 %3576
        %3578 = vrot.lane.b32.xlu0 %v3503, 32
        %v3579 = vpop.permute.xlu0 %3578
        %3580 = vrot.lane.b32.xlu0 %v3504, 32
        %v3581 = vpop.permute.xlu0 %3580
        %3582 = vrot.lane.b32.xlu0 %v3505, 32
        %v3583 = vpop.permute.xlu0 %3582
        %3584 = vrot.lane.b32.xlu0 %v3506, 32
        %v3585 = vpop.permute.xlu0 %3584
        %3586 = vrot.lane.b32.xlu0 %v3507, 32
        %v3587 = vpop.permute.xlu0 %3586
        %3588 = vrot.lane.b32.xlu0 %v3508, 32
        %v3589 = vpop.permute.xlu0 %3588
        %3590 = vrot.lane.b32.xlu0 %v3509, 32
        %v3591 = vpop.permute.xlu0 %3590
        %3592 = vrot.lane.b32.xlu0 %v3510, 32
        %v3593 = vpop.permute.xlu0 %3592
        %3594 = vrot.lane.b32.xlu0 %v3511, 32
        %v3595 = vpop.permute.xlu0 %3594
        %3596 = vrot.lane.b32.xlu0 %v3512, 32
        %v3597 = vpop.permute.xlu0 %3596
        %3598 = vrot.lane.b32.xlu0 %v3513, 32
        %v3599 = vpop.permute.xlu0 %3598
        %3600 = vrot.lane.b32.xlu0 %v3514, 32
        %v3601 = vpop.permute.xlu0 %3600
        %3602 = vrot.lane.b32.xlu0 %v3515, 32
        %v3603 = vpop.permute.xlu0 %3602
        %3604 = vrot.lane.b32.xlu0 %v3516, 32
        %v3605 = vpop.permute.xlu0 %3604
        %3606 = vrot.lane.b32.xlu0 %v3517, 32
        %v3607 = vpop.permute.xlu0 %3606
        %3608 = vrot.lane.b32.xlu0 %v3518, 32
        %v3609 = vpop.permute.xlu0 %3608
        %3610 = vrot.lane.b32.xlu0 %v3519, 32
        %v3611 = vpop.permute.xlu0 %3610
        %3612 = vrot.lane.b32.xlu0 %v3520, 32
        %v3613 = vpop.permute.xlu0 %3612
        %3614 = vrot.lane.b32.xlu0 %v3521, 32
        %v3615 = vpop.permute.xlu0 %3614
        %3616 = vrot.lane.b32.xlu0 %v3522, 32
        %v3617 = vpop.permute.xlu0 %3616
        %3618 = vrot.lane.b32.xlu0 %v3523, 32
        %v3619 = vpop.permute.xlu0 %3618
        %3652 = vrot.lane.b32.xlu0 %v3492, 64
        %v3653 = vpop.permute.xlu0 %3652
        %3654 = vrot.lane.b32.xlu0 %v3493, 64
        %v3655 = vpop.permute.xlu0 %3654
        %3656 = vrot.lane.b32.xlu0 %v3494, 64
        %v3657 = vpop.permute.xlu0 %3656
        %3658 = vrot.lane.b32.xlu0 %v3495, 64
        %v3659 = vpop.permute.xlu0 %3658
        %3660 = vrot.lane.b32.xlu0 %v3496, 64
        %v3661 = vpop.permute.xlu0 %3660
        %3662 = vrot.lane.b32.xlu0 %v3497, 64
        %v3663 = vpop.permute.xlu0 %3662
        %3664 = vrot.lane.b32.xlu0 %v3498, 64
        %v3665 = vpop.permute.xlu0 %3664
        %3666 = vrot.lane.b32.xlu0 %v3499, 64
        %v3667 = vpop.permute.xlu0 %3666
        %3668 = vrot.lane.b32.xlu0 %v3500, 64
        %v3669 = vpop.permute.xlu0 %3668
        %3670 = vrot.lane.b32.xlu0 %v3501, 64
        %v3671 = vpop.permute.xlu0 %3670
        %3672 = vrot.lane.b32.xlu0 %v3502, 64
        %v3673 = vpop.permute.xlu0 %3672
        %3674 = vrot.lane.b32.xlu0 %v3503, 64
        %v3675 = vpop.permute.xlu0 %3674
        %3676 = vrot.lane.b32.xlu0 %v3504, 64
        %v3677 = vpop.permute.xlu0 %3676
        %3678 = vrot.lane.b32.xlu0 %v3505, 64
        %v3679 = vpop.permute.xlu0 %3678
        %3680 = vrot.lane.b32.xlu0 %v3506, 64
        %v3681 = vpop.permute.xlu0 %3680
        %3682 = vrot.lane.b32.xlu0 %v3507, 64
        %v3683 = vpop.permute.xlu0 %3682
        %3684 = vrot.lane.b32.xlu0 %v3508, 64
        %v3685 = vpop.permute.xlu0 %3684
        %3686 = vrot.lane.b32.xlu0 %v3509, 64
        %v3687 = vpop.permute.xlu0 %3686
        %3688 = vrot.lane.b32.xlu0 %v3510, 64
        %v3689 = vpop.permute.xlu0 %3688
        %3690 = vrot.lane.b32.xlu0 %v3511, 64
        %v3691 = vpop.permute.xlu0 %3690
        %3692 = vrot.lane.b32.xlu0 %v3512, 64
        %v3693 = vpop.permute.xlu0 %3692
        %3694 = vrot.lane.b32.xlu0 %v3513, 64
        %v3695 = vpop.permute.xlu0 %3694
        %3696 = vrot.lane.b32.xlu0 %v3514, 64
        %v3697 = vpop.permute.xlu0 %3696
        %3698 = vrot.lane.b32.xlu0 %v3515, 64
        %v3699 = vpop.permute.xlu0 %3698
        %3700 = vrot.lane.b32.xlu0 %v3516, 64
        %v3701 = vpop.permute.xlu0 %3700
        %3702 = vrot.lane.b32.xlu0 %v3517, 64
        %v3703 = vpop.permute.xlu0 %3702
        %3704 = vrot.lane.b32.xlu0 %v3518, 64
        %v3705 = vpop.permute.xlu0 %3704
        %3706 = vrot.lane.b32.xlu0 %v3519, 64
        %v3707 = vpop.permute.xlu0 %3706
        %3708 = vrot.lane.b32.xlu0 %v3520, 64
        %v3709 = vpop.permute.xlu0 %3708
        %3710 = vrot.lane.b32.xlu0 %v3521, 64
        %v3711 = vpop.permute.xlu0 %3710
        %3712 = vrot.lane.b32.xlu0 %v3522, 64
        %v3713 = vpop.permute.xlu0 %3712
        %3714 = vrot.lane.b32.xlu0 %v3523, 64
        %v3715 = vpop.permute.xlu0 %3714
        %v3748 = vsel %vm777, %v3492, %v3557
        %v3749 = vsel %vm777, %v3493, %v3559
        %v3750 = vsel %vm777, %v3494, %v3561
        %v3751 = vsel %vm777, %v3495, %v3563
        %v3752 = vsel %vm777, %v3496, %v3565
        %v3753 = vsel %vm777, %v3497, %v3567
        %v3754 = vsel %vm777, %v3498, %v3569
        %v3755 = vsel %vm777, %v3499, %v3571
        %v3756 = vsel %vm777, %v3500, %v3573
        %v3757 = vsel %vm777, %v3501, %v3575
        %v3758 = vsel %vm777, %v3502, %v3577
        %v3759 = vsel %vm777, %v3503, %v3579
        %v3760 = vsel %vm777, %v3504, %v3581
        %v3761 = vsel %vm777, %v3505, %v3583
        %v3762 = vsel %vm777, %v3506, %v3585
        %v3763 = vsel %vm777, %v3507, %v3587
        %v3764 = vsel %vm777, %v3508, %v3589
        %v3765 = vsel %vm777, %v3509, %v3591
        %v3766 = vsel %vm777, %v3510, %v3593
        %v3767 = vsel %vm777, %v3511, %v3595
        %v3768 = vsel %vm777, %v3512, %v3597
        %v3769 = vsel %vm777, %v3513, %v3599
        %v3770 = vsel %vm777, %v3514, %v3601
        %v3771 = vsel %vm777, %v3515, %v3603
        %v3772 = vsel %vm777, %v3516, %v3605
        %v3773 = vsel %vm777, %v3517, %v3607
        %v3774 = vsel %vm777, %v3518, %v3609
        %v3775 = vsel %vm777, %v3519, %v3611
        %v3776 = vsel %vm777, %v3520, %v3613
        %v3777 = vsel %vm777, %v3521, %v3615
        %v3778 = vsel %vm777, %v3522, %v3617
        %v3779 = vsel %vm777, %v3523, %v3619
        %v3780 = vsel %vm810, %v3748, %v3653
        %v3781 = vsel %vm810, %v3749, %v3655
        %v3782 = vsel %vm810, %v3750, %v3657
        %v3783 = vsel %vm810, %v3751, %v3659
        %v3784 = vsel %vm810, %v3752, %v3661
        %v3785 = vsel %vm810, %v3753, %v3663
        %v3786 = vsel %vm810, %v3754, %v3665
        %v3787 = vsel %vm810, %v3755, %v3667
        %v3788 = vsel %vm810, %v3756, %v3669
        %v3789 = vsel %vm810, %v3757, %v3671
        %v3790 = vsel %vm810, %v3758, %v3673
        %v3791 = vsel %vm810, %v3759, %v3675
        %v3792 = vsel %vm810, %v3760, %v3677
        %v3793 = vsel %vm810, %v3761, %v3679
        %v3794 = vsel %vm810, %v3762, %v3681
        %v3795 = vsel %vm810, %v3763, %v3683
        %v3796 = vsel %vm810, %v3764, %v3685
        %v3797 = vsel %vm810, %v3765, %v3687
        %v3798 = vsel %vm810, %v3766, %v3689
        %v3799 = vsel %vm810, %v3767, %v3691
        %v3800 = vsel %vm810, %v3768, %v3693
        %v3801 = vsel %vm810, %v3769, %v3695
        %v3802 = vsel %vm810, %v3770, %v3697
        %v3803 = vsel %vm810, %v3771, %v3699
        %v3804 = vsel %vm810, %v3772, %v3701
        %v3805 = vsel %vm810, %v3773, %v3703
        %v3806 = vsel %vm810, %v3774, %v3705
        %v3807 = vsel %vm810, %v3775, %v3707
        %v3808 = vsel %vm810, %v3776, %v3709
        %v3809 = vsel %vm810, %v3777, %v3711
        %v3810 = vsel %vm810, %v3778, %v3713
        %v3811 = vsel %vm810, %v3779, %v3715
        %s3812 = scalar_lea.vmem %s1, 384
        %v3813 = vld [vmem:[%s3812] sm:$0xff]
        %v3814 = vld [vmem:[%s3812 + $0x8] sm:$0xff]
        %v3815 = vld [vmem:[%s3812 + $0x10] sm:$0xff]
        %v3816 = vld [vmem:[%s3812 + $0x18] sm:$0xff]
        %v3817 = vld [vmem:[%s3812 + $0x20] sm:$0xff]
        %v3818 = vld [vmem:[%s3812 + $0x28] sm:$0xff]
        %v3819 = vld [vmem:[%s3812 + $0x30] sm:$0xff]
        %v3820 = vld [vmem:[%s3812 + $0x38] sm:$0xff]
        %v3821 = vld [vmem:[%s3812 + $0x40] sm:$0xff]
        %v3822 = vld [vmem:[%s3812 + $0x48] sm:$0xff]
        %v3823 = vld [vmem:[%s3812 + $0x50] sm:$0xff]
        %v3824 = vld [vmem:[%s3812 + $0x58] sm:$0xff]
        %v3826 = vsel %vm1284, %v3780, 0
        %v3829 = vsel %vm1284, %v3781, 0
        %v3832 = vsel %vm1284, %v3782, 0
        %v3835 = vsel %vm1284, %v3783, 0
        %v3838 = vsel %vm1284, %v3784, 0
        %v3841 = vsel %vm1284, %v3785, 0
        %v3844 = vsel %vm1284, %v3786, 0
        %v3847 = vsel %vm1284, %v3787, 0
        %v3850 = vsel %vm1284, %v3788, 0
        %v3853 = vsel %vm1284, %v3789, 0
        %v3856 = vsel %vm1284, %v3790, 0
        %v3859 = vsel %vm1284, %v3791, 0
        %v3862 = vsel %vm1284, %v3792, 0
        %v3865 = vsel %vm1284, %v3793, 0
        %v3868 = vsel %vm1284, %v3794, 0
        %v3871 = vsel %vm1284, %v3795, 0
        %v3874 = vsel %vm1284, %v3796, 0
        %v3877 = vsel %vm1284, %v3797, 0
        %v3880 = vsel %vm1284, %v3798, 0
        %v3883 = vsel %vm1284, %v3799, 0
        %v3886 = vsel %vm1284, %v3800, 0
        %v3889 = vsel %vm1284, %v3801, 0
        %v3892 = vsel %vm1284, %v3802, 0
        %v3895 = vsel %vm1284, %v3803, 0
        %v3898 = vsel %vm1284, %v3804, 0
        %v3901 = vsel %vm1284, %v3805, 0
        %v3904 = vsel %vm1284, %v3806, 0
        %v3907 = vsel %vm1284, %v3807, 0
        %v3910 = vsel %vm1284, %v3808, 0
        %v3913 = vsel %vm1284, %v3809, 0
        %v3916 = vsel %vm1284, %v3810, 0
        %v3919 = vsel %vm1284, %v3811, 0
        %3921 = vmatprep.subr.mxu0 0.0
        %3922 = vmatpush1.msra.mxu0 %v3813
        %3923 = vmatprep.subr.mxu0 0.0
        %3924 = vmatpush1.msra.mxu0 %v3814
        %3925 = vmatprep.subr.mxu0 0.0
        %3926 = vmatpush1.msra.mxu0 %v3815
        %3927 = vmatprep.subr.mxu0 0.0
        %3928 = vmatpush1.msra.mxu0 %v3816
        %3929 = vmatprep.subr.mxu0 0.0
        %3930 = vmatpush1.msra.mxu0 %v3817
        %3931 = vmatprep.subr.mxu0 0.0
        %3932 = vmatpush1.msra.mxu0 %v3818
        %3933 = vmatprep.subr.mxu0 0.0
        %3934 = vmatpush1.msra.mxu0 %v3819
        %3935 = vmatprep.subr.mxu0 0.0
        %3936 = vmatpush1.msra.mxu0 %v3820
        %3937 = vmatprep.subr.mxu0 0.0
        %3938 = vmatpush1.msra.mxu0 %v3821
        %3939 = vmatprep.subr.mxu0 0.0
        %3940 = vmatpush1.msra.mxu0 %v3822
        %3941 = vmatprep.subr.mxu0 0.0
        %3942 = vmatpush1.msra.mxu0 %v3823
        %3943 = vmatprep.subr.mxu0 0.0
        %3944 = vmatpush1.msra.mxu0 %v3824
        %3945 = vmatprep.subr.mxu0 0.0
        %3946 = vmatpush1.msra.mxu0 0.0
        %3947 = vmatprep.subr.mxu0 0.0
        %3948 = vmatpush1.msra.mxu0 0.0
        %3949 = vmatprep.subr.mxu0 0.0
        %3950 = vmatpush1.msra.mxu0 0.0
        %3951 = vmatprep.subr.mxu0 0.0
        %3952 = vmatpush1.msra.mxu0 0.0
        %3953 = vmatprep.subr.mxu0 0.0
        %3954 = vmatpush1.msra.mxu0 0.0
        %3955 = vmatprep.subr.mxu0 0.0
        %3956 = vmatpush1.msra.mxu0 0.0
        %3957 = vmatprep.subr.mxu0 0.0
        %3958 = vmatpush1.msra.mxu0 0.0
        %3959 = vmatprep.subr.mxu0 0.0
        %3960 = vmatpush1.msra.mxu0 0.0
        %3961 = vmatprep.subr.mxu0 0.0
        %3962 = vmatpush1.msra.mxu0 0.0
        %3963 = vmatprep.subr.mxu0 0.0
        %3964 = vmatpush1.msra.mxu0 0.0
        %3965 = vmatprep.subr.mxu0 0.0
        %3966 = vmatpush1.msra.mxu0 0.0
        %3967 = vmatprep.subr.mxu0 0.0
        %3968 = vmatpush1.msra.mxu0 0.0
        %3969 = vmatprep.subr.mxu0 0.0
        %3970 = vmatpush1.msra.mxu0 0.0
        %3971 = vmatprep.subr.mxu0 0.0
        %3972 = vmatpush1.msra.mxu0 0.0
        %3973 = vmatprep.subr.mxu0 0.0
        %3974 = vmatpush1.msra.mxu0 0.0
        %3975 = vmatprep.subr.mxu0 0.0
        %3976 = vmatpush1.msra.mxu0 0.0
        %3977 = vmatprep.subr.mxu0 0.0
        %3978 = vmatpush1.msra.mxu0 0.0
        %3979 = vmatprep.subr.mxu0 0.0
        %3980 = vmatpush1.msra.mxu0 0.0
        %3981 = vmatprep.subr.mxu0 0.0
        %3982 = vmatpush1.msra.mxu0 0.0
        %3983 = vmatprep.subr.mxu0 0.0
        %3984 = vmatpush1.msra.mxu0 0.0
        %3985 = vmatprep.mubr.f32.mxu0 0.0
        %3986 = vmatmul.mubr.f32.gmra.mrb[0].mxu0 %v3826
        %v3987 = vpop.f32.mrb[0].mxu0
        %v3988 = vadd.f32 0.0, %v3987
        %v3989 = vpop.f32.mrb[0].mxu0
        %3990 = vmatprep.mubr.f32.mxu0 0.0
        %3991 = vmatmul.mubr.f32.gmra.mrb[0].mxu0 %v3829
        %v3992 = vpop.f32.mrb[0].mxu0
        %v3993 = vadd.f32 0.0, %v3992
        %v3994 = vpop.f32.mrb[0].mxu0
        %3995 = vmatprep.mubr.f32.mxu0 0.0
        %3996 = vmatmul.mubr.f32.gmra.mrb[0].mxu0 %v3832
        %v3997 = vpop.f32.mrb[0].mxu0
        %v3998 = vadd.f32 0.0, %v3997
        %v3999 = vpop.f32.mrb[0].mxu0
        %4000 = vmatprep.mubr.f32.mxu0 0.0
        %4001 = vmatmul.mubr.f32.gmra.mrb[0].mxu0 %v3835
        %v4002 = vpop.f32.mrb[0].mxu0
        %v4003 = vadd.f32 0.0, %v4002
        %v4004 = vpop.f32.mrb[0].mxu0
        %4005 = vmatprep.mubr.f32.mxu0 0.0
        %4006 = vmatmul.mubr.f32.gmra.mrb[0].mxu0 %v3838
        %v4007 = vpop.f32.mrb[0].mxu0
        %v4008 = vadd.f32 0.0, %v4007
        %v4009 = vpop.f32.mrb[0].mxu0
        %4010 = vmatprep.mubr.f32.mxu0 0.0
        %4011 = vmatmul.mubr.f32.gmra.mrb[0].mxu0 %v3841
        %v4012 = vpop.f32.mrb[0].mxu0
        %v4013 = vadd.f32 0.0, %v4012
        %v4014 = vpop.f32.mrb[0].mxu0
        %4015 = vmatprep.mubr.f32.mxu0 0.0
        %4016 = vmatmul.mubr.f32.gmra.mrb[0].mxu0 %v3844
        %v4017 = vpop.f32.mrb[0].mxu0
        %v4018 = vadd.f32 0.0, %v4017
        %v4019 = vpop.f32.mrb[0].mxu0
        %4020 = vmatprep.mubr.f32.mxu0 0.0
        %4021 = vmatmul.mubr.f32.gmra.mrb[0].mxu0 %v3847
        %v4022 = vpop.f32.mrb[0].mxu0
        %v4023 = vadd.f32 0.0, %v4022
        %v4024 = vpop.f32.mrb[0].mxu0
        %4025 = vmatprep.mubr.f32.mxu0 0.0
        %4026 = vmatmul.mubr.f32.gmra.mrb[0].mxu0 %v3850
        %v4027 = vpop.f32.mrb[0].mxu0
        %v4028 = vadd.f32 0.0, %v4027
        %v4029 = vpop.f32.mrb[0].mxu0
        %4030 = vmatprep.mubr.f32.mxu0 0.0
        %4031 = vmatmul.mubr.f32.gmra.mrb[0].mxu0 %v3853
        %v4032 = vpop.f32.mrb[0].mxu0
        %v4033 = vadd.f32 0.0, %v4032
        %v4034 = vpop.f32.mrb[0].mxu0
        %4035 = vmatprep.mubr.f32.mxu0 0.0
        %4036 = vmatmul.mubr.f32.gmra.mrb[0].mxu0 %v3856
        %v4037 = vpop.f32.mrb[0].mxu0
        %v4038 = vadd.f32 0.0, %v4037
        %v4039 = vpop.f32.mrb[0].mxu0
        %4040 = vmatprep.mubr.f32.mxu0 0.0
        %4041 = vmatmul.mubr.f32.gmra.mrb[0].mxu0 %v3859
        %v4042 = vpop.f32.mrb[0].mxu0
        %v4043 = vadd.f32 0.0, %v4042
        %v4044 = vpop.f32.mrb[0].mxu0
        %4045 = vmatprep.mubr.f32.mxu0 0.0
        %4046 = vmatmul.mubr.f32.gmra.mrb[0].mxu0 %v3862
        %v4047 = vpop.f32.mrb[0].mxu0
        %v4048 = vadd.f32 0.0, %v4047
        %v4049 = vpop.f32.mrb[0].mxu0
        %4050 = vmatprep.mubr.f32.mxu0 0.0
        %4051 = vmatmul.mubr.f32.gmra.mrb[0].mxu0 %v3865
        %v4052 = vpop.f32.mrb[0].mxu0
        %v4053 = vadd.f32 0.0, %v4052
        %v4054 = vpop.f32.mrb[0].mxu0
        %4055 = vmatprep.mubr.f32.mxu0 0.0
        %4056 = vmatmul.mubr.f32.gmra.mrb[0].mxu0 %v3868
        %v4057 = vpop.f32.mrb[0].mxu0
        %v4058 = vadd.f32 0.0, %v4057
        %v4059 = vpop.f32.mrb[0].mxu0
        %4060 = vmatprep.mubr.f32.mxu0 0.0
        %4061 = vmatmul.mubr.f32.gmra.mrb[0].mxu0 %v3871
        %v4062 = vpop.f32.mrb[0].mxu0
        %v4063 = vadd.f32 0.0, %v4062
        %v4064 = vpop.f32.mrb[0].mxu0
        %4065 = vmatprep.mubr.f32.mxu0 0.0
        %4066 = vmatmul.mubr.f32.gmra.mrb[0].mxu0 %v3874
        %v4067 = vpop.f32.mrb[0].mxu0
        %v4068 = vadd.f32 0.0, %v4067
        %v4069 = vpop.f32.mrb[0].mxu0
        %4070 = vmatprep.mubr.f32.mxu0 0.0
        %4071 = vmatmul.mubr.f32.gmra.mrb[0].mxu0 %v3877
        %v4072 = vpop.f32.mrb[0].mxu0
        %v4073 = vadd.f32 0.0, %v4072
        %v4074 = vpop.f32.mrb[0].mxu0
        %4075 = vmatprep.mubr.f32.mxu0 0.0
        %4076 = vmatmul.mubr.f32.gmra.mrb[0].mxu0 %v3880
        %v4077 = vpop.f32.mrb[0].mxu0
        %v4078 = vadd.f32 0.0, %v4077
        %v4079 = vpop.f32.mrb[0].mxu0
        %4080 = vmatprep.mubr.f32.mxu0 0.0
        %4081 = vmatmul.mubr.f32.gmra.mrb[0].mxu0 %v3883
        %v4082 = vpop.f32.mrb[0].mxu0
        %v4083 = vadd.f32 0.0, %v4082
        %v4084 = vpop.f32.mrb[0].mxu0
        %4085 = vmatprep.mubr.f32.mxu0 0.0
        %4086 = vmatmul.mubr.f32.gmra.mrb[0].mxu0 %v3886
        %v4087 = vpop.f32.mrb[0].mxu0
        %v4088 = vadd.f32 0.0, %v4087
        %v4089 = vpop.f32.mrb[0].mxu0
        %4090 = vmatprep.mubr.f32.mxu0 0.0
        %4091 = vmatmul.mubr.f32.gmra.mrb[0].mxu0 %v3889
        %v4092 = vpop.f32.mrb[0].mxu0
        %v4093 = vadd.f32 0.0, %v4092
        %v4094 = vpop.f32.mrb[0].mxu0
        %4095 = vmatprep.mubr.f32.mxu0 0.0
        %4096 = vmatmul.mubr.f32.gmra.mrb[0].mxu0 %v3892
        %v4097 = vpop.f32.mrb[0].mxu0
        %v4098 = vadd.f32 0.0, %v4097
        %v4099 = vpop.f32.mrb[0].mxu0
        %4100 = vmatprep.mubr.f32.mxu0 0.0
        %4101 = vmatmul.mubr.f32.gmra.mrb[0].mxu0 %v3895
        %v4102 = vpop.f32.mrb[0].mxu0
        %v4103 = vadd.f32 0.0, %v4102
        %v4104 = vpop.f32.mrb[0].mxu0
        %4105 = vmatprep.mubr.f32.mxu0 0.0
        %4106 = vmatmul.mubr.f32.gmra.mrb[0].mxu0 %v3898
        %v4107 = vpop.f32.mrb[0].mxu0
        %v4108 = vadd.f32 0.0, %v4107
        %v4109 = vpop.f32.mrb[0].mxu0
        %4110 = vmatprep.mubr.f32.mxu0 0.0
        %4111 = vmatmul.mubr.f32.gmra.mrb[0].mxu0 %v3901
        %v4112 = vpop.f32.mrb[0].mxu0
        %v4113 = vadd.f32 0.0, %v4112
        %v4114 = vpop.f32.mrb[0].mxu0
        %4115 = vmatprep.mubr.f32.mxu0 0.0
        %4116 = vmatmul.mubr.f32.gmra.mrb[0].mxu0 %v3904
        %v4117 = vpop.f32.mrb[0].mxu0
        %v4118 = vadd.f32 0.0, %v4117
        %v4119 = vpop.f32.mrb[0].mxu0
        %4120 = vmatprep.mubr.f32.mxu0 0.0
        %4121 = vmatmul.mubr.f32.gmra.mrb[0].mxu0 %v3907
        %v4122 = vpop.f32.mrb[0].mxu0
        %v4123 = vadd.f32 0.0, %v4122
        %v4124 = vpop.f32.mrb[0].mxu0
        %4125 = vmatprep.mubr.f32.mxu0 0.0
        %4126 = vmatmul.mubr.f32.gmra.mrb[0].mxu0 %v3910
        %v4127 = vpop.f32.mrb[0].mxu0
        %v4128 = vadd.f32 0.0, %v4127
        %v4129 = vpop.f32.mrb[0].mxu0
        %4130 = vmatprep.mubr.f32.mxu0 0.0
        %4131 = vmatmul.mubr.f32.gmra.mrb[0].mxu0 %v3913
        %v4132 = vpop.f32.mrb[0].mxu0
        %v4133 = vadd.f32 0.0, %v4132
        %v4134 = vpop.f32.mrb[0].mxu0
        %4135 = vmatprep.mubr.f32.mxu0 0.0
        %4136 = vmatmul.mubr.f32.gmra.mrb[0].mxu0 %v3916
        %v4137 = vpop.f32.mrb[0].mxu0
        %v4138 = vadd.f32 0.0, %v4137
        %v4139 = vpop.f32.mrb[0].mxu0
        %4140 = vmatprep.mubr.f32.mxu0 0.0
        %4141 = vmatmul.mubr.f32.gmra.mrb[0].mxu0 %v3919
        %v4142 = vpop.f32.mrb[0].mxu0
        %v4143 = vadd.f32 0.0, %v4142
        %v4144 = vpop.f32.mrb[0].mxu0
        %4145 = vdwg.mxu0
        %v4146 = vadd.f32 %v3460, %v3988
        %v4147 = vadd.f32 %v3461, %v3993
        %v4148 = vadd.f32 %v3462, %v3998
        %v4149 = vadd.f32 %v3463, %v4003
        %v4150 = vadd.f32 %v3464, %v4008
        %v4151 = vadd.f32 %v3465, %v4013
        %v4152 = vadd.f32 %v3466, %v4018
        %v4153 = vadd.f32 %v3467, %v4023
        %v4154 = vadd.f32 %v3468, %v4028
        %v4155 = vadd.f32 %v3469, %v4033
        %v4156 = vadd.f32 %v3470, %v4038
        %v4157 = vadd.f32 %v3471, %v4043
        %v4158 = vadd.f32 %v3472, %v4048
        %v4159 = vadd.f32 %v3473, %v4053
        %v4160 = vadd.f32 %v3474, %v4058
        %v4161 = vadd.f32 %v3475, %v4063
        %v4162 = vadd.f32 %v3476, %v4068
        %v4163 = vadd.f32 %v3477, %v4073
        %v4164 = vadd.f32 %v3478, %v4078
        %v4165 = vadd.f32 %v3479, %v4083
        %v4166 = vadd.f32 %v3480, %v4088
        %v4167 = vadd.f32 %v3481, %v4093
        %v4168 = vadd.f32 %v3482, %v4098
        %v4169 = vadd.f32 %v3483, %v4103
        %v4170 = vadd.f32 %v3484, %v4108
        %v4171 = vadd.f32 %v3485, %v4113
        %v4172 = vadd.f32 %v3486, %v4118
        %v4173 = vadd.f32 %v3487, %v4123
        %v4174 = vadd.f32 %v3488, %v4128
        %v4175 = vadd.f32 %v3489, %v4133
        %v4176 = vadd.f32 %v3490, %v4138
        %v4177 = vadd.f32 %v3491, %v4143
        %v4178 = vld [vmem:[%s2709 + $0x5] sm:$0xff]
        %v4179 = vld [vmem:[%s2709 + $0xd] sm:$0xff]
        %v4180 = vld [vmem:[%s2709 + $0x1d] sm:$0xff]
        %v4181 = vld [vmem:[%s2709 + $0x25] sm:$0xff]
        %v4182 = vld [vmem:[%s2709 + $0x35] sm:$0xff]
        %v4183 = vld [vmem:[%s2709 + $0x3d] sm:$0xff]
        %v4184 = vld [vmem:[%s2709 + $0x4d] sm:$0xff]
        %v4185 = vld [vmem:[%s2709 + $0x55] sm:$0xff]
        %v4186 = vld [vmem:[%s2709 + $0x65] sm:$0xff]
        %v4187 = vld [vmem:[%s2709 + $0x6d] sm:$0xff]
        %v4188 = vld [vmem:[%s2709 + $0x7d] sm:$0xff]
        %v4189 = vld [vmem:[%s2709 + $0x85] sm:$0xff]
        %v4190 = vld [vmem:[%s2709 + $0x95] sm:$0xff]
        %v4191 = vld [vmem:[%s2709 + $0x9d] sm:$0xff]
        %v4192 = vld [vmem:[%s2709 + $0xad] sm:$0xff]
        %v4193 = vld [vmem:[%s2709 + $0xb5] sm:$0xff]
        %v4194 = vld [vmem:[%s2709 + $0xc5] sm:$0xff]
        %v4195 = vld [vmem:[%s2709 + $0xcd] sm:$0xff]
        %v4196 = vld [vmem:[%s2709 + $0xdd] sm:$0xff]
        %v4197 = vld [vmem:[%s2709 + $0xe5] sm:$0xff]
        %v4198 = vld [vmem:[%s2709 + $0xf5] sm:$0xff]
        %v4199 = vld [vmem:[%s2709 + $0xfd] sm:$0xff]
        %v4200 = vld [vmem:[%s2709 + $0x10d] sm:$0xff]
        %v4201 = vld [vmem:[%s2709 + $0x115] sm:$0xff]
        %v4202 = vld [vmem:[%s2709 + $0x125] sm:$0xff]
        %v4203 = vld [vmem:[%s2709 + $0x12d] sm:$0xff]
        %v4204 = vld [vmem:[%s2709 + $0x13d] sm:$0xff]
        %v4205 = vld [vmem:[%s2709 + $0x145] sm:$0xff]
        %v4206 = vld [vmem:[%s2709 + $0x155] sm:$0xff]
        %v4207 = vld [vmem:[%s2709 + $0x15d] sm:$0xff]
        %v4208 = vld [vmem:[%s2709 + $0x16d] sm:$0xff]
        %v4209 = vld [vmem:[%s2709 + $0x175] sm:$0xff]
        %v4210 = vld [vmem:[%s2709 + $0x6] sm:$0xff]
        %v4211 = vld [vmem:[%s2709 + $0xe] sm:$0xff]
        %v4212 = vld [vmem:[%s2709 + $0x1e] sm:$0xff]
        %v4213 = vld [vmem:[%s2709 + $0x26] sm:$0xff]
        %v4214 = vld [vmem:[%s2709 + $0x36] sm:$0xff]
        %v4215 = vld [vmem:[%s2709 + $0x3e] sm:$0xff]
        %v4216 = vld [vmem:[%s2709 + $0x4e] sm:$0xff]
        %v4217 = vld [vmem:[%s2709 + $0x56] sm:$0xff]
        %v4218 = vld [vmem:[%s2709 + $0x66] sm:$0xff]
        %v4219 = vld [vmem:[%s2709 + $0x6e] sm:$0xff]
        %v4220 = vld [vmem:[%s2709 + $0x7e] sm:$0xff]
        %v4221 = vld [vmem:[%s2709 + $0x86] sm:$0xff]
        %v4222 = vld [vmem:[%s2709 + $0x96] sm:$0xff]
        %v4223 = vld [vmem:[%s2709 + $0x9e] sm:$0xff]
        %v4224 = vld [vmem:[%s2709 + $0xae] sm:$0xff]
        %v4225 = vld [vmem:[%s2709 + $0xb6] sm:$0xff]
        %v4226 = vld [vmem:[%s2709 + $0xc6] sm:$0xff]
        %v4227 = vld [vmem:[%s2709 + $0xce] sm:$0xff]
        %v4228 = vld [vmem:[%s2709 + $0xde] sm:$0xff]
        %v4229 = vld [vmem:[%s2709 + $0xe6] sm:$0xff]
        %v4230 = vld [vmem:[%s2709 + $0xf6] sm:$0xff]
        %v4231 = vld [vmem:[%s2709 + $0xfe] sm:$0xff]
        %v4232 = vld [vmem:[%s2709 + $0x10e] sm:$0xff]
        %v4233 = vld [vmem:[%s2709 + $0x116] sm:$0xff]
        %v4234 = vld [vmem:[%s2709 + $0x126] sm:$0xff]
        %v4235 = vld [vmem:[%s2709 + $0x12e] sm:$0xff]
        %v4236 = vld [vmem:[%s2709 + $0x13e] sm:$0xff]
        %v4237 = vld [vmem:[%s2709 + $0x146] sm:$0xff]
        %v4238 = vld [vmem:[%s2709 + $0x156] sm:$0xff]
        %v4239 = vld [vmem:[%s2709 + $0x15e] sm:$0xff]
        %v4240 = vld [vmem:[%s2709 + $0x16e] sm:$0xff]
        %v4241 = vld [vmem:[%s2709 + $0x176] sm:$0xff]
        %v4242 = vld [vmem:[%s2709 + $0x8] sm:$0xff]
        %v4243 = vld [vmem:[%s2709 + $0x10] sm:$0xff]
        %v4244 = vld [vmem:[%s2709 + $0x20] sm:$0xff]
        %v4245 = vld [vmem:[%s2709 + $0x28] sm:$0xff]
        %v4246 = vld [vmem:[%s2709 + $0x38] sm:$0xff]
        %v4247 = vld [vmem:[%s2709 + $0x40] sm:$0xff]
        %v4248 = vld [vmem:[%s2709 + $0x50] sm:$0xff]
        %v4249 = vld [vmem:[%s2709 + $0x58] sm:$0xff]
        %v4250 = vld [vmem:[%s2709 + $0x68] sm:$0xff]
        %v4251 = vld [vmem:[%s2709 + $0x70] sm:$0xff]
        %v4252 = vld [vmem:[%s2709 + $0x80] sm:$0xff]
        %v4253 = vld [vmem:[%s2709 + $0x88] sm:$0xff]
        %v4254 = vld [vmem:[%s2709 + $0x98] sm:$0xff]
        %v4255 = vld [vmem:[%s2709 + $0xa0] sm:$0xff]
        %v4256 = vld [vmem:[%s2709 + $0xb0] sm:$0xff]
        %v4257 = vld [vmem:[%s2709 + $0xb8] sm:$0xff]
        %v4258 = vld [vmem:[%s2709 + $0xc8] sm:$0xff]
        %v4259 = vld [vmem:[%s2709 + $0xd0] sm:$0xff]
        %v4260 = vld [vmem:[%s2709 + $0xe0] sm:$0xff]
        %v4261 = vld [vmem:[%s2709 + $0xe8] sm:$0xff]
        %v4262 = vld [vmem:[%s2709 + $0xf8] sm:$0xff]
        %v4263 = vld [vmem:[%s2709 + $0x100] sm:$0xff]
        %v4264 = vld [vmem:[%s2709 + $0x110] sm:$0xff]
        %v4265 = vld [vmem:[%s2709 + $0x118] sm:$0xff]
        %v4266 = vld [vmem:[%s2709 + $0x128] sm:$0xff]
        %v4267 = vld [vmem:[%s2709 + $0x130] sm:$0xff]
        %v4268 = vld [vmem:[%s2709 + $0x140] sm:$0xff]
        %v4269 = vld [vmem:[%s2709 + $0x148] sm:$0xff]
        %v4270 = vld [vmem:[%s2709 + $0x158] sm:$0xff]
        %v4271 = vld [vmem:[%s2709 + $0x160] sm:$0xff]
        %v4272 = vld [vmem:[%s2709 + $0x170] sm:$0xff]
        %v4273 = vld [vmem:[%s2709 + $0x178] sm:$0xff]
        %4306 = vrot.lane.b32.xlu0 %v4210, 32
        %v4307 = vpop.permute.xlu0 %4306
        %4308 = vrot.lane.b32.xlu0 %v4211, 32
        %v4309 = vpop.permute.xlu0 %4308
        %4310 = vrot.lane.b32.xlu0 %v4212, 32
        %v4311 = vpop.permute.xlu0 %4310
        %4312 = vrot.lane.b32.xlu0 %v4213, 32
        %v4313 = vpop.permute.xlu0 %4312
        %4314 = vrot.lane.b32.xlu0 %v4214, 32
        %v4315 = vpop.permute.xlu0 %4314
        %4316 = vrot.lane.b32.xlu0 %v4215, 32
        %v4317 = vpop.permute.xlu0 %4316
        %4318 = vrot.lane.b32.xlu0 %v4216, 32
        %v4319 = vpop.permute.xlu0 %4318
        %4320 = vrot.lane.b32.xlu0 %v4217, 32
        %v4321 = vpop.permute.xlu0 %4320
        %4322 = vrot.lane.b32.xlu0 %v4218, 32
        %v4323 = vpop.permute.xlu0 %4322
        %4324 = vrot.lane.b32.xlu0 %v4219, 32
        %v4325 = vpop.permute.xlu0 %4324
        %4326 = vrot.lane.b32.xlu0 %v4220, 32
        %v4327 = vpop.permute.xlu0 %4326
        %4328 = vrot.lane.b32.xlu0 %v4221, 32
        %v4329 = vpop.permute.xlu0 %4328
        %4330 = vrot.lane.b32.xlu0 %v4222, 32
        %v4331 = vpop.permute.xlu0 %4330
        %4332 = vrot.lane.b32.xlu0 %v4223, 32
        %v4333 = vpop.permute.xlu0 %4332
        %4334 = vrot.lane.b32.xlu0 %v4224, 32
        %v4335 = vpop.permute.xlu0 %4334
        %4336 = vrot.lane.b32.xlu0 %v4225, 32
        %v4337 = vpop.permute.xlu0 %4336
        %4338 = vrot.lane.b32.xlu0 %v4226, 32
        %v4339 = vpop.permute.xlu0 %4338
        %4340 = vrot.lane.b32.xlu0 %v4227, 32
        %v4341 = vpop.permute.xlu0 %4340
        %4342 = vrot.lane.b32.xlu0 %v4228, 32
        %v4343 = vpop.permute.xlu0 %4342
        %4344 = vrot.lane.b32.xlu0 %v4229, 32
        %v4345 = vpop.permute.xlu0 %4344
        %4346 = vrot.lane.b32.xlu0 %v4230, 32
        %v4347 = vpop.permute.xlu0 %4346
        %4348 = vrot.lane.b32.xlu0 %v4231, 32
        %v4349 = vpop.permute.xlu0 %4348
        %4350 = vrot.lane.b32.xlu0 %v4232, 32
        %v4351 = vpop.permute.xlu0 %4350
        %4352 = vrot.lane.b32.xlu0 %v4233, 32
        %v4353 = vpop.permute.xlu0 %4352
        %4354 = vrot.lane.b32.xlu0 %v4234, 32
        %v4355 = vpop.permute.xlu0 %4354
        %4356 = vrot.lane.b32.xlu0 %v4235, 32
        %v4357 = vpop.permute.xlu0 %4356
        %4358 = vrot.lane.b32.xlu0 %v4236, 32
        %v4359 = vpop.permute.xlu0 %4358
        %4360 = vrot.lane.b32.xlu0 %v4237, 32
        %v4361 = vpop.permute.xlu0 %4360
        %4362 = vrot.lane.b32.xlu0 %v4238, 32
        %v4363 = vpop.permute.xlu0 %4362
        %4364 = vrot.lane.b32.xlu0 %v4239, 32
        %v4365 = vpop.permute.xlu0 %4364
        %4366 = vrot.lane.b32.xlu0 %v4240, 32
        %v4367 = vpop.permute.xlu0 %4366
        %4368 = vrot.lane.b32.xlu0 %v4241, 32
        %v4369 = vpop.permute.xlu0 %4368
        %4434 = vrot.lane.b32.xlu0 %v4242, 64
        %v4435 = vpop.permute.xlu0 %4434
        %4436 = vrot.lane.b32.xlu0 %v4243, 64
        %v4437 = vpop.permute.xlu0 %4436
        %4438 = vrot.lane.b32.xlu0 %v4244, 64
        %v4439 = vpop.permute.xlu0 %4438
        %4440 = vrot.lane.b32.xlu0 %v4245, 64
        %v4441 = vpop.permute.xlu0 %4440
        %4442 = vrot.lane.b32.xlu0 %v4246, 64
        %v4443 = vpop.permute.xlu0 %4442
        %4444 = vrot.lane.b32.xlu0 %v4247, 64
        %v4445 = vpop.permute.xlu0 %4444
        %4446 = vrot.lane.b32.xlu0 %v4248, 64
        %v4447 = vpop.permute.xlu0 %4446
        %4448 = vrot.lane.b32.xlu0 %v4249, 64
        %v4449 = vpop.permute.xlu0 %4448
        %4450 = vrot.lane.b32.xlu0 %v4250, 64
        %v4451 = vpop.permute.xlu0 %4450
        %4452 = vrot.lane.b32.xlu0 %v4251, 64
        %v4453 = vpop.permute.xlu0 %4452
        %4454 = vrot.lane.b32.xlu0 %v4252, 64
        %v4455 = vpop.permute.xlu0 %4454
        %4456 = vrot.lane.b32.xlu0 %v4253, 64
        %v4457 = vpop.permute.xlu0 %4456
        %4458 = vrot.lane.b32.xlu0 %v4254, 64
        %v4459 = vpop.permute.xlu0 %4458
        %4460 = vrot.lane.b32.xlu0 %v4255, 64
        %v4461 = vpop.permute.xlu0 %4460
        %4462 = vrot.lane.b32.xlu0 %v4256, 64
        %v4463 = vpop.permute.xlu0 %4462
        %4464 = vrot.lane.b32.xlu0 %v4257, 64
        %v4465 = vpop.permute.xlu0 %4464
        %4466 = vrot.lane.b32.xlu0 %v4258, 64
        %v4467 = vpop.permute.xlu0 %4466
        %4468 = vrot.lane.b32.xlu0 %v4259, 64
        %v4469 = vpop.permute.xlu0 %4468
        %4470 = vrot.lane.b32.xlu0 %v4260, 64
        %v4471 = vpop.permute.xlu0 %4470
        %4472 = vrot.lane.b32.xlu0 %v4261, 64
        %v4473 = vpop.permute.xlu0 %4472
        %4474 = vrot.lane.b32.xlu0 %v4262, 64
        %v4475 = vpop.permute.xlu0 %4474
        %4476 = vrot.lane.b32.xlu0 %v4263, 64
        %v4477 = vpop.permute.xlu0 %4476
        %4478 = vrot.lane.b32.xlu0 %v4264, 64
        %v4479 = vpop.permute.xlu0 %4478
        %4480 = vrot.lane.b32.xlu0 %v4265, 64
        %v4481 = vpop.permute.xlu0 %4480
        %4482 = vrot.lane.b32.xlu0 %v4266, 64
        %v4483 = vpop.permute.xlu0 %4482
        %4484 = vrot.lane.b32.xlu0 %v4267, 64
        %v4485 = vpop.permute.xlu0 %4484
        %4486 = vrot.lane.b32.xlu0 %v4268, 64
        %v4487 = vpop.permute.xlu0 %4486
        %4488 = vrot.lane.b32.xlu0 %v4269, 64
        %v4489 = vpop.permute.xlu0 %4488
        %4490 = vrot.lane.b32.xlu0 %v4270, 64
        %v4491 = vpop.permute.xlu0 %4490
        %4492 = vrot.lane.b32.xlu0 %v4271, 64
        %v4493 = vpop.permute.xlu0 %4492
        %4494 = vrot.lane.b32.xlu0 %v4272, 64
        %v4495 = vpop.permute.xlu0 %4494
        %4496 = vrot.lane.b32.xlu0 %v4273, 64
        %v4497 = vpop.permute.xlu0 %4496
        %v4530 = vsel %vm777, %v4178, %v4307
        %v4531 = vsel %vm777, %v4179, %v4309
        %v4532 = vsel %vm777, %v4180, %v4311
        %v4533 = vsel %vm777, %v4181, %v4313
        %v4534 = vsel %vm777, %v4182, %v4315
        %v4535 = vsel %vm777, %v4183, %v4317
        %v4536 = vsel %vm777, %v4184, %v4319
        %v4537 = vsel %vm777, %v4185, %v4321
        %v4538 = vsel %vm777, %v4186, %v4323
        %v4539 = vsel %vm777, %v4187, %v4325
        %v4540 = vsel %vm777, %v4188, %v4327
        %v4541 = vsel %vm777, %v4189, %v4329
        %v4542 = vsel %vm777, %v4190, %v4331
        %v4543 = vsel %vm777, %v4191, %v4333
        %v4544 = vsel %vm777, %v4192, %v4335
        %v4545 = vsel %vm777, %v4193, %v4337
        %v4546 = vsel %vm777, %v4194, %v4339
        %v4547 = vsel %vm777, %v4195, %v4341
        %v4548 = vsel %vm777, %v4196, %v4343
        %v4549 = vsel %vm777, %v4197, %v4345
        %v4550 = vsel %vm777, %v4198, %v4347
        %v4551 = vsel %vm777, %v4199, %v4349
        %v4552 = vsel %vm777, %v4200, %v4351
        %v4553 = vsel %vm777, %v4201, %v4353
        %v4554 = vsel %vm777, %v4202, %v4355
        %v4555 = vsel %vm777, %v4203, %v4357
        %v4556 = vsel %vm777, %v4204, %v4359
        %v4557 = vsel %vm777, %v4205, %v4361
        %v4558 = vsel %vm777, %v4206, %v4363
        %v4559 = vsel %vm777, %v4207, %v4365
        %v4560 = vsel %vm777, %v4208, %v4367
        %v4561 = vsel %vm777, %v4209, %v4369
        %v4562 = vsel %vm810, %v4530, %v4435
        %v4563 = vsel %vm810, %v4531, %v4437
        %v4564 = vsel %vm810, %v4532, %v4439
        %v4565 = vsel %vm810, %v4533, %v4441
        %v4566 = vsel %vm810, %v4534, %v4443
        %v4567 = vsel %vm810, %v4535, %v4445
        %v4568 = vsel %vm810, %v4536, %v4447
        %v4569 = vsel %vm810, %v4537, %v4449
        %v4570 = vsel %vm810, %v4538, %v4451
        %v4571 = vsel %vm810, %v4539, %v4453
        %v4572 = vsel %vm810, %v4540, %v4455
        %v4573 = vsel %vm810, %v4541, %v4457
        %v4574 = vsel %vm810, %v4542, %v4459
        %v4575 = vsel %vm810, %v4543, %v4461
        %v4576 = vsel %vm810, %v4544, %v4463
        %v4577 = vsel %vm810, %v4545, %v4465
        %v4578 = vsel %vm810, %v4546, %v4467
        %v4579 = vsel %vm810, %v4547, %v4469
        %v4580 = vsel %vm810, %v4548, %v4471
        %v4581 = vsel %vm810, %v4549, %v4473
        %v4582 = vsel %vm810, %v4550, %v4475
        %v4583 = vsel %vm810, %v4551, %v4477
        %v4584 = vsel %vm810, %v4552, %v4479
        %v4585 = vsel %vm810, %v4553, %v4481
        %v4586 = vsel %vm810, %v4554, %v4483
        %v4587 = vsel %vm810, %v4555, %v4485
        %v4588 = vsel %vm810, %v4556, %v4487
        %v4589 = vsel %vm810, %v4557, %v4489
        %v4590 = vsel %vm810, %v4558, %v4491
        %v4591 = vsel %vm810, %v4559, %v4493
        %v4592 = vsel %vm810, %v4560, %v4495
        %v4593 = vsel %vm810, %v4561, %v4497
        %s4594 = scalar_lea.vmem %s1, 480
        %v4595 = vld [vmem:[%s4594] sm:$0xff]
        %v4596 = vld [vmem:[%s4594 + $0x8] sm:$0xff]
        %v4597 = vld [vmem:[%s4594 + $0x10] sm:$0xff]
        %v4598 = vld [vmem:[%s4594 + $0x18] sm:$0xff]
        %v4599 = vld [vmem:[%s4594 + $0x20] sm:$0xff]
        %v4600 = vld [vmem:[%s4594 + $0x28] sm:$0xff]
        %v4601 = vld [vmem:[%s4594 + $0x30] sm:$0xff]
        %v4602 = vld [vmem:[%s4594 + $0x38] sm:$0xff]
        %v4603 = vld [vmem:[%s4594 + $0x40] sm:$0xff]
        %v4604 = vld [vmem:[%s4594 + $0x48] sm:$0xff]
        %v4605 = vld [vmem:[%s4594 + $0x50] sm:$0xff]
        %v4606 = vld [vmem:[%s4594 + $0x58] sm:$0xff]
        %v4608 = vsel %vm1284, %v4562, 0
        %v4611 = vsel %vm1284, %v4563, 0
        %v4614 = vsel %vm1284, %v4564, 0
        %v4617 = vsel %vm1284, %v4565, 0
        %v4620 = vsel %vm1284, %v4566, 0
        %v4623 = vsel %vm1284, %v4567, 0
        %v4626 = vsel %vm1284, %v4568, 0
        %v4629 = vsel %vm1284, %v4569, 0
        %v4632 = vsel %vm1284, %v4570, 0
        %v4635 = vsel %vm1284, %v4571, 0
        %v4638 = vsel %vm1284, %v4572, 0
        %v4641 = vsel %vm1284, %v4573, 0
        %v4644 = vsel %vm1284, %v4574, 0
        %v4647 = vsel %vm1284, %v4575, 0
        %v4650 = vsel %vm1284, %v4576, 0
        %v4653 = vsel %vm1284, %v4577, 0
        %v4656 = vsel %vm1284, %v4578, 0
        %v4659 = vsel %vm1284, %v4579, 0
        %v4662 = vsel %vm1284, %v4580, 0
        %v4665 = vsel %vm1284, %v4581, 0
        %v4668 = vsel %vm1284, %v4582, 0
        %v4671 = vsel %vm1284, %v4583, 0
        %v4674 = vsel %vm1284, %v4584, 0
        %v4677 = vsel %vm1284, %v4585, 0
        %v4680 = vsel %vm1284, %v4586, 0
        %v4683 = vsel %vm1284, %v4587, 0
        %v4686 = vsel %vm1284, %v4588, 0
        %v4689 = vsel %vm1284, %v4589, 0
        %v4692 = vsel %vm1284, %v4590, 0
        %v4695 = vsel %vm1284, %v4591, 0
        %v4698 = vsel %vm1284, %v4592, 0
        %v4701 = vsel %vm1284, %v4593, 0
        %4703 = vmatprep.subr.mxu0 0.0
        %4704 = vmatpush1.msra.mxu0 %v4595
        %4705 = vmatprep.subr.mxu0 0.0
        %4706 = vmatpush1.msra.mxu0 %v4596
        %4707 = vmatprep.subr.mxu0 0.0
        %4708 = vmatpush1.msra.mxu0 %v4597
        %4709 = vmatprep.subr.mxu0 0.0
        %4710 = vmatpush1.msra.mxu0 %v4598
        %4711 = vmatprep.subr.mxu0 0.0
        %4712 = vmatpush1.msra.mxu0 %v4599
        %4713 = vmatprep.subr.mxu0 0.0
        %4714 = vmatpush1.msra.mxu0 %v4600
        %4715 = vmatprep.subr.mxu0 0.0
        %4716 = vmatpush1.msra.mxu0 %v4601
        %4717 = vmatprep.subr.mxu0 0.0
        %4718 = vmatpush1.msra.mxu0 %v4602
        %4719 = vmatprep.subr.mxu0 0.0
        %4720 = vmatpush1.msra.mxu0 %v4603
        %4721 = vmatprep.subr.mxu0 0.0
        %4722 = vmatpush1.msra.mxu0 %v4604
        %4723 = vmatprep.subr.mxu0 0.0
        %4724 = vmatpush1.msra.mxu0 %v4605
        %4725 = vmatprep.subr.mxu0 0.0
        %4726 = vmatpush1.msra.mxu0 %v4606
        %4727 = vmatprep.subr.mxu0 0.0
        %4728 = vmatpush1.msra.mxu0 0.0
        %4729 = vmatprep.subr.mxu0 0.0
        %4730 = vmatpush1.msra.mxu0 0.0
        %4731 = vmatprep.subr.mxu0 0.0
        %4732 = vmatpush1.msra.mxu0 0.0
        %4733 = vmatprep.subr.mxu0 0.0
        %4734 = vmatpush1.msra.mxu0 0.0
        %4735 = vmatprep.subr.mxu0 0.0
        %4736 = vmatpush1.msra.mxu0 0.0
        %4737 = vmatprep.subr.mxu0 0.0
        %4738 = vmatpush1.msra.mxu0 0.0
        %4739 = vmatprep.subr.mxu0 0.0
        %4740 = vmatpush1.msra.mxu0 0.0
        %4741 = vmatprep.subr.mxu0 0.0
        %4742 = vmatpush1.msra.mxu0 0.0
        %4743 = vmatprep.subr.mxu0 0.0
        %4744 = vmatpush1.msra.mxu0 0.0
        %4745 = vmatprep.subr.mxu0 0.0
        %4746 = vmatpush1.msra.mxu0 0.0
        %4747 = vmatprep.subr.mxu0 0.0
        %4748 = vmatpush1.msra.mxu0 0.0
        %4749 = vmatprep.subr.mxu0 0.0
        %4750 = vmatpush1.msra.mxu0 0.0
        %4751 = vmatprep.subr.mxu0 0.0
        %4752 = vmatpush1.msra.mxu0 0.0
        %4753 = vmatprep.subr.mxu0 0.0
        %4754 = vmatpush1.msra.mxu0 0.0
        %4755 = vmatprep.subr.mxu0 0.0
        %4756 = vmatpush1.msra.mxu0 0.0
        %4757 = vmatprep.subr.mxu0 0.0
        %4758 = vmatpush1.msra.mxu0 0.0
        %4759 = vmatprep.subr.mxu0 0.0
        %4760 = vmatpush1.msra.mxu0 0.0
        %4761 = vmatprep.subr.mxu0 0.0
        %4762 = vmatpush1.msra.mxu0 0.0
        %4763 = vmatprep.subr.mxu0 0.0
        %4764 = vmatpush1.msra.mxu0 0.0
        %4765 = vmatprep.subr.mxu0 0.0
        %4766 = vmatpush1.msra.mxu0 0.0
        %4767 = vmatprep.mubr.f32.mxu0 0.0
        %4768 = vmatmul.mubr.f32.gmra.mrb[0].mxu0 %v4608
        %v4769 = vpop.f32.mrb[0].mxu0
        %v4770 = vadd.f32 0.0, %v4769
        %v4771 = vpop.f32.mrb[0].mxu0
        %4772 = vmatprep.mubr.f32.mxu0 0.0
        %4773 = vmatmul.mubr.f32.gmra.mrb[0].mxu0 %v4611
        %v4774 = vpop.f32.mrb[0].mxu0
        %v4775 = vadd.f32 0.0, %v4774
        %v4776 = vpop.f32.mrb[0].mxu0
        %4777 = vmatprep.mubr.f32.mxu0 0.0
        %4778 = vmatmul.mubr.f32.gmra.mrb[0].mxu0 %v4614
        %v4779 = vpop.f32.mrb[0].mxu0
        %v4780 = vadd.f32 0.0, %v4779
        %v4781 = vpop.f32.mrb[0].mxu0
        %4782 = vmatprep.mubr.f32.mxu0 0.0
        %4783 = vmatmul.mubr.f32.gmra.mrb[0].mxu0 %v4617
        %v4784 = vpop.f32.mrb[0].mxu0
        %v4785 = vadd.f32 0.0, %v4784
        %v4786 = vpop.f32.mrb[0].mxu0
        %4787 = vmatprep.mubr.f32.mxu0 0.0
        %4788 = vmatmul.mubr.f32.gmra.mrb[0].mxu0 %v4620
        %v4789 = vpop.f32.mrb[0].mxu0
        %v4790 = vadd.f32 0.0, %v4789
        %v4791 = vpop.f32.mrb[0].mxu0
        %4792 = vmatprep.mubr.f32.mxu0 0.0
        %4793 = vmatmul.mubr.f32.gmra.mrb[0].mxu0 %v4623
        %v4794 = vpop.f32.mrb[0].mxu0
        %v4795 = vadd.f32 0.0, %v4794
        %v4796 = vpop.f32.mrb[0].mxu0
        %4797 = vmatprep.mubr.f32.mxu0 0.0
        %4798 = vmatmul.mubr.f32.gmra.mrb[0].mxu0 %v4626
        %v4799 = vpop.f32.mrb[0].mxu0
        %v4800 = vadd.f32 0.0, %v4799
        %v4801 = vpop.f32.mrb[0].mxu0
        %4802 = vmatprep.mubr.f32.mxu0 0.0
        %4803 = vmatmul.mubr.f32.gmra.mrb[0].mxu0 %v4629
        %v4804 = vpop.f32.mrb[0].mxu0
        %v4805 = vadd.f32 0.0, %v4804
        %v4806 = vpop.f32.mrb[0].mxu0
        %4807 = vmatprep.mubr.f32.mxu0 0.0
        %4808 = vmatmul.mubr.f32.gmra.mrb[0].mxu0 %v4632
        %v4809 = vpop.f32.mrb[0].mxu0
        %v4810 = vadd.f32 0.0, %v4809
        %v4811 = vpop.f32.mrb[0].mxu0
        %4812 = vmatprep.mubr.f32.mxu0 0.0
        %4813 = vmatmul.mubr.f32.gmra.mrb[0].mxu0 %v4635
        %v4814 = vpop.f32.mrb[0].mxu0
        %v4815 = vadd.f32 0.0, %v4814
        %v4816 = vpop.f32.mrb[0].mxu0
        %4817 = vmatprep.mubr.f32.mxu0 0.0
        %4818 = vmatmul.mubr.f32.gmra.mrb[0].mxu0 %v4638
        %v4819 = vpop.f32.mrb[0].mxu0
        %v4820 = vadd.f32 0.0, %v4819
        %v4821 = vpop.f32.mrb[0].mxu0
        %4822 = vmatprep.mubr.f32.mxu0 0.0
        %4823 = vmatmul.mubr.f32.gmra.mrb[0].mxu0 %v4641
        %v4824 = vpop.f32.mrb[0].mxu0
        %v4825 = vadd.f32 0.0, %v4824
        %v4826 = vpop.f32.mrb[0].mxu0
        %4827 = vmatprep.mubr.f32.mxu0 0.0
        %4828 = vmatmul.mubr.f32.gmra.mrb[0].mxu0 %v4644
        %v4829 = vpop.f32.mrb[0].mxu0
        %v4830 = vadd.f32 0.0, %v4829
        %v4831 = vpop.f32.mrb[0].mxu0
        %4832 = vmatprep.mubr.f32.mxu0 0.0
        %4833 = vmatmul.mubr.f32.gmra.mrb[0].mxu0 %v4647
        %v4834 = vpop.f32.mrb[0].mxu0
        %v4835 = vadd.f32 0.0, %v4834
        %v4836 = vpop.f32.mrb[0].mxu0
        %4837 = vmatprep.mubr.f32.mxu0 0.0
        %4838 = vmatmul.mubr.f32.gmra.mrb[0].mxu0 %v4650
        %v4839 = vpop.f32.mrb[0].mxu0
        %v4840 = vadd.f32 0.0, %v4839
        %v4841 = vpop.f32.mrb[0].mxu0
        %4842 = vmatprep.mubr.f32.mxu0 0.0
        %4843 = vmatmul.mubr.f32.gmra.mrb[0].mxu0 %v4653
        %v4844 = vpop.f32.mrb[0].mxu0
        %v4845 = vadd.f32 0.0, %v4844
        %v4846 = vpop.f32.mrb[0].mxu0
        %4847 = vmatprep.mubr.f32.mxu0 0.0
        %4848 = vmatmul.mubr.f32.gmra.mrb[0].mxu0 %v4656
        %v4849 = vpop.f32.mrb[0].mxu0
        %v4850 = vadd.f32 0.0, %v4849
        %v4851 = vpop.f32.mrb[0].mxu0
        %4852 = vmatprep.mubr.f32.mxu0 0.0
        %4853 = vmatmul.mubr.f32.gmra.mrb[0].mxu0 %v4659
        %v4854 = vpop.f32.mrb[0].mxu0
        %v4855 = vadd.f32 0.0, %v4854
        %v4856 = vpop.f32.mrb[0].mxu0
        %4857 = vmatprep.mubr.f32.mxu0 0.0
        %4858 = vmatmul.mubr.f32.gmra.mrb[0].mxu0 %v4662
        %v4859 = vpop.f32.mrb[0].mxu0
        %v4860 = vadd.f32 0.0, %v4859
        %v4861 = vpop.f32.mrb[0].mxu0
        %4862 = vmatprep.mubr.f32.mxu0 0.0
        %4863 = vmatmul.mubr.f32.gmra.mrb[0].mxu0 %v4665
        %v4864 = vpop.f32.mrb[0].mxu0
        %v4865 = vadd.f32 0.0, %v4864
        %v4866 = vpop.f32.mrb[0].mxu0
        %4867 = vmatprep.mubr.f32.mxu0 0.0
        %4868 = vmatmul.mubr.f32.gmra.mrb[0].mxu0 %v4668
        %v4869 = vpop.f32.mrb[0].mxu0
        %v4870 = vadd.f32 0.0, %v4869
        %v4871 = vpop.f32.mrb[0].mxu0
        %4872 = vmatprep.mubr.f32.mxu0 0.0
        %4873 = vmatmul.mubr.f32.gmra.mrb[0].mxu0 %v4671
        %v4874 = vpop.f32.mrb[0].mxu0
        %v4875 = vadd.f32 0.0, %v4874
        %v4876 = vpop.f32.mrb[0].mxu0
        %4877 = vmatprep.mubr.f32.mxu0 0.0
        %4878 = vmatmul.mubr.f32.gmra.mrb[0].mxu0 %v4674
        %v4879 = vpop.f32.mrb[0].mxu0
        %v4880 = vadd.f32 0.0, %v4879
        %v4881 = vpop.f32.mrb[0].mxu0
        %4882 = vmatprep.mubr.f32.mxu0 0.0
        %4883 = vmatmul.mubr.f32.gmra.mrb[0].mxu0 %v4677
        %v4884 = vpop.f32.mrb[0].mxu0
        %v4885 = vadd.f32 0.0, %v4884
        %v4886 = vpop.f32.mrb[0].mxu0
        %4887 = vmatprep.mubr.f32.mxu0 0.0
        %4888 = vmatmul.mubr.f32.gmra.mrb[0].mxu0 %v4680
        %v4889 = vpop.f32.mrb[0].mxu0
        %v4890 = vadd.f32 0.0, %v4889
        %v4891 = vpop.f32.mrb[0].mxu0
        %4892 = vmatprep.mubr.f32.mxu0 0.0
        %4893 = vmatmul.mubr.f32.gmra.mrb[0].mxu0 %v4683
        %v4894 = vpop.f32.mrb[0].mxu0
        %v4895 = vadd.f32 0.0, %v4894
        %v4896 = vpop.f32.mrb[0].mxu0
        %4897 = vmatprep.mubr.f32.mxu0 0.0
        %4898 = vmatmul.mubr.f32.gmra.mrb[0].mxu0 %v4686
        %v4899 = vpop.f32.mrb[0].mxu0
        %v4900 = vadd.f32 0.0, %v4899
        %v4901 = vpop.f32.mrb[0].mxu0
        %4902 = vmatprep.mubr.f32.mxu0 0.0
        %4903 = vmatmul.mubr.f32.gmra.mrb[0].mxu0 %v4689
        %v4904 = vpop.f32.mrb[0].mxu0
        %v4905 = vadd.f32 0.0, %v4904
        %v4906 = vpop.f32.mrb[0].mxu0
        %4907 = vmatprep.mubr.f32.mxu0 0.0
        %4908 = vmatmul.mubr.f32.gmra.mrb[0].mxu0 %v4692
        %v4909 = vpop.f32.mrb[0].mxu0
        %v4910 = vadd.f32 0.0, %v4909
        %v4911 = vpop.f32.mrb[0].mxu0
        %4912 = vmatprep.mubr.f32.mxu0 0.0
        %4913 = vmatmul.mubr.f32.gmra.mrb[0].mxu0 %v4695
        %v4914 = vpop.f32.mrb[0].mxu0
        %v4915 = vadd.f32 0.0, %v4914
        %v4916 = vpop.f32.mrb[0].mxu0
        %4917 = vmatprep.mubr.f32.mxu0 0.0
        %4918 = vmatmul.mubr.f32.gmra.mrb[0].mxu0 %v4698
        %v4919 = vpop.f32.mrb[0].mxu0
        %v4920 = vadd.f32 0.0, %v4919
        %v4921 = vpop.f32.mrb[0].mxu0
        %4922 = vmatprep.mubr.f32.mxu0 0.0
        %4923 = vmatmul.mubr.f32.gmra.mrb[0].mxu0 %v4701
        %v4924 = vpop.f32.mrb[0].mxu0
        %v4925 = vadd.f32 0.0, %v4924
        %v4926 = vpop.f32.mrb[0].mxu0
        %4927 = vdwg.mxu0
        %v4928 = vadd.f32 %v4146, %v4770
        %v4929 = vadd.f32 %v4147, %v4775
        %v4930 = vadd.f32 %v4148, %v4780
        %v4931 = vadd.f32 %v4149, %v4785
        %v4932 = vadd.f32 %v4150, %v4790
        %v4933 = vadd.f32 %v4151, %v4795
        %v4934 = vadd.f32 %v4152, %v4800
        %v4935 = vadd.f32 %v4153, %v4805
        %v4936 = vadd.f32 %v4154, %v4810
        %v4937 = vadd.f32 %v4155, %v4815
        %v4938 = vadd.f32 %v4156, %v4820
        %v4939 = vadd.f32 %v4157, %v4825
        %v4940 = vadd.f32 %v4158, %v4830
        %v4941 = vadd.f32 %v4159, %v4835
        %v4942 = vadd.f32 %v4160, %v4840
        %v4943 = vadd.f32 %v4161, %v4845
        %v4944 = vadd.f32 %v4162, %v4850
        %v4945 = vadd.f32 %v4163, %v4855
        %v4946 = vadd.f32 %v4164, %v4860
        %v4947 = vadd.f32 %v4165, %v4865
        %v4948 = vadd.f32 %v4166, %v4870
        %v4949 = vadd.f32 %v4167, %v4875
        %v4950 = vadd.f32 %v4168, %v4880
        %v4951 = vadd.f32 %v4169, %v4885
        %v4952 = vadd.f32 %v4170, %v4890
        %v4953 = vadd.f32 %v4171, %v4895
        %v4954 = vadd.f32 %v4172, %v4900
        %v4955 = vadd.f32 %v4173, %v4905
        %v4956 = vadd.f32 %v4174, %v4910
        %v4957 = vadd.f32 %v4175, %v4915
        %v4958 = vadd.f32 %v4176, %v4920
        %v4959 = vadd.f32 %v4177, %v4925
        %s4960 = scalar_lea.vmem %s422, 120
        %v4961 = vld [vmem:[%s4960 + $0x3] sm:$0xff]
        %v4962 = vld [vmem:[%s4960 + $0xb] sm:$0xff]
        %v4963 = vld [vmem:[%s4960 + $0x1b] sm:$0xff]
        %v4964 = vld [vmem:[%s4960 + $0x23] sm:$0xff]
        %v4965 = vld [vmem:[%s4960 + $0x33] sm:$0xff]
        %v4966 = vld [vmem:[%s4960 + $0x3b] sm:$0xff]
        %v4967 = vld [vmem:[%s4960 + $0x4b] sm:$0xff]
        %v4968 = vld [vmem:[%s4960 + $0x53] sm:$0xff]
        %v4969 = vld [vmem:[%s4960 + $0x63] sm:$0xff]
        %v4970 = vld [vmem:[%s4960 + $0x6b] sm:$0xff]
        %v4971 = vld [vmem:[%s4960 + $0x7b] sm:$0xff]
        %v4972 = vld [vmem:[%s4960 + $0x83] sm:$0xff]
        %v4973 = vld [vmem:[%s4960 + $0x93] sm:$0xff]
        %v4974 = vld [vmem:[%s4960 + $0x9b] sm:$0xff]
        %v4975 = vld [vmem:[%s4960 + $0xab] sm:$0xff]
        %v4976 = vld [vmem:[%s4960 + $0xb3] sm:$0xff]
        %v4977 = vld [vmem:[%s4960 + $0xc3] sm:$0xff]
        %v4978 = vld [vmem:[%s4960 + $0xcb] sm:$0xff]
        %v4979 = vld [vmem:[%s4960 + $0xdb] sm:$0xff]
        %v4980 = vld [vmem:[%s4960 + $0xe3] sm:$0xff]
        %v4981 = vld [vmem:[%s4960 + $0xf3] sm:$0xff]
        %v4982 = vld [vmem:[%s4960 + $0xfb] sm:$0xff]
        %v4983 = vld [vmem:[%s4960 + $0x10b] sm:$0xff]
        %v4984 = vld [vmem:[%s4960 + $0x113] sm:$0xff]
        %v4985 = vld [vmem:[%s4960 + $0x123] sm:$0xff]
        %v4986 = vld [vmem:[%s4960 + $0x12b] sm:$0xff]
        %v4987 = vld [vmem:[%s4960 + $0x13b] sm:$0xff]
        %v4988 = vld [vmem:[%s4960 + $0x143] sm:$0xff]
        %v4989 = vld [vmem:[%s4960 + $0x153] sm:$0xff]
        %v4990 = vld [vmem:[%s4960 + $0x15b] sm:$0xff]
        %v4991 = vld [vmem:[%s4960 + $0x16b] sm:$0xff]
        %v4992 = vld [vmem:[%s4960 + $0x173] sm:$0xff]
        %s4993 = scalar_lea.vmem %s422, 144
        %v4994 = vld [vmem:[%s4993 + $0x2] sm:$0xff]
        %v4995 = vld [vmem:[%s4993 + $0xa] sm:$0xff]
        %v4996 = vld [vmem:[%s4993 + $0x1a] sm:$0xff]
        %v4997 = vld [vmem:[%s4993 + $0x22] sm:$0xff]
        %v4998 = vld [vmem:[%s4993 + $0x32] sm:$0xff]
        %v4999 = vld [vmem:[%s4993 + $0x3a] sm:$0xff]
        %v5000 = vld [vmem:[%s4993 + $0x4a] sm:$0xff]
        %v5001 = vld [vmem:[%s4993 + $0x52] sm:$0xff]
        %v5002 = vld [vmem:[%s4993 + $0x62] sm:$0xff]
        %v5003 = vld [vmem:[%s4993 + $0x6a] sm:$0xff]
        %v5004 = vld [vmem:[%s4993 + $0x7a] sm:$0xff]
        %v5005 = vld [vmem:[%s4993 + $0x82] sm:$0xff]
        %v5006 = vld [vmem:[%s4993 + $0x92] sm:$0xff]
        %v5007 = vld [vmem:[%s4993 + $0x9a] sm:$0xff]
        %v5008 = vld [vmem:[%s4993 + $0xaa] sm:$0xff]
        %v5009 = vld [vmem:[%s4993 + $0xb2] sm:$0xff]
        %v5010 = vld [vmem:[%s4993 + $0xc2] sm:$0xff]
        %v5011 = vld [vmem:[%s4993 + $0xca] sm:$0xff]
        %v5012 = vld [vmem:[%s4993 + $0xda] sm:$0xff]
        %v5013 = vld [vmem:[%s4993 + $0xe2] sm:$0xff]
        %v5014 = vld [vmem:[%s4993 + $0xf2] sm:$0xff]
        %v5015 = vld [vmem:[%s4993 + $0xfa] sm:$0xff]
        %v5016 = vld [vmem:[%s4993 + $0x10a] sm:$0xff]
        %v5017 = vld [vmem:[%s4993 + $0x112] sm:$0xff]
        %v5018 = vld [vmem:[%s4993 + $0x122] sm:$0xff]
        %v5019 = vld [vmem:[%s4993 + $0x12a] sm:$0xff]
        %v5020 = vld [vmem:[%s4993 + $0x13a] sm:$0xff]
        %v5021 = vld [vmem:[%s4993 + $0x142] sm:$0xff]
        %v5022 = vld [vmem:[%s4993 + $0x152] sm:$0xff]
        %v5023 = vld [vmem:[%s4993 + $0x15a] sm:$0xff]
        %v5024 = vld [vmem:[%s4993 + $0x16a] sm:$0xff]
        %v5025 = vld [vmem:[%s4993 + $0x172] sm:$0xff]
        %s5026 = scalar_lea.vmem %s422, 192
        %v5027 = vld [vmem:[%s5026] sm:$0xff]
        %v5028 = vld [vmem:[%s5026 + $0x8] sm:$0xff]
        %v5029 = vld [vmem:[%s5026 + $0x18] sm:$0xff]
        %v5030 = vld [vmem:[%s5026 + $0x20] sm:$0xff]
        %v5031 = vld [vmem:[%s5026 + $0x30] sm:$0xff]
        %v5032 = vld [vmem:[%s5026 + $0x38] sm:$0xff]
        %v5033 = vld [vmem:[%s5026 + $0x48] sm:$0xff]
        %v5034 = vld [vmem:[%s5026 + $0x50] sm:$0xff]
        %v5035 = vld [vmem:[%s5026 + $0x60] sm:$0xff]
        %v5036 = vld [vmem:[%s5026 + $0x68] sm:$0xff]
        %v5037 = vld [vmem:[%s5026 + $0x78] sm:$0xff]
        %v5038 = vld [vmem:[%s5026 + $0x80] sm:$0xff]
        %v5039 = vld [vmem:[%s5026 + $0x90] sm:$0xff]
        %v5040 = vld [vmem:[%s5026 + $0x98] sm:$0xff]
        %v5041 = vld [vmem:[%s5026 + $0xa8] sm:$0xff]
        %v5042 = vld [vmem:[%s5026 + $0xb0] sm:$0xff]
        %v5043 = vld [vmem:[%s5026 + $0xc0] sm:$0xff]
        %v5044 = vld [vmem:[%s5026 + $0xc8] sm:$0xff]
        %v5045 = vld [vmem:[%s5026 + $0xd8] sm:$0xff]
        %v5046 = vld [vmem:[%s5026 + $0xe0] sm:$0xff]
        %v5047 = vld [vmem:[%s5026 + $0xf0] sm:$0xff]
        %v5048 = vld [vmem:[%s5026 + $0xf8] sm:$0xff]
        %v5049 = vld [vmem:[%s5026 + $0x108] sm:$0xff]
        %v5050 = vld [vmem:[%s5026 + $0x110] sm:$0xff]
        %v5051 = vld [vmem:[%s5026 + $0x120] sm:$0xff]
        %v5052 = vld [vmem:[%s5026 + $0x128] sm:$0xff]
        %v5053 = vld [vmem:[%s5026 + $0x138] sm:$0xff]
        %v5054 = vld [vmem:[%s5026 + $0x140] sm:$0xff]
        %v5055 = vld [vmem:[%s5026 + $0x150] sm:$0xff]
        %v5056 = vld [vmem:[%s5026 + $0x158] sm:$0xff]
        %v5057 = vld [vmem:[%s5026 + $0x168] sm:$0xff]
        %v5058 = vld [vmem:[%s5026 + $0x170] sm:$0xff]
        %5091 = vrot.lane.b32.xlu0 %v4994, 32
        %v5092 = vpop.permute.xlu0 %5091
        %5093 = vrot.lane.b32.xlu0 %v4995, 32
        %v5094 = vpop.permute.xlu0 %5093
        %5095 = vrot.lane.b32.xlu0 %v4996, 32
        %v5096 = vpop.permute.xlu0 %5095
        %5097 = vrot.lane.b32.xlu0 %v4997, 32
        %v5098 = vpop.permute.xlu0 %5097
        %5099 = vrot.lane.b32.xlu0 %v4998, 32
        %v5100 = vpop.permute.xlu0 %5099
        %5101 = vrot.lane.b32.xlu0 %v4999, 32
        %v5102 = vpop.permute.xlu0 %5101
        %5103 = vrot.lane.b32.xlu0 %v5000, 32
        %v5104 = vpop.permute.xlu0 %5103
        %5105 = vrot.lane.b32.xlu0 %v5001, 32
        %v5106 = vpop.permute.xlu0 %5105
        %5107 = vrot.lane.b32.xlu0 %v5002, 32
        %v5108 = vpop.permute.xlu0 %5107
        %5109 = vrot.lane.b32.xlu0 %v5003, 32
        %v5110 = vpop.permute.xlu0 %5109
        %5111 = vrot.lane.b32.xlu0 %v5004, 32
        %v5112 = vpop.permute.xlu0 %5111
        %5113 = vrot.lane.b32.xlu0 %v5005, 32
        %v5114 = vpop.permute.xlu0 %5113
        %5115 = vrot.lane.b32.xlu0 %v5006, 32
        %v5116 = vpop.permute.xlu0 %5115
        %5117 = vrot.lane.b32.xlu0 %v5007, 32
        %v5118 = vpop.permute.xlu0 %5117
        %5119 = vrot.lane.b32.xlu0 %v5008, 32
        %v5120 = vpop.permute.xlu0 %5119
        %5121 = vrot.lane.b32.xlu0 %v5009, 32
        %v5122 = vpop.permute.xlu0 %5121
        %5123 = vrot.lane.b32.xlu0 %v5010, 32
        %v5124 = vpop.permute.xlu0 %5123
        %5125 = vrot.lane.b32.xlu0 %v5011, 32
        %v5126 = vpop.permute.xlu0 %5125
        %5127 = vrot.lane.b32.xlu0 %v5012, 32
        %v5128 = vpop.permute.xlu0 %5127
        %5129 = vrot.lane.b32.xlu0 %v5013, 32
        %v5130 = vpop.permute.xlu0 %5129
        %5131 = vrot.lane.b32.xlu0 %v5014, 32
        %v5132 = vpop.permute.xlu0 %5131
        %5133 = vrot.lane.b32.xlu0 %v5015, 32
        %v5134 = vpop.permute.xlu0 %5133
        %5135 = vrot.lane.b32.xlu0 %v5016, 32
        %v5136 = vpop.permute.xlu0 %5135
        %5137 = vrot.lane.b32.xlu0 %v5017, 32
        %v5138 = vpop.permute.xlu0 %5137
        %5139 = vrot.lane.b32.xlu0 %v5018, 32
        %v5140 = vpop.permute.xlu0 %5139
        %5141 = vrot.lane.b32.xlu0 %v5019, 32
        %v5142 = vpop.permute.xlu0 %5141
        %5143 = vrot.lane.b32.xlu0 %v5020, 32
        %v5144 = vpop.permute.xlu0 %5143
        %5145 = vrot.lane.b32.xlu0 %v5021, 32
        %v5146 = vpop.permute.xlu0 %5145
        %5147 = vrot.lane.b32.xlu0 %v5022, 32
        %v5148 = vpop.permute.xlu0 %5147
        %5149 = vrot.lane.b32.xlu0 %v5023, 32
        %v5150 = vpop.permute.xlu0 %5149
        %5151 = vrot.lane.b32.xlu0 %v5024, 32
        %v5152 = vpop.permute.xlu0 %5151
        %5153 = vrot.lane.b32.xlu0 %v5025, 32
        %v5154 = vpop.permute.xlu0 %5153
        %5219 = vrot.lane.b32.xlu0 %v5027, 64
        %v5220 = vpop.permute.xlu0 %5219
        %5221 = vrot.lane.b32.xlu0 %v5028, 64
        %v5222 = vpop.permute.xlu0 %5221
        %5223 = vrot.lane.b32.xlu0 %v5029, 64
        %v5224 = vpop.permute.xlu0 %5223
        %5225 = vrot.lane.b32.xlu0 %v5030, 64
        %v5226 = vpop.permute.xlu0 %5225
        %5227 = vrot.lane.b32.xlu0 %v5031, 64
        %v5228 = vpop.permute.xlu0 %5227
        %5229 = vrot.lane.b32.xlu0 %v5032, 64
        %v5230 = vpop.permute.xlu0 %5229
        %5231 = vrot.lane.b32.xlu0 %v5033, 64
        %v5232 = vpop.permute.xlu0 %5231
        %5233 = vrot.lane.b32.xlu0 %v5034, 64
        %v5234 = vpop.permute.xlu0 %5233
        %5235 = vrot.lane.b32.xlu0 %v5035, 64
        %v5236 = vpop.permute.xlu0 %5235
        %5237 = vrot.lane.b32.xlu0 %v5036, 64
        %v5238 = vpop.permute.xlu0 %5237
        %5239 = vrot.lane.b32.xlu0 %v5037, 64
        %v5240 = vpop.permute.xlu0 %5239
        %5241 = vrot.lane.b32.xlu0 %v5038, 64
        %v5242 = vpop.permute.xlu0 %5241
        %5243 = vrot.lane.b32.xlu0 %v5039, 64
        %v5244 = vpop.permute.xlu0 %5243
        %5245 = vrot.lane.b32.xlu0 %v5040, 64
        %v5246 = vpop.permute.xlu0 %5245
        %5247 = vrot.lane.b32.xlu0 %v5041, 64
        %v5248 = vpop.permute.xlu0 %5247
        %5249 = vrot.lane.b32.xlu0 %v5042, 64
        %v5250 = vpop.permute.xlu0 %5249
        %5251 = vrot.lane.b32.xlu0 %v5043, 64
        %v5252 = vpop.permute.xlu0 %5251
        %5253 = vrot.lane.b32.xlu0 %v5044, 64
        %v5254 = vpop.permute.xlu0 %5253
        %5255 = vrot.lane.b32.xlu0 %v5045, 64
        %v5256 = vpop.permute.xlu0 %5255
        %5257 = vrot.lane.b32.xlu0 %v5046, 64
        %v5258 = vpop.permute.xlu0 %5257
        %5259 = vrot.lane.b32.xlu0 %v5047, 64
        %v5260 = vpop.permute.xlu0 %5259
        %5261 = vrot.lane.b32.xlu0 %v5048, 64
        %v5262 = vpop.permute.xlu0 %5261
        %5263 = vrot.lane.b32.xlu0 %v5049, 64
        %v5264 = vpop.permute.xlu0 %5263
        %5265 = vrot.lane.b32.xlu0 %v5050, 64
        %v5266 = vpop.permute.xlu0 %5265
        %5267 = vrot.lane.b32.xlu0 %v5051, 64
        %v5268 = vpop.permute.xlu0 %5267
        %5269 = vrot.lane.b32.xlu0 %v5052, 64
        %v5270 = vpop.permute.xlu0 %5269
        %5271 = vrot.lane.b32.xlu0 %v5053, 64
        %v5272 = vpop.permute.xlu0 %5271
        %5273 = vrot.lane.b32.xlu0 %v5054, 64
        %v5274 = vpop.permute.xlu0 %5273
        %5275 = vrot.lane.b32.xlu0 %v5055, 64
        %v5276 = vpop.permute.xlu0 %5275
        %5277 = vrot.lane.b32.xlu0 %v5056, 64
        %v5278 = vpop.permute.xlu0 %5277
        %5279 = vrot.lane.b32.xlu0 %v5057, 64
        %v5280 = vpop.permute.xlu0 %5279
        %5281 = vrot.lane.b32.xlu0 %v5058, 64
        %v5282 = vpop.permute.xlu0 %5281
        %v5315 = vsel %vm777, %v4961, %v5092
        %v5316 = vsel %vm777, %v4962, %v5094
        %v5317 = vsel %vm777, %v4963, %v5096
        %v5318 = vsel %vm777, %v4964, %v5098
        %v5319 = vsel %vm777, %v4965, %v5100
        %v5320 = vsel %vm777, %v4966, %v5102
        %v5321 = vsel %vm777, %v4967, %v5104
        %v5322 = vsel %vm777, %v4968, %v5106
        %v5323 = vsel %vm777, %v4969, %v5108
        %v5324 = vsel %vm777, %v4970, %v5110
        %v5325 = vsel %vm777, %v4971, %v5112
        %v5326 = vsel %vm777, %v4972, %v5114
        %v5327 = vsel %vm777, %v4973, %v5116
        %v5328 = vsel %vm777, %v4974, %v5118
        %v5329 = vsel %vm777, %v4975, %v5120
        %v5330 = vsel %vm777, %v4976, %v5122
        %v5331 = vsel %vm777, %v4977, %v5124
        %v5332 = vsel %vm777, %v4978, %v5126
        %v5333 = vsel %vm777, %v4979, %v5128
        %v5334 = vsel %vm777, %v4980, %v5130
        %v5335 = vsel %vm777, %v4981, %v5132
        %v5336 = vsel %vm777, %v4982, %v5134
        %v5337 = vsel %vm777, %v4983, %v5136
        %v5338 = vsel %vm777, %v4984, %v5138
        %v5339 = vsel %vm777, %v4985, %v5140
        %v5340 = vsel %vm777, %v4986, %v5142
        %v5341 = vsel %vm777, %v4987, %v5144
        %v5342 = vsel %vm777, %v4988, %v5146
        %v5343 = vsel %vm777, %v4989, %v5148
        %v5344 = vsel %vm777, %v4990, %v5150
        %v5345 = vsel %vm777, %v4991, %v5152
        %v5346 = vsel %vm777, %v4992, %v5154
        %v5347 = vsel %vm810, %v5315, %v5220
        %v5348 = vsel %vm810, %v5316, %v5222
        %v5349 = vsel %vm810, %v5317, %v5224
        %v5350 = vsel %vm810, %v5318, %v5226
        %v5351 = vsel %vm810, %v5319, %v5228
        %v5352 = vsel %vm810, %v5320, %v5230
        %v5353 = vsel %vm810, %v5321, %v5232
        %v5354 = vsel %vm810, %v5322, %v5234
        %v5355 = vsel %vm810, %v5323, %v5236
        %v5356 = vsel %vm810, %v5324, %v5238
        %v5357 = vsel %vm810, %v5325, %v5240
        %v5358 = vsel %vm810, %v5326, %v5242
        %v5359 = vsel %vm810, %v5327, %v5244
        %v5360 = vsel %vm810, %v5328, %v5246
        %v5361 = vsel %vm810, %v5329, %v5248
        %v5362 = vsel %vm810, %v5330, %v5250
        %v5363 = vsel %vm810, %v5331, %v5252
        %v5364 = vsel %vm810, %v5332, %v5254
        %v5365 = vsel %vm810, %v5333, %v5256
        %v5366 = vsel %vm810, %v5334, %v5258
        %v5367 = vsel %vm810, %v5335, %v5260
        %v5368 = vsel %vm810, %v5336, %v5262
        %v5369 = vsel %vm810, %v5337, %v5264
        %v5370 = vsel %vm810, %v5338, %v5266
        %v5371 = vsel %vm810, %v5339, %v5268
        %v5372 = vsel %vm810, %v5340, %v5270
        %v5373 = vsel %vm810, %v5341, %v5272
        %v5374 = vsel %vm810, %v5342, %v5274
        %v5375 = vsel %vm810, %v5343, %v5276
        %v5376 = vsel %vm810, %v5344, %v5278
        %v5377 = vsel %vm810, %v5345, %v5280
        %v5378 = vsel %vm810, %v5346, %v5282
        %s5379 = scalar_lea.vmem %s1, 576
        %v5380 = vld [vmem:[%s5379] sm:$0xff]
        %v5381 = vld [vmem:[%s5379 + $0x8] sm:$0xff]
        %v5382 = vld [vmem:[%s5379 + $0x10] sm:$0xff]
        %v5383 = vld [vmem:[%s5379 + $0x18] sm:$0xff]
        %v5384 = vld [vmem:[%s5379 + $0x20] sm:$0xff]
        %v5385 = vld [vmem:[%s5379 + $0x28] sm:$0xff]
        %v5386 = vld [vmem:[%s5379 + $0x30] sm:$0xff]
        %v5387 = vld [vmem:[%s5379 + $0x38] sm:$0xff]
        %v5388 = vld [vmem:[%s5379 + $0x40] sm:$0xff]
        %v5389 = vld [vmem:[%s5379 + $0x48] sm:$0xff]
        %v5390 = vld [vmem:[%s5379 + $0x50] sm:$0xff]
        %v5391 = vld [vmem:[%s5379 + $0x58] sm:$0xff]
        %v5393 = vsel %vm1284, %v5347, 0
        %v5396 = vsel %vm1284, %v5348, 0
        %v5399 = vsel %vm1284, %v5349, 0
        %v5402 = vsel %vm1284, %v5350, 0
        %v5405 = vsel %vm1284, %v5351, 0
        %v5408 = vsel %vm1284, %v5352, 0
        %v5411 = vsel %vm1284, %v5353, 0
        %v5414 = vsel %vm1284, %v5354, 0
        %v5417 = vsel %vm1284, %v5355, 0
        %v5420 = vsel %vm1284, %v5356, 0
        %v5423 = vsel %vm1284, %v5357, 0
        %v5426 = vsel %vm1284, %v5358, 0
        %v5429 = vsel %vm1284, %v5359, 0
        %v5432 = vsel %vm1284, %v5360, 0
        %v5435 = vsel %vm1284, %v5361, 0
        %v5438 = vsel %vm1284, %v5362, 0
        %v5441 = vsel %vm1284, %v5363, 0
        %v5444 = vsel %vm1284, %v5364, 0
        %v5447 = vsel %vm1284, %v5365, 0
        %v5450 = vsel %vm1284, %v5366, 0
        %v5453 = vsel %vm1284, %v5367, 0
        %v5456 = vsel %vm1284, %v5368, 0
        %v5459 = vsel %vm1284, %v5369, 0
        %v5462 = vsel %vm1284, %v5370, 0
        %v5465 = vsel %vm1284, %v5371, 0
        %v5468 = vsel %vm1284, %v5372, 0
        %v5471 = vsel %vm1284, %v5373, 0
        %v5474 = vsel %vm1284, %v5374, 0
        %v5477 = vsel %vm1284, %v5375, 0
        %v5480 = vsel %vm1284, %v5376, 0
        %v5483 = vsel %vm1284, %v5377, 0
        %v5486 = vsel %vm1284, %v5378, 0
        %5488 = vmatprep.subr.mxu0 0.0
        %5489 = vmatpush1.msra.mxu0 %v5380
        %5490 = vmatprep.subr.mxu0 0.0
        %5491 = vmatpush1.msra.mxu0 %v5381
        %5492 = vmatprep.subr.mxu0 0.0
        %5493 = vmatpush1.msra.mxu0 %v5382
        %5494 = vmatprep.subr.mxu0 0.0
        %5495 = vmatpush1.msra.mxu0 %v5383
        %5496 = vmatprep.subr.mxu0 0.0
        %5497 = vmatpush1.msra.mxu0 %v5384
        %5498 = vmatprep.subr.mxu0 0.0
        %5499 = vmatpush1.msra.mxu0 %v5385
        %5500 = vmatprep.subr.mxu0 0.0
        %5501 = vmatpush1.msra.mxu0 %v5386
        %5502 = vmatprep.subr.mxu0 0.0
        %5503 = vmatpush1.msra.mxu0 %v5387
        %5504 = vmatprep.subr.mxu0 0.0
        %5505 = vmatpush1.msra.mxu0 %v5388
        %5506 = vmatprep.subr.mxu0 0.0
        %5507 = vmatpush1.msra.mxu0 %v5389
        %5508 = vmatprep.subr.mxu0 0.0
        %5509 = vmatpush1.msra.mxu0 %v5390
        %5510 = vmatprep.subr.mxu0 0.0
        %5511 = vmatpush1.msra.mxu0 %v5391
        %5512 = vmatprep.subr.mxu0 0.0
        %5513 = vmatpush1.msra.mxu0 0.0
        %5514 = vmatprep.subr.mxu0 0.0
        %5515 = vmatpush1.msra.mxu0 0.0
        %5516 = vmatprep.subr.mxu0 0.0
        %5517 = vmatpush1.msra.mxu0 0.0
        %5518 = vmatprep.subr.mxu0 0.0
        %5519 = vmatpush1.msra.mxu0 0.0
        %5520 = vmatprep.subr.mxu0 0.0
        %5521 = vmatpush1.msra.mxu0 0.0
        %5522 = vmatprep.subr.mxu0 0.0
        %5523 = vmatpush1.msra.mxu0 0.0
        %5524 = vmatprep.subr.mxu0 0.0
        %5525 = vmatpush1.msra.mxu0 0.0
        %5526 = vmatprep.subr.mxu0 0.0
        %5527 = vmatpush1.msra.mxu0 0.0
        %5528 = vmatprep.subr.mxu0 0.0
        %5529 = vmatpush1.msra.mxu0 0.0
        %5530 = vmatprep.subr.mxu0 0.0
        %5531 = vmatpush1.msra.mxu0 0.0
        %5532 = vmatprep.subr.mxu0 0.0
        %5533 = vmatpush1.msra.mxu0 0.0
        %5534 = vmatprep.subr.mxu0 0.0
        %5535 = vmatpush1.msra.mxu0 0.0
        %5536 = vmatprep.subr.mxu0 0.0
        %5537 = vmatpush1.msra.mxu0 0.0
        %5538 = vmatprep.subr.mxu0 0.0
        %5539 = vmatpush1.msra.mxu0 0.0
        %5540 = vmatprep.subr.mxu0 0.0
        %5541 = vmatpush1.msra.mxu0 0.0
        %5542 = vmatprep.subr.mxu0 0.0
        %5543 = vmatpush1.msra.mxu0 0.0
        %5544 = vmatprep.subr.mxu0 0.0
        %5545 = vmatpush1.msra.mxu0 0.0
        %5546 = vmatprep.subr.mxu0 0.0
        %5547 = vmatpush1.msra.mxu0 0.0
        %5548 = vmatprep.subr.mxu0 0.0
        %5549 = vmatpush1.msra.mxu0 0.0
        %5550 = vmatprep.subr.mxu0 0.0
        %5551 = vmatpush1.msra.mxu0 0.0
        %5552 = vmatprep.mubr.f32.mxu0 0.0
        %5553 = vmatmul.mubr.f32.gmra.mrb[0].mxu0 %v5393
        %v5554 = vpop.f32.mrb[0].mxu0
        %v5555 = vadd.f32 0.0, %v5554
        %v5556 = vpop.f32.mrb[0].mxu0
        %5557 = vmatprep.mubr.f32.mxu0 0.0
        %5558 = vmatmul.mubr.f32.gmra.mrb[0].mxu0 %v5396
        %v5559 = vpop.f32.mrb[0].mxu0
        %v5560 = vadd.f32 0.0, %v5559
        %v5561 = vpop.f32.mrb[0].mxu0
        %5562 = vmatprep.mubr.f32.mxu0 0.0
        %5563 = vmatmul.mubr.f32.gmra.mrb[0].mxu0 %v5399
        %v5564 = vpop.f32.mrb[0].mxu0
        %v5565 = vadd.f32 0.0, %v5564
        %v5566 = vpop.f32.mrb[0].mxu0
        %5567 = vmatprep.mubr.f32.mxu0 0.0
        %5568 = vmatmul.mubr.f32.gmra.mrb[0].mxu0 %v5402
        %v5569 = vpop.f32.mrb[0].mxu0
        %v5570 = vadd.f32 0.0, %v5569
        %v5571 = vpop.f32.mrb[0].mxu0
        %5572 = vmatprep.mubr.f32.mxu0 0.0
        %5573 = vmatmul.mubr.f32.gmra.mrb[0].mxu0 %v5405
        %v5574 = vpop.f32.mrb[0].mxu0
        %v5575 = vadd.f32 0.0, %v5574
        %v5576 = vpop.f32.mrb[0].mxu0
        %5577 = vmatprep.mubr.f32.mxu0 0.0
        %5578 = vmatmul.mubr.f32.gmra.mrb[0].mxu0 %v5408
        %v5579 = vpop.f32.mrb[0].mxu0
        %v5580 = vadd.f32 0.0, %v5579
        %v5581 = vpop.f32.mrb[0].mxu0
        %5582 = vmatprep.mubr.f32.mxu0 0.0
        %5583 = vmatmul.mubr.f32.gmra.mrb[0].mxu0 %v5411
        %v5584 = vpop.f32.mrb[0].mxu0
        %v5585 = vadd.f32 0.0, %v5584
        %v5586 = vpop.f32.mrb[0].mxu0
        %5587 = vmatprep.mubr.f32.mxu0 0.0
        %5588 = vmatmul.mubr.f32.gmra.mrb[0].mxu0 %v5414
        %v5589 = vpop.f32.mrb[0].mxu0
        %v5590 = vadd.f32 0.0, %v5589
        %v5591 = vpop.f32.mrb[0].mxu0
        %5592 = vmatprep.mubr.f32.mxu0 0.0
        %5593 = vmatmul.mubr.f32.gmra.mrb[0].mxu0 %v5417
        %v5594 = vpop.f32.mrb[0].mxu0
        %v5595 = vadd.f32 0.0, %v5594
        %v5596 = vpop.f32.mrb[0].mxu0
        %5597 = vmatprep.mubr.f32.mxu0 0.0
        %5598 = vmatmul.mubr.f32.gmra.mrb[0].mxu0 %v5420
        %v5599 = vpop.f32.mrb[0].mxu0
        %v5600 = vadd.f32 0.0, %v5599
        %v5601 = vpop.f32.mrb[0].mxu0
        %5602 = vmatprep.mubr.f32.mxu0 0.0
        %5603 = vmatmul.mubr.f32.gmra.mrb[0].mxu0 %v5423
        %v5604 = vpop.f32.mrb[0].mxu0
        %v5605 = vadd.f32 0.0, %v5604
        %v5606 = vpop.f32.mrb[0].mxu0
        %5607 = vmatprep.mubr.f32.mxu0 0.0
        %5608 = vmatmul.mubr.f32.gmra.mrb[0].mxu0 %v5426
        %v5609 = vpop.f32.mrb[0].mxu0
        %v5610 = vadd.f32 0.0, %v5609
        %v5611 = vpop.f32.mrb[0].mxu0
        %5612 = vmatprep.mubr.f32.mxu0 0.0
        %5613 = vmatmul.mubr.f32.gmra.mrb[0].mxu0 %v5429
        %v5614 = vpop.f32.mrb[0].mxu0
        %v5615 = vadd.f32 0.0, %v5614
        %v5616 = vpop.f32.mrb[0].mxu0
        %5617 = vmatprep.mubr.f32.mxu0 0.0
        %5618 = vmatmul.mubr.f32.gmra.mrb[0].mxu0 %v5432
        %v5619 = vpop.f32.mrb[0].mxu0
        %v5620 = vadd.f32 0.0, %v5619
        %v5621 = vpop.f32.mrb[0].mxu0
        %5622 = vmatprep.mubr.f32.mxu0 0.0
        %5623 = vmatmul.mubr.f32.gmra.mrb[0].mxu0 %v5435
        %v5624 = vpop.f32.mrb[0].mxu0
        %v5625 = vadd.f32 0.0, %v5624
        %v5626 = vpop.f32.mrb[0].mxu0
        %5627 = vmatprep.mubr.f32.mxu0 0.0
        %5628 = vmatmul.mubr.f32.gmra.mrb[0].mxu0 %v5438
        %v5629 = vpop.f32.mrb[0].mxu0
        %v5630 = vadd.f32 0.0, %v5629
        %v5631 = vpop.f32.mrb[0].mxu0
        %5632 = vmatprep.mubr.f32.mxu0 0.0
        %5633 = vmatmul.mubr.f32.gmra.mrb[0].mxu0 %v5441
        %v5634 = vpop.f32.mrb[0].mxu0
        %v5635 = vadd.f32 0.0, %v5634
        %v5636 = vpop.f32.mrb[0].mxu0
        %5637 = vmatprep.mubr.f32.mxu0 0.0
        %5638 = vmatmul.mubr.f32.gmra.mrb[0].mxu0 %v5444
        %v5639 = vpop.f32.mrb[0].mxu0
        %v5640 = vadd.f32 0.0, %v5639
        %v5641 = vpop.f32.mrb[0].mxu0
        %5642 = vmatprep.mubr.f32.mxu0 0.0
        %5643 = vmatmul.mubr.f32.gmra.mrb[0].mxu0 %v5447
        %v5644 = vpop.f32.mrb[0].mxu0
        %v5645 = vadd.f32 0.0, %v5644
        %v5646 = vpop.f32.mrb[0].mxu0
        %5647 = vmatprep.mubr.f32.mxu0 0.0
        %5648 = vmatmul.mubr.f32.gmra.mrb[0].mxu0 %v5450
        %v5649 = vpop.f32.mrb[0].mxu0
        %v5650 = vadd.f32 0.0, %v5649
        %v5651 = vpop.f32.mrb[0].mxu0
        %5652 = vmatprep.mubr.f32.mxu0 0.0
        %5653 = vmatmul.mubr.f32.gmra.mrb[0].mxu0 %v5453
        %v5654 = vpop.f32.mrb[0].mxu0
        %v5655 = vadd.f32 0.0, %v5654
        %v5656 = vpop.f32.mrb[0].mxu0
        %5657 = vmatprep.mubr.f32.mxu0 0.0
        %5658 = vmatmul.mubr.f32.gmra.mrb[0].mxu0 %v5456
        %v5659 = vpop.f32.mrb[0].mxu0
        %v5660 = vadd.f32 0.0, %v5659
        %v5661 = vpop.f32.mrb[0].mxu0
        %5662 = vmatprep.mubr.f32.mxu0 0.0
        %5663 = vmatmul.mubr.f32.gmra.mrb[0].mxu0 %v5459
        %v5664 = vpop.f32.mrb[0].mxu0
        %v5665 = vadd.f32 0.0, %v5664
        %v5666 = vpop.f32.mrb[0].mxu0
        %5667 = vmatprep.mubr.f32.mxu0 0.0
        %5668 = vmatmul.mubr.f32.gmra.mrb[0].mxu0 %v5462
        %v5669 = vpop.f32.mrb[0].mxu0
        %v5670 = vadd.f32 0.0, %v5669
        %v5671 = vpop.f32.mrb[0].mxu0
        %5672 = vmatprep.mubr.f32.mxu0 0.0
        %5673 = vmatmul.mubr.f32.gmra.mrb[0].mxu0 %v5465
        %v5674 = vpop.f32.mrb[0].mxu0
        %v5675 = vadd.f32 0.0, %v5674
        %v5676 = vpop.f32.mrb[0].mxu0
        %5677 = vmatprep.mubr.f32.mxu0 0.0
        %5678 = vmatmul.mubr.f32.gmra.mrb[0].mxu0 %v5468
        %v5679 = vpop.f32.mrb[0].mxu0
        %v5680 = vadd.f32 0.0, %v5679
        %v5681 = vpop.f32.mrb[0].mxu0
        %5682 = vmatprep.mubr.f32.mxu0 0.0
        %5683 = vmatmul.mubr.f32.gmra.mrb[0].mxu0 %v5471
        %v5684 = vpop.f32.mrb[0].mxu0
        %v5685 = vadd.f32 0.0, %v5684
        %v5686 = vpop.f32.mrb[0].mxu0
        %5687 = vmatprep.mubr.f32.mxu0 0.0
        %5688 = vmatmul.mubr.f32.gmra.mrb[0].mxu0 %v5474
        %v5689 = vpop.f32.mrb[0].mxu0
        %v5690 = vadd.f32 0.0, %v5689
        %v5691 = vpop.f32.mrb[0].mxu0
        %5692 = vmatprep.mubr.f32.mxu0 0.0
        %5693 = vmatmul.mubr.f32.gmra.mrb[0].mxu0 %v5477
        %v5694 = vpop.f32.mrb[0].mxu0
        %v5695 = vadd.f32 0.0, %v5694
        %v5696 = vpop.f32.mrb[0].mxu0
        %5697 = vmatprep.mubr.f32.mxu0 0.0
        %5698 = vmatmul.mubr.f32.gmra.mrb[0].mxu0 %v5480
        %v5699 = vpop.f32.mrb[0].mxu0
        %v5700 = vadd.f32 0.0, %v5699
        %v5701 = vpop.f32.mrb[0].mxu0
        %5702 = vmatprep.mubr.f32.mxu0 0.0
        %5703 = vmatmul.mubr.f32.gmra.mrb[0].mxu0 %v5483
        %v5704 = vpop.f32.mrb[0].mxu0
        %v5705 = vadd.f32 0.0, %v5704
        %v5706 = vpop.f32.mrb[0].mxu0
        %5707 = vmatprep.mubr.f32.mxu0 0.0
        %5708 = vmatmul.mubr.f32.gmra.mrb[0].mxu0 %v5486
        %v5709 = vpop.f32.mrb[0].mxu0
        %v5710 = vadd.f32 0.0, %v5709
        %v5711 = vpop.f32.mrb[0].mxu0
        %5712 = vdwg.mxu0
        %v5713 = vadd.f32 %v4928, %v5555
        %v5714 = vadd.f32 %v4929, %v5560
        %v5715 = vadd.f32 %v4930, %v5565
        %v5716 = vadd.f32 %v4931, %v5570
        %v5717 = vadd.f32 %v4932, %v5575
        %v5718 = vadd.f32 %v4933, %v5580
        %v5719 = vadd.f32 %v4934, %v5585
        %v5720 = vadd.f32 %v4935, %v5590
        %v5721 = vadd.f32 %v4936, %v5595
        %v5722 = vadd.f32 %v4937, %v5600
        %v5723 = vadd.f32 %v4938, %v5605
        %v5724 = vadd.f32 %v4939, %v5610
        %v5725 = vadd.f32 %v4940, %v5615
        %v5726 = vadd.f32 %v4941, %v5620
        %v5727 = vadd.f32 %v4942, %v5625
        %v5728 = vadd.f32 %v4943, %v5630
        %v5729 = vadd.f32 %v4944, %v5635
        %v5730 = vadd.f32 %v4945, %v5640
        %v5731 = vadd.f32 %v4946, %v5645
        %v5732 = vadd.f32 %v4947, %v5650
        %v5733 = vadd.f32 %v4948, %v5655
        %v5734 = vadd.f32 %v4949, %v5660
        %v5735 = vadd.f32 %v4950, %v5665
        %v5736 = vadd.f32 %v4951, %v5670
        %v5737 = vadd.f32 %v4952, %v5675
        %v5738 = vadd.f32 %v4953, %v5680
        %v5739 = vadd.f32 %v4954, %v5685
        %v5740 = vadd.f32 %v4955, %v5690
        %v5741 = vadd.f32 %v4956, %v5695
        %v5742 = vadd.f32 %v4957, %v5700
        %v5743 = vadd.f32 %v4958, %v5705
        %v5744 = vadd.f32 %v4959, %v5710
        %v5745 = vld [vmem:[%s4960 + $0x4] sm:$0xff]
        %v5746 = vld [vmem:[%s4960 + $0xc] sm:$0xff]
        %v5747 = vld [vmem:[%s4960 + $0x1c] sm:$0xff]
        %v5748 = vld [vmem:[%s4960 + $0x24] sm:$0xff]
        %v5749 = vld [vmem:[%s4960 + $0x34] sm:$0xff]
        %v5750 = vld [vmem:[%s4960 + $0x3c] sm:$0xff]
        %v5751 = vld [vmem:[%s4960 + $0x4c] sm:$0xff]
        %v5752 = vld [vmem:[%s4960 + $0x54] sm:$0xff]
        %v5753 = vld [vmem:[%s4960 + $0x64] sm:$0xff]
        %v5754 = vld [vmem:[%s4960 + $0x6c] sm:$0xff]
        %v5755 = vld [vmem:[%s4960 + $0x7c] sm:$0xff]
        %v5756 = vld [vmem:[%s4960 + $0x84] sm:$0xff]
        %v5757 = vld [vmem:[%s4960 + $0x94] sm:$0xff]
        %v5758 = vld [vmem:[%s4960 + $0x9c] sm:$0xff]
        %v5759 = vld [vmem:[%s4960 + $0xac] sm:$0xff]
        %v5760 = vld [vmem:[%s4960 + $0xb4] sm:$0xff]
        %v5761 = vld [vmem:[%s4960 + $0xc4] sm:$0xff]
        %v5762 = vld [vmem:[%s4960 + $0xcc] sm:$0xff]
        %v5763 = vld [vmem:[%s4960 + $0xdc] sm:$0xff]
        %v5764 = vld [vmem:[%s4960 + $0xe4] sm:$0xff]
        %v5765 = vld [vmem:[%s4960 + $0xf4] sm:$0xff]
        %v5766 = vld [vmem:[%s4960 + $0xfc] sm:$0xff]
        %v5767 = vld [vmem:[%s4960 + $0x10c] sm:$0xff]
        %v5768 = vld [vmem:[%s4960 + $0x114] sm:$0xff]
        %v5769 = vld [vmem:[%s4960 + $0x124] sm:$0xff]
        %v5770 = vld [vmem:[%s4960 + $0x12c] sm:$0xff]
        %v5771 = vld [vmem:[%s4960 + $0x13c] sm:$0xff]
        %v5772 = vld [vmem:[%s4960 + $0x144] sm:$0xff]
        %v5773 = vld [vmem:[%s4960 + $0x154] sm:$0xff]
        %v5774 = vld [vmem:[%s4960 + $0x15c] sm:$0xff]
        %v5775 = vld [vmem:[%s4960 + $0x16c] sm:$0xff]
        %v5776 = vld [vmem:[%s4960 + $0x174] sm:$0xff]
        %v5777 = vld [vmem:[%s4993 + $0x4] sm:$0xff]
        %v5778 = vld [vmem:[%s4993 + $0xc] sm:$0xff]
        %v5779 = vld [vmem:[%s4993 + $0x1c] sm:$0xff]
        %v5780 = vld [vmem:[%s4993 + $0x24] sm:$0xff]
        %v5781 = vld [vmem:[%s4993 + $0x34] sm:$0xff]
        %v5782 = vld [vmem:[%s4993 + $0x3c] sm:$0xff]
        %v5783 = vld [vmem:[%s4993 + $0x4c] sm:$0xff]
        %v5784 = vld [vmem:[%s4993 + $0x54] sm:$0xff]
        %v5785 = vld [vmem:[%s4993 + $0x64] sm:$0xff]
        %v5786 = vld [vmem:[%s4993 + $0x6c] sm:$0xff]
        %v5787 = vld [vmem:[%s4993 + $0x7c] sm:$0xff]
        %v5788 = vld [vmem:[%s4993 + $0x84] sm:$0xff]
        %v5789 = vld [vmem:[%s4993 + $0x94] sm:$0xff]
        %v5790 = vld [vmem:[%s4993 + $0x9c] sm:$0xff]
        %v5791 = vld [vmem:[%s4993 + $0xac] sm:$0xff]
        %v5792 = vld [vmem:[%s4993 + $0xb4] sm:$0xff]
        %v5793 = vld [vmem:[%s4993 + $0xc4] sm:$0xff]
        %v5794 = vld [vmem:[%s4993 + $0xcc] sm:$0xff]
        %v5795 = vld [vmem:[%s4993 + $0xdc] sm:$0xff]
        %v5796 = vld [vmem:[%s4993 + $0xe4] sm:$0xff]
        %v5797 = vld [vmem:[%s4993 + $0xf4] sm:$0xff]
        %v5798 = vld [vmem:[%s4993 + $0xfc] sm:$0xff]
        %v5799 = vld [vmem:[%s4993 + $0x10c] sm:$0xff]
        %v5800 = vld [vmem:[%s4993 + $0x114] sm:$0xff]
        %v5801 = vld [vmem:[%s4993 + $0x124] sm:$0xff]
        %v5802 = vld [vmem:[%s4993 + $0x12c] sm:$0xff]
        %v5803 = vld [vmem:[%s4993 + $0x13c] sm:$0xff]
        %v5804 = vld [vmem:[%s4993 + $0x144] sm:$0xff]
        %v5805 = vld [vmem:[%s4993 + $0x154] sm:$0xff]
        %v5806 = vld [vmem:[%s4993 + $0x15c] sm:$0xff]
        %v5807 = vld [vmem:[%s4993 + $0x16c] sm:$0xff]
        %v5808 = vld [vmem:[%s4993 + $0x174] sm:$0xff]
        %v5809 = vld [vmem:[%s5026 + $0x4] sm:$0xff]
        %v5810 = vld [vmem:[%s5026 + $0xc] sm:$0xff]
        %v5811 = vld [vmem:[%s5026 + $0x1c] sm:$0xff]
        %v5812 = vld [vmem:[%s5026 + $0x24] sm:$0xff]
        %v5813 = vld [vmem:[%s5026 + $0x34] sm:$0xff]
        %v5814 = vld [vmem:[%s5026 + $0x3c] sm:$0xff]
        %v5815 = vld [vmem:[%s5026 + $0x4c] sm:$0xff]
        %v5816 = vld [vmem:[%s5026 + $0x54] sm:$0xff]
        %v5817 = vld [vmem:[%s5026 + $0x64] sm:$0xff]
        %v5818 = vld [vmem:[%s5026 + $0x6c] sm:$0xff]
        %v5819 = vld [vmem:[%s5026 + $0x7c] sm:$0xff]
        %v5820 = vld [vmem:[%s5026 + $0x84] sm:$0xff]
        %v5821 = vld [vmem:[%s5026 + $0x94] sm:$0xff]
        %v5822 = vld [vmem:[%s5026 + $0x9c] sm:$0xff]
        %v5823 = vld [vmem:[%s5026 + $0xac] sm:$0xff]
        %v5824 = vld [vmem:[%s5026 + $0xb4] sm:$0xff]
        %v5825 = vld [vmem:[%s5026 + $0xc4] sm:$0xff]
        %v5826 = vld [vmem:[%s5026 + $0xcc] sm:$0xff]
        %v5827 = vld [vmem:[%s5026 + $0xdc] sm:$0xff]
        %v5828 = vld [vmem:[%s5026 + $0xe4] sm:$0xff]
        %v5829 = vld [vmem:[%s5026 + $0xf4] sm:$0xff]
        %v5830 = vld [vmem:[%s5026 + $0xfc] sm:$0xff]
        %v5831 = vld [vmem:[%s5026 + $0x10c] sm:$0xff]
        %v5832 = vld [vmem:[%s5026 + $0x114] sm:$0xff]
        %v5833 = vld [vmem:[%s5026 + $0x124] sm:$0xff]
        %v5834 = vld [vmem:[%s5026 + $0x12c] sm:$0xff]
        %v5835 = vld [vmem:[%s5026 + $0x13c] sm:$0xff]
        %v5836 = vld [vmem:[%s5026 + $0x144] sm:$0xff]
        %v5837 = vld [vmem:[%s5026 + $0x154] sm:$0xff]
        %v5838 = vld [vmem:[%s5026 + $0x15c] sm:$0xff]
        %v5839 = vld [vmem:[%s5026 + $0x16c] sm:$0xff]
        %v5840 = vld [vmem:[%s5026 + $0x174] sm:$0xff]
        %5873 = vrot.lane.b32.xlu0 %v5777, 32
        %v5874 = vpop.permute.xlu0 %5873
        %5875 = vrot.lane.b32.xlu0 %v5778, 32
        %v5876 = vpop.permute.xlu0 %5875
        %5877 = vrot.lane.b32.xlu0 %v5779, 32
        %v5878 = vpop.permute.xlu0 %5877
        %5879 = vrot.lane.b32.xlu0 %v5780, 32
        %v5880 = vpop.permute.xlu0 %5879
        %5881 = vrot.lane.b32.xlu0 %v5781, 32
        %v5882 = vpop.permute.xlu0 %5881
        %5883 = vrot.lane.b32.xlu0 %v5782, 32
        %v5884 = vpop.permute.xlu0 %5883
        %5885 = vrot.lane.b32.xlu0 %v5783, 32
        %v5886 = vpop.permute.xlu0 %5885
        %5887 = vrot.lane.b32.xlu0 %v5784, 32
        %v5888 = vpop.permute.xlu0 %5887
        %5889 = vrot.lane.b32.xlu0 %v5785, 32
        %v5890 = vpop.permute.xlu0 %5889
        %5891 = vrot.lane.b32.xlu0 %v5786, 32
        %v5892 = vpop.permute.xlu0 %5891
        %5893 = vrot.lane.b32.xlu0 %v5787, 32
        %v5894 = vpop.permute.xlu0 %5893
        %5895 = vrot.lane.b32.xlu0 %v5788, 32
        %v5896 = vpop.permute.xlu0 %5895
        %5897 = vrot.lane.b32.xlu0 %v5789, 32
        %v5898 = vpop.permute.xlu0 %5897
        %5899 = vrot.lane.b32.xlu0 %v5790, 32
        %v5900 = vpop.permute.xlu0 %5899
        %5901 = vrot.lane.b32.xlu0 %v5791, 32
        %v5902 = vpop.permute.xlu0 %5901
        %5903 = vrot.lane.b32.xlu0 %v5792, 32
        %v5904 = vpop.permute.xlu0 %5903
        %5905 = vrot.lane.b32.xlu0 %v5793, 32
        %v5906 = vpop.permute.xlu0 %5905
        %5907 = vrot.lane.b32.xlu0 %v5794, 32
        %v5908 = vpop.permute.xlu0 %5907
        %5909 = vrot.lane.b32.xlu0 %v5795, 32
        %v5910 = vpop.permute.xlu0 %5909
        %5911 = vrot.lane.b32.xlu0 %v5796, 32
        %v5912 = vpop.permute.xlu0 %5911
        %5913 = vrot.lane.b32.xlu0 %v5797, 32
        %v5914 = vpop.permute.xlu0 %5913
        %5915 = vrot.lane.b32.xlu0 %v5798, 32
        %v5916 = vpop.permute.xlu0 %5915
        %5917 = vrot.lane.b32.xlu0 %v5799, 32
        %v5918 = vpop.permute.xlu0 %5917
        %5919 = vrot.lane.b32.xlu0 %v5800, 32
        %v5920 = vpop.permute.xlu0 %5919
        %5921 = vrot.lane.b32.xlu0 %v5801, 32
        %v5922 = vpop.permute.xlu0 %5921
        %5923 = vrot.lane.b32.xlu0 %v5802, 32
        %v5924 = vpop.permute.xlu0 %5923
        %5925 = vrot.lane.b32.xlu0 %v5803, 32
        %v5926 = vpop.permute.xlu0 %5925
        %5927 = vrot.lane.b32.xlu0 %v5804, 32
        %v5928 = vpop.permute.xlu0 %5927
        %5929 = vrot.lane.b32.xlu0 %v5805, 32
        %v5930 = vpop.permute.xlu0 %5929
        %5931 = vrot.lane.b32.xlu0 %v5806, 32
        %v5932 = vpop.permute.xlu0 %5931
        %5933 = vrot.lane.b32.xlu0 %v5807, 32
        %v5934 = vpop.permute.xlu0 %5933
        %5935 = vrot.lane.b32.xlu0 %v5808, 32
        %v5936 = vpop.permute.xlu0 %5935
        %6001 = vrot.lane.b32.xlu0 %v5809, 64
        %v6002 = vpop.permute.xlu0 %6001
        %6003 = vrot.lane.b32.xlu0 %v5810, 64
        %v6004 = vpop.permute.xlu0 %6003
        %6005 = vrot.lane.b32.xlu0 %v5811, 64
        %v6006 = vpop.permute.xlu0 %6005
        %6007 = vrot.lane.b32.xlu0 %v5812, 64
        %v6008 = vpop.permute.xlu0 %6007
        %6009 = vrot.lane.b32.xlu0 %v5813, 64
        %v6010 = vpop.permute.xlu0 %6009
        %6011 = vrot.lane.b32.xlu0 %v5814, 64
        %v6012 = vpop.permute.xlu0 %6011
        %6013 = vrot.lane.b32.xlu0 %v5815, 64
        %v6014 = vpop.permute.xlu0 %6013
        %6015 = vrot.lane.b32.xlu0 %v5816, 64
        %v6016 = vpop.permute.xlu0 %6015
        %6017 = vrot.lane.b32.xlu0 %v5817, 64
        %v6018 = vpop.permute.xlu0 %6017
        %6019 = vrot.lane.b32.xlu0 %v5818, 64
        %v6020 = vpop.permute.xlu0 %6019
        %6021 = vrot.lane.b32.xlu0 %v5819, 64
        %v6022 = vpop.permute.xlu0 %6021
        %6023 = vrot.lane.b32.xlu0 %v5820, 64
        %v6024 = vpop.permute.xlu0 %6023
        %6025 = vrot.lane.b32.xlu0 %v5821, 64
        %v6026 = vpop.permute.xlu0 %6025
        %6027 = vrot.lane.b32.xlu0 %v5822, 64
        %v6028 = vpop.permute.xlu0 %6027
        %6029 = vrot.lane.b32.xlu0 %v5823, 64
        %v6030 = vpop.permute.xlu0 %6029
        %6031 = vrot.lane.b32.xlu0 %v5824, 64
        %v6032 = vpop.permute.xlu0 %6031
        %6033 = vrot.lane.b32.xlu0 %v5825, 64
        %v6034 = vpop.permute.xlu0 %6033
        %6035 = vrot.lane.b32.xlu0 %v5826, 64
        %v6036 = vpop.permute.xlu0 %6035
        %6037 = vrot.lane.b32.xlu0 %v5827, 64
        %v6038 = vpop.permute.xlu0 %6037
        %6039 = vrot.lane.b32.xlu0 %v5828, 64
        %v6040 = vpop.permute.xlu0 %6039
        %6041 = vrot.lane.b32.xlu0 %v5829, 64
        %v6042 = vpop.permute.xlu0 %6041
        %6043 = vrot.lane.b32.xlu0 %v5830, 64
        %v6044 = vpop.permute.xlu0 %6043
        %6045 = vrot.lane.b32.xlu0 %v5831, 64
        %v6046 = vpop.permute.xlu0 %6045
        %6047 = vrot.lane.b32.xlu0 %v5832, 64
        %v6048 = vpop.permute.xlu0 %6047
        %6049 = vrot.lane.b32.xlu0 %v5833, 64
        %v6050 = vpop.permute.xlu0 %6049
        %6051 = vrot.lane.b32.xlu0 %v5834, 64
        %v6052 = vpop.permute.xlu0 %6051
        %6053 = vrot.lane.b32.xlu0 %v5835, 64
        %v6054 = vpop.permute.xlu0 %6053
        %6055 = vrot.lane.b32.xlu0 %v5836, 64
        %v6056 = vpop.permute.xlu0 %6055
        %6057 = vrot.lane.b32.xlu0 %v5837, 64
        %v6058 = vpop.permute.xlu0 %6057
        %6059 = vrot.lane.b32.xlu0 %v5838, 64
        %v6060 = vpop.permute.xlu0 %6059
        %6061 = vrot.lane.b32.xlu0 %v5839, 64
        %v6062 = vpop.permute.xlu0 %6061
        %6063 = vrot.lane.b32.xlu0 %v5840, 64
        %v6064 = vpop.permute.xlu0 %6063
        %v6097 = vsel %vm777, %v5745, %v5874
        %v6098 = vsel %vm777, %v5746, %v5876
        %v6099 = vsel %vm777, %v5747, %v5878
        %v6100 = vsel %vm777, %v5748, %v5880
        %v6101 = vsel %vm777, %v5749, %v5882
        %v6102 = vsel %vm777, %v5750, %v5884
        %v6103 = vsel %vm777, %v5751, %v5886
        %v6104 = vsel %vm777, %v5752, %v5888
        %v6105 = vsel %vm777, %v5753, %v5890
        %v6106 = vsel %vm777, %v5754, %v5892
        %v6107 = vsel %vm777, %v5755, %v5894
        %v6108 = vsel %vm777, %v5756, %v5896
        %v6109 = vsel %vm777, %v5757, %v5898
        %v6110 = vsel %vm777, %v5758, %v5900
        %v6111 = vsel %vm777, %v5759, %v5902
        %v6112 = vsel %vm777, %v5760, %v5904
        %v6113 = vsel %vm777, %v5761, %v5906
        %v6114 = vsel %vm777, %v5762, %v5908
        %v6115 = vsel %vm777, %v5763, %v5910
        %v6116 = vsel %vm777, %v5764, %v5912
        %v6117 = vsel %vm777, %v5765, %v5914
        %v6118 = vsel %vm777, %v5766, %v5916
        %v6119 = vsel %vm777, %v5767, %v5918
        %v6120 = vsel %vm777, %v5768, %v5920
        %v6121 = vsel %vm777, %v5769, %v5922
        %v6122 = vsel %vm777, %v5770, %v5924
        %v6123 = vsel %vm777, %v5771, %v5926
        %v6124 = vsel %vm777, %v5772, %v5928
        %v6125 = vsel %vm777, %v5773, %v5930
        %v6126 = vsel %vm777, %v5774, %v5932
        %v6127 = vsel %vm777, %v5775, %v5934
        %v6128 = vsel %vm777, %v5776, %v5936
        %v6129 = vsel %vm810, %v6097, %v6002
        %v6130 = vsel %vm810, %v6098, %v6004
        %v6131 = vsel %vm810, %v6099, %v6006
        %v6132 = vsel %vm810, %v6100, %v6008
        %v6133 = vsel %vm810, %v6101, %v6010
        %v6134 = vsel %vm810, %v6102, %v6012
        %v6135 = vsel %vm810, %v6103, %v6014
        %v6136 = vsel %vm810, %v6104, %v6016
        %v6137 = vsel %vm810, %v6105, %v6018
        %v6138 = vsel %vm810, %v6106, %v6020
        %v6139 = vsel %vm810, %v6107, %v6022
        %v6140 = vsel %vm810, %v6108, %v6024
        %v6141 = vsel %vm810, %v6109, %v6026
        %v6142 = vsel %vm810, %v6110, %v6028
        %v6143 = vsel %vm810, %v6111, %v6030
        %v6144 = vsel %vm810, %v6112, %v6032
        %v6145 = vsel %vm810, %v6113, %v6034
        %v6146 = vsel %vm810, %v6114, %v6036
        %v6147 = vsel %vm810, %v6115, %v6038
        %v6148 = vsel %vm810, %v6116, %v6040
        %v6149 = vsel %vm810, %v6117, %v6042
        %v6150 = vsel %vm810, %v6118, %v6044
        %v6151 = vsel %vm810, %v6119, %v6046
        %v6152 = vsel %vm810, %v6120, %v6048
        %v6153 = vsel %vm810, %v6121, %v6050
        %v6154 = vsel %vm810, %v6122, %v6052
        %v6155 = vsel %vm810, %v6123, %v6054
        %v6156 = vsel %vm810, %v6124, %v6056
        %v6157 = vsel %vm810, %v6125, %v6058
        %v6158 = vsel %vm810, %v6126, %v6060
        %v6159 = vsel %vm810, %v6127, %v6062
        %v6160 = vsel %vm810, %v6128, %v6064
        %s6161 = scalar_lea.vmem %s1, 672
        %v6162 = vld [vmem:[%s6161] sm:$0xff]
        %v6163 = vld [vmem:[%s6161 + $0x8] sm:$0xff]
        %v6164 = vld [vmem:[%s6161 + $0x10] sm:$0xff]
        %v6165 = vld [vmem:[%s6161 + $0x18] sm:$0xff]
        %v6166 = vld [vmem:[%s6161 + $0x20] sm:$0xff]
        %v6167 = vld [vmem:[%s6161 + $0x28] sm:$0xff]
        %v6168 = vld [vmem:[%s6161 + $0x30] sm:$0xff]
        %v6169 = vld [vmem:[%s6161 + $0x38] sm:$0xff]
        %v6170 = vld [vmem:[%s6161 + $0x40] sm:$0xff]
        %v6171 = vld [vmem:[%s6161 + $0x48] sm:$0xff]
        %v6172 = vld [vmem:[%s6161 + $0x50] sm:$0xff]
        %v6173 = vld [vmem:[%s6161 + $0x58] sm:$0xff]
        %v6175 = vsel %vm1284, %v6129, 0
        %v6178 = vsel %vm1284, %v6130, 0
        %v6181 = vsel %vm1284, %v6131, 0
        %v6184 = vsel %vm1284, %v6132, 0
        %v6187 = vsel %vm1284, %v6133, 0
        %v6190 = vsel %vm1284, %v6134, 0
        %v6193 = vsel %vm1284, %v6135, 0
        %v6196 = vsel %vm1284, %v6136, 0
        %v6199 = vsel %vm1284, %v6137, 0
        %v6202 = vsel %vm1284, %v6138, 0
        %v6205 = vsel %vm1284, %v6139, 0
        %v6208 = vsel %vm1284, %v6140, 0
        %v6211 = vsel %vm1284, %v6141, 0
        %v6214 = vsel %vm1284, %v6142, 0
        %v6217 = vsel %vm1284, %v6143, 0
        %v6220 = vsel %vm1284, %v6144, 0
        %v6223 = vsel %vm1284, %v6145, 0
        %v6226 = vsel %vm1284, %v6146, 0
        %v6229 = vsel %vm1284, %v6147, 0
        %v6232 = vsel %vm1284, %v6148, 0
        %v6235 = vsel %vm1284, %v6149, 0
        %v6238 = vsel %vm1284, %v6150, 0
        %v6241 = vsel %vm1284, %v6151, 0
        %v6244 = vsel %vm1284, %v6152, 0
        %v6247 = vsel %vm1284, %v6153, 0
        %v6250 = vsel %vm1284, %v6154, 0
        %v6253 = vsel %vm1284, %v6155, 0
        %v6256 = vsel %vm1284, %v6156, 0
        %v6259 = vsel %vm1284, %v6157, 0
        %v6262 = vsel %vm1284, %v6158, 0
        %v6265 = vsel %vm1284, %v6159, 0
        %v6268 = vsel %vm1284, %v6160, 0
        %6270 = vmatprep.subr.mxu0 0.0
        %6271 = vmatpush1.msra.mxu0 %v6162
        %6272 = vmatprep.subr.mxu0 0.0
        %6273 = vmatpush1.msra.mxu0 %v6163
        %6274 = vmatprep.subr.mxu0 0.0
        %6275 = vmatpush1.msra.mxu0 %v6164
        %6276 = vmatprep.subr.mxu0 0.0
        %6277 = vmatpush1.msra.mxu0 %v6165
        %6278 = vmatprep.subr.mxu0 0.0
        %6279 = vmatpush1.msra.mxu0 %v6166
        %6280 = vmatprep.subr.mxu0 0.0
        %6281 = vmatpush1.msra.mxu0 %v6167
        %6282 = vmatprep.subr.mxu0 0.0
        %6283 = vmatpush1.msra.mxu0 %v6168
        %6284 = vmatprep.subr.mxu0 0.0
        %6285 = vmatpush1.msra.mxu0 %v6169
        %6286 = vmatprep.subr.mxu0 0.0
        %6287 = vmatpush1.msra.mxu0 %v6170
        %6288 = vmatprep.subr.mxu0 0.0
        %6289 = vmatpush1.msra.mxu0 %v6171
        %6290 = vmatprep.subr.mxu0 0.0
        %6291 = vmatpush1.msra.mxu0 %v6172
        %6292 = vmatprep.subr.mxu0 0.0
        %6293 = vmatpush1.msra.mxu0 %v6173
        %6294 = vmatprep.subr.mxu0 0.0
        %6295 = vmatpush1.msra.mxu0 0.0
        %6296 = vmatprep.subr.mxu0 0.0
        %6297 = vmatpush1.msra.mxu0 0.0
        %6298 = vmatprep.subr.mxu0 0.0
        %6299 = vmatpush1.msra.mxu0 0.0
        %6300 = vmatprep.subr.mxu0 0.0
        %6301 = vmatpush1.msra.mxu0 0.0
        %6302 = vmatprep.subr.mxu0 0.0
        %6303 = vmatpush1.msra.mxu0 0.0
        %6304 = vmatprep.subr.mxu0 0.0
        %6305 = vmatpush1.msra.mxu0 0.0
        %6306 = vmatprep.subr.mxu0 0.0
        %6307 = vmatpush1.msra.mxu0 0.0
        %6308 = vmatprep.subr.mxu0 0.0
        %6309 = vmatpush1.msra.mxu0 0.0
        %6310 = vmatprep.subr.mxu0 0.0
        %6311 = vmatpush1.msra.mxu0 0.0
        %6312 = vmatprep.subr.mxu0 0.0
        %6313 = vmatpush1.msra.mxu0 0.0
        %6314 = vmatprep.subr.mxu0 0.0
        %6315 = vmatpush1.msra.mxu0 0.0
        %6316 = vmatprep.subr.mxu0 0.0
        %6317 = vmatpush1.msra.mxu0 0.0
        %6318 = vmatprep.subr.mxu0 0.0
        %6319 = vmatpush1.msra.mxu0 0.0
        %6320 = vmatprep.subr.mxu0 0.0
        %6321 = vmatpush1.msra.mxu0 0.0
        %6322 = vmatprep.subr.mxu0 0.0
        %6323 = vmatpush1.msra.mxu0 0.0
        %6324 = vmatprep.subr.mxu0 0.0
        %6325 = vmatpush1.msra.mxu0 0.0
        %6326 = vmatprep.subr.mxu0 0.0
        %6327 = vmatpush1.msra.mxu0 0.0
        %6328 = vmatprep.subr.mxu0 0.0
        %6329 = vmatpush1.msra.mxu0 0.0
        %6330 = vmatprep.subr.mxu0 0.0
        %6331 = vmatpush1.msra.mxu0 0.0
        %6332 = vmatprep.subr.mxu0 0.0
        %6333 = vmatpush1.msra.mxu0 0.0
        %6334 = vmatprep.mubr.f32.mxu0 0.0
        %6335 = vmatmul.mubr.f32.gmra.mrb[0].mxu0 %v6175
        %v6336 = vpop.f32.mrb[0].mxu0
        %v6337 = vadd.f32 0.0, %v6336
        %v6338 = vpop.f32.mrb[0].mxu0
        %6339 = vmatprep.mubr.f32.mxu0 0.0
        %6340 = vmatmul.mubr.f32.gmra.mrb[0].mxu0 %v6178
        %v6341 = vpop.f32.mrb[0].mxu0
        %v6342 = vadd.f32 0.0, %v6341
        %v6343 = vpop.f32.mrb[0].mxu0
        %6344 = vmatprep.mubr.f32.mxu0 0.0
        %6345 = vmatmul.mubr.f32.gmra.mrb[0].mxu0 %v6181
        %v6346 = vpop.f32.mrb[0].mxu0
        %v6347 = vadd.f32 0.0, %v6346
        %v6348 = vpop.f32.mrb[0].mxu0
        %6349 = vmatprep.mubr.f32.mxu0 0.0
        %6350 = vmatmul.mubr.f32.gmra.mrb[0].mxu0 %v6184
        %v6351 = vpop.f32.mrb[0].mxu0
        %v6352 = vadd.f32 0.0, %v6351
        %v6353 = vpop.f32.mrb[0].mxu0
        %6354 = vmatprep.mubr.f32.mxu0 0.0
        %6355 = vmatmul.mubr.f32.gmra.mrb[0].mxu0 %v6187
        %v6356 = vpop.f32.mrb[0].mxu0
        %v6357 = vadd.f32 0.0, %v6356
        %v6358 = vpop.f32.mrb[0].mxu0
        %6359 = vmatprep.mubr.f32.mxu0 0.0
        %6360 = vmatmul.mubr.f32.gmra.mrb[0].mxu0 %v6190
        %v6361 = vpop.f32.mrb[0].mxu0
        %v6362 = vadd.f32 0.0, %v6361
        %v6363 = vpop.f32.mrb[0].mxu0
        %6364 = vmatprep.mubr.f32.mxu0 0.0
        %6365 = vmatmul.mubr.f32.gmra.mrb[0].mxu0 %v6193
        %v6366 = vpop.f32.mrb[0].mxu0
        %v6367 = vadd.f32 0.0, %v6366
        %v6368 = vpop.f32.mrb[0].mxu0
        %6369 = vmatprep.mubr.f32.mxu0 0.0
        %6370 = vmatmul.mubr.f32.gmra.mrb[0].mxu0 %v6196
        %v6371 = vpop.f32.mrb[0].mxu0
        %v6372 = vadd.f32 0.0, %v6371
        %v6373 = vpop.f32.mrb[0].mxu0
        %6374 = vmatprep.mubr.f32.mxu0 0.0
        %6375 = vmatmul.mubr.f32.gmra.mrb[0].mxu0 %v6199
        %v6376 = vpop.f32.mrb[0].mxu0
        %v6377 = vadd.f32 0.0, %v6376
        %v6378 = vpop.f32.mrb[0].mxu0
        %6379 = vmatprep.mubr.f32.mxu0 0.0
        %6380 = vmatmul.mubr.f32.gmra.mrb[0].mxu0 %v6202
        %v6381 = vpop.f32.mrb[0].mxu0
        %v6382 = vadd.f32 0.0, %v6381
        %v6383 = vpop.f32.mrb[0].mxu0
        %6384 = vmatprep.mubr.f32.mxu0 0.0
        %6385 = vmatmul.mubr.f32.gmra.mrb[0].mxu0 %v6205
        %v6386 = vpop.f32.mrb[0].mxu0
        %v6387 = vadd.f32 0.0, %v6386
        %v6388 = vpop.f32.mrb[0].mxu0
        %6389 = vmatprep.mubr.f32.mxu0 0.0
        %6390 = vmatmul.mubr.f32.gmra.mrb[0].mxu0 %v6208
        %v6391 = vpop.f32.mrb[0].mxu0
        %v6392 = vadd.f32 0.0, %v6391
        %v6393 = vpop.f32.mrb[0].mxu0
        %6394 = vmatprep.mubr.f32.mxu0 0.0
        %6395 = vmatmul.mubr.f32.gmra.mrb[0].mxu0 %v6211
        %v6396 = vpop.f32.mrb[0].mxu0
        %v6397 = vadd.f32 0.0, %v6396
        %v6398 = vpop.f32.mrb[0].mxu0
        %6399 = vmatprep.mubr.f32.mxu0 0.0
        %6400 = vmatmul.mubr.f32.gmra.mrb[0].mxu0 %v6214
        %v6401 = vpop.f32.mrb[0].mxu0
        %v6402 = vadd.f32 0.0, %v6401
        %v6403 = vpop.f32.mrb[0].mxu0
        %6404 = vmatprep.mubr.f32.mxu0 0.0
        %6405 = vmatmul.mubr.f32.gmra.mrb[0].mxu0 %v6217
        %v6406 = vpop.f32.mrb[0].mxu0
        %v6407 = vadd.f32 0.0, %v6406
        %v6408 = vpop.f32.mrb[0].mxu0
        %6409 = vmatprep.mubr.f32.mxu0 0.0
        %6410 = vmatmul.mubr.f32.gmra.mrb[0].mxu0 %v6220
        %v6411 = vpop.f32.mrb[0].mxu0
        %v6412 = vadd.f32 0.0, %v6411
        %v6413 = vpop.f32.mrb[0].mxu0
        %6414 = vmatprep.mubr.f32.mxu0 0.0
        %6415 = vmatmul.mubr.f32.gmra.mrb[0].mxu0 %v6223
        %v6416 = vpop.f32.mrb[0].mxu0
        %v6417 = vadd.f32 0.0, %v6416
        %v6418 = vpop.f32.mrb[0].mxu0
        %6419 = vmatprep.mubr.f32.mxu0 0.0
        %6420 = vmatmul.mubr.f32.gmra.mrb[0].mxu0 %v6226
        %v6421 = vpop.f32.mrb[0].mxu0
        %v6422 = vadd.f32 0.0, %v6421
        %v6423 = vpop.f32.mrb[0].mxu0
        %6424 = vmatprep.mubr.f32.mxu0 0.0
        %6425 = vmatmul.mubr.f32.gmra.mrb[0].mxu0 %v6229
        %v6426 = vpop.f32.mrb[0].mxu0
        %v6427 = vadd.f32 0.0, %v6426
        %v6428 = vpop.f32.mrb[0].mxu0
        %6429 = vmatprep.mubr.f32.mxu0 0.0
        %6430 = vmatmul.mubr.f32.gmra.mrb[0].mxu0 %v6232
        %v6431 = vpop.f32.mrb[0].mxu0
        %v6432 = vadd.f32 0.0, %v6431
        %v6433 = vpop.f32.mrb[0].mxu0
        %6434 = vmatprep.mubr.f32.mxu0 0.0
        %6435 = vmatmul.mubr.f32.gmra.mrb[0].mxu0 %v6235
        %v6436 = vpop.f32.mrb[0].mxu0
        %v6437 = vadd.f32 0.0, %v6436
        %v6438 = vpop.f32.mrb[0].mxu0
        %6439 = vmatprep.mubr.f32.mxu0 0.0
        %6440 = vmatmul.mubr.f32.gmra.mrb[0].mxu0 %v6238
        %v6441 = vpop.f32.mrb[0].mxu0
        %v6442 = vadd.f32 0.0, %v6441
        %v6443 = vpop.f32.mrb[0].mxu0
        %6444 = vmatprep.mubr.f32.mxu0 0.0
        %6445 = vmatmul.mubr.f32.gmra.mrb[0].mxu0 %v6241
        %v6446 = vpop.f32.mrb[0].mxu0
        %v6447 = vadd.f32 0.0, %v6446
        %v6448 = vpop.f32.mrb[0].mxu0
        %6449 = vmatprep.mubr.f32.mxu0 0.0
        %6450 = vmatmul.mubr.f32.gmra.mrb[0].mxu0 %v6244
        %v6451 = vpop.f32.mrb[0].mxu0
        %v6452 = vadd.f32 0.0, %v6451
        %v6453 = vpop.f32.mrb[0].mxu0
        %6454 = vmatprep.mubr.f32.mxu0 0.0
        %6455 = vmatmul.mubr.f32.gmra.mrb[0].mxu0 %v6247
        %v6456 = vpop.f32.mrb[0].mxu0
        %v6457 = vadd.f32 0.0, %v6456
        %v6458 = vpop.f32.mrb[0].mxu0
        %6459 = vmatprep.mubr.f32.mxu0 0.0
        %6460 = vmatmul.mubr.f32.gmra.mrb[0].mxu0 %v6250
        %v6461 = vpop.f32.mrb[0].mxu0
        %v6462 = vadd.f32 0.0, %v6461
        %v6463 = vpop.f32.mrb[0].mxu0
        %6464 = vmatprep.mubr.f32.mxu0 0.0
        %6465 = vmatmul.mubr.f32.gmra.mrb[0].mxu0 %v6253
        %v6466 = vpop.f32.mrb[0].mxu0
        %v6467 = vadd.f32 0.0, %v6466
        %v6468 = vpop.f32.mrb[0].mxu0
        %6469 = vmatprep.mubr.f32.mxu0 0.0
        %6470 = vmatmul.mubr.f32.gmra.mrb[0].mxu0 %v6256
        %v6471 = vpop.f32.mrb[0].mxu0
        %v6472 = vadd.f32 0.0, %v6471
        %v6473 = vpop.f32.mrb[0].mxu0
        %6474 = vmatprep.mubr.f32.mxu0 0.0
        %6475 = vmatmul.mubr.f32.gmra.mrb[0].mxu0 %v6259
        %v6476 = vpop.f32.mrb[0].mxu0
        %v6477 = vadd.f32 0.0, %v6476
        %v6478 = vpop.f32.mrb[0].mxu0
        %6479 = vmatprep.mubr.f32.mxu0 0.0
        %6480 = vmatmul.mubr.f32.gmra.mrb[0].mxu0 %v6262
        %v6481 = vpop.f32.mrb[0].mxu0
        %v6482 = vadd.f32 0.0, %v6481
        %v6483 = vpop.f32.mrb[0].mxu0
        %6484 = vmatprep.mubr.f32.mxu0 0.0
        %6485 = vmatmul.mubr.f32.gmra.mrb[0].mxu0 %v6265
        %v6486 = vpop.f32.mrb[0].mxu0
        %v6487 = vadd.f32 0.0, %v6486
        %v6488 = vpop.f32.mrb[0].mxu0
        %6489 = vmatprep.mubr.f32.mxu0 0.0
        %6490 = vmatmul.mubr.f32.gmra.mrb[0].mxu0 %v6268
        %v6491 = vpop.f32.mrb[0].mxu0
        %v6492 = vadd.f32 0.0, %v6491
        %v6493 = vpop.f32.mrb[0].mxu0
        %6494 = vdwg.mxu0
        %v6495 = vadd.f32 %v5713, %v6337
        %v6496 = vadd.f32 %v5714, %v6342
        %v6497 = vadd.f32 %v5715, %v6347
        %v6498 = vadd.f32 %v5716, %v6352
        %v6499 = vadd.f32 %v5717, %v6357
        %v6500 = vadd.f32 %v5718, %v6362
        %v6501 = vadd.f32 %v5719, %v6367
        %v6502 = vadd.f32 %v5720, %v6372
        %v6503 = vadd.f32 %v5721, %v6377
        %v6504 = vadd.f32 %v5722, %v6382
        %v6505 = vadd.f32 %v5723, %v6387
        %v6506 = vadd.f32 %v5724, %v6392
        %v6507 = vadd.f32 %v5725, %v6397
        %v6508 = vadd.f32 %v5726, %v6402
        %v6509 = vadd.f32 %v5727, %v6407
        %v6510 = vadd.f32 %v5728, %v6412
        %v6511 = vadd.f32 %v5729, %v6417
        %v6512 = vadd.f32 %v5730, %v6422
        %v6513 = vadd.f32 %v5731, %v6427
        %v6514 = vadd.f32 %v5732, %v6432
        %v6515 = vadd.f32 %v5733, %v6437
        %v6516 = vadd.f32 %v5734, %v6442
        %v6517 = vadd.f32 %v5735, %v6447
        %v6518 = vadd.f32 %v5736, %v6452
        %v6519 = vadd.f32 %v5737, %v6457
        %v6520 = vadd.f32 %v5738, %v6462
        %v6521 = vadd.f32 %v5739, %v6467
        %v6522 = vadd.f32 %v5740, %v6472
        %v6523 = vadd.f32 %v5741, %v6477
        %v6524 = vadd.f32 %v5742, %v6482
        %v6525 = vadd.f32 %v5743, %v6487
        %v6526 = vadd.f32 %v5744, %v6492
        %v6527 = vld [vmem:[%s4960 + $0x5] sm:$0xff]
        %v6528 = vld [vmem:[%s4960 + $0xd] sm:$0xff]
        %v6529 = vld [vmem:[%s4960 + $0x1d] sm:$0xff]
        %v6530 = vld [vmem:[%s4960 + $0x25] sm:$0xff]
        %v6531 = vld [vmem:[%s4960 + $0x35] sm:$0xff]
        %v6532 = vld [vmem:[%s4960 + $0x3d] sm:$0xff]
        %v6533 = vld [vmem:[%s4960 + $0x4d] sm:$0xff]
        %v6534 = vld [vmem:[%s4960 + $0x55] sm:$0xff]
        %v6535 = vld [vmem:[%s4960 + $0x65] sm:$0xff]
        %v6536 = vld [vmem:[%s4960 + $0x6d] sm:$0xff]
        %v6537 = vld [vmem:[%s4960 + $0x7d] sm:$0xff]
        %v6538 = vld [vmem:[%s4960 + $0x85] sm:$0xff]
        %v6539 = vld [vmem:[%s4960 + $0x95] sm:$0xff]
        %v6540 = vld [vmem:[%s4960 + $0x9d] sm:$0xff]
        %v6541 = vld [vmem:[%s4960 + $0xad] sm:$0xff]
        %v6542 = vld [vmem:[%s4960 + $0xb5] sm:$0xff]
        %v6543 = vld [vmem:[%s4960 + $0xc5] sm:$0xff]
        %v6544 = vld [vmem:[%s4960 + $0xcd] sm:$0xff]
        %v6545 = vld [vmem:[%s4960 + $0xdd] sm:$0xff]
        %v6546 = vld [vmem:[%s4960 + $0xe5] sm:$0xff]
        %v6547 = vld [vmem:[%s4960 + $0xf5] sm:$0xff]
        %v6548 = vld [vmem:[%s4960 + $0xfd] sm:$0xff]
        %v6549 = vld [vmem:[%s4960 + $0x10d] sm:$0xff]
        %v6550 = vld [vmem:[%s4960 + $0x115] sm:$0xff]
        %v6551 = vld [vmem:[%s4960 + $0x125] sm:$0xff]
        %v6552 = vld [vmem:[%s4960 + $0x12d] sm:$0xff]
        %v6553 = vld [vmem:[%s4960 + $0x13d] sm:$0xff]
        %v6554 = vld [vmem:[%s4960 + $0x145] sm:$0xff]
        %v6555 = vld [vmem:[%s4960 + $0x155] sm:$0xff]
        %v6556 = vld [vmem:[%s4960 + $0x15d] sm:$0xff]
        %v6557 = vld [vmem:[%s4960 + $0x16d] sm:$0xff]
        %v6558 = vld [vmem:[%s4960 + $0x175] sm:$0xff]
        %v6559 = vld [vmem:[%s4993 + $0x6] sm:$0xff]
        %v6560 = vld [vmem:[%s4993 + $0xe] sm:$0xff]
        %v6561 = vld [vmem:[%s4993 + $0x1e] sm:$0xff]
        %v6562 = vld [vmem:[%s4993 + $0x26] sm:$0xff]
        %v6563 = vld [vmem:[%s4993 + $0x36] sm:$0xff]
        %v6564 = vld [vmem:[%s4993 + $0x3e] sm:$0xff]
        %v6565 = vld [vmem:[%s4993 + $0x4e] sm:$0xff]
        %v6566 = vld [vmem:[%s4993 + $0x56] sm:$0xff]
        %v6567 = vld [vmem:[%s4993 + $0x66] sm:$0xff]
        %v6568 = vld [vmem:[%s4993 + $0x6e] sm:$0xff]
        %v6569 = vld [vmem:[%s4993 + $0x7e] sm:$0xff]
        %v6570 = vld [vmem:[%s4993 + $0x86] sm:$0xff]
        %v6571 = vld [vmem:[%s4993 + $0x96] sm:$0xff]
        %v6572 = vld [vmem:[%s4993 + $0x9e] sm:$0xff]
        %v6573 = vld [vmem:[%s4993 + $0xae] sm:$0xff]
        %v6574 = vld [vmem:[%s4993 + $0xb6] sm:$0xff]
        %v6575 = vld [vmem:[%s4993 + $0xc6] sm:$0xff]
        %v6576 = vld [vmem:[%s4993 + $0xce] sm:$0xff]
        %v6577 = vld [vmem:[%s4993 + $0xde] sm:$0xff]
        %v6578 = vld [vmem:[%s4993 + $0xe6] sm:$0xff]
        %v6579 = vld [vmem:[%s4993 + $0xf6] sm:$0xff]
        %v6580 = vld [vmem:[%s4993 + $0xfe] sm:$0xff]
        %v6581 = vld [vmem:[%s4993 + $0x10e] sm:$0xff]
        %v6582 = vld [vmem:[%s4993 + $0x116] sm:$0xff]
        %v6583 = vld [vmem:[%s4993 + $0x126] sm:$0xff]
        %v6584 = vld [vmem:[%s4993 + $0x12e] sm:$0xff]
        %v6585 = vld [vmem:[%s4993 + $0x13e] sm:$0xff]
        %v6586 = vld [vmem:[%s4993 + $0x146] sm:$0xff]
        %v6587 = vld [vmem:[%s4993 + $0x156] sm:$0xff]
        %v6588 = vld [vmem:[%s4993 + $0x15e] sm:$0xff]
        %v6589 = vld [vmem:[%s4993 + $0x16e] sm:$0xff]
        %v6590 = vld [vmem:[%s4993 + $0x176] sm:$0xff]
        %v6591 = vld [vmem:[%s5026 + $0x8] sm:$0xff]
        %v6592 = vld [vmem:[%s5026 + $0x10] sm:$0xff]
        %v6593 = vld [vmem:[%s5026 + $0x20] sm:$0xff]
        %v6594 = vld [vmem:[%s5026 + $0x28] sm:$0xff]
        %v6595 = vld [vmem:[%s5026 + $0x38] sm:$0xff]
        %v6596 = vld [vmem:[%s5026 + $0x40] sm:$0xff]
        %v6597 = vld [vmem:[%s5026 + $0x50] sm:$0xff]
        %v6598 = vld [vmem:[%s5026 + $0x58] sm:$0xff]
        %v6599 = vld [vmem:[%s5026 + $0x68] sm:$0xff]
        %v6600 = vld [vmem:[%s5026 + $0x70] sm:$0xff]
        %v6601 = vld [vmem:[%s5026 + $0x80] sm:$0xff]
        %v6602 = vld [vmem:[%s5026 + $0x88] sm:$0xff]
        %v6603 = vld [vmem:[%s5026 + $0x98] sm:$0xff]
        %v6604 = vld [vmem:[%s5026 + $0xa0] sm:$0xff]
        %v6605 = vld [vmem:[%s5026 + $0xb0] sm:$0xff]
        %v6606 = vld [vmem:[%s5026 + $0xb8] sm:$0xff]
        %v6607 = vld [vmem:[%s5026 + $0xc8] sm:$0xff]
        %v6608 = vld [vmem:[%s5026 + $0xd0] sm:$0xff]
        %v6609 = vld [vmem:[%s5026 + $0xe0] sm:$0xff]
        %v6610 = vld [vmem:[%s5026 + $0xe8] sm:$0xff]
        %v6611 = vld [vmem:[%s5026 + $0xf8] sm:$0xff]
        %v6612 = vld [vmem:[%s5026 + $0x100] sm:$0xff]
        %v6613 = vld [vmem:[%s5026 + $0x110] sm:$0xff]
        %v6614 = vld [vmem:[%s5026 + $0x118] sm:$0xff]
        %v6615 = vld [vmem:[%s5026 + $0x128] sm:$0xff]
        %v6616 = vld [vmem:[%s5026 + $0x130] sm:$0xff]
        %v6617 = vld [vmem:[%s5026 + $0x140] sm:$0xff]
        %v6618 = vld [vmem:[%s5026 + $0x148] sm:$0xff]
        %v6619 = vld [vmem:[%s5026 + $0x158] sm:$0xff]
        %v6620 = vld [vmem:[%s5026 + $0x160] sm:$0xff]
        %v6621 = vld [vmem:[%s5026 + $0x170] sm:$0xff]
        %v6622 = vld [vmem:[%s5026 + $0x178] sm:$0xff]
        %6655 = vrot.lane.b32.xlu0 %v6559, 32
        %v6656 = vpop.permute.xlu0 %6655
        %6657 = vrot.lane.b32.xlu0 %v6560, 32
        %v6658 = vpop.permute.xlu0 %6657
        %6659 = vrot.lane.b32.xlu0 %v6561, 32
        %v6660 = vpop.permute.xlu0 %6659
        %6661 = vrot.lane.b32.xlu0 %v6562, 32
        %v6662 = vpop.permute.xlu0 %6661
        %6663 = vrot.lane.b32.xlu0 %v6563, 32
        %v6664 = vpop.permute.xlu0 %6663
        %6665 = vrot.lane.b32.xlu0 %v6564, 32
        %v6666 = vpop.permute.xlu0 %6665
        %6667 = vrot.lane.b32.xlu0 %v6565, 32
        %v6668 = vpop.permute.xlu0 %6667
        %6669 = vrot.lane.b32.xlu0 %v6566, 32
        %v6670 = vpop.permute.xlu0 %6669
        %6671 = vrot.lane.b32.xlu0 %v6567, 32
        %v6672 = vpop.permute.xlu0 %6671
        %6673 = vrot.lane.b32.xlu0 %v6568, 32
        %v6674 = vpop.permute.xlu0 %6673
        %6675 = vrot.lane.b32.xlu0 %v6569, 32
        %v6676 = vpop.permute.xlu0 %6675
        %6677 = vrot.lane.b32.xlu0 %v6570, 32
        %v6678 = vpop.permute.xlu0 %6677
        %6679 = vrot.lane.b32.xlu0 %v6571, 32
        %v6680 = vpop.permute.xlu0 %6679
        %6681 = vrot.lane.b32.xlu0 %v6572, 32
        %v6682 = vpop.permute.xlu0 %6681
        %6683 = vrot.lane.b32.xlu0 %v6573, 32
        %v6684 = vpop.permute.xlu0 %6683
        %6685 = vrot.lane.b32.xlu0 %v6574, 32
        %v6686 = vpop.permute.xlu0 %6685
        %6687 = vrot.lane.b32.xlu0 %v6575, 32
        %v6688 = vpop.permute.xlu0 %6687
        %6689 = vrot.lane.b32.xlu0 %v6576, 32
        %v6690 = vpop.permute.xlu0 %6689
        %6691 = vrot.lane.b32.xlu0 %v6577, 32
        %v6692 = vpop.permute.xlu0 %6691
        %6693 = vrot.lane.b32.xlu0 %v6578, 32
        %v6694 = vpop.permute.xlu0 %6693
        %6695 = vrot.lane.b32.xlu0 %v6579, 32
        %v6696 = vpop.permute.xlu0 %6695
        %6697 = vrot.lane.b32.xlu0 %v6580, 32
        %v6698 = vpop.permute.xlu0 %6697
        %6699 = vrot.lane.b32.xlu0 %v6581, 32
        %v6700 = vpop.permute.xlu0 %6699
        %6701 = vrot.lane.b32.xlu0 %v6582, 32
        %v6702 = vpop.permute.xlu0 %6701
        %6703 = vrot.lane.b32.xlu0 %v6583, 32
        %v6704 = vpop.permute.xlu0 %6703
        %6705 = vrot.lane.b32.xlu0 %v6584, 32
        %v6706 = vpop.permute.xlu0 %6705
        %6707 = vrot.lane.b32.xlu0 %v6585, 32
        %v6708 = vpop.permute.xlu0 %6707
        %6709 = vrot.lane.b32.xlu0 %v6586, 32
        %v6710 = vpop.permute.xlu0 %6709
        %6711 = vrot.lane.b32.xlu0 %v6587, 32
        %v6712 = vpop.permute.xlu0 %6711
        %6713 = vrot.lane.b32.xlu0 %v6588, 32
        %v6714 = vpop.permute.xlu0 %6713
        %6715 = vrot.lane.b32.xlu0 %v6589, 32
        %v6716 = vpop.permute.xlu0 %6715
        %6717 = vrot.lane.b32.xlu0 %v6590, 32
        %v6718 = vpop.permute.xlu0 %6717
        %6783 = vrot.lane.b32.xlu0 %v6591, 64
        %v6784 = vpop.permute.xlu0 %6783
        %6785 = vrot.lane.b32.xlu0 %v6592, 64
        %v6786 = vpop.permute.xlu0 %6785
        %6787 = vrot.lane.b32.xlu0 %v6593, 64
        %v6788 = vpop.permute.xlu0 %6787
        %6789 = vrot.lane.b32.xlu0 %v6594, 64
        %v6790 = vpop.permute.xlu0 %6789
        %6791 = vrot.lane.b32.xlu0 %v6595, 64
        %v6792 = vpop.permute.xlu0 %6791
        %6793 = vrot.lane.b32.xlu0 %v6596, 64
        %v6794 = vpop.permute.xlu0 %6793
        %6795 = vrot.lane.b32.xlu0 %v6597, 64
        %v6796 = vpop.permute.xlu0 %6795
        %6797 = vrot.lane.b32.xlu0 %v6598, 64
        %v6798 = vpop.permute.xlu0 %6797
        %6799 = vrot.lane.b32.xlu0 %v6599, 64
        %v6800 = vpop.permute.xlu0 %6799
        %6801 = vrot.lane.b32.xlu0 %v6600, 64
        %v6802 = vpop.permute.xlu0 %6801
        %6803 = vrot.lane.b32.xlu0 %v6601, 64
        %v6804 = vpop.permute.xlu0 %6803
        %6805 = vrot.lane.b32.xlu0 %v6602, 64
        %v6806 = vpop.permute.xlu0 %6805
        %6807 = vrot.lane.b32.xlu0 %v6603, 64
        %v6808 = vpop.permute.xlu0 %6807
        %6809 = vrot.lane.b32.xlu0 %v6604, 64
        %v6810 = vpop.permute.xlu0 %6809
        %6811 = vrot.lane.b32.xlu0 %v6605, 64
        %v6812 = vpop.permute.xlu0 %6811
        %6813 = vrot.lane.b32.xlu0 %v6606, 64
        %v6814 = vpop.permute.xlu0 %6813
        %6815 = vrot.lane.b32.xlu0 %v6607, 64
        %v6816 = vpop.permute.xlu0 %6815
        %6817 = vrot.lane.b32.xlu0 %v6608, 64
        %v6818 = vpop.permute.xlu0 %6817
        %6819 = vrot.lane.b32.xlu0 %v6609, 64
        %v6820 = vpop.permute.xlu0 %6819
        %6821 = vrot.lane.b32.xlu0 %v6610, 64
        %v6822 = vpop.permute.xlu0 %6821
        %6823 = vrot.lane.b32.xlu0 %v6611, 64
        %v6824 = vpop.permute.xlu0 %6823
        %6825 = vrot.lane.b32.xlu0 %v6612, 64
        %v6826 = vpop.permute.xlu0 %6825
        %6827 = vrot.lane.b32.xlu0 %v6613, 64
        %v6828 = vpop.permute.xlu0 %6827
        %6829 = vrot.lane.b32.xlu0 %v6614, 64
        %v6830 = vpop.permute.xlu0 %6829
        %6831 = vrot.lane.b32.xlu0 %v6615, 64
        %v6832 = vpop.permute.xlu0 %6831
        %6833 = vrot.lane.b32.xlu0 %v6616, 64
        %v6834 = vpop.permute.xlu0 %6833
        %6835 = vrot.lane.b32.xlu0 %v6617, 64
        %v6836 = vpop.permute.xlu0 %6835
        %6837 = vrot.lane.b32.xlu0 %v6618, 64
        %v6838 = vpop.permute.xlu0 %6837
        %6839 = vrot.lane.b32.xlu0 %v6619, 64
        %v6840 = vpop.permute.xlu0 %6839
        %6841 = vrot.lane.b32.xlu0 %v6620, 64
        %v6842 = vpop.permute.xlu0 %6841
        %6843 = vrot.lane.b32.xlu0 %v6621, 64
        %v6844 = vpop.permute.xlu0 %6843
        %6845 = vrot.lane.b32.xlu0 %v6622, 64
        %v6846 = vpop.permute.xlu0 %6845
        %v6879 = vsel %vm777, %v6527, %v6656
        %v6880 = vsel %vm777, %v6528, %v6658
        %v6881 = vsel %vm777, %v6529, %v6660
        %v6882 = vsel %vm777, %v6530, %v6662
        %v6883 = vsel %vm777, %v6531, %v6664
        %v6884 = vsel %vm777, %v6532, %v6666
        %v6885 = vsel %vm777, %v6533, %v6668
        %v6886 = vsel %vm777, %v6534, %v6670
        %v6887 = vsel %vm777, %v6535, %v6672
        %v6888 = vsel %vm777, %v6536, %v6674
        %v6889 = vsel %vm777, %v6537, %v6676
        %v6890 = vsel %vm777, %v6538, %v6678
        %v6891 = vsel %vm777, %v6539, %v6680
        %v6892 = vsel %vm777, %v6540, %v6682
        %v6893 = vsel %vm777, %v6541, %v6684
        %v6894 = vsel %vm777, %v6542, %v6686
        %v6895 = vsel %vm777, %v6543, %v6688
        %v6896 = vsel %vm777, %v6544, %v6690
        %v6897 = vsel %vm777, %v6545, %v6692
        %v6898 = vsel %vm777, %v6546, %v6694
        %v6899 = vsel %vm777, %v6547, %v6696
        %v6900 = vsel %vm777, %v6548, %v6698
        %v6901 = vsel %vm777, %v6549, %v6700
        %v6902 = vsel %vm777, %v6550, %v6702
        %v6903 = vsel %vm777, %v6551, %v6704
        %v6904 = vsel %vm777, %v6552, %v6706
        %v6905 = vsel %vm777, %v6553, %v6708
        %v6906 = vsel %vm777, %v6554, %v6710
        %v6907 = vsel %vm777, %v6555, %v6712
        %v6908 = vsel %vm777, %v6556, %v6714
        %v6909 = vsel %vm777, %v6557, %v6716
        %v6910 = vsel %vm777, %v6558, %v6718
        %v6911 = vsel %vm810, %v6879, %v6784
        %v6912 = vsel %vm810, %v6880, %v6786
        %v6913 = vsel %vm810, %v6881, %v6788
        %v6914 = vsel %vm810, %v6882, %v6790
        %v6915 = vsel %vm810, %v6883, %v6792
        %v6916 = vsel %vm810, %v6884, %v6794
        %v6917 = vsel %vm810, %v6885, %v6796
        %v6918 = vsel %vm810, %v6886, %v6798
        %v6919 = vsel %vm810, %v6887, %v6800
        %v6920 = vsel %vm810, %v6888, %v6802
        %v6921 = vsel %vm810, %v6889, %v6804
        %v6922 = vsel %vm810, %v6890, %v6806
        %v6923 = vsel %vm810, %v6891, %v6808
        %v6924 = vsel %vm810, %v6892, %v6810
        %v6925 = vsel %vm810, %v6893, %v6812
        %v6926 = vsel %vm810, %v6894, %v6814
        %v6927 = vsel %vm810, %v6895, %v6816
        %v6928 = vsel %vm810, %v6896, %v6818
        %v6929 = vsel %vm810, %v6897, %v6820
        %v6930 = vsel %vm810, %v6898, %v6822
        %v6931 = vsel %vm810, %v6899, %v6824
        %v6932 = vsel %vm810, %v6900, %v6826
        %v6933 = vsel %vm810, %v6901, %v6828
        %v6934 = vsel %vm810, %v6902, %v6830
        %v6935 = vsel %vm810, %v6903, %v6832
        %v6936 = vsel %vm810, %v6904, %v6834
        %v6937 = vsel %vm810, %v6905, %v6836
        %v6938 = vsel %vm810, %v6906, %v6838
        %v6939 = vsel %vm810, %v6907, %v6840
        %v6940 = vsel %vm810, %v6908, %v6842
        %v6941 = vsel %vm810, %v6909, %v6844
        %v6942 = vsel %vm810, %v6910, %v6846
        %s6943 = scalar_lea.vmem %s1, 768
        %v6944 = vld [vmem:[%s6943] sm:$0xff]
        %v6945 = vld [vmem:[%s6943 + $0x8] sm:$0xff]
        %v6946 = vld [vmem:[%s6943 + $0x10] sm:$0xff]
        %v6947 = vld [vmem:[%s6943 + $0x18] sm:$0xff]
        %v6948 = vld [vmem:[%s6943 + $0x20] sm:$0xff]
        %v6949 = vld [vmem:[%s6943 + $0x28] sm:$0xff]
        %v6950 = vld [vmem:[%s6943 + $0x30] sm:$0xff]
        %v6951 = vld [vmem:[%s6943 + $0x38] sm:$0xff]
        %v6952 = vld [vmem:[%s6943 + $0x40] sm:$0xff]
        %v6953 = vld [vmem:[%s6943 + $0x48] sm:$0xff]
        %v6954 = vld [vmem:[%s6943 + $0x50] sm:$0xff]
        %v6955 = vld [vmem:[%s6943 + $0x58] sm:$0xff]
        %v6957 = vsel %vm1284, %v6911, 0
        %v6960 = vsel %vm1284, %v6912, 0
        %v6963 = vsel %vm1284, %v6913, 0
        %v6966 = vsel %vm1284, %v6914, 0
        %v6969 = vsel %vm1284, %v6915, 0
        %v6972 = vsel %vm1284, %v6916, 0
        %v6975 = vsel %vm1284, %v6917, 0
        %v6978 = vsel %vm1284, %v6918, 0
        %v6981 = vsel %vm1284, %v6919, 0
        %v6984 = vsel %vm1284, %v6920, 0
        %v6987 = vsel %vm1284, %v6921, 0
        %v6990 = vsel %vm1284, %v6922, 0
        %v6993 = vsel %vm1284, %v6923, 0
        %v6996 = vsel %vm1284, %v6924, 0
        %v6999 = vsel %vm1284, %v6925, 0
        %v7002 = vsel %vm1284, %v6926, 0
        %v7005 = vsel %vm1284, %v6927, 0
        %v7008 = vsel %vm1284, %v6928, 0
        %v7011 = vsel %vm1284, %v6929, 0
        %v7014 = vsel %vm1284, %v6930, 0
        %v7017 = vsel %vm1284, %v6931, 0
        %v7020 = vsel %vm1284, %v6932, 0
        %v7023 = vsel %vm1284, %v6933, 0
        %v7026 = vsel %vm1284, %v6934, 0
        %v7029 = vsel %vm1284, %v6935, 0
        %v7032 = vsel %vm1284, %v6936, 0
        %v7035 = vsel %vm1284, %v6937, 0
        %v7038 = vsel %vm1284, %v6938, 0
        %v7041 = vsel %vm1284, %v6939, 0
        %v7044 = vsel %vm1284, %v6940, 0
        %v7047 = vsel %vm1284, %v6941, 0
        %v7050 = vsel %vm1284, %v6942, 0
        %7052 = vmatprep.subr.mxu0 0.0
        %7053 = vmatpush1.msra.mxu0 %v6944
        %7054 = vmatprep.subr.mxu0 0.0
        %7055 = vmatpush1.msra.mxu0 %v6945
        %7056 = vmatprep.subr.mxu0 0.0
        %7057 = vmatpush1.msra.mxu0 %v6946
        %7058 = vmatprep.subr.mxu0 0.0
        %7059 = vmatpush1.msra.mxu0 %v6947
        %7060 = vmatprep.subr.mxu0 0.0
        %7061 = vmatpush1.msra.mxu0 %v6948
        %7062 = vmatprep.subr.mxu0 0.0
        %7063 = vmatpush1.msra.mxu0 %v6949
        %7064 = vmatprep.subr.mxu0 0.0
        %7065 = vmatpush1.msra.mxu0 %v6950
        %7066 = vmatprep.subr.mxu0 0.0
        %7067 = vmatpush1.msra.mxu0 %v6951
        %7068 = vmatprep.subr.mxu0 0.0
        %7069 = vmatpush1.msra.mxu0 %v6952
        %7070 = vmatprep.subr.mxu0 0.0
        %7071 = vmatpush1.msra.mxu0 %v6953
        %7072 = vmatprep.subr.mxu0 0.0
        %7073 = vmatpush1.msra.mxu0 %v6954
        %7074 = vmatprep.subr.mxu0 0.0
        %7075 = vmatpush1.msra.mxu0 %v6955
        %7076 = vmatprep.subr.mxu0 0.0
        %7077 = vmatpush1.msra.mxu0 0.0
        %7078 = vmatprep.subr.mxu0 0.0
        %7079 = vmatpush1.msra.mxu0 0.0
        %7080 = vmatprep.subr.mxu0 0.0
        %7081 = vmatpush1.msra.mxu0 0.0
        %7082 = vmatprep.subr.mxu0 0.0
        %7083 = vmatpush1.msra.mxu0 0.0
        %7084 = vmatprep.subr.mxu0 0.0
        %7085 = vmatpush1.msra.mxu0 0.0
        %7086 = vmatprep.subr.mxu0 0.0
        %7087 = vmatpush1.msra.mxu0 0.0
        %7088 = vmatprep.subr.mxu0 0.0
        %7089 = vmatpush1.msra.mxu0 0.0
        %7090 = vmatprep.subr.mxu0 0.0
        %7091 = vmatpush1.msra.mxu0 0.0
        %7092 = vmatprep.subr.mxu0 0.0
        %7093 = vmatpush1.msra.mxu0 0.0
        %7094 = vmatprep.subr.mxu0 0.0
        %7095 = vmatpush1.msra.mxu0 0.0
        %7096 = vmatprep.subr.mxu0 0.0
        %7097 = vmatpush1.msra.mxu0 0.0
        %7098 = vmatprep.subr.mxu0 0.0
        %7099 = vmatpush1.msra.mxu0 0.0
        %7100 = vmatprep.subr.mxu0 0.0
        %7101 = vmatpush1.msra.mxu0 0.0
        %7102 = vmatprep.subr.mxu0 0.0
        %7103 = vmatpush1.msra.mxu0 0.0
        %7104 = vmatprep.subr.mxu0 0.0
        %7105 = vmatpush1.msra.mxu0 0.0
        %7106 = vmatprep.subr.mxu0 0.0
        %7107 = vmatpush1.msra.mxu0 0.0
        %7108 = vmatprep.subr.mxu0 0.0
        %7109 = vmatpush1.msra.mxu0 0.0
        %7110 = vmatprep.subr.mxu0 0.0
        %7111 = vmatpush1.msra.mxu0 0.0
        %7112 = vmatprep.subr.mxu0 0.0
        %7113 = vmatpush1.msra.mxu0 0.0
        %7114 = vmatprep.subr.mxu0 0.0
        %7115 = vmatpush1.msra.mxu0 0.0
        %7116 = vmatprep.mubr.f32.mxu0 0.0
        %7117 = vmatmul.mubr.f32.gmra.mrb[0].mxu0 %v6957
        %v7118 = vpop.f32.mrb[0].mxu0
        %v7119 = vadd.f32 0.0, %v7118
        %v7120 = vpop.f32.mrb[0].mxu0
        %7121 = vmatprep.mubr.f32.mxu0 0.0
        %7122 = vmatmul.mubr.f32.gmra.mrb[0].mxu0 %v6960
        %v7123 = vpop.f32.mrb[0].mxu0
        %v7124 = vadd.f32 0.0, %v7123
        %v7125 = vpop.f32.mrb[0].mxu0
        %7126 = vmatprep.mubr.f32.mxu0 0.0
        %7127 = vmatmul.mubr.f32.gmra.mrb[0].mxu0 %v6963
        %v7128 = vpop.f32.mrb[0].mxu0
        %v7129 = vadd.f32 0.0, %v7128
        %v7130 = vpop.f32.mrb[0].mxu0
        %7131 = vmatprep.mubr.f32.mxu0 0.0
        %7132 = vmatmul.mubr.f32.gmra.mrb[0].mxu0 %v6966
        %v7133 = vpop.f32.mrb[0].mxu0
        %v7134 = vadd.f32 0.0, %v7133
        %v7135 = vpop.f32.mrb[0].mxu0
        %7136 = vmatprep.mubr.f32.mxu0 0.0
        %7137 = vmatmul.mubr.f32.gmra.mrb[0].mxu0 %v6969
        %v7138 = vpop.f32.mrb[0].mxu0
        %v7139 = vadd.f32 0.0, %v7138
        %v7140 = vpop.f32.mrb[0].mxu0
        %7141 = vmatprep.mubr.f32.mxu0 0.0
        %7142 = vmatmul.mubr.f32.gmra.mrb[0].mxu0 %v6972
        %v7143 = vpop.f32.mrb[0].mxu0
        %v7144 = vadd.f32 0.0, %v7143
        %v7145 = vpop.f32.mrb[0].mxu0
        %7146 = vmatprep.mubr.f32.mxu0 0.0
        %7147 = vmatmul.mubr.f32.gmra.mrb[0].mxu0 %v6975
        %v7148 = vpop.f32.mrb[0].mxu0
        %v7149 = vadd.f32 0.0, %v7148
        %v7150 = vpop.f32.mrb[0].mxu0
        %7151 = vmatprep.mubr.f32.mxu0 0.0
        %7152 = vmatmul.mubr.f32.gmra.mrb[0].mxu0 %v6978
        %v7153 = vpop.f32.mrb[0].mxu0
        %v7154 = vadd.f32 0.0, %v7153
        %v7155 = vpop.f32.mrb[0].mxu0
        %7156 = vmatprep.mubr.f32.mxu0 0.0
        %7157 = vmatmul.mubr.f32.gmra.mrb[0].mxu0 %v6981
        %v7158 = vpop.f32.mrb[0].mxu0
        %v7159 = vadd.f32 0.0, %v7158
        %v7160 = vpop.f32.mrb[0].mxu0
        %7161 = vmatprep.mubr.f32.mxu0 0.0
        %7162 = vmatmul.mubr.f32.gmra.mrb[0].mxu0 %v6984
        %v7163 = vpop.f32.mrb[0].mxu0
        %v7164 = vadd.f32 0.0, %v7163
        %v7165 = vpop.f32.mrb[0].mxu0
        %7166 = vmatprep.mubr.f32.mxu0 0.0
        %7167 = vmatmul.mubr.f32.gmra.mrb[0].mxu0 %v6987
        %v7168 = vpop.f32.mrb[0].mxu0
        %v7169 = vadd.f32 0.0, %v7168
        %v7170 = vpop.f32.mrb[0].mxu0
        %7171 = vmatprep.mubr.f32.mxu0 0.0
        %7172 = vmatmul.mubr.f32.gmra.mrb[0].mxu0 %v6990
        %v7173 = vpop.f32.mrb[0].mxu0
        %v7174 = vadd.f32 0.0, %v7173
        %v7175 = vpop.f32.mrb[0].mxu0
        %7176 = vmatprep.mubr.f32.mxu0 0.0
        %7177 = vmatmul.mubr.f32.gmra.mrb[0].mxu0 %v6993
        %v7178 = vpop.f32.mrb[0].mxu0
        %v7179 = vadd.f32 0.0, %v7178
        %v7180 = vpop.f32.mrb[0].mxu0
        %7181 = vmatprep.mubr.f32.mxu0 0.0
        %7182 = vmatmul.mubr.f32.gmra.mrb[0].mxu0 %v6996
        %v7183 = vpop.f32.mrb[0].mxu0
        %v7184 = vadd.f32 0.0, %v7183
        %v7185 = vpop.f32.mrb[0].mxu0
        %7186 = vmatprep.mubr.f32.mxu0 0.0
        %7187 = vmatmul.mubr.f32.gmra.mrb[0].mxu0 %v6999
        %v7188 = vpop.f32.mrb[0].mxu0
        %v7189 = vadd.f32 0.0, %v7188
        %v7190 = vpop.f32.mrb[0].mxu0
        %7191 = vmatprep.mubr.f32.mxu0 0.0
        %7192 = vmatmul.mubr.f32.gmra.mrb[0].mxu0 %v7002
        %v7193 = vpop.f32.mrb[0].mxu0
        %v7194 = vadd.f32 0.0, %v7193
        %v7195 = vpop.f32.mrb[0].mxu0
        %7196 = vmatprep.mubr.f32.mxu0 0.0
        %7197 = vmatmul.mubr.f32.gmra.mrb[0].mxu0 %v7005
        %v7198 = vpop.f32.mrb[0].mxu0
        %v7199 = vadd.f32 0.0, %v7198
        %v7200 = vpop.f32.mrb[0].mxu0
        %7201 = vmatprep.mubr.f32.mxu0 0.0
        %7202 = vmatmul.mubr.f32.gmra.mrb[0].mxu0 %v7008
        %v7203 = vpop.f32.mrb[0].mxu0
        %v7204 = vadd.f32 0.0, %v7203
        %v7205 = vpop.f32.mrb[0].mxu0
        %7206 = vmatprep.mubr.f32.mxu0 0.0
        %7207 = vmatmul.mubr.f32.gmra.mrb[0].mxu0 %v7011
        %v7208 = vpop.f32.mrb[0].mxu0
        %v7209 = vadd.f32 0.0, %v7208
        %v7210 = vpop.f32.mrb[0].mxu0
        %7211 = vmatprep.mubr.f32.mxu0 0.0
        %7212 = vmatmul.mubr.f32.gmra.mrb[0].mxu0 %v7014
        %v7213 = vpop.f32.mrb[0].mxu0
        %v7214 = vadd.f32 0.0, %v7213
        %v7215 = vpop.f32.mrb[0].mxu0
        %7216 = vmatprep.mubr.f32.mxu0 0.0
        %7217 = vmatmul.mubr.f32.gmra.mrb[0].mxu0 %v7017
        %v7218 = vpop.f32.mrb[0].mxu0
        %v7219 = vadd.f32 0.0, %v7218
        %v7220 = vpop.f32.mrb[0].mxu0
        %7221 = vmatprep.mubr.f32.mxu0 0.0
        %7222 = vmatmul.mubr.f32.gmra.mrb[0].mxu0 %v7020
        %v7223 = vpop.f32.mrb[0].mxu0
        %v7224 = vadd.f32 0.0, %v7223
        %v7225 = vpop.f32.mrb[0].mxu0
        %7226 = vmatprep.mubr.f32.mxu0 0.0
        %7227 = vmatmul.mubr.f32.gmra.mrb[0].mxu0 %v7023
        %v7228 = vpop.f32.mrb[0].mxu0
        %v7229 = vadd.f32 0.0, %v7228
        %v7230 = vpop.f32.mrb[0].mxu0
        %7231 = vmatprep.mubr.f32.mxu0 0.0
        %7232 = vmatmul.mubr.f32.gmra.mrb[0].mxu0 %v7026
        %v7233 = vpop.f32.mrb[0].mxu0
        %v7234 = vadd.f32 0.0, %v7233
        %v7235 = vpop.f32.mrb[0].mxu0
        %7236 = vmatprep.mubr.f32.mxu0 0.0
        %7237 = vmatmul.mubr.f32.gmra.mrb[0].mxu0 %v7029
        %v7238 = vpop.f32.mrb[0].mxu0
        %v7239 = vadd.f32 0.0, %v7238
        %v7240 = vpop.f32.mrb[0].mxu0
        %7241 = vmatprep.mubr.f32.mxu0 0.0
        %7242 = vmatmul.mubr.f32.gmra.mrb[0].mxu0 %v7032
        %v7243 = vpop.f32.mrb[0].mxu0
        %v7244 = vadd.f32 0.0, %v7243
        %v7245 = vpop.f32.mrb[0].mxu0
        %7246 = vmatprep.mubr.f32.mxu0 0.0
        %7247 = vmatmul.mubr.f32.gmra.mrb[0].mxu0 %v7035
        %v7248 = vpop.f32.mrb[0].mxu0
        %v7249 = vadd.f32 0.0, %v7248
        %v7250 = vpop.f32.mrb[0].mxu0
        %7251 = vmatprep.mubr.f32.mxu0 0.0
        %7252 = vmatmul.mubr.f32.gmra.mrb[0].mxu0 %v7038
        %v7253 = vpop.f32.mrb[0].mxu0
        %v7254 = vadd.f32 0.0, %v7253
        %v7255 = vpop.f32.mrb[0].mxu0
        %7256 = vmatprep.mubr.f32.mxu0 0.0
        %7257 = vmatmul.mubr.f32.gmra.mrb[0].mxu0 %v7041
        %v7258 = vpop.f32.mrb[0].mxu0
        %v7259 = vadd.f32 0.0, %v7258
        %v7260 = vpop.f32.mrb[0].mxu0
        %7261 = vmatprep.mubr.f32.mxu0 0.0
        %7262 = vmatmul.mubr.f32.gmra.mrb[0].mxu0 %v7044
        %v7263 = vpop.f32.mrb[0].mxu0
        %v7264 = vadd.f32 0.0, %v7263
        %v7265 = vpop.f32.mrb[0].mxu0
        %7266 = vmatprep.mubr.f32.mxu0 0.0
        %7267 = vmatmul.mubr.f32.gmra.mrb[0].mxu0 %v7047
        %v7268 = vpop.f32.mrb[0].mxu0
        %v7269 = vadd.f32 0.0, %v7268
        %v7270 = vpop.f32.mrb[0].mxu0
        %7271 = vmatprep.mubr.f32.mxu0 0.0
        %7272 = vmatmul.mubr.f32.gmra.mrb[0].mxu0 %v7050
        %v7273 = vpop.f32.mrb[0].mxu0
        %v7274 = vadd.f32 0.0, %v7273
        %v7275 = vpop.f32.mrb[0].mxu0
        %7276 = vdwg.mxu0
        %v7277 = vadd.f32 %v6495, %v7119
        %v7278 = vadd.f32 %v6496, %v7124
        %v7279 = vadd.f32 %v6497, %v7129
        %v7280 = vadd.f32 %v6498, %v7134
        %v7281 = vadd.f32 %v6499, %v7139
        %v7282 = vadd.f32 %v6500, %v7144
        %v7283 = vadd.f32 %v6501, %v7149
        %v7284 = vadd.f32 %v6502, %v7154
        %v7285 = vadd.f32 %v6503, %v7159
        %v7286 = vadd.f32 %v6504, %v7164
        %v7287 = vadd.f32 %v6505, %v7169
        %v7288 = vadd.f32 %v6506, %v7174
        %v7289 = vadd.f32 %v6507, %v7179
        %v7290 = vadd.f32 %v6508, %v7184
        %v7291 = vadd.f32 %v6509, %v7189
        %v7292 = vadd.f32 %v6510, %v7194
        %v7293 = vadd.f32 %v6511, %v7199
        %v7294 = vadd.f32 %v6512, %v7204
        %v7295 = vadd.f32 %v6513, %v7209
        %v7296 = vadd.f32 %v6514, %v7214
        %v7297 = vadd.f32 %v6515, %v7219
        %v7298 = vadd.f32 %v6516, %v7224
        %v7299 = vadd.f32 %v6517, %v7229
        %v7300 = vadd.f32 %v6518, %v7234
        %v7301 = vadd.f32 %v6519, %v7239
        %v7302 = vadd.f32 %v6520, %v7244
        %v7303 = vadd.f32 %v6521, %v7249
        %v7304 = vadd.f32 %v6522, %v7254
        %v7305 = vadd.f32 %v6523, %v7259
        %v7306 = vadd.f32 %v6524, %v7264
        %v7307 = vadd.f32 %v6525, %v7269
        %v7308 = vadd.f32 %v6526, %v7274
        %v7309 = vld [vmem:[#allocation2] sm:$0x1]
        %v7311 = vlaneseq
        %v7312 = vshrl.u32 %v7311, 7
        %v7313 = vsub.s32 0, %v7312
        %v7314 = vrot.slane %v7309, %v7313
        %v7316 = vmul.f32 %v7314, %v7277
        %v7317 = vmul.f32 %v7314, %v7278
        %v7318 = vmul.f32 %v7314, %v7279
        %v7319 = vmul.f32 %v7314, %v7280
        %v7320 = vmul.f32 %v7314, %v7281
        %v7321 = vmul.f32 %v7314, %v7282
        %v7322 = vmul.f32 %v7314, %v7283
        %v7323 = vmul.f32 %v7314, %v7284
        %v7324 = vmul.f32 %v7314, %v7285
        %v7325 = vmul.f32 %v7314, %v7286
        %v7326 = vmul.f32 %v7314, %v7287
        %v7327 = vmul.f32 %v7314, %v7288
        %v7328 = vmul.f32 %v7314, %v7289
        %v7329 = vmul.f32 %v7314, %v7290
        %v7330 = vmul.f32 %v7314, %v7291
        %v7331 = vmul.f32 %v7314, %v7292
        %v7332 = vmul.f32 %v7314, %v7293
        %v7333 = vmul.f32 %v7314, %v7294
        %v7334 = vmul.f32 %v7314, %v7295
        %v7335 = vmul.f32 %v7314, %v7296
        %v7336 = vmul.f32 %v7314, %v7297
        %v7337 = vmul.f32 %v7314, %v7298
        %v7338 = vmul.f32 %v7314, %v7299
        %v7339 = vmul.f32 %v7314, %v7300
        %v7340 = vmul.f32 %v7314, %v7301
        %v7341 = vmul.f32 %v7314, %v7302
        %v7342 = vmul.f32 %v7314, %v7303
        %v7343 = vmul.f32 %v7314, %v7304
        %v7344 = vmul.f32 %v7314, %v7305
        %v7345 = vmul.f32 %v7314, %v7306
        %v7346 = vmul.f32 %v7314, %v7307
        %v7347 = vmul.f32 %v7314, %v7308
        %v7348 = vld [vmem:[#allocation6] sm:$0x1]
        %v7350 = vlaneseq
        %v7351 = vshrl.u32 %v7350, 7
        %v7352 = vsub.s32 0, %v7351
        %v7353 = vrot.slane %v7348, %v7352
        %v7355 = vadd.f32 %v7316, %v7353
        %v7356 = vadd.f32 %v7317, %v7353
        %v7357 = vadd.f32 %v7318, %v7353
        %v7358 = vadd.f32 %v7319, %v7353
        %v7359 = vadd.f32 %v7320, %v7353
        %v7360 = vadd.f32 %v7321, %v7353
        %v7361 = vadd.f32 %v7322, %v7353
        %v7362 = vadd.f32 %v7323, %v7353
        %v7363 = vadd.f32 %v7324, %v7353
        %v7364 = vadd.f32 %v7325, %v7353
        %v7365 = vadd.f32 %v7326, %v7353
        %v7366 = vadd.f32 %v7327, %v7353
        %v7367 = vadd.f32 %v7328, %v7353
        %v7368 = vadd.f32 %v7329, %v7353
        %v7369 = vadd.f32 %v7330, %v7353
        %v7370 = vadd.f32 %v7331, %v7353
        %v7371 = vadd.f32 %v7332, %v7353
        %v7372 = vadd.f32 %v7333, %v7353
        %v7373 = vadd.f32 %v7334, %v7353
        %v7374 = vadd.f32 %v7335, %v7353
        %v7375 = vadd.f32 %v7336, %v7353
        %v7376 = vadd.f32 %v7337, %v7353
        %v7377 = vadd.f32 %v7338, %v7353
        %v7378 = vadd.f32 %v7339, %v7353
        %v7379 = vadd.f32 %v7340, %v7353
        %v7380 = vadd.f32 %v7341, %v7353
        %v7381 = vadd.f32 %v7342, %v7353
        %v7382 = vadd.f32 %v7343, %v7353
        %v7383 = vadd.f32 %v7344, %v7353
        %v7384 = vadd.f32 %v7345, %v7353
        %v7385 = vadd.f32 %v7346, %v7353
        %v7386 = vadd.f32 %v7347, %v7353
        %v7387 = vmax.f32 %v7355, 0.0
        %v7388 = vmax.f32 %v7356, 0.0
        %v7389 = vmax.f32 %v7357, 0.0
        %v7390 = vmax.f32 %v7358, 0.0
        %v7391 = vmax.f32 %v7359, 0.0
        %v7392 = vmax.f32 %v7360, 0.0
        %v7393 = vmax.f32 %v7361, 0.0
        %v7394 = vmax.f32 %v7362, 0.0
        %v7395 = vmax.f32 %v7363, 0.0
        %v7396 = vmax.f32 %v7364, 0.0
        %v7397 = vmax.f32 %v7365, 0.0
        %v7398 = vmax.f32 %v7366, 0.0
        %v7399 = vmax.f32 %v7367, 0.0
        %v7400 = vmax.f32 %v7368, 0.0
        %v7401 = vmax.f32 %v7369, 0.0
        %v7402 = vmax.f32 %v7370, 0.0
        %v7403 = vmax.f32 %v7371, 0.0
        %v7404 = vmax.f32 %v7372, 0.0
        %v7405 = vmax.f32 %v7373, 0.0
        %v7406 = vmax.f32 %v7374, 0.0
        %v7407 = vmax.f32 %v7375, 0.0
        %v7408 = vmax.f32 %v7376, 0.0
        %v7409 = vmax.f32 %v7377, 0.0
        %v7410 = vmax.f32 %v7378, 0.0
        %v7411 = vmax.f32 %v7379, 0.0
        %v7412 = vmax.f32 %v7380, 0.0
        %v7413 = vmax.f32 %v7381, 0.0
        %v7414 = vmax.f32 %v7382, 0.0
        %v7415 = vmax.f32 %v7383, 0.0
        %v7416 = vmax.f32 %v7384, 0.0
        %v7417 = vmax.f32 %v7385, 0.0
        %v7418 = vmax.f32 %v7386, 0.0
        %v7419 = vsel %vm777, %v7387, 0.0
        %v7420 = vsel %vm777, %v7388, 0.0
        %v7421 = vadd.f32 %v7419, %v7420
        %v7422 = vsel %vm777, %v7389, 0.0
        %v7423 = vadd.f32 %v7421, %v7422
        %v7424 = vsel %vm777, %v7390, 0.0
        %v7425 = vadd.f32 %v7423, %v7424
        %v7426 = vsel %vm777, %v7391, 0.0
        %v7427 = vadd.f32 %v7425, %v7426
        %v7428 = vsel %vm777, %v7392, 0.0
        %v7429 = vadd.f32 %v7427, %v7428
        %v7430 = vsel %vm777, %v7393, 0.0
        %v7431 = vadd.f32 %v7429, %v7430
        %v7432 = vsel %vm777, %v7394, 0.0
        %v7433 = vadd.f32 %v7431, %v7432
        %v7434 = vsel %vm777, %v7395, 0.0
        %v7435 = vadd.f32 %v7433, %v7434
        %v7436 = vsel %vm777, %v7396, 0.0
        %v7437 = vadd.f32 %v7435, %v7436
        %v7438 = vsel %vm777, %v7397, 0.0
        %v7439 = vadd.f32 %v7437, %v7438
        %v7440 = vsel %vm777, %v7398, 0.0
        %v7441 = vadd.f32 %v7439, %v7440
        %v7442 = vsel %vm777, %v7399, 0.0
        %v7443 = vadd.f32 %v7441, %v7442
        %v7444 = vsel %vm777, %v7400, 0.0
        %v7445 = vadd.f32 %v7443, %v7444
        %v7446 = vsel %vm777, %v7401, 0.0
        %v7447 = vadd.f32 %v7445, %v7446
        %v7448 = vsel %vm777, %v7402, 0.0
        %v7449 = vadd.f32 %v7447, %v7448
        %v7450 = vsel %vm777, %v7403, 0.0
        %v7451 = vadd.f32 %v7449, %v7450
        %v7452 = vsel %vm777, %v7404, 0.0
        %v7453 = vadd.f32 %v7451, %v7452
        %v7454 = vsel %vm777, %v7405, 0.0
        %v7455 = vadd.f32 %v7453, %v7454
        %v7456 = vsel %vm777, %v7406, 0.0
        %v7457 = vadd.f32 %v7455, %v7456
        %v7458 = vsel %vm777, %v7407, 0.0
        %v7459 = vadd.f32 %v7457, %v7458
        %v7460 = vsel %vm777, %v7408, 0.0
        %v7461 = vadd.f32 %v7459, %v7460
        %v7462 = vsel %vm777, %v7409, 0.0
        %v7463 = vadd.f32 %v7461, %v7462
        %v7464 = vsel %vm777, %v7410, 0.0
        %v7465 = vadd.f32 %v7463, %v7464
        %v7466 = vsel %vm777, %v7411, 0.0
        %v7467 = vadd.f32 %v7465, %v7466
        %v7468 = vsel %vm777, %v7412, 0.0
        %v7469 = vadd.f32 %v7467, %v7468
        %v7470 = vsel %vm777, %v7413, 0.0
        %v7471 = vadd.f32 %v7469, %v7470
        %v7472 = vsel %vm777, %v7414, 0.0
        %v7473 = vadd.f32 %v7471, %v7472
        %v7474 = vsel %vm777, %v7415, 0.0
        %v7475 = vadd.f32 %v7473, %v7474
        %v7476 = vsel %vm777, %v7416, 0.0
        %v7477 = vadd.f32 %v7475, %v7476
        %v7478 = vsel %vm777, %v7417, 0.0
        %v7479 = vadd.f32 %v7477, %v7478
        %v7480 = vsel %vm777, %v7418, 0.0
        %v7481 = vadd.f32 %v7479, %v7480
        %v7482 = vrot.slane %v7481, 4
        %v7483 = vadd.f32 %v7481, %v7482
        %v7484 = vrot.slane %v7483, 2
        %v7485 = vadd.f32 %v7483, %v7484
        %v7486 = vrot.slane %v7485, 1
        %v7487 = vadd.f32 %v7485, %v7486
        %v7488 = vmul.f32 %v7487, 0.00390625
        %v7489 = vld [vmem:[%s6] sm:$0x1]
        %v7490 = vld [vmem:[%s4] sm:$0x1]
        %v7491 = vmul.f32 %v7488, %v7490
        %vm7492 = vcmask 253952
        %v7493 = vsel %vm7492, %v7491, 0.0
        %7494 = vadd.xlane.f32.xlu0 %v7493
        %v7495 = vpop.xlane.xlu0 %7494
        %s7496 = sld [smem:[#allocation8]]
        %v7497 = vstv %s7496
        %v7498 = vadd.f32 %v7495, %v7497
        %v7499 = vmax.f32 %v7498, 0.0
        %v7500 = vld [vmem:[%s5] sm:$0x1]
        %v7501 = vmul.f32 %v7499, %v7500
        %v7502 = vadd.f32 %v7489, %v7501
        %v7503 = vld [vmem:[%s4 + $0x1] sm:$0x1]
        %v7504 = vmul.f32 %v7488, %v7503
        %v7505 = vsel %vm7492, %v7504, 0.0
        %7506 = vadd.xlane.f32.xlu0 %v7505
        %v7507 = vpop.xlane.xlu0 %7506
        %s7508 = sld [smem:[#allocation8 + $0x1]]
        %v7509 = vstv %s7508
        %v7510 = vadd.f32 %v7507, %v7509
        %v7511 = vmax.f32 %v7510, 0.0
        %v7512 = vld [vmem:[%s5 + $0x1] sm:$0x1]
        %v7513 = vmul.f32 %v7511, %v7512
        %v7514 = vadd.f32 %v7502, %v7513
        %v7515 = vsub.f32 0.0, %v7514
        %v7516 = vmul.f32 %v7515, 1.442695
        %v7517 = vpow.pop %v7516
        %v7518 = vadd.f32 %v7517, 1.0
        %v7519 = vrcp.pop %v7518
        %v7520 = vmul.f32 1.0, %v7519
        %v7522 = vlaneseq
        %v7523 = vshrl.u32 %v7522, 7
        %v7524 = vsub.s32 0, %v7523
        %v7525 = vrot.slane %v7520, %v7524
        %v7527 = vmul.f32 %v7387, %v7525
        %v7528 = vmul.f32 %v7388, %v7525
        %v7529 = vmul.f32 %v7389, %v7525
        %v7530 = vmul.f32 %v7390, %v7525
        %v7531 = vmul.f32 %v7391, %v7525
        %v7532 = vmul.f32 %v7392, %v7525
        %v7533 = vmul.f32 %v7393, %v7525
        %v7534 = vmul.f32 %v7394, %v7525
        %v7535 = vmul.f32 %v7395, %v7525
        %v7536 = vmul.f32 %v7396, %v7525
        %v7537 = vmul.f32 %v7397, %v7525
        %v7538 = vmul.f32 %v7398, %v7525
        %v7539 = vmul.f32 %v7399, %v7525
        %v7540 = vmul.f32 %v7400, %v7525
        %v7541 = vmul.f32 %v7401, %v7525
        %v7542 = vmul.f32 %v7402, %v7525
        %v7543 = vmul.f32 %v7403, %v7525
        %v7544 = vmul.f32 %v7404, %v7525
        %v7545 = vmul.f32 %v7405, %v7525
        %v7546 = vmul.f32 %v7406, %v7525
        %v7547 = vmul.f32 %v7407, %v7525
        %v7548 = vmul.f32 %v7408, %v7525
        %v7549 = vmul.f32 %v7409, %v7525
        %v7550 = vmul.f32 %v7410, %v7525
        %v7551 = vmul.f32 %v7411, %v7525
        %v7552 = vmul.f32 %v7412, %v7525
        %v7553 = vmul.f32 %v7413, %v7525
        %v7554 = vmul.f32 %v7414, %v7525
        %v7555 = vmul.f32 %v7415, %v7525
        %v7556 = vmul.f32 %v7416, %v7525
        %v7557 = vmul.f32 %v7417, %v7525
        %v7558 = vmul.f32 %v7418, %v7525
        %v7559 = vsel %vm777, %v7527, 0.0
        %7560 = vadd.xlane.f32.xlu0 %v7559
        %v7561 = vpop.xlane.xlu0 %7560
        %v7562 = vsel %vm777, %v7528, 0.0
        %7563 = vadd.xlane.f32.xlu0 %v7562
        %v7564 = vpop.xlane.xlu0 %7563
        %v7565 = vsel %vm777, %v7529, 0.0
        %7566 = vadd.xlane.f32.xlu0 %v7565
        %v7567 = vpop.xlane.xlu0 %7566
        %v7568 = vsel %vm777, %v7530, 0.0
        %7569 = vadd.xlane.f32.xlu0 %v7568
        %v7570 = vpop.xlane.xlu0 %7569
        %v7571 = vsel %vm777, %v7531, 0.0
        %7572 = vadd.xlane.f32.xlu0 %v7571
        %v7573 = vpop.xlane.xlu0 %7572
        %v7574 = vsel %vm777, %v7532, 0.0
        %7575 = vadd.xlane.f32.xlu0 %v7574
        %v7576 = vpop.xlane.xlu0 %7575
        %v7577 = vsel %vm777, %v7533, 0.0
        %7578 = vadd.xlane.f32.xlu0 %v7577
        %v7579 = vpop.xlane.xlu0 %7578
        %v7580 = vsel %vm777, %v7534, 0.0
        %7581 = vadd.xlane.f32.xlu0 %v7580
        %v7582 = vpop.xlane.xlu0 %7581
        %v7583 = vsel %vm777, %v7535, 0.0
        %7584 = vadd.xlane.f32.xlu0 %v7583
        %v7585 = vpop.xlane.xlu0 %7584
        %v7586 = vsel %vm777, %v7536, 0.0
        %7587 = vadd.xlane.f32.xlu0 %v7586
        %v7588 = vpop.xlane.xlu0 %7587
        %v7589 = vsel %vm777, %v7537, 0.0
        %7590 = vadd.xlane.f32.xlu0 %v7589
        %v7591 = vpop.xlane.xlu0 %7590
        %v7592 = vsel %vm777, %v7538, 0.0
        %7593 = vadd.xlane.f32.xlu0 %v7592
        %v7594 = vpop.xlane.xlu0 %7593
        %v7595 = vsel %vm777, %v7539, 0.0
        %7596 = vadd.xlane.f32.xlu0 %v7595
        %v7597 = vpop.xlane.xlu0 %7596
        %v7598 = vsel %vm777, %v7540, 0.0
        %7599 = vadd.xlane.f32.xlu0 %v7598
        %v7600 = vpop.xlane.xlu0 %7599
        %v7601 = vsel %vm777, %v7541, 0.0
        %7602 = vadd.xlane.f32.xlu0 %v7601
        %v7603 = vpop.xlane.xlu0 %7602
        %v7604 = vsel %vm777, %v7542, 0.0
        %7605 = vadd.xlane.f32.xlu0 %v7604
        %v7606 = vpop.xlane.xlu0 %7605
        %v7607 = vsel %vm777, %v7543, 0.0
        %7608 = vadd.xlane.f32.xlu0 %v7607
        %v7609 = vpop.xlane.xlu0 %7608
        %v7610 = vsel %vm777, %v7544, 0.0
        %7611 = vadd.xlane.f32.xlu0 %v7610
        %v7612 = vpop.xlane.xlu0 %7611
        %v7613 = vsel %vm777, %v7545, 0.0
        %7614 = vadd.xlane.f32.xlu0 %v7613
        %v7615 = vpop.xlane.xlu0 %7614
        %v7616 = vsel %vm777, %v7546, 0.0
        %7617 = vadd.xlane.f32.xlu0 %v7616
        %v7618 = vpop.xlane.xlu0 %7617
        %v7619 = vsel %vm777, %v7547, 0.0
        %7620 = vadd.xlane.f32.xlu0 %v7619
        %v7621 = vpop.xlane.xlu0 %7620
        %v7622 = vsel %vm777, %v7548, 0.0
        %7623 = vadd.xlane.f32.xlu0 %v7622
        %v7624 = vpop.xlane.xlu0 %7623
        %v7625 = vsel %vm777, %v7549, 0.0
        %7626 = vadd.xlane.f32.xlu0 %v7625
        %v7627 = vpop.xlane.xlu0 %7626
        %v7628 = vsel %vm777, %v7550, 0.0
        %7629 = vadd.xlane.f32.xlu0 %v7628
        %v7630 = vpop.xlane.xlu0 %7629
        %v7631 = vsel %vm777, %v7551, 0.0
        %7632 = vadd.xlane.f32.xlu0 %v7631
        %v7633 = vpop.xlane.xlu0 %7632
        %v7634 = vsel %vm777, %v7552, 0.0
        %7635 = vadd.xlane.f32.xlu0 %v7634
        %v7636 = vpop.xlane.xlu0 %7635
        %v7637 = vsel %vm777, %v7553, 0.0
        %7638 = vadd.xlane.f32.xlu0 %v7637
        %v7639 = vpop.xlane.xlu0 %7638
        %v7640 = vsel %vm777, %v7554, 0.0
        %7641 = vadd.xlane.f32.xlu0 %v7640
        %v7642 = vpop.xlane.xlu0 %7641
        %v7643 = vsel %vm777, %v7555, 0.0
        %7644 = vadd.xlane.f32.xlu0 %v7643
        %v7645 = vpop.xlane.xlu0 %7644
        %v7646 = vsel %vm777, %v7556, 0.0
        %7647 = vadd.xlane.f32.xlu0 %v7646
        %v7648 = vpop.xlane.xlu0 %7647
        %v7649 = vsel %vm777, %v7557, 0.0
        %7650 = vadd.xlane.f32.xlu0 %v7649
        %v7651 = vpop.xlane.xlu0 %7650
        %v7652 = vsel %vm777, %v7558, 0.0
        %7653 = vadd.xlane.f32.xlu0 %v7652
        %v7654 = vpop.xlane.xlu0 %7653
        %v7655 = vrcp.pop 32.0
        %v7656 = vmul.f32 %v7561, %v7655
        %v7657 = vmul.f32 %v7564, %v7655
        %v7658 = vmul.f32 %v7567, %v7655
        %v7659 = vmul.f32 %v7570, %v7655
        %v7660 = vmul.f32 %v7573, %v7655
        %v7661 = vmul.f32 %v7576, %v7655
        %v7662 = vmul.f32 %v7579, %v7655
        %v7663 = vmul.f32 %v7582, %v7655
        %v7664 = vmul.f32 %v7585, %v7655
        %v7665 = vmul.f32 %v7588, %v7655
        %v7666 = vmul.f32 %v7591, %v7655
        %v7667 = vmul.f32 %v7594, %v7655
        %v7668 = vmul.f32 %v7597, %v7655
        %v7669 = vmul.f32 %v7600, %v7655
        %v7670 = vmul.f32 %v7603, %v7655
        %v7671 = vmul.f32 %v7606, %v7655
        %v7672 = vmul.f32 %v7609, %v7655
        %v7673 = vmul.f32 %v7612, %v7655
        %v7674 = vmul.f32 %v7615, %v7655
        %v7675 = vmul.f32 %v7618, %v7655
        %v7676 = vmul.f32 %v7621, %v7655
        %v7677 = vmul.f32 %v7624, %v7655
        %v7678 = vmul.f32 %v7627, %v7655
        %v7679 = vmul.f32 %v7630, %v7655
        %v7680 = vmul.f32 %v7633, %v7655
        %v7681 = vmul.f32 %v7636, %v7655
        %v7682 = vmul.f32 %v7639, %v7655
        %v7683 = vmul.f32 %v7642, %v7655
        %v7684 = vmul.f32 %v7645, %v7655
        %v7685 = vmul.f32 %v7648, %v7655
        %v7686 = vmul.f32 %v7651, %v7655
        %v7687 = vmul.f32 %v7654, %v7655
        %v7720 = vlaneseq
        %v7721 = vand.u32 %v7720, 127
        %v7722 = vadd.s32 %v7721, 4294967293
        %v7723 = vlaneseq
        %v7724 = vshrl.u32 %v7723, 7
        %v7725 = vsub.s32 %v7722, %v7724
        %v7726 = vrot.slane %v7656, %v7725
        %v7727 = vadd.s32 %v7721, 4294967285
        %v7728 = vlaneseq
        %v7729 = vshrl.u32 %v7728, 7
        %v7730 = vsub.s32 %v7727, %v7729
        %v7731 = vrot.slane %v7657, %v7730
        %vm7732 = vcmask 154712
        %v7733 = vsel %vm7732, %v7731, %v7726
        %v7734 = vlaneseq
        %v7735 = vshrl.u32 %v7734, 7
        %v7736 = vsub.s32 %v7722, %v7735
        %v7737 = vrot.slane %v7658, %v7736
        %v7738 = vlaneseq
        %v7739 = vshrl.u32 %v7738, 7
        %v7740 = vsub.s32 %v7727, %v7739
        %v7741 = vrot.slane %v7659, %v7740
        %v7742 = vsel %vm7732, %v7741, %v7737
        %v7743 = vlaneseq
        %v7744 = vshrl.u32 %v7743, 7
        %v7745 = vsub.s32 %v7722, %v7744
        %v7746 = vrot.slane %v7660, %v7745
        %v7747 = vlaneseq
        %v7748 = vshrl.u32 %v7747, 7
        %v7749 = vsub.s32 %v7727, %v7748
        %v7750 = vrot.slane %v7661, %v7749
        %v7751 = vsel %vm7732, %v7750, %v7746
        %v7752 = vlaneseq
        %v7753 = vshrl.u32 %v7752, 7
        %v7754 = vsub.s32 %v7722, %v7753
        %v7755 = vrot.slane %v7662, %v7754
        %v7756 = vlaneseq
        %v7757 = vshrl.u32 %v7756, 7
        %v7758 = vsub.s32 %v7727, %v7757
        %v7759 = vrot.slane %v7663, %v7758
        %v7760 = vsel %vm7732, %v7759, %v7755
        %v7761 = vlaneseq
        %v7762 = vshrl.u32 %v7761, 7
        %v7763 = vsub.s32 %v7722, %v7762
        %v7764 = vrot.slane %v7664, %v7763
        %v7765 = vlaneseq
        %v7766 = vshrl.u32 %v7765, 7
        %v7767 = vsub.s32 %v7727, %v7766
        %v7768 = vrot.slane %v7665, %v7767
        %v7769 = vsel %vm7732, %v7768, %v7764
        %v7770 = vlaneseq
        %v7771 = vshrl.u32 %v7770, 7
        %v7772 = vsub.s32 %v7722, %v7771
        %v7773 = vrot.slane %v7666, %v7772
        %v7774 = vlaneseq
        %v7775 = vshrl.u32 %v7774, 7
        %v7776 = vsub.s32 %v7727, %v7775
        %v7777 = vrot.slane %v7667, %v7776
        %v7778 = vsel %vm7732, %v7777, %v7773
        %v7779 = vlaneseq
        %v7780 = vshrl.u32 %v7779, 7
        %v7781 = vsub.s32 %v7722, %v7780
        %v7782 = vrot.slane %v7668, %v7781
        %v7783 = vlaneseq
        %v7784 = vshrl.u32 %v7783, 7
        %v7785 = vsub.s32 %v7727, %v7784
        %v7786 = vrot.slane %v7669, %v7785
        %v7787 = vsel %vm7732, %v7786, %v7782
        %v7788 = vlaneseq
        %v7789 = vshrl.u32 %v7788, 7
        %v7790 = vsub.s32 %v7722, %v7789
        %v7791 = vrot.slane %v7670, %v7790
        %v7792 = vlaneseq
        %v7793 = vshrl.u32 %v7792, 7
        %v7794 = vsub.s32 %v7727, %v7793
        %v7795 = vrot.slane %v7671, %v7794
        %v7796 = vsel %vm7732, %v7795, %v7791
        %v7797 = vlaneseq
        %v7798 = vshrl.u32 %v7797, 7
        %v7799 = vsub.s32 %v7722, %v7798
        %v7800 = vrot.slane %v7672, %v7799
        %v7801 = vlaneseq
        %v7802 = vshrl.u32 %v7801, 7
        %v7803 = vsub.s32 %v7727, %v7802
        %v7804 = vrot.slane %v7673, %v7803
        %v7805 = vsel %vm7732, %v7804, %v7800
        %v7806 = vlaneseq
        %v7807 = vshrl.u32 %v7806, 7
        %v7808 = vsub.s32 %v7722, %v7807
        %v7809 = vrot.slane %v7674, %v7808
        %v7810 = vlaneseq
        %v7811 = vshrl.u32 %v7810, 7
        %v7812 = vsub.s32 %v7727, %v7811
        %v7813 = vrot.slane %v7675, %v7812
        %v7814 = vsel %vm7732, %v7813, %v7809
        %v7815 = vlaneseq
        %v7816 = vshrl.u32 %v7815, 7
        %v7817 = vsub.s32 %v7722, %v7816
        %v7818 = vrot.slane %v7676, %v7817
        %v7819 = vlaneseq
        %v7820 = vshrl.u32 %v7819, 7
        %v7821 = vsub.s32 %v7727, %v7820
        %v7822 = vrot.slane %v7677, %v7821
        %v7823 = vsel %vm7732, %v7822, %v7818
        %v7824 = vlaneseq
        %v7825 = vshrl.u32 %v7824, 7
        %v7826 = vsub.s32 %v7722, %v7825
        %v7827 = vrot.slane %v7678, %v7826
        %v7828 = vlaneseq
        %v7829 = vshrl.u32 %v7828, 7
        %v7830 = vsub.s32 %v7727, %v7829
        %v7831 = vrot.slane %v7679, %v7830
        %v7832 = vsel %vm7732, %v7831, %v7827
        %v7833 = vlaneseq
        %v7834 = vshrl.u32 %v7833, 7
        %v7835 = vsub.s32 %v7722, %v7834
        %v7836 = vrot.slane %v7680, %v7835
        %v7837 = vlaneseq
        %v7838 = vshrl.u32 %v7837, 7
        %v7839 = vsub.s32 %v7727, %v7838
        %v7840 = vrot.slane %v7681, %v7839
        %v7841 = vsel %vm7732, %v7840, %v7836
        %v7842 = vlaneseq
        %v7843 = vshrl.u32 %v7842, 7
        %v7844 = vsub.s32 %v7722, %v7843
        %v7845 = vrot.slane %v7682, %v7844
        %v7846 = vlaneseq
        %v7847 = vshrl.u32 %v7846, 7
        %v7848 = vsub.s32 %v7727, %v7847
        %v7849 = vrot.slane %v7683, %v7848
        %v7850 = vsel %vm7732, %v7849, %v7845
        %v7851 = vlaneseq
        %v7852 = vshrl.u32 %v7851, 7
        %v7853 = vsub.s32 %v7722, %v7852
        %v7854 = vrot.slane %v7684, %v7853
        %v7855 = vlaneseq
        %v7856 = vshrl.u32 %v7855, 7
        %v7857 = vsub.s32 %v7727, %v7856
        %v7858 = vrot.slane %v7685, %v7857
        %v7859 = vsel %vm7732, %v7858, %v7854
        %v7860 = vlaneseq
        %v7861 = vshrl.u32 %v7860, 7
        %v7862 = vsub.s32 %v7722, %v7861
        %v7863 = vrot.slane %v7686, %v7862
        %v7864 = vlaneseq
        %v7865 = vshrl.u32 %v7864, 7
        %v7866 = vsub.s32 %v7727, %v7865
        %v7867 = vrot.slane %v7687, %v7866
        %v7868 = vsel %vm7732, %v7867, %v7863
        %vm7869 = vcmask 1041409
        %v7870 = vsel %vm7869, %v7742, %v7733
        %vm7871 = vcmask 1042434
        %v7872 = vsel %vm7871, %v7751, %v7870
        %vm7873 = vcmask 1043459
        %v7874 = vsel %vm7873, %v7760, %v7872
        %vm7875 = vcmask 1044484
        %v7876 = vsel %vm7875, %v7769, %v7874
        %vm7877 = vcmask 1045509
        %v7878 = vsel %vm7877, %v7778, %v7876
        %vm7879 = vcmask 1046534
        %v7880 = vsel %vm7879, %v7787, %v7878
        %vm7881 = vcmask 1047559
        %v7882 = vsel %vm7881, %v7796, %v7880
        %v7883 = vsel %vm7869, %v7814, %v7805
        %v7884 = vsel %vm7871, %v7823, %v7883
        %v7885 = vsel %vm7873, %v7832, %v7884
        %v7886 = vsel %vm7875, %v7841, %v7885
        %v7887 = vsel %vm7877, %v7850, %v7886
        %v7888 = vsel %vm7879, %v7859, %v7887
        %v7889 = vsel %vm7881, %v7868, %v7888
        %vm7892 = vcmask 23552
        %v7893 = vsel %vm7892, 0.0, %v7882
        %v7894 = vsel %vm7892, 0.0, %v7889
        %vm7895 = vcmask 154624
        %v7896 = vsel %vm7895, %v7893, 0.0
        %v7897 = vsel %vm7895, %v7894, 0.0
        %vm7900 = vcmask 1042432
        %v7901 = vrot.slane %v7896, 5
        %v7902 = vrot.slane %v7897, 5
        %v7903 = vsel %vm7900, %v7901, %v7902
        %v7907 = vsel %vm7900, 0.0, %v7901
        %v7908 = vsel %vm7900, %v7902, 0.0
        %s7909 = sld [smem:[#allocation9]]
        %v7910 = vstv %s7909
        %v7911 = vmul.f32 %v7907, %v7910
        %v7912 = vmul.f32 %v7903, %v7910
        %v7913 = vadd.f32 %v7911, 0.0
        %v7914 = vadd.f32 %v7912, 0.0
        %s7915 = sld [smem:[#allocation9 + $0x1]]
        %v7916 = vstv %s7915
        %v7917 = vmul.f32 %v7907, %v7916
        %v7918 = vmul.f32 %v7903, %v7916
        %7921 = vrot.lane.b32.xlu0 %v7917, 127
        %v7922 = vpop.permute.xlu0 %7921
        %7923 = vrot.lane.b32.xlu0 %v7918, 127
        %v7924 = vpop.permute.xlu0 %7923
        %v7927 = vadd.f32 %v7913, %v7922
        %v7928 = vadd.f32 %v7914, %v7924
        %s7929 = sld [smem:[#allocation9 + $0x2]]
        %v7930 = vstv %s7929
        %v7931 = vmul.f32 %v7907, %v7930
        %v7932 = vmul.f32 %v7903, %v7930
        %7935 = vrot.lane.b32.xlu0 %v7931, 126
        %v7936 = vpop.permute.xlu0 %7935
        %7937 = vrot.lane.b32.xlu0 %v7932, 126
        %v7938 = vpop.permute.xlu0 %7937
        %v7941 = vadd.f32 %v7927, %v7936
        %v7942 = vadd.f32 %v7928, %v7938
        %s7943 = sld [smem:[#allocation9 + $0x3]]
        %v7944 = vstv %s7943
        %v7945 = vmul.f32 %v7907, %v7944
        %v7946 = vmul.f32 %v7903, %v7944
        %7949 = vrot.lane.b32.xlu0 %v7945, 125
        %v7950 = vpop.permute.xlu0 %7949
        %7951 = vrot.lane.b32.xlu0 %v7946, 125
        %v7952 = vpop.permute.xlu0 %7951
        %v7955 = vadd.f32 %v7941, %v7950
        %v7956 = vadd.f32 %v7942, %v7952
        %s7957 = sld [smem:[#allocation9 + $0x4]]
        %v7958 = vstv %s7957
        %v7959 = vmul.f32 %v7907, %v7958
        %v7960 = vmul.f32 %v7903, %v7958
        %7963 = vrot.lane.b32.xlu0 %v7959, 124
        %v7964 = vpop.permute.xlu0 %7963
        %7965 = vrot.lane.b32.xlu0 %v7960, 124
        %v7966 = vpop.permute.xlu0 %7965
        %v7969 = vadd.f32 %v7955, %v7964
        %v7970 = vadd.f32 %v7956, %v7966
        %s7971 = sld [smem:[#allocation9 + $0x5]]
        %v7972 = vstv %s7971
        %v7973 = vmul.f32 %v7907, %v7972
        %v7974 = vmul.f32 %v7903, %v7972
        %7977 = vrot.lane.b32.xlu0 %v7973, 123
        %v7978 = vpop.permute.xlu0 %7977
        %7979 = vrot.lane.b32.xlu0 %v7974, 123
        %v7980 = vpop.permute.xlu0 %7979
        %v7983 = vadd.f32 %v7969, %v7978
        %v7984 = vadd.f32 %v7970, %v7980
        %s7985 = sld [smem:[#allocation9 + $0x6]]
        %v7986 = vstv %s7985
        %v7987 = vmul.f32 %v7907, %v7986
        %v7988 = vmul.f32 %v7903, %v7986
        %7991 = vrot.lane.b32.xlu0 %v7987, 122
        %v7992 = vpop.permute.xlu0 %7991
        %7993 = vrot.lane.b32.xlu0 %v7988, 122
        %v7994 = vpop.permute.xlu0 %7993
        %v7997 = vadd.f32 %v7983, %v7992
        %v7998 = vadd.f32 %v7984, %v7994
        %s7999 = sld [smem:[#allocation9 + $0x7]]
        %v8000 = vstv %s7999
        %v8001 = vmul.f32 %v7907, %v8000
        %v8002 = vmul.f32 %v7903, %v8000
        %v8003 = vmul.f32 %v7908, %v8000
        %vm8007 = vcmask 1046528
        %v8008 = vrot.slane %v8001, 1
        %v8009 = vrot.slane %v8002, 1
        %v8010 = vsel %vm8007, %v8008, %v8009
        %v8011 = vrot.slane %v8003, 1
        %v8012 = vsel %vm8007, %v8009, %v8011
        %v8015 = vadd.f32 %v7997, %v8010
        %v8016 = vadd.f32 %v7998, %v8012
        %s8017 = sld [smem:[#allocation9 + $0x8]]
        %v8018 = vstv %s8017
        %v8019 = vmul.f32 %v7907, %v8018
        %v8020 = vmul.f32 %v7903, %v8018
        %v8021 = vmul.f32 %v7908, %v8018
        %v8025 = vrot.slane %v8019, 1
        %v8026 = vrot.slane %v8020, 1
        %v8027 = vsel %vm8007, %v8025, %v8026
        %v8028 = vrot.slane %v8021, 1
        %v8029 = vsel %vm8007, %v8026, %v8028
        %8030 = vrot.lane.b32.xlu0 %v8027, 127
        %v8031 = vpop.permute.xlu0 %8030
        %8032 = vrot.lane.b32.xlu0 %v8029, 127
        %v8033 = vpop.permute.xlu0 %8032
        %v8036 = vadd.f32 %v8015, %v8031
        %v8037 = vadd.f32 %v8016, %v8033
        %s8038 = sld [smem:[#allocation9 + $0x9]]
        %v8039 = vstv %s8038
        %v8040 = vmul.f32 %v7907, %v8039
        %v8041 = vmul.f32 %v7903, %v8039
        %v8042 = vmul.f32 %v7908, %v8039
        %v8046 = vrot.slane %v8040, 1
        %v8047 = vrot.slane %v8041, 1
        %v8048 = vsel %vm8007, %v8046, %v8047
        %v8049 = vrot.slane %v8042, 1
        %v8050 = vsel %vm8007, %v8047, %v8049
        %8051 = vrot.lane.b32.xlu0 %v8048, 126
        %v8052 = vpop.permute.xlu0 %8051
        %8053 = vrot.lane.b32.xlu0 %v8050, 126
        %v8054 = vpop.permute.xlu0 %8053
        %v8057 = vadd.f32 %v8036, %v8052
        %v8058 = vadd.f32 %v8037, %v8054
        %s8059 = sld [smem:[#allocation9 + $0xa]]
        %v8060 = vstv %s8059
        %v8061 = vmul.f32 %v7907, %v8060
        %v8062 = vmul.f32 %v7903, %v8060
        %v8063 = vmul.f32 %v7908, %v8060
        %v8067 = vrot.slane %v8061, 1
        %v8068 = vrot.slane %v8062, 1
        %v8069 = vsel %vm8007, %v8067, %v8068
        %v8070 = vrot.slane %v8063, 1
        %v8071 = vsel %vm8007, %v8068, %v8070
        %8072 = vrot.lane.b32.xlu0 %v8069, 125
        %v8073 = vpop.permute.xlu0 %8072
        %8074 = vrot.lane.b32.xlu0 %v8071, 125
        %v8075 = vpop.permute.xlu0 %8074
        %v8078 = vadd.f32 %v8057, %v8073
        %v8079 = vadd.f32 %v8058, %v8075
        %s8080 = sld [smem:[#allocation9 + $0xb]]
        %v8081 = vstv %s8080
        %v8082 = vmul.f32 %v7907, %v8081
        %v8083 = vmul.f32 %v7903, %v8081
        %v8084 = vmul.f32 %v7908, %v8081
        %v8088 = vrot.slane %v8082, 1
        %v8089 = vrot.slane %v8083, 1
        %v8090 = vsel %vm8007, %v8088, %v8089
        %v8091 = vrot.slane %v8084, 1
        %v8092 = vsel %vm8007, %v8089, %v8091
        %8093 = vrot.lane.b32.xlu0 %v8090, 124
        %v8094 = vpop.permute.xlu0 %8093
        %8095 = vrot.lane.b32.xlu0 %v8092, 124
        %v8096 = vpop.permute.xlu0 %8095
        %v8099 = vadd.f32 %v8078, %v8094
        %v8100 = vadd.f32 %v8079, %v8096
        %s8101 = sld [smem:[#allocation9 + $0xc]]
        %v8102 = vstv %s8101
        %v8103 = vmul.f32 %v7907, %v8102
        %v8104 = vmul.f32 %v7903, %v8102
        %v8105 = vmul.f32 %v7908, %v8102
        %v8109 = vrot.slane %v8103, 1
        %v8110 = vrot.slane %v8104, 1
        %v8111 = vsel %vm8007, %v8109, %v8110
        %v8112 = vrot.slane %v8105, 1
        %v8113 = vsel %vm8007, %v8110, %v8112
        %8114 = vrot.lane.b32.xlu0 %v8111, 123
        %v8115 = vpop.permute.xlu0 %8114
        %8116 = vrot.lane.b32.xlu0 %v8113, 123
        %v8117 = vpop.permute.xlu0 %8116
        %v8120 = vadd.f32 %v8099, %v8115
        %v8121 = vadd.f32 %v8100, %v8117
        %s8122 = sld [smem:[#allocation9 + $0xd]]
        %v8123 = vstv %s8122
        %v8124 = vmul.f32 %v7907, %v8123
        %v8125 = vmul.f32 %v7903, %v8123
        %v8126 = vmul.f32 %v7908, %v8123
        %v8130 = vrot.slane %v8124, 1
        %v8131 = vrot.slane %v8125, 1
        %v8132 = vsel %vm8007, %v8130, %v8131
        %v8133 = vrot.slane %v8126, 1
        %v8134 = vsel %vm8007, %v8131, %v8133
        %8135 = vrot.lane.b32.xlu0 %v8132, 122
        %v8136 = vpop.permute.xlu0 %8135
        %8137 = vrot.lane.b32.xlu0 %v8134, 122
        %v8138 = vpop.permute.xlu0 %8137
        %v8141 = vadd.f32 %v8120, %v8136
        %v8142 = vadd.f32 %v8121, %v8138
        %s8143 = sld [smem:[#allocation9 + $0xe]]
        %v8144 = vstv %s8143
        %v8145 = vmul.f32 %v7907, %v8144
        %v8146 = vmul.f32 %v7903, %v8144
        %v8147 = vmul.f32 %v7908, %v8144
        %vm8151 = vcmask 1045504
        %v8152 = vrot.slane %v8145, 2
        %v8153 = vrot.slane %v8146, 2
        %v8154 = vsel %vm8151, %v8152, %v8153
        %v8155 = vrot.slane %v8147, 2
        %v8156 = vsel %vm8151, %v8153, %v8155
        %v8159 = vadd.f32 %v8141, %v8154
        %v8160 = vadd.f32 %v8142, %v8156
        %s8161 = sld [smem:[#allocation9 + $0xf]]
        %v8162 = vstv %s8161
        %v8163 = vmul.f32 %v7907, %v8162
        %v8164 = vmul.f32 %v7903, %v8162
        %v8165 = vmul.f32 %v7908, %v8162
        %v8169 = vrot.slane %v8163, 2
        %v8170 = vrot.slane %v8164, 2
        %v8171 = vsel %vm8151, %v8169, %v8170
        %v8172 = vrot.slane %v8165, 2
        %v8173 = vsel %vm8151, %v8170, %v8172
        %8174 = vrot.lane.b32.xlu0 %v8171, 127
        %v8175 = vpop.permute.xlu0 %8174
        %8176 = vrot.lane.b32.xlu0 %v8173, 127
        %v8177 = vpop.permute.xlu0 %8176
        %v8180 = vadd.f32 %v8159, %v8175
        %v8181 = vadd.f32 %v8160, %v8177
        %s8182 = sld [smem:[#allocation9 + $0x10]]
        %v8183 = vstv %s8182
        %v8184 = vmul.f32 %v7907, %v8183
        %v8185 = vmul.f32 %v7903, %v8183
        %v8186 = vmul.f32 %v7908, %v8183
        %v8190 = vrot.slane %v8184, 2
        %v8191 = vrot.slane %v8185, 2
        %v8192 = vsel %vm8151, %v8190, %v8191
        %v8193 = vrot.slane %v8186, 2
        %v8194 = vsel %vm8151, %v8191, %v8193
        %8195 = vrot.lane.b32.xlu0 %v8192, 126
        %v8196 = vpop.permute.xlu0 %8195
        %8197 = vrot.lane.b32.xlu0 %v8194, 126
        %v8198 = vpop.permute.xlu0 %8197
        %v8201 = vadd.f32 %v8180, %v8196
        %v8202 = vadd.f32 %v8181, %v8198
        %s8203 = sld [smem:[#allocation9 + $0x11]]
        %v8204 = vstv %s8203
        %v8205 = vmul.f32 %v7907, %v8204
        %v8206 = vmul.f32 %v7903, %v8204
        %v8207 = vmul.f32 %v7908, %v8204
        %v8211 = vrot.slane %v8205, 2
        %v8212 = vrot.slane %v8206, 2
        %v8213 = vsel %vm8151, %v8211, %v8212
        %v8214 = vrot.slane %v8207, 2
        %v8215 = vsel %vm8151, %v8212, %v8214
        %8216 = vrot.lane.b32.xlu0 %v8213, 125
        %v8217 = vpop.permute.xlu0 %8216
        %8218 = vrot.lane.b32.xlu0 %v8215, 125
        %v8219 = vpop.permute.xlu0 %8218
        %v8222 = vadd.f32 %v8201, %v8217
        %v8223 = vadd.f32 %v8202, %v8219
        %s8224 = sld [smem:[#allocation9 + $0x12]]
        %v8225 = vstv %s8224
        %v8226 = vmul.f32 %v7907, %v8225
        %v8227 = vmul.f32 %v7903, %v8225
        %v8228 = vmul.f32 %v7908, %v8225
        %v8232 = vrot.slane %v8226, 2
        %v8233 = vrot.slane %v8227, 2
        %v8234 = vsel %vm8151, %v8232, %v8233
        %v8235 = vrot.slane %v8228, 2
        %v8236 = vsel %vm8151, %v8233, %v8235
        %8237 = vrot.lane.b32.xlu0 %v8234, 124
        %v8238 = vpop.permute.xlu0 %8237
        %8239 = vrot.lane.b32.xlu0 %v8236, 124
        %v8240 = vpop.permute.xlu0 %8239
        %v8243 = vadd.f32 %v8222, %v8238
        %v8244 = vadd.f32 %v8223, %v8240
        %s8245 = sld [smem:[#allocation9 + $0x13]]
        %v8246 = vstv %s8245
        %v8247 = vmul.f32 %v7907, %v8246
        %v8248 = vmul.f32 %v7903, %v8246
        %v8249 = vmul.f32 %v7908, %v8246
        %v8253 = vrot.slane %v8247, 2
        %v8254 = vrot.slane %v8248, 2
        %v8255 = vsel %vm8151, %v8253, %v8254
        %v8256 = vrot.slane %v8249, 2
        %v8257 = vsel %vm8151, %v8254, %v8256
        %8258 = vrot.lane.b32.xlu0 %v8255, 123
        %v8259 = vpop.permute.xlu0 %8258
        %8260 = vrot.lane.b32.xlu0 %v8257, 123
        %v8261 = vpop.permute.xlu0 %8260
        %v8264 = vadd.f32 %v8243, %v8259
        %v8265 = vadd.f32 %v8244, %v8261
        %s8266 = sld [smem:[#allocation9 + $0x14]]
        %v8267 = vstv %s8266
        %v8268 = vmul.f32 %v7907, %v8267
        %v8269 = vmul.f32 %v7903, %v8267
        %v8270 = vmul.f32 %v7908, %v8267
        %v8274 = vrot.slane %v8268, 2
        %v8275 = vrot.slane %v8269, 2
        %v8276 = vsel %vm8151, %v8274, %v8275
        %v8277 = vrot.slane %v8270, 2
        %v8278 = vsel %vm8151, %v8275, %v8277
        %8279 = vrot.lane.b32.xlu0 %v8276, 122
        %v8280 = vpop.permute.xlu0 %8279
        %8281 = vrot.lane.b32.xlu0 %v8278, 122
        %v8282 = vpop.permute.xlu0 %8281
        %v8285 = vadd.f32 %v8264, %v8280
        %v8286 = vadd.f32 %v8265, %v8282
        %s8287 = sld [smem:[#allocation9 + $0x15]]
        %v8288 = vstv %s8287
        %v8289 = vmul.f32 %v7907, %v8288
        %v8290 = vmul.f32 %v7903, %v8288
        %v8291 = vmul.f32 %v7908, %v8288
        %vm8295 = vcmask 1044480
        %v8296 = vrot.slane %v8289, 3
        %v8297 = vrot.slane %v8290, 3
        %v8298 = vsel %vm8295, %v8296, %v8297
        %v8299 = vrot.slane %v8291, 3
        %v8300 = vsel %vm8295, %v8297, %v8299
        %v8303 = vadd.f32 %v8285, %v8298
        %v8304 = vadd.f32 %v8286, %v8300
        %s8305 = sld [smem:[#allocation9 + $0x16]]
        %v8306 = vstv %s8305
        %v8307 = vmul.f32 %v7907, %v8306
        %v8308 = vmul.f32 %v7903, %v8306
        %v8309 = vmul.f32 %v7908, %v8306
        %v8313 = vrot.slane %v8307, 3
        %v8314 = vrot.slane %v8308, 3
        %v8315 = vsel %vm8295, %v8313, %v8314
        %v8316 = vrot.slane %v8309, 3
        %v8317 = vsel %vm8295, %v8314, %v8316
        %8318 = vrot.lane.b32.xlu0 %v8315, 127
        %v8319 = vpop.permute.xlu0 %8318
        %8320 = vrot.lane.b32.xlu0 %v8317, 127
        %v8321 = vpop.permute.xlu0 %8320
        %v8324 = vadd.f32 %v8303, %v8319
        %v8325 = vadd.f32 %v8304, %v8321
        %s8326 = sld [smem:[#allocation9 + $0x17]]
        %v8327 = vstv %s8326
        %v8328 = vmul.f32 %v7907, %v8327
        %v8329 = vmul.f32 %v7903, %v8327
        %v8330 = vmul.f32 %v7908, %v8327
        %v8334 = vrot.slane %v8328, 3
        %v8335 = vrot.slane %v8329, 3
        %v8336 = vsel %vm8295, %v8334, %v8335
        %v8337 = vrot.slane %v8330, 3
        %v8338 = vsel %vm8295, %v8335, %v8337
        %8339 = vrot.lane.b32.xlu0 %v8336, 126
        %v8340 = vpop.permute.xlu0 %8339
        %8341 = vrot.lane.b32.xlu0 %v8338, 126
        %v8342 = vpop.permute.xlu0 %8341
        %v8345 = vadd.f32 %v8324, %v8340
        %v8346 = vadd.f32 %v8325, %v8342
        %s8347 = sld [smem:[#allocation9 + $0x18]]
        %v8348 = vstv %s8347
        %v8349 = vmul.f32 %v7907, %v8348
        %v8350 = vmul.f32 %v7903, %v8348
        %v8351 = vmul.f32 %v7908, %v8348
        %v8355 = vrot.slane %v8349, 3
        %v8356 = vrot.slane %v8350, 3
        %v8357 = vsel %vm8295, %v8355, %v8356
        %v8358 = vrot.slane %v8351, 3
        %v8359 = vsel %vm8295, %v8356, %v8358
        %8360 = vrot.lane.b32.xlu0 %v8357, 125
        %v8361 = vpop.permute.xlu0 %8360
        %8362 = vrot.lane.b32.xlu0 %v8359, 125
        %v8363 = vpop.permute.xlu0 %8362
        %v8366 = vadd.f32 %v8345, %v8361
        %v8367 = vadd.f32 %v8346, %v8363
        %s8368 = sld [smem:[#allocation9 + $0x19]]
        %v8369 = vstv %s8368
        %v8370 = vmul.f32 %v7907, %v8369
        %v8371 = vmul.f32 %v7903, %v8369
        %v8372 = vmul.f32 %v7908, %v8369
        %v8376 = vrot.slane %v8370, 3
        %v8377 = vrot.slane %v8371, 3
        %v8378 = vsel %vm8295, %v8376, %v8377
        %v8379 = vrot.slane %v8372, 3
        %v8380 = vsel %vm8295, %v8377, %v8379
        %8381 = vrot.lane.b32.xlu0 %v8378, 124
        %v8382 = vpop.permute.xlu0 %8381
        %8383 = vrot.lane.b32.xlu0 %v8380, 124
        %v8384 = vpop.permute.xlu0 %8383
        %v8387 = vadd.f32 %v8366, %v8382
        %v8388 = vadd.f32 %v8367, %v8384
        %s8389 = sld [smem:[#allocation9 + $0x1a]]
        %v8390 = vstv %s8389
        %v8391 = vmul.f32 %v7907, %v8390
        %v8392 = vmul.f32 %v7903, %v8390
        %v8393 = vmul.f32 %v7908, %v8390
        %v8397 = vrot.slane %v8391, 3
        %v8398 = vrot.slane %v8392, 3
        %v8399 = vsel %vm8295, %v8397, %v8398
        %v8400 = vrot.slane %v8393, 3
        %v8401 = vsel %vm8295, %v8398, %v8400
        %8402 = vrot.lane.b32.xlu0 %v8399, 123
        %v8403 = vpop.permute.xlu0 %8402
        %8404 = vrot.lane.b32.xlu0 %v8401, 123
        %v8405 = vpop.permute.xlu0 %8404
        %v8408 = vadd.f32 %v8387, %v8403
        %v8409 = vadd.f32 %v8388, %v8405
        %s8410 = sld [smem:[#allocation9 + $0x1b]]
        %v8411 = vstv %s8410
        %v8412 = vmul.f32 %v7907, %v8411
        %v8413 = vmul.f32 %v7903, %v8411
        %v8414 = vmul.f32 %v7908, %v8411
        %v8418 = vrot.slane %v8412, 3
        %v8419 = vrot.slane %v8413, 3
        %v8420 = vsel %vm8295, %v8418, %v8419
        %v8421 = vrot.slane %v8414, 3
        %v8422 = vsel %vm8295, %v8419, %v8421
        %8423 = vrot.lane.b32.xlu0 %v8420, 122
        %v8424 = vpop.permute.xlu0 %8423
        %8425 = vrot.lane.b32.xlu0 %v8422, 122
        %v8426 = vpop.permute.xlu0 %8425
        %v8429 = vadd.f32 %v8408, %v8424
        %v8430 = vadd.f32 %v8409, %v8426
        %s8431 = sld [smem:[#allocation9 + $0x1c]]
        %v8432 = vstv %s8431
        %v8433 = vmul.f32 %v7907, %v8432
        %v8434 = vmul.f32 %v7903, %v8432
        %v8435 = vmul.f32 %v7908, %v8432
        %vm8439 = vcmask 1043456
        %v8440 = vrot.slane %v8433, 4
        %v8441 = vrot.slane %v8434, 4
        %v8442 = vsel %vm8439, %v8440, %v8441
        %v8443 = vrot.slane %v8435, 4
        %v8444 = vsel %vm8439, %v8441, %v8443
        %v8447 = vadd.f32 %v8429, %v8442
        %v8448 = vadd.f32 %v8430, %v8444
        %s8449 = sld [smem:[#allocation9 + $0x1d]]
        %v8450 = vstv %s8449
        %v8451 = vmul.f32 %v7907, %v8450
        %v8452 = vmul.f32 %v7903, %v8450
        %v8453 = vmul.f32 %v7908, %v8450
        %v8457 = vrot.slane %v8451, 4
        %v8458 = vrot.slane %v8452, 4
        %v8459 = vsel %vm8439, %v8457, %v8458
        %v8460 = vrot.slane %v8453, 4
        %v8461 = vsel %vm8439, %v8458, %v8460
        %8462 = vrot.lane.b32.xlu0 %v8459, 127
        %v8463 = vpop.permute.xlu0 %8462
        %8464 = vrot.lane.b32.xlu0 %v8461, 127
        %v8465 = vpop.permute.xlu0 %8464
        %v8468 = vadd.f32 %v8447, %v8463
        %v8469 = vadd.f32 %v8448, %v8465
        %s8470 = sld [smem:[#allocation9 + $0x1e]]
        %v8471 = vstv %s8470
        %v8472 = vmul.f32 %v7907, %v8471
        %v8473 = vmul.f32 %v7903, %v8471
        %v8474 = vmul.f32 %v7908, %v8471
        %v8478 = vrot.slane %v8472, 4
        %v8479 = vrot.slane %v8473, 4
        %v8480 = vsel %vm8439, %v8478, %v8479
        %v8481 = vrot.slane %v8474, 4
        %v8482 = vsel %vm8439, %v8479, %v8481
        %8483 = vrot.lane.b32.xlu0 %v8480, 126
        %v8484 = vpop.permute.xlu0 %8483
        %8485 = vrot.lane.b32.xlu0 %v8482, 126
        %v8486 = vpop.permute.xlu0 %8485
        %v8489 = vadd.f32 %v8468, %v8484
        %v8490 = vadd.f32 %v8469, %v8486
        %s8491 = sld [smem:[#allocation9 + $0x1f]]
        %v8492 = vstv %s8491
        %v8493 = vmul.f32 %v7907, %v8492
        %v8494 = vmul.f32 %v7903, %v8492
        %v8495 = vmul.f32 %v7908, %v8492
        %v8499 = vrot.slane %v8493, 4
        %v8500 = vrot.slane %v8494, 4
        %v8501 = vsel %vm8439, %v8499, %v8500
        %v8502 = vrot.slane %v8495, 4
        %v8503 = vsel %vm8439, %v8500, %v8502
        %8504 = vrot.lane.b32.xlu0 %v8501, 125
        %v8505 = vpop.permute.xlu0 %8504
        %8506 = vrot.lane.b32.xlu0 %v8503, 125
        %v8507 = vpop.permute.xlu0 %8506
        %v8510 = vadd.f32 %v8489, %v8505
        %v8511 = vadd.f32 %v8490, %v8507
        %s8512 = sld [smem:[#allocation9 + $0x20]]
        %v8513 = vstv %s8512
        %v8514 = vmul.f32 %v7907, %v8513
        %v8515 = vmul.f32 %v7903, %v8513
        %v8516 = vmul.f32 %v7908, %v8513
        %v8520 = vrot.slane %v8514, 4
        %v8521 = vrot.slane %v8515, 4
        %v8522 = vsel %vm8439, %v8520, %v8521
        %v8523 = vrot.slane %v8516, 4
        %v8524 = vsel %vm8439, %v8521, %v8523
        %8525 = vrot.lane.b32.xlu0 %v8522, 124
        %v8526 = vpop.permute.xlu0 %8525
        %8527 = vrot.lane.b32.xlu0 %v8524, 124
        %v8528 = vpop.permute.xlu0 %8527
        %v8531 = vadd.f32 %v8510, %v8526
        %v8532 = vadd.f32 %v8511, %v8528
        %s8533 = sld [smem:[#allocation9 + $0x21]]
        %v8534 = vstv %s8533
        %v8535 = vmul.f32 %v7907, %v8534
        %v8536 = vmul.f32 %v7903, %v8534
        %v8537 = vmul.f32 %v7908, %v8534
        %v8541 = vrot.slane %v8535, 4
        %v8542 = vrot.slane %v8536, 4
        %v8543 = vsel %vm8439, %v8541, %v8542
        %v8544 = vrot.slane %v8537, 4
        %v8545 = vsel %vm8439, %v8542, %v8544
        %8546 = vrot.lane.b32.xlu0 %v8543, 123
        %v8547 = vpop.permute.xlu0 %8546
        %8548 = vrot.lane.b32.xlu0 %v8545, 123
        %v8549 = vpop.permute.xlu0 %8548
        %v8552 = vadd.f32 %v8531, %v8547
        %v8553 = vadd.f32 %v8532, %v8549
        %s8554 = sld [smem:[#allocation9 + $0x22]]
        %v8555 = vstv %s8554
        %v8556 = vmul.f32 %v7907, %v8555
        %v8557 = vmul.f32 %v7903, %v8555
        %v8558 = vmul.f32 %v7908, %v8555
        %v8562 = vrot.slane %v8556, 4
        %v8563 = vrot.slane %v8557, 4
        %v8564 = vsel %vm8439, %v8562, %v8563
        %v8565 = vrot.slane %v8558, 4
        %v8566 = vsel %vm8439, %v8563, %v8565
        %8567 = vrot.lane.b32.xlu0 %v8564, 122
        %v8568 = vpop.permute.xlu0 %8567
        %8569 = vrot.lane.b32.xlu0 %v8566, 122
        %v8570 = vpop.permute.xlu0 %8569
        %v8573 = vadd.f32 %v8552, %v8568
        %v8574 = vadd.f32 %v8553, %v8570
        %s8575 = sld [smem:[#allocation9 + $0x23]]
        %v8576 = vstv %s8575
        %v8577 = vmul.f32 %v7907, %v8576
        %v8578 = vmul.f32 %v7903, %v8576
        %v8579 = vmul.f32 %v7908, %v8576
        %v8583 = vrot.slane %v8577, 5
        %v8584 = vrot.slane %v8578, 5
        %v8585 = vsel %vm7900, %v8583, %v8584
        %v8586 = vrot.slane %v8579, 5
        %v8587 = vsel %vm7900, %v8584, %v8586
        %v8590 = vadd.f32 %v8573, %v8585
        %v8591 = vadd.f32 %v8574, %v8587
        %s8592 = sld [smem:[#allocation9 + $0x24]]
        %v8593 = vstv %s8592
        %v8594 = vmul.f32 %v7907, %v8593
        %v8595 = vmul.f32 %v7903, %v8593
        %v8596 = vmul.f32 %v7908, %v8593
        %v8600 = vrot.slane %v8594, 5
        %v8601 = vrot.slane %v8595, 5
        %v8602 = vsel %vm7900, %v8600, %v8601
        %v8603 = vrot.slane %v8596, 5
        %v8604 = vsel %vm7900, %v8601, %v8603
        %8605 = vrot.lane.b32.xlu0 %v8602, 127
        %v8606 = vpop.permute.xlu0 %8605
        %8607 = vrot.lane.b32.xlu0 %v8604, 127
        %v8608 = vpop.permute.xlu0 %8607
        %v8611 = vadd.f32 %v8590, %v8606
        %v8612 = vadd.f32 %v8591, %v8608
        %s8613 = sld [smem:[#allocation9 + $0x25]]
        %v8614 = vstv %s8613
        %v8615 = vmul.f32 %v7907, %v8614
        %v8616 = vmul.f32 %v7903, %v8614
        %v8617 = vmul.f32 %v7908, %v8614
        %v8621 = vrot.slane %v8615, 5
        %v8622 = vrot.slane %v8616, 5
        %v8623 = vsel %vm7900, %v8621, %v8622
        %v8624 = vrot.slane %v8617, 5
        %v8625 = vsel %vm7900, %v8622, %v8624
        %8626 = vrot.lane.b32.xlu0 %v8623, 126
        %v8627 = vpop.permute.xlu0 %8626
        %8628 = vrot.lane.b32.xlu0 %v8625, 126
        %v8629 = vpop.permute.xlu0 %8628
        %v8632 = vadd.f32 %v8611, %v8627
        %v8633 = vadd.f32 %v8612, %v8629
        %s8634 = sld [smem:[#allocation9 + $0x26]]
        %v8635 = vstv %s8634
        %v8636 = vmul.f32 %v7907, %v8635
        %v8637 = vmul.f32 %v7903, %v8635
        %v8638 = vmul.f32 %v7908, %v8635
        %v8642 = vrot.slane %v8636, 5
        %v8643 = vrot.slane %v8637, 5
        %v8644 = vsel %vm7900, %v8642, %v8643
        %v8645 = vrot.slane %v8638, 5
        %v8646 = vsel %vm7900, %v8643, %v8645
        %8647 = vrot.lane.b32.xlu0 %v8644, 125
        %v8648 = vpop.permute.xlu0 %8647
        %8649 = vrot.lane.b32.xlu0 %v8646, 125
        %v8650 = vpop.permute.xlu0 %8649
        %v8653 = vadd.f32 %v8632, %v8648
        %v8654 = vadd.f32 %v8633, %v8650
        %s8655 = sld [smem:[#allocation9 + $0x27]]
        %v8656 = vstv %s8655
        %v8657 = vmul.f32 %v7907, %v8656
        %v8658 = vmul.f32 %v7903, %v8656
        %v8659 = vmul.f32 %v7908, %v8656
        %v8663 = vrot.slane %v8657, 5
        %v8664 = vrot.slane %v8658, 5
        %v8665 = vsel %vm7900, %v8663, %v8664
        %v8666 = vrot.slane %v8659, 5
        %v8667 = vsel %vm7900, %v8664, %v8666
        %8668 = vrot.lane.b32.xlu0 %v8665, 124
        %v8669 = vpop.permute.xlu0 %8668
        %8670 = vrot.lane.b32.xlu0 %v8667, 124
        %v8671 = vpop.permute.xlu0 %8670
        %v8674 = vadd.f32 %v8653, %v8669
        %v8675 = vadd.f32 %v8654, %v8671
        %s8676 = sld [smem:[#allocation9 + $0x28]]
        %v8677 = vstv %s8676
        %v8678 = vmul.f32 %v7907, %v8677
        %v8679 = vmul.f32 %v7903, %v8677
        %v8680 = vmul.f32 %v7908, %v8677
        %v8684 = vrot.slane %v8678, 5
        %v8685 = vrot.slane %v8679, 5
        %v8686 = vsel %vm7900, %v8684, %v8685
        %v8687 = vrot.slane %v8680, 5
        %v8688 = vsel %vm7900, %v8685, %v8687
        %8689 = vrot.lane.b32.xlu0 %v8686, 123
        %v8690 = vpop.permute.xlu0 %8689
        %8691 = vrot.lane.b32.xlu0 %v8688, 123
        %v8692 = vpop.permute.xlu0 %8691
        %v8695 = vadd.f32 %v8674, %v8690
        %v8696 = vadd.f32 %v8675, %v8692
        %s8697 = sld [smem:[#allocation9 + $0x29]]
        %v8698 = vstv %s8697
        %v8699 = vmul.f32 %v7907, %v8698
        %v8700 = vmul.f32 %v7903, %v8698
        %v8701 = vmul.f32 %v7908, %v8698
        %v8705 = vrot.slane %v8699, 5
        %v8706 = vrot.slane %v8700, 5
        %v8707 = vsel %vm7900, %v8705, %v8706
        %v8708 = vrot.slane %v8701, 5
        %v8709 = vsel %vm7900, %v8706, %v8708
        %8710 = vrot.lane.b32.xlu0 %v8707, 122
        %v8711 = vpop.permute.xlu0 %8710
        %8712 = vrot.lane.b32.xlu0 %v8709, 122
        %v8713 = vpop.permute.xlu0 %8712
        %v8716 = vadd.f32 %v8695, %v8711
        %v8717 = vadd.f32 %v8696, %v8713
        %s8718 = sld [smem:[#allocation9 + $0x2a]]
        %v8719 = vstv %s8718
        %v8720 = vmul.f32 %v7907, %v8719
        %v8721 = vmul.f32 %v7903, %v8719
        %v8722 = vmul.f32 %v7908, %v8719
        %vm8726 = vcmask 1041408
        %v8727 = vrot.slane %v8720, 6
        %v8728 = vrot.slane %v8721, 6
        %v8729 = vsel %vm8726, %v8727, %v8728
        %v8730 = vrot.slane %v8722, 6
        %v8731 = vsel %vm8726, %v8728, %v8730
        %v8734 = vadd.f32 %v8716, %v8729
        %v8735 = vadd.f32 %v8717, %v8731
        %s8736 = sld [smem:[#allocation9 + $0x2b]]
        %v8737 = vstv %s8736
        %v8738 = vmul.f32 %v7907, %v8737
        %v8739 = vmul.f32 %v7903, %v8737
        %v8740 = vmul.f32 %v7908, %v8737
        %v8744 = vrot.slane %v8738, 6
        %v8745 = vrot.slane %v8739, 6
        %v8746 = vsel %vm8726, %v8744, %v8745
        %v8747 = vrot.slane %v8740, 6
        %v8748 = vsel %vm8726, %v8745, %v8747
        %8749 = vrot.lane.b32.xlu0 %v8746, 127
        %v8750 = vpop.permute.xlu0 %8749
        %8751 = vrot.lane.b32.xlu0 %v8748, 127
        %v8752 = vpop.permute.xlu0 %8751
        %v8755 = vadd.f32 %v8734, %v8750
        %v8756 = vadd.f32 %v8735, %v8752
        %s8757 = sld [smem:[#allocation9 + $0x2c]]
        %v8758 = vstv %s8757
        %v8759 = vmul.f32 %v7907, %v8758
        %v8760 = vmul.f32 %v7903, %v8758
        %v8761 = vmul.f32 %v7908, %v8758
        %v8765 = vrot.slane %v8759, 6
        %v8766 = vrot.slane %v8760, 6
        %v8767 = vsel %vm8726, %v8765, %v8766
        %v8768 = vrot.slane %v8761, 6
        %v8769 = vsel %vm8726, %v8766, %v8768
        %8770 = vrot.lane.b32.xlu0 %v8767, 126
        %v8771 = vpop.permute.xlu0 %8770
        %8772 = vrot.lane.b32.xlu0 %v8769, 126
        %v8773 = vpop.permute.xlu0 %8772
        %v8776 = vadd.f32 %v8755, %v8771
        %v8777 = vadd.f32 %v8756, %v8773
        %s8778 = sld [smem:[#allocation9 + $0x2d]]
        %v8779 = vstv %s8778
        %v8780 = vmul.f32 %v7907, %v8779
        %v8781 = vmul.f32 %v7903, %v8779
        %v8782 = vmul.f32 %v7908, %v8779
        %v8786 = vrot.slane %v8780, 6
        %v8787 = vrot.slane %v8781, 6
        %v8788 = vsel %vm8726, %v8786, %v8787
        %v8789 = vrot.slane %v8782, 6
        %v8790 = vsel %vm8726, %v8787, %v8789
        %8791 = vrot.lane.b32.xlu0 %v8788, 125
        %v8792 = vpop.permute.xlu0 %8791
        %8793 = vrot.lane.b32.xlu0 %v8790, 125
        %v8794 = vpop.permute.xlu0 %8793
        %v8797 = vadd.f32 %v8776, %v8792
        %v8798 = vadd.f32 %v8777, %v8794
        %s8799 = sld [smem:[#allocation9 + $0x2e]]
        %v8800 = vstv %s8799
        %v8801 = vmul.f32 %v7907, %v8800
        %v8802 = vmul.f32 %v7903, %v8800
        %v8803 = vmul.f32 %v7908, %v8800
        %v8807 = vrot.slane %v8801, 6
        %v8808 = vrot.slane %v8802, 6
        %v8809 = vsel %vm8726, %v8807, %v8808
        %v8810 = vrot.slane %v8803, 6
        %v8811 = vsel %vm8726, %v8808, %v8810
        %8812 = vrot.lane.b32.xlu0 %v8809, 124
        %v8813 = vpop.permute.xlu0 %8812
        %8814 = vrot.lane.b32.xlu0 %v8811, 124
        %v8815 = vpop.permute.xlu0 %8814
        %v8818 = vadd.f32 %v8797, %v8813
        %v8819 = vadd.f32 %v8798, %v8815
        %s8820 = sld [smem:[#allocation9 + $0x2f]]
        %v8821 = vstv %s8820
        %v8822 = vmul.f32 %v7907, %v8821
        %v8823 = vmul.f32 %v7903, %v8821
        %v8824 = vmul.f32 %v7908, %v8821
        %v8828 = vrot.slane %v8822, 6
        %v8829 = vrot.slane %v8823, 6
        %v8830 = vsel %vm8726, %v8828, %v8829
        %v8831 = vrot.slane %v8824, 6
        %v8832 = vsel %vm8726, %v8829, %v8831
        %8833 = vrot.lane.b32.xlu0 %v8830, 123
        %v8834 = vpop.permute.xlu0 %8833
        %8835 = vrot.lane.b32.xlu0 %v8832, 123
        %v8836 = vpop.permute.xlu0 %8835
        %v8839 = vadd.f32 %v8818, %v8834
        %v8840 = vadd.f32 %v8819, %v8836
        %s8841 = sld [smem:[#allocation9 + $0x30]]
        %v8842 = vstv %s8841
        %v8843 = vmul.f32 %v7907, %v8842
        %v8844 = vmul.f32 %v7903, %v8842
        %v8845 = vmul.f32 %v7908, %v8842
        %v8849 = vrot.slane %v8843, 6
        %v8850 = vrot.slane %v8844, 6
        %v8851 = vsel %vm8726, %v8849, %v8850
        %v8852 = vrot.slane %v8845, 6
        %v8853 = vsel %vm8726, %v8850, %v8852
        %8854 = vrot.lane.b32.xlu0 %v8851, 122
        %v8855 = vpop.permute.xlu0 %8854
        %8856 = vrot.lane.b32.xlu0 %v8853, 122
        %v8857 = vpop.permute.xlu0 %8856
        %v8860 = vadd.f32 %v8839, %v8855
        %v8861 = vadd.f32 %v8840, %v8857
        %s8862 = sld [smem:[#allocation11]]
        %v8863 = vstv %s8862
        %v8864 = vmul.f32 %v8863, %v8860
        %v8865 = vmul.f32 %v8863, %v8861
        %s8866 = sld [smem:[#allocation11 + $0x1]]
        %v8867 = vstv %s8866
        %v8868 = vadd.f32 %v8864, %v8867
        %v8869 = vadd.f32 %v8865, %v8867
        %v8870 = vsub.f32 0.0, %v8868
        %v8871 = vsub.f32 0.0, %v8869
        %v8872 = vmul.f32 %v8870, 1.442695
        %v8873 = vpow.pop %v8872
        %v8874 = vmul.f32 %v8871, 1.442695
        %v8875 = vpow.pop %v8874
        %v8876 = vadd.f32 %v8873, 1.0
        %v8877 = vadd.f32 %v8875, 1.0
        %v8878 = vrcp.pop %v8876
        %v8879 = vmul.f32 1.0, %v8878
        %v8880 = vrcp.pop %v8877
        %v8881 = vmul.f32 1.0, %v8880
        %v8882 = vlaneseq
        %v8883 = vshrl.u32 %v8882, 7
        %v8884 = vsub.s32 0, %v8883
        %v8885 = vrot.slane %v8879, %v8884
        %8887 = vbcast.lane.b32.xlu0 %v8885, 256
        %v8888 = vpop.permute.xlu0 %8887
        %s8890 = sor.u32 256, 8
        %8891 = vbcast.lane.b32.xlu0 %v8885, %s8890
        %v8892 = vpop.permute.xlu0 %8891
        %v8893 = vlaneseq
        %v8894 = vshrl.u32 %v8893, 7
        %v8895 = vsub.s32 1, %v8894
        %v8896 = vrot.slane %v8879, %v8895
        %8898 = vbcast.lane.b32.xlu0 %v8896, 256
        %v8899 = vpop.permute.xlu0 %8898
        %s8901 = sor.u32 256, 8
        %8902 = vbcast.lane.b32.xlu0 %v8896, %s8901
        %v8903 = vpop.permute.xlu0 %8902
        %v8904 = vlaneseq
        %v8905 = vshrl.u32 %v8904, 7
        %v8906 = vsub.s32 2, %v8905
        %v8907 = vrot.slane %v8879, %v8906
        %8909 = vbcast.lane.b32.xlu0 %v8907, 256
        %v8910 = vpop.permute.xlu0 %8909
        %s8912 = sor.u32 256, 8
        %8913 = vbcast.lane.b32.xlu0 %v8907, %s8912
        %v8914 = vpop.permute.xlu0 %8913
        %v8915 = vlaneseq
        %v8916 = vshrl.u32 %v8915, 7
        %v8917 = vsub.s32 3, %v8916
        %v8918 = vrot.slane %v8879, %v8917
        %8920 = vbcast.lane.b32.xlu0 %v8918, 256
        %v8921 = vpop.permute.xlu0 %8920
        %s8923 = sor.u32 256, 8
        %8924 = vbcast.lane.b32.xlu0 %v8918, %s8923
        %v8925 = vpop.permute.xlu0 %8924
        %v8926 = vlaneseq
        %v8927 = vshrl.u32 %v8926, 7
        %v8928 = vsub.s32 4, %v8927
        %v8929 = vrot.slane %v8879, %v8928
        %8931 = vbcast.lane.b32.xlu0 %v8929, 256
        %v8932 = vpop.permute.xlu0 %8931
        %s8934 = sor.u32 256, 8
        %8935 = vbcast.lane.b32.xlu0 %v8929, %s8934
        %v8936 = vpop.permute.xlu0 %8935
        %v8937 = vlaneseq
        %v8938 = vshrl.u32 %v8937, 7
        %v8939 = vsub.s32 5, %v8938
        %v8940 = vrot.slane %v8879, %v8939
        %8942 = vbcast.lane.b32.xlu0 %v8940, 256
        %v8943 = vpop.permute.xlu0 %8942
        %s8945 = sor.u32 256, 8
        %8946 = vbcast.lane.b32.xlu0 %v8940, %s8945
        %v8947 = vpop.permute.xlu0 %8946
        %v8948 = vlaneseq
        %v8949 = vshrl.u32 %v8948, 7
        %v8950 = vsub.s32 6, %v8949
        %v8951 = vrot.slane %v8879, %v8950
        %8953 = vbcast.lane.b32.xlu0 %v8951, 256
        %v8954 = vpop.permute.xlu0 %8953
        %s8956 = sor.u32 256, 8
        %8957 = vbcast.lane.b32.xlu0 %v8951, %s8956
        %v8958 = vpop.permute.xlu0 %8957
        %v8959 = vlaneseq
        %v8960 = vshrl.u32 %v8959, 7
        %v8961 = vsub.s32 7, %v8960
        %v8962 = vrot.slane %v8879, %v8961
        %8964 = vbcast.lane.b32.xlu0 %v8962, 256
        %v8965 = vpop.permute.xlu0 %8964
        %s8967 = sor.u32 256, 8
        %8968 = vbcast.lane.b32.xlu0 %v8962, %s8967
        %v8969 = vpop.permute.xlu0 %8968
        %v8970 = vlaneseq
        %v8971 = vshrl.u32 %v8970, 7
        %v8972 = vsub.s32 0, %v8971
        %v8973 = vrot.slane %v8881, %v8972
        %8975 = vbcast.lane.b32.xlu0 %v8973, 256
        %v8976 = vpop.permute.xlu0 %8975
        %s8978 = sor.u32 256, 8
        %8979 = vbcast.lane.b32.xlu0 %v8973, %s8978
        %v8980 = vpop.permute.xlu0 %8979
        %v8981 = vlaneseq
        %v8982 = vshrl.u32 %v8981, 7
        %v8983 = vsub.s32 1, %v8982
        %v8984 = vrot.slane %v8881, %v8983
        %8986 = vbcast.lane.b32.xlu0 %v8984, 256
        %v8987 = vpop.permute.xlu0 %8986
        %s8989 = sor.u32 256, 8
        %8990 = vbcast.lane.b32.xlu0 %v8984, %s8989
        %v8991 = vpop.permute.xlu0 %8990
        %v8992 = vlaneseq
        %v8993 = vshrl.u32 %v8992, 7
        %v8994 = vsub.s32 2, %v8993
        %v8995 = vrot.slane %v8881, %v8994
        %8997 = vbcast.lane.b32.xlu0 %v8995, 256
        %v8998 = vpop.permute.xlu0 %8997
        %s9000 = sor.u32 256, 8
        %9001 = vbcast.lane.b32.xlu0 %v8995, %s9000
        %v9002 = vpop.permute.xlu0 %9001
        %v9003 = vlaneseq
        %v9004 = vshrl.u32 %v9003, 7
        %v9005 = vsub.s32 3, %v9004
        %v9006 = vrot.slane %v8881, %v9005
        %9008 = vbcast.lane.b32.xlu0 %v9006, 256
        %v9009 = vpop.permute.xlu0 %9008
        %s9011 = sor.u32 256, 8
        %9012 = vbcast.lane.b32.xlu0 %v9006, %s9011
        %v9013 = vpop.permute.xlu0 %9012
        %v9014 = vlaneseq
        %v9015 = vshrl.u32 %v9014, 7
        %v9016 = vsub.s32 4, %v9015
        %v9017 = vrot.slane %v8881, %v9016
        %9019 = vbcast.lane.b32.xlu0 %v9017, 256
        %v9020 = vpop.permute.xlu0 %9019
        %s9022 = sor.u32 256, 8
        %9023 = vbcast.lane.b32.xlu0 %v9017, %s9022
        %v9024 = vpop.permute.xlu0 %9023
        %v9025 = vlaneseq
        %v9026 = vshrl.u32 %v9025, 7
        %v9027 = vsub.s32 5, %v9026
        %v9028 = vrot.slane %v8881, %v9027
        %9030 = vbcast.lane.b32.xlu0 %v9028, 256
        %v9031 = vpop.permute.xlu0 %9030
        %s9033 = sor.u32 256, 8
        %9034 = vbcast.lane.b32.xlu0 %v9028, %s9033
        %v9035 = vpop.permute.xlu0 %9034
        %v9036 = vlaneseq
        %v9037 = vshrl.u32 %v9036, 7
        %v9038 = vsub.s32 6, %v9037
        %v9039 = vrot.slane %v8881, %v9038
        %9041 = vbcast.lane.b32.xlu0 %v9039, 256
        %v9042 = vpop.permute.xlu0 %9041
        %s9044 = sor.u32 256, 8
        %9045 = vbcast.lane.b32.xlu0 %v9039, %s9044
        %v9046 = vpop.permute.xlu0 %9045
        %v9047 = vlaneseq
        %v9048 = vshrl.u32 %v9047, 7
        %v9049 = vsub.s32 7, %v9048
        %v9050 = vrot.slane %v8881, %v9049
        %9052 = vbcast.lane.b32.xlu0 %v9050, 256
        %v9053 = vpop.permute.xlu0 %9052
        %s9055 = sor.u32 256, 8
        %9056 = vbcast.lane.b32.xlu0 %v9050, %s9055
        %v9057 = vpop.permute.xlu0 %9056
        %v9058 = vmul.f32 %v7527, %v8888
        %v9059 = vmul.f32 %v7528, %v8892
        %v9060 = vmul.f32 %v7529, %v8899
        %v9061 = vmul.f32 %v7530, %v8903
        %v9062 = vmul.f32 %v7531, %v8910
        %v9063 = vmul.f32 %v7532, %v8914
        %v9064 = vmul.f32 %v7533, %v8921
        %v9065 = vmul.f32 %v7534, %v8925
        %v9066 = vmul.f32 %v7535, %v8932
        %v9067 = vmul.f32 %v7536, %v8936
        %v9068 = vmul.f32 %v7537, %v8943
        %v9069 = vmul.f32 %v7538, %v8947
        %v9070 = vmul.f32 %v7539, %v8954
        %v9071 = vmul.f32 %v7540, %v8958
        %v9072 = vmul.f32 %v7541, %v8965
        %v9073 = vmul.f32 %v7542, %v8969
        %v9074 = vmul.f32 %v7543, %v8976
        %v9075 = vmul.f32 %v7544, %v8980
        %v9076 = vmul.f32 %v7545, %v8987
        %v9077 = vmul.f32 %v7546, %v8991
        %v9078 = vmul.f32 %v7547, %v8998
        %v9079 = vmul.f32 %v7548, %v9002
        %v9080 = vmul.f32 %v7549, %v9009
        %v9081 = vmul.f32 %v7550, %v9013
        %v9082 = vmul.f32 %v7551, %v9020
        %v9083 = vmul.f32 %v7552, %v9024
        %v9084 = vmul.f32 %v7553, %v9031
        %v9085 = vmul.f32 %v7554, %v9035
        %v9086 = vmul.f32 %v7555, %v9042
        %v9087 = vmul.f32 %v7556, %v9046
        %v9088 = vmul.f32 %v7557, %v9053
        %v9089 = vmul.f32 %v7558, %v9057
        %9090 = vxpose.xlu0.b32.start [1/16] %v9058, 128
        %9091 = vxpose.xlu0.b32.cont [2/16] %v9059, 128
        %9092 = vxpose.xlu0.b32.cont [3/16] %v9060, 128
        %9093 = vxpose.xlu0.b32.cont [4/16] %v9061, 128
        %9094 = vxpose.xlu0.b32.cont [5/16] %v9062, 128
        %9095 = vxpose.xlu0.b32.cont [6/16] %v9063, 128
        %9096 = vxpose.xlu0.b32.cont [7/16] %v9064, 128
        %9097 = vxpose.xlu0.b32.cont [8/16] %v9065, 128
        %9098 = vxpose.xlu0.b32.cont [9/16] %v9066, 128
        %9099 = vxpose.xlu0.b32.cont [10/16] %v9067, 128
        %9100 = vxpose.xlu0.b32.cont [11/16] %v9068, 128
        %9101 = vxpose.xlu0.b32.cont [12/16] %v9069, 128
        %9102 = vxpose.xlu0.b32.cont [13/16] %v9070, 128
        %9103 = vxpose.xlu0.b32.cont [14/16] %v9071, 128
        %9104 = vxpose.xlu0.b32.cont [15/16] %v9072, 128
        %9105 = vxpose.xlu0.b32.end [16/16] %v9073, 128
        %v9106 = vpop.trf.xlu0
        %v9107 = vpop.trf.xlu0
        %v9108 = vpop.trf.xlu0
        %v9109 = vpop.trf.xlu0
        %v9110 = vpop.trf.xlu0
        %v9111 = vpop.trf.xlu0
        %v9112 = vpop.trf.xlu0
        %v9113 = vpop.trf.xlu0
        %v9114 = vpop.trf.xlu0
        %v9115 = vpop.trf.xlu0
        %v9116 = vpop.trf.xlu0
        %v9117 = vpop.trf.xlu0
        %v9118 = vpop.trf.xlu0
        %v9119 = vpop.trf.xlu0
        %v9120 = vpop.trf.xlu0
        %v9121 = vpop.trf.xlu0
        %9122 = vxpose.xlu0.b32.start [1/16] %v9074, 128
        %9123 = vxpose.xlu0.b32.cont [2/16] %v9075, 128
        %9124 = vxpose.xlu0.b32.cont [3/16] %v9076, 128
        %9125 = vxpose.xlu0.b32.cont [4/16] %v9077, 128
        %9126 = vxpose.xlu0.b32.cont [5/16] %v9078, 128
        %9127 = vxpose.xlu0.b32.cont [6/16] %v9079, 128
        %9128 = vxpose.xlu0.b32.cont [7/16] %v9080, 128
        %9129 = vxpose.xlu0.b32.cont [8/16] %v9081, 128
        %9130 = vxpose.xlu0.b32.cont [9/16] %v9082, 128
        %9131 = vxpose.xlu0.b32.cont [10/16] %v9083, 128
        %9132 = vxpose.xlu0.b32.cont [11/16] %v9084, 128
        %9133 = vxpose.xlu0.b32.cont [12/16] %v9085, 128
        %9134 = vxpose.xlu0.b32.cont [13/16] %v9086, 128
        %9135 = vxpose.xlu0.b32.cont [14/16] %v9087, 128
        %9136 = vxpose.xlu0.b32.cont [15/16] %v9088, 128
        %9137 = vxpose.xlu0.b32.end [16/16] %v9089, 128
        %v9138 = vpop.trf.xlu0
        %v9139 = vpop.trf.xlu0
        %v9140 = vpop.trf.xlu0
        %v9141 = vpop.trf.xlu0
        %v9142 = vpop.trf.xlu0
        %v9143 = vpop.trf.xlu0
        %v9144 = vpop.trf.xlu0
        %v9145 = vpop.trf.xlu0
        %v9146 = vpop.trf.xlu0
        %v9147 = vpop.trf.xlu0
        %v9148 = vpop.trf.xlu0
        %v9149 = vpop.trf.xlu0
        %v9150 = vpop.trf.xlu0
        %v9151 = vpop.trf.xlu0
        %v9152 = vpop.trf.xlu0
        %v9153 = vpop.trf.xlu0
        %9154 = vst [vmem:[%s417] sm:$0xff] %v9106
        %9155 = vst [vmem:[%s417 + $0x8] sm:$0xff] %v9138
        %9156 = vst [vmem:[%s417 + $0x10] sm:$0xff] %v9107
        %9157 = vst [vmem:[%s417 + $0x18] sm:$0xff] %v9139
        %9158 = vst [vmem:[%s417 + $0x20] sm:$0xff] %v9108
        %9159 = vst [vmem:[%s417 + $0x28] sm:$0xff] %v9140
        %9160 = vst [vmem:[%s417 + $0x30] sm:$0xff] %v9109
        %9161 = vst [vmem:[%s417 + $0x38] sm:$0xff] %v9141
        %s9162 = sand.u32 %s251, 1
        %s9163 = scalar_lea.sflag [#allocation4], %s9162
        %s9164 = sand.u32 %s251, 1
        %s9165 = smul.addr %s9164, 64
        %s9166 = scalar_lea.vmem [#allocation12], %s9165
        // Predicated region
        $region81: #{tpu_custom_call.1} parent=59 // pred_check
          %p9167 = pneg %p261
        $region82: #{tpu_custom_call.1} parent=59 // pred_check_branch
          %9169 = sbr.rel (%p9167) target = $region84
        $region83: #{tpu_custom_call.1} parent=59 // pred_region
          %s9171 = ssub.s32 1024, 1024
          %9172 = vsyncadd %s9163, %s9171
          %s9173 = smul.addr %s28, 8
          %s9174 = smul.addr %s9173, 128
          %s9175 = scalar_lea.hbm %s10, %s9174
          %s9176 = sshll.u32 %s9166, 4
          %s9177 = int_to_ptr.vmem [resolvable:$true] %s9176
          %9182 = dma.vmem_to_hbm [thread:$0]  %s9177, 1024, %s9175, %s9163, 256, 256, 16
        $region84: #{tpu_custom_call.1} parent=59 // pred_fallthru
          _
      $region60: #{tpu_custom_call.1} parent=5 // pred_fallthru
        _
      %p9183 = scmp.le.s32.totalorder 2, %s23
      // Predicated region
      $region85: #{tpu_custom_call.1} parent=5 // pred_check
        %p9184 = pneg %p9183
      $region86: #{tpu_custom_call.1} parent=5 // pred_check_branch
        %9186 = sbr.rel (%p9184) target = $region88
      $region87: #{tpu_custom_call.1} parent=5 // pred_region
        %s9187 = ssub.s32 %s23, 2
        // Predicated region
        $region89: #{tpu_custom_call.1} parent=87 // pred_check
          %p9188 = pneg %p267
        $region90: #{tpu_custom_call.1} parent=87 // pred_check_branch
          %9190 = sbr.rel (%p9188) target = $region92
        $region91: #{tpu_custom_call.1} parent=87 // pred_region
          %s9191 = sand.u32 %s252, 1
          %s9192 = scalar_lea.sflag [#allocation4], %s9191
          %s9193 = sand.u32 %s252, 1
          %s9194 = smul.addr %s9193, 64
          %s9195 = scalar_lea.vmem [#allocation12], %s9194
          %9196 = dma.done %s9192, 1024
        $region92: #{tpu_custom_call.1} parent=87 // pred_fallthru
          _
      $region88: #{tpu_custom_call.1} parent=5 // pred_fallthru
        _
    $region6: #{tpu_custom_call.1} parent=1 // loop_footer
      %s27 = sadd.s32 1, %s23
    $region7: #{tpu_custom_call.1} parent=1 // loop_footer_branch
      %22 = sbr.rel target = $region3
    $region8: #{tpu_custom_call.1} parent=1 // loop_exit
      _
    %9197 = vsyncpa [#allocation3], 1
    %s9198 = scalar_lea.sflag [#allocation3], 1
    %9199 = vsyncpa %s9198, 1
    %9200 = vsyncpa [#allocation7], 1
    %9201 = vsyncpa [#allocation4], 1
    %s9202 = scalar_lea.sflag [#allocation4], 1
    %9203 = vsyncpa %s9202, 1
    %9204 = vsyncpa [#allocation5], 1
    %s9205 = scalar_lea.sflag [#allocation5], 1
    %9206 = vsyncpa %s9205, 1
    %9207 = vsyncpa [#allocation10], 1

</llo_original>
